<compile_context>
chip_gen: v7x
topology: tpu7x:2x2x1
jax: 0.10.0
libtpu: 0.0.40
codegen_flags: <defaults>
</compile_context>

<pallas_src>
import functools
import math

import jax
import jax.numpy as jnp
import numpy as np
from jax.experimental import pallas as pl
from jax.experimental.pallas import tpu as pltpu

BN_EPS = 1e-5
BN_SCALE = 1.0 / math.sqrt(1.0 + BN_EPS)   # gamma=1, running_var=1
NUM_ROWS = 14                              # fixed by pos_embed shape (1, C, 14, 14)
NUM_SEG = NUM_ROWS * NUM_ROWS              # 196
TEMP_IMG = 56
WIN = TEMP_IMG // NUM_ROWS                 # 4
VMEM_LIMIT = 32 * 1024 * 1024              # v7x-safe scoped VMEM budget


def _round_up(n, m):
    return ((n + m - 1) // m) * m


# ----------------------------------------------------------------------------
# Pallas kernels
# ----------------------------------------------------------------------------
def _matmul_bias_act_kernel(x_ref, w_ref, b_ref, o_ref, *, relu):
    # bf16 MXU inputs, f32 accumulation; BN scale already folded into w.
    acc = jnp.dot(x_ref[...], w_ref[...], preferred_element_type=jnp.float32)
    acc = acc + b_ref[...]
    if relu:
        acc = jnp.maximum(acc, 0.0)
    o_ref[...] = acc.astype(o_ref.dtype)


def matmul_bias_act(x, w, bias, *, relu, tm):
    """y = act(x @ w + bias), bf16 in / bf16 out, f32 accumulate.

    Caller guarantees M % tm == 0 and K, N multiples of 128 (weights/biases are
    pre-padded at init), so there is no per-call pad or output slice."""
    M, K = x.shape
    Kw, N = w.shape
    assert K == Kw and M % tm == 0 and K % 128 == 0 and N % 128 == 0
    return pl.pallas_call(
        functools.partial(_matmul_bias_act_kernel, relu=relu),
        out_shape=jax.ShapeDtypeStruct((M, N), jnp.bfloat16),
        grid=(M // tm,),
        in_specs=[
            pl.BlockSpec((tm, K), lambda i: (i, 0)),
            pl.BlockSpec((K, N), lambda i: (0, 0)),
            pl.BlockSpec((1, N), lambda i: (0, 0)),
        ],
        out_specs=pl.BlockSpec((tm, N), lambda i: (i, 0)),
        compiler_params=pltpu.CompilerParams(
            dimension_semantics=("parallel",),
            vmem_limit_bytes=VMEM_LIMIT),
    )(x, w, bias)


def _ffn_chain_kernel(x_ref, w1_ref, b1_ref, w2_ref, b2_ref, o_ref, x_sc):
    # One grid step per backbone block; x stays resident in the VMEM scratch, so
    # the (B*S, Cp) activation never round-trips to HBM between blocks.
    @pl.when(pl.program_id(0) == 0)
    def _():
        x_sc[...] = x_ref[...]

    x = x_sc[...]                                                   # (M, Cp) bf16
    h = jnp.dot(x, w1_ref[0], preferred_element_type=jnp.float32) + b1_ref[0]
    h = jnp.maximum(h, 0.0).astype(jnp.bfloat16)                    # fc1 + BN + ReLU
    y = jnp.dot(h, w2_ref[0], preferred_element_type=jnp.float32) + b2_ref[0]
    y = (y + x.astype(jnp.float32)).astype(jnp.bfloat16)            # fc2 + BN + residual
    x_sc[...] = y
    o_ref[...] = y[None]                                            # per-block featMap


def ffn_chain(x0, ffn):
    """x0: (B*S, Cp) bf16.  Runs all blocks in ONE pallas_call; returns the
    per-block outputs (n_blocks, B*S, Cp) bf16."""
    M, cp = x0.shape
    n_blocks, _, hp = ffn["w1"].shape
    return pl.pallas_call(
        _ffn_chain_kernel,
        out_shape=jax.ShapeDtypeStruct((n_blocks, M, cp), jnp.bfloat16),
        grid=(n_blocks,),
        in_specs=[
            pl.BlockSpec((M, cp), lambda b: (0, 0)),
            pl.BlockSpec((1, cp, hp), lambda b: (b, 0, 0)),
            pl.BlockSpec((1, 1, hp), lambda b: (b, 0, 0)),
            pl.BlockSpec((1, hp, cp), lambda b: (b, 0, 0)),
            pl.BlockSpec((1, 1, cp), lambda b: (b, 0, 0)),
        ],
        out_specs=pl.BlockSpec((1, M, cp), lambda b: (b, 0, 0)),
        scratch_shapes=[pltpu.VMEM((M, cp), jnp.bfloat16)],
        compiler_params=pltpu.CompilerParams(
            dimension_semantics=("arbitrary",),       # sequential through x_sc
            vmem_limit_bytes=VMEM_LIMIT),
    )(x0, ffn["w1"], ffn["b1"], ffn["w2"], ffn["b2"])


def _seg_pool_kernel(m_ref, f_ref, o_ref):
    # Per-superpixel masked mean at 14x14 resolution:
    #   num[k, c] = sum_s counts[k, s] * feat[s, c]     (MXU)
    #   cnt[k]    = sum_s counts[k, s]                  (tiny row-sum)
    m = m_ref[0]                                                    # (K, S) bf16
    num = jnp.dot(m, f_ref[0], preferred_element_type=jnp.float32)  # (K, Cp)
    cnt = jnp.sum(m.astype(jnp.float32), axis=-1, keepdims=True)    # (K, 1)
    inv = jnp.where(cnt > 0.5, 1.0 / cnt, 0.0)                      # empty mask -> 0 (nan_to_num)
    o_ref[...] = (num * inv)[None].astype(o_ref.dtype)


def seg_pool(msum, feat):
    """msum: (B, 196, 196) bf16 window counts; feat: (B, 196, Cp) bf16."""
    B, K, S = msum.shape
    cp = feat.shape[-1]
    return pl.pallas_call(
        _seg_pool_kernel,
        out_shape=jax.ShapeDtypeStruct((B, K, cp), jnp.bfloat16),
        grid=(B,),
        in_specs=[
            pl.BlockSpec((1, K, S), lambda b: (b, 0, 0)),
            pl.BlockSpec((1, S, cp), lambda b: (b, 0, 0)),
        ],
        out_specs=pl.BlockSpec((1, K, cp), lambda b: (b, 0, 0)),
        compiler_params=pltpu.CompilerParams(
            dimension_semantics=("parallel",),
            vmem_limit_bytes=VMEM_LIMIT),
    )(msum, feat)


# ----------------------------------------------------------------------------
# Parameter construction (mirrors model_init: kaiming conv weights, zero conv
# biases, default BatchNorm).  BN scale folded, weights pre-padded/transposed.
# ----------------------------------------------------------------------------
def kaiming_normal(key, shape):
    fan_in = int(np.prod(shape[1:]))
    return jax.random.normal(key, shape, jnp.float32) * math.sqrt(2.0 / fan_in)


def make_stem_layer(key, cout, cin, cin_group, cout_pad):
    """3x3 conv (+BN folded) as a pre-padded im2col matmul weight.

    cin_group = per-tap channel group size in the im2col patches (3 for the raw
    image layer, the padded channel width otherwise)."""
    w = kaiming_normal(key, (cout, cin, 3, 3)) * BN_SCALE
    k_raw = 9 * cin_group
    kp = _round_up(k_raw, 128)
    wm = jnp.zeros((9, cin_group, cout_pad), jnp.float32)
    wm = wm.at[:, :cin, :cout].set(jnp.transpose(w, (2, 3, 1, 0)).reshape(9, cin, cout))
    wm = jnp.pad(wm.reshape(k_raw, cout_pad), ((0, kp - k_raw), (0, 0)))
    # conv bias zeroed by model_init, BN shift (beta=0, mean=0) folds to zero
    return {"w": wm.astype(jnp.bfloat16), "b": jnp.zeros((1, cout_pad), jnp.float32)}


def make_ffn_stack(key, channels, n_blocks):
    cp = _round_up(channels, 128)
    hidden = channels * 4
    hp = _round_up(hidden, 128)
    keys = jax.random.split(key, 2 * n_blocks)
    w1s, w2s = [], []
    for i in range(n_blocks):
        w1 = kaiming_normal(keys[2 * i], (hidden, channels, 1, 1)) * BN_SCALE
        w2 = kaiming_normal(keys[2 * i + 1], (channels, hidden, 1, 1)) * BN_SCALE
        w1s.append(jnp.zeros((cp, hp), jnp.float32).at[:channels, :hidden].set(
            w1.reshape(hidden, channels).T))
        w2s.append(jnp.zeros((hp, cp), jnp.float32).at[:hidden, :channels].set(
            w2.reshape(channels, hidden).T))
    return {
        "w1": jnp.stack(w1s).astype(jnp.bfloat16),        # (nb, Cp, Hp)
        "b1": jnp.zeros((n_blocks, 1, hp), jnp.float32),
        "w2": jnp.stack(w2s).astype(jnp.bfloat16),        # (nb, Hp, Cp)
        "b2": jnp.zeros((n_blocks, 1, cp), jnp.float32),
    }


def init_params(key, channels, n_blocks, n_classes):
    keys = jax.random.split(key, 16)
    c8, c4, c2 = channels // 8, channels // 4, channels // 2
    p8, p4, p2, pc = (_round_up(c, 128) for c in (c8, c4, c2, channels))
    params = {}
    params["stem"] = [
        make_stem_layer(keys[0], c8, 3, 3, p8),
        make_stem_layer(keys[1], c4, c8, p8, p4),
        make_stem_layer(keys[2], c2, c4, p4, p2),
        make_stem_layer(keys[3], channels, c2, p2, pc),
        make_stem_layer(keys[4], channels, channels, pc, pc),
    ]
    params["pos_embed"] = jnp.zeros((1, NUM_ROWS, NUM_ROWS, pc), jnp.bfloat16)
    params["ffn"] = make_ffn_stack(keys[5], channels, n_blocks)
    w1 = kaiming_normal(keys[6], (1024, channels, 1, 1)) * BN_SCALE   # BN folded
    w2 = kaiming_normal(keys[7], (n_classes, 1024, 1, 1))
    params["pred"] = {
        "w1": w1.reshape(1024, channels).T,               # (C, 1024)
        "b1": jnp.zeros((1024,), jnp.float32),
        "w2": w2.reshape(n_classes, 1024).T,              # (1024, n_classes)
        "b2": jnp.zeros((n_classes,), jnp.float32),
    }
    return params


# ----------------------------------------------------------------------------
# Conv wrapper (im2col in XLA over channel-padded bf16 NHWC, matmul in Pallas).
# ----------------------------------------------------------------------------
def conv3x3_bn_act(x_pad, layer, *, stride, pad, relu):
    """x_pad: (B, H, W, Cstore) bf16 (channel-padded except for the raw image).
    Returns (B, Ho, Wo, CoutPad) bf16."""
    B, H, W, cstore = x_pad.shape
    k = 3
    xp = jnp.pad(x_pad, ((0, 0), (pad, pad), (pad, pad), (0, 0)))
    Ho = (H + 2 * pad - k) // stride + 1
    Wo = (W + 2 * pad - k) // stride + 1
    cols = []
    for di in range(k):
        for dj in range(k):
            cols.append(xp[:, di:di + stride * (Ho - 1) + 1:stride,
                           dj:dj + stride * (Wo - 1) + 1:stride, :])
    patches = jnp.concatenate(cols, axis=-1).reshape(B * Ho * Wo, k * k * cstore)
    kp = layer["w"].shape[0]
    if patches.shape[1] != kp:                 # only the 3-channel input layer
        patches = jnp.pad(patches, ((0, 0), (0, kp - patches.shape[1])))
    M = B * Ho * Wo
    # 2 balanced grid steps (one per v7x TC) when M allows it, else 1 step.
    tm = M // 2 if (M % 2 == 0 and (M // 2) % 8 == 0) else M
    y = matmul_bias_act(patches, layer["w"], layer["b"], relu=relu, tm=tm)
    return y.reshape(B, Ho, Wo, layer["w"].shape[1])


# ----------------------------------------------------------------------------
# Stem_slic_V2
# ----------------------------------------------------------------------------
def _bilinear_neighbors(out_size, in_size):
    # Replicates torch F.interpolate(mode='bilinear', align_corners=False) ==
    # jax.image.resize(method='bilinear', antialias=False): half-pixel centers,
    # two taps per axis with weights (1 - frac, frac).
    u = (np.arange(out_size, dtype=np.float64) + 0.5) * (in_size / out_size) - 0.5
    lo = np.floor(u)
    frac = u - lo
    lo_i = np.clip(lo, 0, in_size - 1).astype(np.int32)
    hi_i = np.clip(lo + 1, 0, in_size - 1).astype(np.int32)
    return lo_i, hi_i, (1.0 - frac).astype(np.float32), frac.astype(np.float32)


def compute_features(segmaps, conv_feat_pad):
    """Per-superpixel masked mean of window-gathered conv features.

    Exact reformulation of the reference: bilinear-resized one-hot masks with a
    >0.1 threshold, but evaluated from the 4 bilinear neighbour labels (no
    (B,196,64,64) one-hot / resize), pre-summed over each 4x4 window (the
    gathered feature is constant per window), then a (196,196)@(196,Cp) Pallas
    matmul with in-kernel count normalization."""
    B, himg, _ = segmaps.shape
    cp = conv_feat_pad.shape[-1]
    lo, hi, w0, w1 = _bilinear_neighbors(TEMP_IMG, himg)
    nbr_lbl = [segmaps[:, lo, :][:, :, lo], segmaps[:, lo, :][:, :, hi],
               segmaps[:, hi, :][:, :, lo], segmaps[:, hi, :][:, :, hi]]
    nbr_w = [np.outer(w0, w0), np.outer(w0, w1), np.outer(w1, w0), np.outer(w1, w1)]
    labels = jnp.arange(NUM_SEG, dtype=segmaps.dtype)
    terms = [jnp.asarray(w)[None, :, :, None] *
             (lbl[..., None] == labels).astype(jnp.float32)
             for lbl, w in zip(nbr_lbl, nbr_w)]
    val = terms[0] + terms[1] + terms[2] + terms[3]              # (B,56,56,196)
    mask = (val > 0.1).astype(jnp.float32)
    # 4x4 window counts -> (B, 14, 14, 196); values are integers <= 16 (bf16 exact)
    msum = mask.reshape(B, NUM_ROWS, WIN, NUM_ROWS, WIN, NUM_SEG).sum(axis=(2, 4))
    msum = jnp.swapaxes(msum.reshape(B, NUM_SEG, NUM_SEG), 1, 2)  # (B, label, window)
    feat = conv_feat_pad.reshape(B, NUM_SEG, cp)                  # (B, window, Cp)
    return seg_pool(msum.astype(jnp.bfloat16), feat)              # (B, label, Cp) bf16


def stem_forward(x_nchw, org_x, params):
    x = jnp.transpose(x_nchw, (0, 2, 3, 1)).astype(jnp.bfloat16)     # (B, 64, 64, 3)
    st = params["stem"]
    x = conv3x3_bn_act(x, st[0], stride=2, pad=1, relu=True)    # 64 -> 32
    x = conv3x3_bn_act(x, st[1], stride=2, pad=1, relu=True)    # 32 -> 16
    x = conv3x3_bn_act(x, st[2], stride=1, pad=1, relu=True)    # 16 -> 16
    x = conv3x3_bn_act(x, st[3], stride=1, pad=1, relu=True)    # 16 -> 16
    x = conv3x3_bn_act(x, st[4], stride=1, pad=0, relu=False)   # 16 -> 14
    x_conv_pad = x + params["pos_embed"]                        # (B, 14, 14, Cp) bf16

    # TODO(synk): Slic.iterate is an external C (fast_slic) iterative clustering op
    # with no Pallas equivalent; a deterministic grid superpixel map is used instead.
    B = x_nchw.shape[0]
    himg = org_x.shape[2]
    idx = (jnp.arange(himg) * NUM_ROWS) // himg
    seg = idx[:, None] * NUM_ROWS + idx[None, :]
    x_slic = jnp.broadcast_to(seg, (B, himg, himg)).astype(jnp.int32)
    return x_slic, x_conv_pad


# ----------------------------------------------------------------------------
# DeepGCN_slic_V2 forward
# ----------------------------------------------------------------------------
def deepgcn_slic_v2_forward(inputs, original_input, params, n_blocks):
    B = inputs.shape[0]
    C = params["pred"]["w1"].shape[0]
    x_slic, x_conv_pad = stem_forward(inputs, original_input, params)
    pooled = compute_features(x_slic, x_conv_pad)                 # (B, 196, Cp) bf16
    cp = pooled.shape[-1]

    # TODO(synk): Grapher (graph-conv / kNN aggregation) class is not provided in
    # the reference module; only the FFN half of each backbone block is applied.
    ys = ffn_chain(pooled.reshape(B * NUM_SEG, cp), params["ffn"])  # (nb, B*S, Cp)
    ys4 = ys.reshape(n_blocks, B, NUM_ROWS, NUM_ROWS, cp)

    x_convFeat = jnp.transpose(x_conv_pad[..., :C].astype(jnp.float32), (0, 3, 1, 2))
    feat_maps = [jnp.transpose(ys4[i, ..., :C].astype(jnp.float32), (0, 3, 1, 2))
                 for i in range(n_blocks)]
    feat_maps_conv = [x_convFeat for _ in range(n_blocks)]

    # adaptive_avg_pool2d(1) + prediction head (B=2 degenerate GEMVs -> plain XLA)
    pooled_vec = jnp.mean(ys4[-1, ..., :C].astype(jnp.float32), axis=(1, 2))  # (B, C)
    pr = params["pred"]
    h = jnp.maximum(pooled_vec @ pr["w1"] + pr["b1"][None, :], 0.0)
    # Dropout: inference-mode identity
    logits = h @ pr["w2"] + pr["b2"][None, :]
    return logits, x_slic, [feat_maps, feat_maps_conv]


# ----------------------------------------------------------------------------
if __name__ == "__main__":
    key = jax.random.PRNGKey(0)
    kx, ko, kp = jax.random.split(key, 3)

    B, CHANNELS, N_BLOCKS, N_CLASSES = 2, 32, 2, 10
    # Stem conv stack implies a 64x64x3 input (-> 14x14 feature map, pos_embed 14x14)
    inputs = jax.random.normal(kx, (B, 3, 64, 64), jnp.float32)
    original_input = jnp.floor(jax.random.uniform(ko, (B, 3, 64, 64)) * 255.0)

    params = init_params(kp, CHANNELS, N_BLOCKS, N_CLASSES)

    fwd = jax.jit(deepgcn_slic_v2_forward, static_argnums=(3,))
    logits, x_slic, feats = fwd(inputs, original_input, params, N_BLOCKS)
    jax.block_until_ready(logits)
    jax.block_until_ready(x_slic)

    assert logits.shape == (B, N_CLASSES)
    assert x_slic.shape == (B, 64, 64)
    assert feats[0][0].shape == (B, CHANNELS, 14, 14)
    assert feats[1][0].shape == (B, CHANNELS, 14, 14)
    print("KERNEL_OK")
</pallas_src>

<mosaic_0001>
module attributes {stable_mosaic.version = 11 : i64} {
  func.func @_matmul_bias_act_kernel(%arg0: i32, %arg1: memref<1024x128xbf16, #tpu.memory_space<vmem>>, %arg2: memref<128x128xbf16, #tpu.memory_space<vmem>>, %arg3: memref<1x128xf32, #tpu.memory_space<vmem>>, %arg4: memref<1024x128xbf16, #tpu.memory_space<vmem>>) attributes {dimension_semantics = [#tpu.dimension_semantics<parallel>], iteration_bounds = array<i64: 2>, scalar_prefetch = 0 : i64, scratch_operands = 0 : i64, tpu.core_type = #tpu.core_type<tc>, window_params = [{transform_indices = @transform_0, window_bounds = array<i64: 1024, 128>}, {pipeline_mode = #tpu.pipeline_mode<synchronous>, transform_indices = @transform_1, window_bounds = array<i64: 128, 128>}, {pipeline_mode = #tpu.pipeline_mode<synchronous>, transform_indices = @transform_2, window_bounds = array<i64: 1, 128>}, {transform_indices = @transform_3, window_bounds = array<i64: 1024, 128>}]} {
    %c0 = arith.constant 0 : index
    %c0_0 = arith.constant 0 : index
    %0 = vector.load %arg1[%c0, %c0_0] : memref<1024x128xbf16, #tpu.memory_space<vmem>>, vector<1024x128xbf16>
    %c0_1 = arith.constant 0 : index
    %c0_2 = arith.constant 0 : index
    %1 = vector.load %arg2[%c0_1, %c0_2] : memref<128x128xbf16, #tpu.memory_space<vmem>>, vector<128x128xbf16>
    %cst = arith.constant dense<0.000000e+00> : vector<1024x128xf32>
    %2 = tpu.matmul %0, %1, %cst {dimension_numbers = #tpu.dot_dimension_numbers<[1], [0], [0], [1], [0, 0, 1, 1], [], []>} : vector<1024x128xbf16>, vector<128x128xbf16>, vector<1024x128xf32> -> vector<1024x128xf32>
    %c0_3 = arith.constant 0 : index
    %c0_4 = arith.constant 0 : index
    %3 = vector.load %arg3[%c0_3, %c0_4] : memref<1x128xf32, #tpu.memory_space<vmem>>, vector<1x128xf32>
    %4 = vector.broadcast %3 : vector<1x128xf32> to vector<1024x128xf32>
    %5 = arith.addf %2, %4 : vector<1024x128xf32>
    %cst_5 = arith.constant 0.000000e+00 : f32
    %6 = vector.broadcast %cst_5 : f32 to vector<1024x128xf32>
    %7 = arith.maximumf %5, %6 : vector<1024x128xf32>
    %8 = arith.truncf %7 : vector<1024x128xf32> to vector<1024x128xbf16>
    %c0_6 = arith.constant 0 : index
    %c0_7 = arith.constant 0 : index
    %9 = vector.load %arg4[%c0_6, %c0_7] : memref<1024x128xbf16, #tpu.memory_space<vmem>>, vector<1024x128xbf16>
    tpu.vector_store %arg4[%c0_6, %c0_7], %8 {strides = array<i32>} : memref<1024x128xbf16, #tpu.memory_space<vmem>>, vector<1024x128xbf16>,
    return
  }
  func.func @transform_0(%arg0: i32) -> (i32, i32) {
    %c0_i32 = arith.constant 0 : i32
    %c0_i32_0 = arith.constant 0 : i32
    return %arg0, %c0_i32 : i32, i32
  }
  func.func @transform_1(%arg0: i32) -> (i32, i32) {
    %c0_i32 = arith.constant 0 : i32
    %c0_i32_0 = arith.constant 0 : i32
    %c0_i32_1 = arith.constant 0 : i32
    return %c0_i32, %c0_i32_0 : i32, i32
  }
  func.func @transform_2(%arg0: i32) -> (i32, i32) {
    %c0_i32 = arith.constant 0 : i32
    %c0_i32_0 = arith.constant 0 : i32
    %c0_i32_1 = arith.constant 0 : i32
    return %c0_i32, %c0_i32_0 : i32, i32
  }
  func.func @transform_3(%arg0: i32) -> (i32, i32) {
    %c0_i32 = arith.constant 0 : i32
    %c0_i32_0 = arith.constant 0 : i32
    return %arg0, %c0_i32 : i32, i32
  }
}

module attributes {stable_mosaic.version = 11 : i64} {
  func.func @_matmul_bias_act_kernel(%arg0: i32, %arg1: memref<256x1152xbf16, #tpu.memory_space<vmem>>, %arg2: memref<1152x128xbf16, #tpu.memory_space<vmem>>, %arg3: memref<1x128xf32, #tpu.memory_space<vmem>>, %arg4: memref<256x128xbf16, #tpu.memory_space<vmem>>) attributes {dimension_semantics = [#tpu.dimension_semantics<parallel>], iteration_bounds = array<i64: 2>, scalar_prefetch = 0 : i64, scratch_operands = 0 : i64, tpu.core_type = #tpu.core_type<tc>, window_params = [{transform_indices = @transform_0, window_bounds = array<i64: 256, 1152>}, {pipeline_mode = #tpu.pipeline_mode<synchronous>, transform_indices = @transform_1, window_bounds = array<i64: 1152, 128>}, {pipeline_mode = #tpu.pipeline_mode<synchronous>, transform_indices = @transform_2, window_bounds = array<i64: 1, 128>}, {transform_indices = @transform_3, window_bounds = array<i64: 256, 128>}]} {
    %c0 = arith.constant 0 : index
    %c0_0 = arith.constant 0 : index
    %0 = vector.load %arg1[%c0, %c0_0] : memref<256x1152xbf16, #tpu.memory_space<vmem>>, vector<256x1152xbf16>
    %c0_1 = arith.constant 0 : index
    %c0_2 = arith.constant 0 : index
    %1 = vector.load %arg2[%c0_1, %c0_2] : memref<1152x128xbf16, #tpu.memory_space<vmem>>, vector<1152x128xbf16>
    %cst = arith.constant dense<0.000000e+00> : vector<256x128xf32>
    %2 = tpu.matmul %0, %1, %cst {dimension_numbers = #tpu.dot_dimension_numbers<[1], [0], [0], [1], [0, 0, 1, 1], [], []>} : vector<256x1152xbf16>, vector<1152x128xbf16>, vector<256x128xf32> -> vector<256x128xf32>
    %c0_3 = arith.constant 0 : index
    %c0_4 = arith.constant 0 : index
    %3 = vector.load %arg3[%c0_3, %c0_4] : memref<1x128xf32, #tpu.memory_space<vmem>>, vector<1x128xf32>
    %4 = vector.broadcast %3 : vector<1x128xf32> to vector<256x128xf32>
    %5 = arith.addf %2, %4 : vector<256x128xf32>
    %cst_5 = arith.constant 0.000000e+00 : f32
    %6 = vector.broadcast %cst_5 : f32 to vector<256x128xf32>
    %7 = arith.maximumf %5, %6 : vector<256x128xf32>
    %8 = arith.truncf %7 : vector<256x128xf32> to vector<256x128xbf16>
    %c0_6 = arith.constant 0 : index
    %c0_7 = arith.constant 0 : index
    %9 = vector.load %arg4[%c0_6, %c0_7] : memref<256x128xbf16, #tpu.memory_space<vmem>>, vector<256x128xbf16>
    tpu.vector_store %arg4[%c0_6, %c0_7], %8 {strides = array<i32>} : memref<256x128xbf16, #tpu.memory_space<vmem>>, vector<256x128xbf16>,
    return
  }
  func.func @transform_0(%arg0: i32) -> (i32, i32) {
    %c0_i32 = arith.constant 0 : i32
    %c0_i32_0 = arith.constant 0 : i32
    return %arg0, %c0_i32 : i32, i32
  }
  func.func @transform_1(%arg0: i32) -> (i32, i32) {
    %c0_i32 = arith.constant 0 : i32
    %c0_i32_0 = arith.constant 0 : i32
    %c0_i32_1 = arith.constant 0 : i32
    return %c0_i32, %c0_i32_0 : i32, i32
  }
  func.func @transform_2(%arg0: i32) -> (i32, i32) {
    %c0_i32 = arith.constant 0 : i32
    %c0_i32_0 = arith.constant 0 : i32
    %c0_i32_1 = arith.constant 0 : i32
    return %c0_i32, %c0_i32_0 : i32, i32
  }
  func.func @transform_3(%arg0: i32) -> (i32, i32) {
    %c0_i32 = arith.constant 0 : i32
    %c0_i32_0 = arith.constant 0 : i32
    return %arg0, %c0_i32 : i32, i32
  }
}

module attributes {stable_mosaic.version = 11 : i64} {
  func.func @_matmul_bias_act_kernel(%arg0: i32, %arg1: memref<392x1152xbf16, #tpu.memory_space<vmem>>, %arg2: memref<1152x128xbf16, #tpu.memory_space<vmem>>, %arg3: memref<1x128xf32, #tpu.memory_space<vmem>>, %arg4: memref<392x128xbf16, #tpu.memory_space<vmem>>) attributes {dimension_semantics = [#tpu.dimension_semantics<parallel>], iteration_bounds = array<i64: 1>, scalar_prefetch = 0 : i64, scratch_operands = 0 : i64, tpu.core_type = #tpu.core_type<tc>, window_params = [{transform_indices = @transform_0, window_bounds = array<i64: 392, 1152>}, {pipeline_mode = #tpu.pipeline_mode<synchronous>, transform_indices = @transform_1, window_bounds = array<i64: 1152, 128>}, {pipeline_mode = #tpu.pipeline_mode<synchronous>, transform_indices = @transform_2, window_bounds = array<i64: 1, 128>}, {transform_indices = @transform_3, window_bounds = array<i64: 392, 128>}]} {
    %c0 = arith.constant 0 : index
    %c0_0 = arith.constant 0 : index
    %0 = vector.load %arg1[%c0, %c0_0] : memref<392x1152xbf16, #tpu.memory_space<vmem>>, vector<392x1152xbf16>
    %c0_1 = arith.constant 0 : index
    %c0_2 = arith.constant 0 : index
    %1 = vector.load %arg2[%c0_1, %c0_2] : memref<1152x128xbf16, #tpu.memory_space<vmem>>, vector<1152x128xbf16>
    %cst = arith.constant dense<0.000000e+00> : vector<392x128xf32>
    %2 = tpu.matmul %0, %1, %cst {dimension_numbers = #tpu.dot_dimension_numbers<[1], [0], [0], [1], [0, 0, 1, 1], [], []>} : vector<392x1152xbf16>, vector<1152x128xbf16>, vector<392x128xf32> -> vector<392x128xf32>
    %c0_3 = arith.constant 0 : index
    %c0_4 = arith.constant 0 : index
    %3 = vector.load %arg3[%c0_3, %c0_4] : memref<1x128xf32, #tpu.memory_space<vmem>>, vector<1x128xf32>
    %4 = vector.broadcast %3 : vector<1x128xf32> to vector<392x128xf32>
    %5 = arith.addf %2, %4 : vector<392x128xf32>
    %6 = arith.truncf %5 : vector<392x128xf32> to vector<392x128xbf16>
    %c0_5 = arith.constant 0 : index
    %c0_6 = arith.constant 0 : index
    %7 = vector.load %arg4[%c0_5, %c0_6] : memref<392x128xbf16, #tpu.memory_space<vmem>>, vector<392x128xbf16>
    tpu.vector_store %arg4[%c0_5, %c0_6], %6 {strides = array<i32>} : memref<392x128xbf16, #tpu.memory_space<vmem>>, vector<392x128xbf16>,
    return
  }
  func.func @transform_0(%arg0: i32) -> (i32, i32) {
    %c0_i32 = arith.constant 0 : i32
    %c0_i32_0 = arith.constant 0 : i32
    return %arg0, %c0_i32 : i32, i32
  }
  func.func @transform_1(%arg0: i32) -> (i32, i32) {
    %c0_i32 = arith.constant 0 : i32
    %c0_i32_0 = arith.constant 0 : i32
    %c0_i32_1 = arith.constant 0 : i32
    return %c0_i32, %c0_i32_0 : i32, i32
  }
  func.func @transform_2(%arg0: i32) -> (i32, i32) {
    %c0_i32 = arith.constant 0 : i32
    %c0_i32_0 = arith.constant 0 : i32
    %c0_i32_1 = arith.constant 0 : i32
    return %c0_i32, %c0_i32_0 : i32, i32
  }
  func.func @transform_3(%arg0: i32) -> (i32, i32) {
    %c0_i32 = arith.constant 0 : i32
    %c0_i32_0 = arith.constant 0 : i32
    return %arg0, %c0_i32 : i32, i32
  }
}

module attributes {stable_mosaic.version = 11 : i64} {
  func.func @_seg_pool_kernel(%arg0: i32, %arg1: memref<1x196x196xbf16, #tpu.memory_space<vmem>>, %arg2: memref<1x196x128xbf16, #tpu.memory_space<vmem>>, %arg3: memref<1x196x128xbf16, #tpu.memory_space<vmem>>) attributes {dimension_semantics = [#tpu.dimension_semantics<parallel>], iteration_bounds = array<i64: 2>, scalar_prefetch = 0 : i64, scratch_operands = 0 : i64, tpu.core_type = #tpu.core_type<tc>, window_params = [{transform_indices = @transform_0, window_bounds = array<i64: 1, 196, 196>}, {transform_indices = @transform_1, window_bounds = array<i64: 1, 196, 128>}, {transform_indices = @transform_2, window_bounds = array<i64: 1, 196, 128>}]} {
    %c0 = arith.constant 0 : index
    %c0_0 = arith.constant 0 : index
    %c0_1 = arith.constant 0 : index
    %0 = vector.load %arg1[%c0, %c0_0, %c0_1] : memref<1x196x196xbf16, #tpu.memory_space<vmem>>, vector<1x196x196xbf16>
    %1 = vector.shape_cast %0 : vector<1x196x196xbf16> to vector<196x196xbf16>
    %c0_2 = arith.constant 0 : index
    %c0_3 = arith.constant 0 : index
    %c0_4 = arith.constant 0 : index
    %2 = vector.load %arg2[%c0_2, %c0_3, %c0_4] : memref<1x196x128xbf16, #tpu.memory_space<vmem>>, vector<1x196x128xbf16>
    %3 = vector.shape_cast %2 : vector<1x196x128xbf16> to vector<196x128xbf16>
    %cst = arith.constant dense<0.000000e+00> : vector<196x128xf32>
    %4 = tpu.matmul %1, %3, %cst {dimension_numbers = #tpu.dot_dimension_numbers<[1], [0], [0], [1], [0, 0, 1, 1], [], []>} : vector<196x196xbf16>, vector<196x128xbf16>, vector<196x128xf32> -> vector<196x128xf32>
    %5 = arith.extf %1 : vector<196x196xbf16> to vector<196x196xf32>
    %cst_5 = arith.constant dense<0.000000e+00> : vector<196xf32>
    %6 = vector.multi_reduction <add>, %5, %cst_5 [1] : vector<196x196xf32> to vector<196xf32>
    %7 = vector.shape_cast %6 : vector<196xf32> to vector<196x1xf32>
    %cst_6 = arith.constant 5.000000e-01 : f32
    %8 = vector.broadcast %cst_6 : f32 to vector<196x1xf32>
    %9 = arith.cmpf ogt, %7, %8 : vector<196x1xf32>
    %cst_7 = arith.constant 1.000000e+00 : f32
    %10 = vector.broadcast %cst_7 : f32 to vector<196x1xf32>
    %11 = arith.divf %10, %7 : vector<196x1xf32>
    %cst_8 = arith.constant 0.000000e+00 : f32
    %12 = vector.broadcast %cst_8 : f32 to vector<196x1xf32>
    %13 = arith.select %9, %11, %12 : vector<196x1xi1>, vector<196x1xf32>
    %14 = vector.broadcast %13 : vector<196x1xf32> to vector<196x128xf32>
    %15 = arith.mulf %4, %14 : vector<196x128xf32>
    %16 = vector.shape_cast %15 : vector<196x128xf32> to vector<1x196x128xf32>
    %17 = arith.truncf %16 : vector<1x196x128xf32> to vector<1x196x128xbf16>
    %c0_9 = arith.constant 0 : index
    %c0_10 = arith.constant 0 : index
    %c0_11 = arith.constant 0 : index
    %18 = vector.load %arg3[%c0_9, %c0_10, %c0_11] : memref<1x196x128xbf16, #tpu.memory_space<vmem>>, vector<1x196x128xbf16>
    tpu.vector_store %arg3[%c0_9, %c0_10, %c0_11], %17 {strides = array<i32>} : memref<1x196x128xbf16, #tpu.memory_space<vmem>>, vector<1x196x128xbf16>,
    return
  }
  func.func @transform_0(%arg0: i32) -> (i32, i32, i32) {
    %c0_i32 = arith.constant 0 : i32
    %c0_i32_0 = arith.constant 0 : i32
    %c0_i32_1 = arith.constant 0 : i32
    return %arg0, %c0_i32, %c0_i32_0 : i32, i32, i32
  }
  func.func @transform_1(%arg0: i32) -> (i32, i32, i32) {
    %c0_i32 = arith.constant 0 : i32
    %c0_i32_0 = arith.constant 0 : i32
    %c0_i32_1 = arith.constant 0 : i32
    return %arg0, %c0_i32, %c0_i32_0 : i32, i32, i32
  }
  func.func @transform_2(%arg0: i32) -> (i32, i32, i32) {
    %c0_i32 = arith.constant 0 : i32
    %c0_i32_0 = arith.constant 0 : i32
    %c0_i32_1 = arith.constant 0 : i32
    return %arg0, %c0_i32, %c0_i32_0 : i32, i32, i32
  }
}

module attributes {stable_mosaic.version = 11 : i64} {
  func.func @_ffn_chain_kernel(%arg0: i32, %arg1: memref<392x128xbf16, #tpu.memory_space<vmem>>, %arg2: memref<1x128x128xbf16, #tpu.memory_space<vmem>>, %arg3: memref<1x1x128xf32, #tpu.memory_space<vmem>>, %arg4: memref<1x128x128xbf16, #tpu.memory_space<vmem>>, %arg5: memref<1x1x128xf32, #tpu.memory_space<vmem>>, %arg6: memref<1x392x128xbf16, #tpu.memory_space<vmem>>, %arg7: memref<392x128xbf16, #tpu.memory_space<vmem>>) attributes {dimension_semantics = [#tpu.dimension_semantics<arbitrary>], iteration_bounds = array<i64: 2>, scalar_prefetch = 0 : i64, scratch_operands = 1 : i64, tpu.core_type = #tpu.core_type<tc>, window_params = [{pipeline_mode = #tpu.pipeline_mode<synchronous>, transform_indices = @transform_0, window_bounds = array<i64: 392, 128>}, {transform_indices = @transform_1, window_bounds = array<i64: 1, 128, 128>}, {transform_indices = @transform_2, window_bounds = array<i64: 1, 1, 128>}, {transform_indices = @transform_3, window_bounds = array<i64: 1, 128, 128>}, {transform_indices = @transform_4, window_bounds = array<i64: 1, 1, 128>}, {transform_indices = @transform_5, window_bounds = array<i64: 1, 392, 128>}]} {
    %c0_i32 = arith.constant 0 : i32
    %0 = arith.cmpi eq, %arg0, %c0_i32 : i32
    %1 = arith.extui %0 : i1 to i32
    %c0_i32_0 = arith.constant 0 : i32
    %2 = arith.cmpi ne, %1, %c0_i32_0 : i32
    scf.if %2 {
      %c0_21 = arith.constant 0 : index
      %c0_22 = arith.constant 0 : index
      %27 = vector.load %arg1[%c0_21, %c0_22] : memref<392x128xbf16, #tpu.memory_space<vmem>>, vector<392x128xbf16>
      %c0_23 = arith.constant 0 : index
      %c0_24 = arith.constant 0 : index
      %28 = vector.load %arg7[%c0_23, %c0_24] : memref<392x128xbf16, #tpu.memory_space<vmem>>, vector<392x128xbf16>
      tpu.vector_store %arg7[%c0_23, %c0_24], %27 {strides = array<i32>} : memref<392x128xbf16, #tpu.memory_space<vmem>>, vector<392x128xbf16>,
    } else {
    }
    %c0 = arith.constant 0 : index
    %c0_1 = arith.constant 0 : index
    %3 = vector.load %arg7[%c0, %c0_1] : memref<392x128xbf16, #tpu.memory_space<vmem>>, vector<392x128xbf16>
    %c0_2 = arith.constant 0 : index
    %c0_3 = arith.constant 0 : index
    %c0_4 = arith.constant 0 : index
    %4 = vector.load %arg2[%c0_2, %c0_3, %c0_4] : memref<1x128x128xbf16, #tpu.memory_space<vmem>>, vector<1x128x128xbf16>
    %5 = vector.shape_cast %4 : vector<1x128x128xbf16> to vector<128x128xbf16>
    %cst = arith.constant dense<0.000000e+00> : vector<392x128xf32>
    %6 = tpu.matmul %3, %5, %cst {dimension_numbers = #tpu.dot_dimension_numbers<[1], [0], [0], [1], [0, 0, 1, 1], [], []>} : vector<392x128xbf16>, vector<128x128xbf16>, vector<392x128xf32> -> vector<392x128xf32>
    %c0_5 = arith.constant 0 : index
    %c0_6 = arith.constant 0 : index
    %c0_7 = arith.constant 0 : index
    %7 = vector.load %arg3[%c0_5, %c0_6, %c0_7] : memref<1x1x128xf32, #tpu.memory_space<vmem>>, vector<1x1x128xf32>
    %8 = vector.shape_cast %7 : vector<1x1x128xf32> to vector<1x128xf32>
    %9 = vector.broadcast %8 : vector<1x128xf32> to vector<392x128xf32>
    %10 = arith.addf %6, %9 : vector<392x128xf32>
    %cst_8 = arith.constant 0.000000e+00 : f32
    %11 = vector.broadcast %cst_8 : f32 to vector<392x128xf32>
    %12 = arith.maximumf %10, %11 : vector<392x128xf32>
    %13 = arith.truncf %12 : vector<392x128xf32> to vector<392x128xbf16>
    %c0_9 = arith.constant 0 : index
    %c0_10 = arith.constant 0 : index
    %c0_11 = arith.constant 0 : index
    %14 = vector.load %arg4[%c0_9, %c0_10, %c0_11] : memref<1x128x128xbf16, #tpu.memory_space<vmem>>, vector<1x128x128xbf16>
    %15 = vector.shape_cast %14 : vector<1x128x128xbf16> to vector<128x128xbf16>
    %cst_12 = arith.constant dense<0.000000e+00> : vector<392x128xf32>
    %16 = tpu.matmul %13, %15, %cst_12 {dimension_numbers = #tpu.dot_dimension_numbers<[1], [0], [0], [1], [0, 0, 1, 1], [], []>} : vector<392x128xbf16>, vector<128x128xbf16>, vector<392x128xf32> -> vector<392x128xf32>
    %c0_13 = arith.constant 0 : index
    %c0_14 = arith.constant 0 : index
    %c0_15 = arith.constant 0 : index
    %17 = vector.load %arg5[%c0_13, %c0_14, %c0_15] : memref<1x1x128xf32, #tpu.memory_space<vmem>>, vector<1x1x128xf32>
    %18 = vector.shape_cast %17 : vector<1x1x128xf32> to vector<1x128xf32>
    %19 = vector.broadcast %18 : vector<1x128xf32> to vector<392x128xf32>
    %20 = arith.addf %16, %19 : vector<392x128xf32>
    %21 = arith.extf %3 : vector<392x128xbf16> to vector<392x128xf32>
    %22 = arith.addf %20, %21 : vector<392x128xf32>
    %23 = arith.truncf %22 : vector<392x128xf32> to vector<392x128xbf16>
    %c0_16 = arith.constant 0 : index
    %c0_17 = arith.constant 0 : index
    %24 = vector.load %arg7[%c0_16, %c0_17] : memref<392x128xbf16, #tpu.memory_space<vmem>>, vector<392x128xbf16>
    tpu.vector_store %arg7[%c0_16, %c0_17], %23 {strides = array<i32>} : memref<392x128xbf16, #tpu.memory_space<vmem>>, vector<392x128xbf16>,
    %25 = vector.shape_cast %23 : vector<392x128xbf16> to vector<1x392x128xbf16>
    %c0_18 = arith.constant 0 : index
    %c0_19 = arith.constant 0 : index
    %c0_20 = arith.constant 0 : index
    %26 = vector.load %arg6[%c0_18, %c0_19, %c0_20] : memref<1x392x128xbf16, #tpu.memory_space<vmem>>, vector<1x392x128xbf16>
    tpu.vector_store %arg6[%c0_18, %c0_19, %c0_20], %25 {strides = array<i32>} : memref<1x392x128xbf16, #tpu.memory_space<vmem>>, vector<1x392x128xbf16>,
    return
  }
  func.func @transform_0(%arg0: i32) -> (i32, i32) {
    %c0_i32 = arith.constant 0 : i32
    %c0_i32_0 = arith.constant 0 : i32
    %c0_i32_1 = arith.constant 0 : i32
    return %c0_i32, %c0_i32_0 : i32, i32
  }
  func.func @transform_1(%arg0: i32) -> (i32, i32, i32) {
    %c0_i32 = arith.constant 0 : i32
    %c0_i32_0 = arith.constant 0 : i32
    %c0_i32_1 = arith.constant 0 : i32
    return %arg0, %c0_i32, %c0_i32_0 : i32, i32, i32
  }
  func.func @transform_2(%arg0: i32) -> (i32, i32, i32) {
    %c0_i32 = arith.constant 0 : i32
    %c0_i32_0 = arith.constant 0 : i32
    %c0_i32_1 = arith.constant 0 : i32
    return %arg0, %c0_i32, %c0_i32_0 : i32, i32, i32
  }
  func.func @transform_3(%arg0: i32) -> (i32, i32, i32) {
    %c0_i32 = arith.constant 0 : i32
    %c0_i32_0 = arith.constant 0 : i32
    %c0_i32_1 = arith.constant 0 : i32
    return %arg0, %c0_i32, %c0_i32_0 : i32, i32, i32
  }
  func.func @transform_4(%arg0: i32) -> (i32, i32, i32) {
    %c0_i32 = arith.constant 0 : i32
    %c0_i32_0 = arith.constant 0 : i32
    %c0_i32_1 = arith.constant 0 : i32
    return %arg0, %c0_i32, %c0_i32_0 : i32, i32, i32
  }
  func.func @transform_5(%arg0: i32) -> (i32, i32, i32) {
    %c0_i32 = arith.constant 0 : i32
    %c0_i32_0 = arith.constant 0 : i32
    %c0_i32_1 = arith.constant 0 : i32
    return %arg0, %c0_i32, %c0_i32_0 : i32, i32, i32
  }
}

</mosaic_0001>

<llo_original>
// kernel: deepgcn_slic_v2_forward.7
$region0: #{deepgcn_slic_v2_forward.7}
  #allocation0 [shape = 'u32[]', space=smem, size = 0x4, offset = 0x4, fixed_abs, tag = 'smem constant byte address 0x4 - core index']
  #allocation1 [shape = 'u32[144,128]{1,0:T(1,128)}', space=vmem, size = 0x12000, scoped, tag = 'internal scratch']
  %s0 = inlined_call_operand.vmem [shape: bf16[2048,128], index: 0, kind: input, shape index: {}]
  %s1 = inlined_call_operand.vmem [shape: bf16[128,128], index: 1, kind: input, shape index: {}]
  %s2 = inlined_call_operand.vmem [shape: f32[1,128], index: 2, kind: input, shape index: {}]
  %s3 = inlined_call_operand.vmem [shape: bf16[2048,128], index: 3, kind: output, shape index: {}]
  %s4 = sld [smem:[#allocation0]]
  $region45: #{deepgcn_slic_v2_forward.7} parent=0
    _
  %s6 = ssub.s32 1, %s4
  %s7 = scalar_select 0, %s6, %s4
  loop: start=0, step=1, limit=4
  $region2: #{deepgcn_slic_v2_forward.7} parent=0 // loop_pre_header
    _
  $region3: #{deepgcn_slic_v2_forward.7} parent=0 // loop_header
    %s9 = sphi 0, %s13
    %p10 = scmp.ge.s32.totalorder %s9, 4
    %s19 = sphi 0, %s21
    %s22 = sphi 0, %s19
    %s23 = sphi 0, %s22
    %s39 = sphi 0, %s23
    %s43 = sphi 0, %s43
    %s45 = sphi 0, %s43
    %s46 = sphi 0, %s45
    %s60 = sphi 0, %s46
    %s64 = sphi 0, %s64
    %s66 = sphi 0, %s64
    %s67 = sphi 0, %s66
    %s81 = sphi 0, %s67
    %s87 = sphi 0, %s89
    %s90 = sphi 0, %s87
    %s91 = sphi 0, %s90
    %s107 = sphi 0, %s91
  $region4: #{deepgcn_slic_v2_forward.7} parent=0 // loop_header_branch
    %12 = sbr.rel (%p10) target = $region8
  $region5: #{deepgcn_slic_v2_forward.7} parent=0 // loop_body
    %s14 = ssub.s32 %s9, 1
    %s15 = ssub.s32 %s9, 2
    %s16 = sadd.s32 %s9, 1
    %s17 = ssub.s32 %s9, %s16
    %p18 = scmp.eq.s32.totalorder %s17, 0
    %s20 = sadd.s32 %s19, 1
    %s21 = scalar_select %p18, %s19, %s20
    %p24 = pneg %p18
    %p25 = scmp.eq.s32.totalorder %s9, 1
    %p26 = por %p24, %p25
    %p27 = scmp.ne.s32.totalorder %s19, %s22
    %p28 = scmp.eq.s32.totalorder %s9, 0
    %p29 = por %p27, %p28
    %p30 = scmp.ne.s32.totalorder %s19, %s22
    %p31 = scmp.eq.s32.totalorder %s14, 1
    %p32 = por %p30, %p31
    %p33 = scmp.ne.s32.totalorder %s22, %s23
    %p34 = scmp.eq.s32.totalorder %s14, 0
    %p35 = por %p33, %p34
    %p36 = scmp.ne.s32.totalorder %s22, %s23
    %p37 = scmp.eq.s32.totalorder %s15, 1
    %p38 = por %p36, %p37
    %p40 = scmp.ne.s32.totalorder %s23, %s39
    %p41 = scmp.eq.s32.totalorder %s15, 0
    %p42 = por %p40, %p41
    %s44 = sadd.s32 %s43, 1
    %p47 = scmp.eq.s32.totalorder %s9, 1
    %p48 = scmp.ne.s32.totalorder %s43, %s45
    %p49 = scmp.eq.s32.totalorder %s9, 0
    %p50 = por %p48, %p49
    %p51 = scmp.ne.s32.totalorder %s43, %s45
    %p52 = scmp.eq.s32.totalorder %s14, 1
    %p53 = por %p51, %p52
    %p54 = scmp.ne.s32.totalorder %s45, %s46
    %p55 = scmp.eq.s32.totalorder %s14, 0
    %p56 = por %p54, %p55
    %p57 = scmp.ne.s32.totalorder %s45, %s46
    %p58 = scmp.eq.s32.totalorder %s15, 1
    %p59 = por %p57, %p58
    %p61 = scmp.ne.s32.totalorder %s46, %s60
    %p62 = scmp.eq.s32.totalorder %s15, 0
    %p63 = por %p61, %p62
    %s65 = sadd.s32 %s64, 1
    %p68 = scmp.eq.s32.totalorder %s9, 1
    %p69 = scmp.ne.s32.totalorder %s64, %s66
    %p70 = scmp.eq.s32.totalorder %s9, 0
    %p71 = por %p69, %p70
    %p72 = scmp.ne.s32.totalorder %s64, %s66
    %p73 = scmp.eq.s32.totalorder %s14, 1
    %p74 = por %p72, %p73
    %p75 = scmp.ne.s32.totalorder %s66, %s67
    %p76 = scmp.eq.s32.totalorder %s14, 0
    %p77 = por %p75, %p76
    %p78 = scmp.ne.s32.totalorder %s66, %s67
    %p79 = scmp.eq.s32.totalorder %s15, 1
    %p80 = por %p78, %p79
    %p82 = scmp.ne.s32.totalorder %s67, %s81
    %p83 = scmp.eq.s32.totalorder %s15, 0
    %p84 = por %p82, %p83
    %s85 = ssub.s32 %s9, %s16
    %p86 = scmp.eq.s32.totalorder %s85, 0
    %s88 = sadd.s32 %s87, 1
    %s89 = scalar_select %p86, %s87, %s88
    %p92 = pneg %p86
    %p93 = scmp.eq.s32.totalorder %s9, 1
    %p94 = por %p92, %p93
    %p95 = scmp.ne.s32.totalorder %s87, %s90
    %p96 = scmp.eq.s32.totalorder %s9, 0
    %p97 = por %p95, %p96
    %p98 = scmp.ne.s32.totalorder %s87, %s90
    %p99 = scmp.eq.s32.totalorder %s14, 1
    %p100 = por %p98, %p99
    %p101 = scmp.ne.s32.totalorder %s90, %s91
    %p102 = scmp.eq.s32.totalorder %s14, 0
    %p103 = por %p101, %p102
    %p104 = scmp.ne.s32.totalorder %s90, %s91
    %p105 = scmp.eq.s32.totalorder %s15, 1
    %p106 = por %p104, %p105
    %p108 = scmp.ne.s32.totalorder %s91, %s107
    %p109 = scmp.eq.s32.totalorder %s15, 0
    %p110 = por %p108, %p109
    %p111 = scmp.le.s32.totalorder 1, %s9
    %p112 = scmp.lt.s32.totalorder %s9, 3
    %p113 = pnand %p111, %p112
    %p114 = pneg %p113
    // Predicated region
    $region9: #{deepgcn_slic_v2_forward.7} parent=5 // pred_check
      _
    $region10: #{deepgcn_slic_v2_forward.7} parent=5 // pred_check_branch
      %116 = sbr.rel (%p113) target = $region12
    $region11: #{deepgcn_slic_v2_forward.7} parent=5 // pred_region
      %s117 = ssub.s32 %s9, 1
      // Predicated region
      $region13: #{deepgcn_slic_v2_forward.7} parent=11 // pred_check
        %p118 = pneg %p56
      $region14: #{deepgcn_slic_v2_forward.7} parent=11 // pred_check_branch
        %120 = sbr.rel (%p118) target = $region16
      $region15: #{deepgcn_slic_v2_forward.7} parent=11 // pred_region
        _
      $region16: #{deepgcn_slic_v2_forward.7} parent=11 // pred_fallthru
        _
      // Predicated region
      $region17: #{deepgcn_slic_v2_forward.7} parent=11 // pred_check
        %p121 = pneg %p77
      $region18: #{deepgcn_slic_v2_forward.7} parent=11 // pred_check_branch
        %123 = sbr.rel (%p121) target = $region20
      $region19: #{deepgcn_slic_v2_forward.7} parent=11 // pred_region
        _
      $region20: #{deepgcn_slic_v2_forward.7} parent=11 // pred_fallthru
        _
    $region12: #{deepgcn_slic_v2_forward.7} parent=5 // pred_fallthru
      _
    %p124 = scmp.lt.s32.totalorder %s9, 2
    // Predicated region
    $region21: #{deepgcn_slic_v2_forward.7} parent=5 // pred_check
      %p125 = pneg %p124
    $region22: #{deepgcn_slic_v2_forward.7} parent=5 // pred_check_branch
      %127 = sbr.rel (%p125) target = $region24
    $region23: #{deepgcn_slic_v2_forward.7} parent=5 // pred_region
      // Predicated region
      $region25: #{deepgcn_slic_v2_forward.7} parent=23 // pred_check
        %p128 = pneg %p29
      $region26: #{deepgcn_slic_v2_forward.7} parent=23 // pred_check_branch
        %130 = sbr.rel (%p128) target = $region28
      $region27: #{deepgcn_slic_v2_forward.7} parent=23 // pred_region
        %s131 = smul.u32 128, %s9
        %p132 = scmp.lt.s32.totalorder %s131, 255
        %s133 = scalar_select %p132, %s131, 255
        %s134 = smul.addr %s133, 4
        %s135 = scalar_lea.vmem %s0, %s134
        %s136 = smul.u32 128, %s9
      $region28: #{deepgcn_slic_v2_forward.7} parent=23 // pred_fallthru
        _
    $region24: #{deepgcn_slic_v2_forward.7} parent=5 // pred_fallthru
      _
    %p137 = scmp.le.s32.totalorder 1, %s9
    %p138 = scmp.lt.s32.totalorder %s9, 3
    %p139 = pnand %p137, %p138
    %p140 = pneg %p139
    // Predicated region
    $region29: #{deepgcn_slic_v2_forward.7} parent=5 // pred_check
      _
    $region30: #{deepgcn_slic_v2_forward.7} parent=5 // pred_check_branch
      %142 = sbr.rel (%p139) target = $region32
    $region31: #{deepgcn_slic_v2_forward.7} parent=5 // pred_region
      %s143 = ssub.s32 %s9, 1
      %s144 = smul.u32 128, %s14
      %p145 = scmp.lt.s32.totalorder %s144, 255
      %s146 = scalar_select %p145, %s144, 255
      %s147 = smul.addr %s146, 4
      %s148 = scalar_lea.vmem %s0, %s147
      %p149 = pneg %p35
      %p150 = pneg %p32
      %p151 = pneg %p56
      %p152 = pneg %p53
      %p153 = pneg %p77
      %p154 = pneg %p74
      %p155 = pneg %p103
      %p156 = pneg %p100
      %s157 = smul.u32 128, %s14
      %p158 = scmp.lt.s32.totalorder %s157, 255
      %s159 = scalar_select %p158, %s157, 255
      %s160 = smul.addr %s159, 4
      %s161 = scalar_lea.vmem %s3, %s160
      %s162 = smul.u32 128, %s14
      %p163 = scmp.lt.s32.totalorder %s162, 255
      %s164 = scalar_select %p163, %s162, 255
      %s165 = smul.addr %s164, 4
      %s166 = scalar_lea.vmem %s0, %s165
      %s167 = smul.u32 128, %s14
      %s168 = smul.u32 128, %s14
      %p169 = scmp.lt.s32.totalorder %s168, 255
      %s170 = scalar_select %p169, %s168, 255
      %s171 = smul.addr %s170, 4
      %s172 = scalar_lea.vmem %s3, %s171
      %s173 = smul.u32 128, %s14
      %v175 = vld [vmem:[%s166] sm:$0xf]
      %v176 = vld [vmem:[%s166 + $0x4] sm:$0xf]
      %v177 = vld [vmem:[%s166 + $0x8] sm:$0xf]
      %v178 = vld [vmem:[%s166 + $0xc] sm:$0xf]
      %v179 = vld [vmem:[%s166 + $0x10] sm:$0xf]
      %v180 = vld [vmem:[%s166 + $0x14] sm:$0xf]
      %v181 = vld [vmem:[%s166 + $0x18] sm:$0xf]
      %v182 = vld [vmem:[%s166 + $0x1c] sm:$0xf]
      %v183 = vld [vmem:[%s166 + $0x20] sm:$0xf]
      %v184 = vld [vmem:[%s166 + $0x24] sm:$0xf]
      %v185 = vld [vmem:[%s166 + $0x28] sm:$0xf]
      %v186 = vld [vmem:[%s166 + $0x2c] sm:$0xf]
      %v187 = vld [vmem:[%s166 + $0x30] sm:$0xf]
      %v188 = vld [vmem:[%s166 + $0x34] sm:$0xf]
      %v189 = vld [vmem:[%s166 + $0x38] sm:$0xf]
      %v190 = vld [vmem:[%s166 + $0x3c] sm:$0xf]
      %v191 = vld [vmem:[%s166 + $0x40] sm:$0xf]
      %v192 = vld [vmem:[%s166 + $0x44] sm:$0xf]
      %v193 = vld [vmem:[%s166 + $0x48] sm:$0xf]
      %v194 = vld [vmem:[%s166 + $0x4c] sm:$0xf]
      %v195 = vld [vmem:[%s166 + $0x50] sm:$0xf]
      %v196 = vld [vmem:[%s166 + $0x54] sm:$0xf]
      %v197 = vld [vmem:[%s166 + $0x58] sm:$0xf]
      %v198 = vld [vmem:[%s166 + $0x5c] sm:$0xf]
      %v199 = vld [vmem:[%s166 + $0x60] sm:$0xf]
      %v200 = vld [vmem:[%s166 + $0x64] sm:$0xf]
      %v201 = vld [vmem:[%s166 + $0x68] sm:$0xf]
      %v202 = vld [vmem:[%s166 + $0x6c] sm:$0xf]
      %v203 = vld [vmem:[%s166 + $0x70] sm:$0xf]
      %v204 = vld [vmem:[%s166 + $0x74] sm:$0xf]
      %v205 = vld [vmem:[%s166 + $0x78] sm:$0xf]
      %v206 = vld [vmem:[%s166 + $0x7c] sm:$0xf]
      %v207 = vld [vmem:[%s166 + $0x80] sm:$0xf]
      %v208 = vld [vmem:[%s166 + $0x84] sm:$0xf]
      %v209 = vld [vmem:[%s166 + $0x88] sm:$0xf]
      %v210 = vld [vmem:[%s166 + $0x8c] sm:$0xf]
      %v211 = vld [vmem:[%s166 + $0x90] sm:$0xf]
      %v212 = vld [vmem:[%s166 + $0x94] sm:$0xf]
      %v213 = vld [vmem:[%s166 + $0x98] sm:$0xf]
      %v214 = vld [vmem:[%s166 + $0x9c] sm:$0xf]
      %v215 = vld [vmem:[%s166 + $0xa0] sm:$0xf]
      %v216 = vld [vmem:[%s166 + $0xa4] sm:$0xf]
      %v217 = vld [vmem:[%s166 + $0xa8] sm:$0xf]
      %v218 = vld [vmem:[%s166 + $0xac] sm:$0xf]
      %v219 = vld [vmem:[%s166 + $0xb0] sm:$0xf]
      %v220 = vld [vmem:[%s166 + $0xb4] sm:$0xf]
      %v221 = vld [vmem:[%s166 + $0xb8] sm:$0xf]
      %v222 = vld [vmem:[%s166 + $0xbc] sm:$0xf]
      %v223 = vld [vmem:[%s166 + $0xc0] sm:$0xf]
      %v224 = vld [vmem:[%s166 + $0xc4] sm:$0xf]
      %v225 = vld [vmem:[%s166 + $0xc8] sm:$0xf]
      %v226 = vld [vmem:[%s166 + $0xcc] sm:$0xf]
      %v227 = vld [vmem:[%s166 + $0xd0] sm:$0xf]
      %v228 = vld [vmem:[%s166 + $0xd4] sm:$0xf]
      %v229 = vld [vmem:[%s166 + $0xd8] sm:$0xf]
      %v230 = vld [vmem:[%s166 + $0xdc] sm:$0xf]
      %v231 = vld [vmem:[%s166 + $0xe0] sm:$0xf]
      %v232 = vld [vmem:[%s166 + $0xe4] sm:$0xf]
      %v233 = vld [vmem:[%s166 + $0xe8] sm:$0xf]
      %v234 = vld [vmem:[%s166 + $0xec] sm:$0xf]
      %v235 = vld [vmem:[%s166 + $0xf0] sm:$0xf]
      %v236 = vld [vmem:[%s166 + $0xf4] sm:$0xf]
      %v237 = vld [vmem:[%s166 + $0xf8] sm:$0xf]
      %v238 = vld [vmem:[%s166 + $0xfc] sm:$0xf]
      %v239 = vld [vmem:[%s166 + $0x100] sm:$0xf]
      %v240 = vld [vmem:[%s166 + $0x104] sm:$0xf]
      %v241 = vld [vmem:[%s166 + $0x108] sm:$0xf]
      %v242 = vld [vmem:[%s166 + $0x10c] sm:$0xf]
      %v243 = vld [vmem:[%s166 + $0x110] sm:$0xf]
      %v244 = vld [vmem:[%s166 + $0x114] sm:$0xf]
      %v245 = vld [vmem:[%s166 + $0x118] sm:$0xf]
      %v246 = vld [vmem:[%s166 + $0x11c] sm:$0xf]
      %v247 = vld [vmem:[%s166 + $0x120] sm:$0xf]
      %v248 = vld [vmem:[%s166 + $0x124] sm:$0xf]
      %v249 = vld [vmem:[%s166 + $0x128] sm:$0xf]
      %v250 = vld [vmem:[%s166 + $0x12c] sm:$0xf]
      %v251 = vld [vmem:[%s166 + $0x130] sm:$0xf]
      %v252 = vld [vmem:[%s166 + $0x134] sm:$0xf]
      %v253 = vld [vmem:[%s166 + $0x138] sm:$0xf]
      %v254 = vld [vmem:[%s166 + $0x13c] sm:$0xf]
      %v255 = vld [vmem:[%s166 + $0x140] sm:$0xf]
      %v256 = vld [vmem:[%s166 + $0x144] sm:$0xf]
      %v257 = vld [vmem:[%s166 + $0x148] sm:$0xf]
      %v258 = vld [vmem:[%s166 + $0x14c] sm:$0xf]
      %v259 = vld [vmem:[%s166 + $0x150] sm:$0xf]
      %v260 = vld [vmem:[%s166 + $0x154] sm:$0xf]
      %v261 = vld [vmem:[%s166 + $0x158] sm:$0xf]
      %v262 = vld [vmem:[%s166 + $0x15c] sm:$0xf]
      %v263 = vld [vmem:[%s166 + $0x160] sm:$0xf]
      %v264 = vld [vmem:[%s166 + $0x164] sm:$0xf]
      %v265 = vld [vmem:[%s166 + $0x168] sm:$0xf]
      %v266 = vld [vmem:[%s166 + $0x16c] sm:$0xf]
      %v267 = vld [vmem:[%s166 + $0x170] sm:$0xf]
      %v268 = vld [vmem:[%s166 + $0x174] sm:$0xf]
      %v269 = vld [vmem:[%s166 + $0x178] sm:$0xf]
      %v270 = vld [vmem:[%s166 + $0x17c] sm:$0xf]
      %v271 = vld [vmem:[%s166 + $0x180] sm:$0xf]
      %v272 = vld [vmem:[%s166 + $0x184] sm:$0xf]
      %v273 = vld [vmem:[%s166 + $0x188] sm:$0xf]
      %v274 = vld [vmem:[%s166 + $0x18c] sm:$0xf]
      %v275 = vld [vmem:[%s166 + $0x190] sm:$0xf]
      %v276 = vld [vmem:[%s166 + $0x194] sm:$0xf]
      %v277 = vld [vmem:[%s166 + $0x198] sm:$0xf]
      %v278 = vld [vmem:[%s166 + $0x19c] sm:$0xf]
      %v279 = vld [vmem:[%s166 + $0x1a0] sm:$0xf]
      %v280 = vld [vmem:[%s166 + $0x1a4] sm:$0xf]
      %v281 = vld [vmem:[%s166 + $0x1a8] sm:$0xf]
      %v282 = vld [vmem:[%s166 + $0x1ac] sm:$0xf]
      %v283 = vld [vmem:[%s166 + $0x1b0] sm:$0xf]
      %v284 = vld [vmem:[%s166 + $0x1b4] sm:$0xf]
      %v285 = vld [vmem:[%s166 + $0x1b8] sm:$0xf]
      %v286 = vld [vmem:[%s166 + $0x1bc] sm:$0xf]
      %v287 = vld [vmem:[%s166 + $0x1c0] sm:$0xf]
      %v288 = vld [vmem:[%s166 + $0x1c4] sm:$0xf]
      %v289 = vld [vmem:[%s166 + $0x1c8] sm:$0xf]
      %v290 = vld [vmem:[%s166 + $0x1cc] sm:$0xf]
      %v291 = vld [vmem:[%s166 + $0x1d0] sm:$0xf]
      %v292 = vld [vmem:[%s166 + $0x1d4] sm:$0xf]
      %v293 = vld [vmem:[%s166 + $0x1d8] sm:$0xf]
      %v294 = vld [vmem:[%s166 + $0x1dc] sm:$0xf]
      %v295 = vld [vmem:[%s166 + $0x1e0] sm:$0xf]
      %v296 = vld [vmem:[%s166 + $0x1e4] sm:$0xf]
      %v297 = vld [vmem:[%s166 + $0x1e8] sm:$0xf]
      %v298 = vld [vmem:[%s166 + $0x1ec] sm:$0xf]
      %v299 = vld [vmem:[%s166 + $0x1f0] sm:$0xf]
      %v300 = vld [vmem:[%s166 + $0x1f4] sm:$0xf]
      %v301 = vld [vmem:[%s166 + $0x1f8] sm:$0xf]
      %v302 = vld [vmem:[%s166 + $0x1fc] sm:$0xf]
      %v303 = vld [vmem:[%s1] sm:$0xf]
      %v304 = vld [vmem:[%s1 + $0x4] sm:$0xf]
      %v305 = vld [vmem:[%s1 + $0x8] sm:$0xf]
      %v306 = vld [vmem:[%s1 + $0xc] sm:$0xf]
      %v307 = vld [vmem:[%s1 + $0x10] sm:$0xf]
      %v308 = vld [vmem:[%s1 + $0x14] sm:$0xf]
      %v309 = vld [vmem:[%s1 + $0x18] sm:$0xf]
      %v310 = vld [vmem:[%s1 + $0x1c] sm:$0xf]
      %v311 = vld [vmem:[%s1 + $0x20] sm:$0xf]
      %v312 = vld [vmem:[%s1 + $0x24] sm:$0xf]
      %v313 = vld [vmem:[%s1 + $0x28] sm:$0xf]
      %v314 = vld [vmem:[%s1 + $0x2c] sm:$0xf]
      %v315 = vld [vmem:[%s1 + $0x30] sm:$0xf]
      %v316 = vld [vmem:[%s1 + $0x34] sm:$0xf]
      %v317 = vld [vmem:[%s1 + $0x38] sm:$0xf]
      %v318 = vld [vmem:[%s1 + $0x3c] sm:$0xf]
      %v319 = vld [vmem:[%s2] sm:$0x1]
      %v321 = vlaneseq
      %v322 = vshrl.u32 %v321, 7
      %v323 = vsub.s32 0, %v322
      %v324 = vrot.slane %v319, %v323
      %v454 = vunpack.c.l.b16 %v175
      %v455 = vunpack.c.l.b16 %v176
      %v456 = vunpack.c.l.b16 %v177
      %v457 = vunpack.c.l.b16 %v178
      %v458 = vunpack.c.l.b16 %v179
      %v459 = vunpack.c.l.b16 %v180
      %v460 = vunpack.c.l.b16 %v181
      %v461 = vunpack.c.l.b16 %v182
      %v462 = vunpack.c.l.b16 %v183
      %v463 = vunpack.c.l.b16 %v184
      %v464 = vunpack.c.l.b16 %v185
      %v465 = vunpack.c.l.b16 %v186
      %v466 = vunpack.c.l.b16 %v187
      %v467 = vunpack.c.l.b16 %v188
      %v468 = vunpack.c.l.b16 %v189
      %v469 = vunpack.c.l.b16 %v190
      %v470 = vunpack.c.l.b16 %v191
      %v471 = vunpack.c.l.b16 %v192
      %v472 = vunpack.c.l.b16 %v193
      %v473 = vunpack.c.l.b16 %v194
      %v474 = vunpack.c.l.b16 %v195
      %v475 = vunpack.c.l.b16 %v196
      %v476 = vunpack.c.l.b16 %v197
      %v477 = vunpack.c.l.b16 %v198
      %v478 = vunpack.c.l.b16 %v199
      %v479 = vunpack.c.l.b16 %v200
      %v480 = vunpack.c.l.b16 %v201
      %v481 = vunpack.c.l.b16 %v202
      %v482 = vunpack.c.l.b16 %v203
      %v483 = vunpack.c.l.b16 %v204
      %v484 = vunpack.c.l.b16 %v205
      %v485 = vunpack.c.l.b16 %v206
      %v486 = vunpack.c.l.b16 %v207
      %v487 = vunpack.c.l.b16 %v208
      %v488 = vunpack.c.l.b16 %v209
      %v489 = vunpack.c.l.b16 %v210
      %v490 = vunpack.c.l.b16 %v211
      %v491 = vunpack.c.l.b16 %v212
      %v492 = vunpack.c.l.b16 %v213
      %v493 = vunpack.c.l.b16 %v214
      %v494 = vunpack.c.l.b16 %v215
      %v495 = vunpack.c.l.b16 %v216
      %v496 = vunpack.c.l.b16 %v217
      %v497 = vunpack.c.l.b16 %v218
      %v498 = vunpack.c.l.b16 %v219
      %v499 = vunpack.c.l.b16 %v220
      %v500 = vunpack.c.l.b16 %v221
      %v501 = vunpack.c.l.b16 %v222
      %v502 = vunpack.c.l.b16 %v223
      %v503 = vunpack.c.l.b16 %v224
      %v504 = vunpack.c.l.b16 %v225
      %v505 = vunpack.c.l.b16 %v226
      %v506 = vunpack.c.l.b16 %v227
      %v507 = vunpack.c.l.b16 %v228
      %v508 = vunpack.c.l.b16 %v229
      %v509 = vunpack.c.l.b16 %v230
      %v510 = vunpack.c.l.b16 %v231
      %v511 = vunpack.c.l.b16 %v232
      %v512 = vunpack.c.l.b16 %v233
      %v513 = vunpack.c.l.b16 %v234
      %v514 = vunpack.c.l.b16 %v235
      %v515 = vunpack.c.l.b16 %v236
      %v516 = vunpack.c.l.b16 %v237
      %v517 = vunpack.c.l.b16 %v238
      %v518 = vunpack.c.l.b16 %v239
      %v519 = vunpack.c.l.b16 %v240
      %v520 = vunpack.c.l.b16 %v241
      %v521 = vunpack.c.l.b16 %v242
      %v522 = vunpack.c.l.b16 %v243
      %v523 = vunpack.c.l.b16 %v244
      %v524 = vunpack.c.l.b16 %v245
      %v525 = vunpack.c.l.b16 %v246
      %v526 = vunpack.c.l.b16 %v247
      %v527 = vunpack.c.l.b16 %v248
      %v528 = vunpack.c.l.b16 %v249
      %v529 = vunpack.c.l.b16 %v250
      %v530 = vunpack.c.l.b16 %v251
      %v531 = vunpack.c.l.b16 %v252
      %v532 = vunpack.c.l.b16 %v253
      %v533 = vunpack.c.l.b16 %v254
      %v534 = vunpack.c.l.b16 %v255
      %v535 = vunpack.c.l.b16 %v256
      %v536 = vunpack.c.l.b16 %v257
      %v537 = vunpack.c.l.b16 %v258
      %v538 = vunpack.c.l.b16 %v259
      %v539 = vunpack.c.l.b16 %v260
      %v540 = vunpack.c.l.b16 %v261
      %v541 = vunpack.c.l.b16 %v262
      %v542 = vunpack.c.l.b16 %v263
      %v543 = vunpack.c.l.b16 %v264
      %v544 = vunpack.c.l.b16 %v265
      %v545 = vunpack.c.l.b16 %v266
      %v546 = vunpack.c.l.b16 %v267
      %v547 = vunpack.c.l.b16 %v268
      %v548 = vunpack.c.l.b16 %v269
      %v549 = vunpack.c.l.b16 %v270
      %v550 = vunpack.c.l.b16 %v271
      %v551 = vunpack.c.l.b16 %v272
      %v552 = vunpack.c.l.b16 %v273
      %v553 = vunpack.c.l.b16 %v274
      %v554 = vunpack.c.l.b16 %v275
      %v555 = vunpack.c.l.b16 %v276
      %v556 = vunpack.c.l.b16 %v277
      %v557 = vunpack.c.l.b16 %v278
      %v558 = vunpack.c.l.b16 %v279
      %v559 = vunpack.c.l.b16 %v280
      %v560 = vunpack.c.l.b16 %v281
      %v561 = vunpack.c.l.b16 %v282
      %v562 = vunpack.c.l.b16 %v283
      %v563 = vunpack.c.l.b16 %v284
      %v564 = vunpack.c.l.b16 %v285
      %v565 = vunpack.c.l.b16 %v286
      %v566 = vunpack.c.l.b16 %v287
      %v567 = vunpack.c.l.b16 %v288
      %v568 = vunpack.c.l.b16 %v289
      %v569 = vunpack.c.l.b16 %v290
      %v570 = vunpack.c.l.b16 %v291
      %v571 = vunpack.c.l.b16 %v292
      %v572 = vunpack.c.l.b16 %v293
      %v573 = vunpack.c.l.b16 %v294
      %v574 = vunpack.c.l.b16 %v295
      %v575 = vunpack.c.l.b16 %v296
      %v576 = vunpack.c.l.b16 %v297
      %v577 = vunpack.c.l.b16 %v298
      %v578 = vunpack.c.l.b16 %v299
      %v579 = vunpack.c.l.b16 %v300
      %v580 = vunpack.c.l.b16 %v301
      %v581 = vunpack.c.l.b16 %v302
      %v582 = vpack.c.b16 %v455, %v454
      %v583 = vpack.c.b16 %v457, %v456
      %v584 = vpack.c.b16 %v459, %v458
      %v585 = vpack.c.b16 %v461, %v460
      %v586 = vpack.c.b16 %v463, %v462
      %v587 = vpack.c.b16 %v465, %v464
      %v588 = vpack.c.b16 %v467, %v466
      %v589 = vpack.c.b16 %v469, %v468
      %v590 = vpack.c.b16 %v471, %v470
      %v591 = vpack.c.b16 %v473, %v472
      %v592 = vpack.c.b16 %v475, %v474
      %v593 = vpack.c.b16 %v477, %v476
      %v594 = vpack.c.b16 %v479, %v478
      %v595 = vpack.c.b16 %v481, %v480
      %v596 = vpack.c.b16 %v483, %v482
      %v597 = vpack.c.b16 %v485, %v484
      %v598 = vpack.c.b16 %v487, %v486
      %v599 = vpack.c.b16 %v489, %v488
      %v600 = vpack.c.b16 %v491, %v490
      %v601 = vpack.c.b16 %v493, %v492
      %v602 = vpack.c.b16 %v495, %v494
      %v603 = vpack.c.b16 %v497, %v496
      %v604 = vpack.c.b16 %v499, %v498
      %v605 = vpack.c.b16 %v501, %v500
      %v606 = vpack.c.b16 %v503, %v502
      %v607 = vpack.c.b16 %v505, %v504
      %v608 = vpack.c.b16 %v507, %v506
      %v609 = vpack.c.b16 %v509, %v508
      %v610 = vpack.c.b16 %v511, %v510
      %v611 = vpack.c.b16 %v513, %v512
      %v612 = vpack.c.b16 %v515, %v514
      %v613 = vpack.c.b16 %v517, %v516
      %v614 = vpack.c.b16 %v519, %v518
      %v615 = vpack.c.b16 %v521, %v520
      %v616 = vpack.c.b16 %v523, %v522
      %v617 = vpack.c.b16 %v525, %v524
      %v618 = vpack.c.b16 %v527, %v526
      %v619 = vpack.c.b16 %v529, %v528
      %v620 = vpack.c.b16 %v531, %v530
      %v621 = vpack.c.b16 %v533, %v532
      %v622 = vpack.c.b16 %v535, %v534
      %v623 = vpack.c.b16 %v537, %v536
      %v624 = vpack.c.b16 %v539, %v538
      %v625 = vpack.c.b16 %v541, %v540
      %v626 = vpack.c.b16 %v543, %v542
      %v627 = vpack.c.b16 %v545, %v544
      %v628 = vpack.c.b16 %v547, %v546
      %v629 = vpack.c.b16 %v549, %v548
      %v630 = vpack.c.b16 %v551, %v550
      %v631 = vpack.c.b16 %v553, %v552
      %v632 = vpack.c.b16 %v555, %v554
      %v633 = vpack.c.b16 %v557, %v556
      %v634 = vpack.c.b16 %v559, %v558
      %v635 = vpack.c.b16 %v561, %v560
      %v636 = vpack.c.b16 %v563, %v562
      %v637 = vpack.c.b16 %v565, %v564
      %v638 = vpack.c.b16 %v567, %v566
      %v639 = vpack.c.b16 %v569, %v568
      %v640 = vpack.c.b16 %v571, %v570
      %v641 = vpack.c.b16 %v573, %v572
      %v642 = vpack.c.b16 %v575, %v574
      %v643 = vpack.c.b16 %v577, %v576
      %v644 = vpack.c.b16 %v579, %v578
      %v645 = vpack.c.b16 %v581, %v580
      %v726 = vunpack.c.l.b16 %v303
      %v727 = vunpack.c.l.b16 %v304
      %v728 = vunpack.c.l.b16 %v305
      %v729 = vunpack.c.l.b16 %v306
      %v730 = vunpack.c.l.b16 %v307
      %v731 = vunpack.c.l.b16 %v308
      %v732 = vunpack.c.l.b16 %v309
      %v733 = vunpack.c.l.b16 %v310
      %v734 = vunpack.c.l.b16 %v311
      %v735 = vunpack.c.l.b16 %v312
      %v736 = vunpack.c.l.b16 %v313
      %v737 = vunpack.c.l.b16 %v314
      %v738 = vunpack.c.l.b16 %v315
      %v739 = vunpack.c.l.b16 %v316
      %v740 = vunpack.c.l.b16 %v317
      %v741 = vunpack.c.l.b16 %v318
      %v742 = vpack.c.b16 %v727, %v726
      %v743 = vpack.c.b16 %v729, %v728
      %v744 = vpack.c.b16 %v731, %v730
      %v745 = vpack.c.b16 %v733, %v732
      %v746 = vpack.c.b16 %v735, %v734
      %v747 = vpack.c.b16 %v737, %v736
      %v748 = vpack.c.b16 %v739, %v738
      %v749 = vpack.c.b16 %v741, %v740
      %758 = vmatprep.subr.bf16.mxu0 0
      %759 = vmatpush1.bf16.msra.mxu0 %v742
      %760 = vmatprep.subr.bf16.mxu0 0
      %761 = vmatpush1.bf16.msra.mxu0 %v743
      %762 = vmatprep.subr.bf16.mxu0 0
      %763 = vmatpush1.bf16.msra.mxu0 %v744
      %764 = vmatprep.subr.bf16.mxu0 0
      %765 = vmatpush1.bf16.msra.mxu0 %v745
      %766 = vmatprep.subr.bf16.mxu0 0
      %767 = vmatpush1.bf16.msra.mxu0 %v746
      %768 = vmatprep.subr.bf16.mxu0 0
      %769 = vmatpush1.bf16.msra.mxu0 %v747
      %770 = vmatprep.subr.bf16.mxu0 0
      %771 = vmatpush1.bf16.msra.mxu0 %v748
      %772 = vmatprep.subr.bf16.mxu0 0
      %773 = vmatpush1.bf16.msra.mxu0 %v749
      %774 = vmatprep.subr.bf16.mxu0 0
      %775 = vmatpush1.bf16.msra.mxu0 0
      %776 = vmatprep.subr.bf16.mxu0 0
      %777 = vmatpush1.bf16.msra.mxu0 0
      %778 = vmatprep.subr.bf16.mxu0 0
      %779 = vmatpush1.bf16.msra.mxu0 0
      %780 = vmatprep.subr.bf16.mxu0 0
      %781 = vmatpush1.bf16.msra.mxu0 0
      %782 = vmatprep.subr.bf16.mxu0 0
      %783 = vmatpush1.bf16.msra.mxu0 0
      %784 = vmatprep.subr.bf16.mxu0 0
      %785 = vmatpush1.bf16.msra.mxu0 0
      %786 = vmatprep.subr.bf16.mxu0 0
      %787 = vmatpush1.bf16.msra.mxu0 0
      %788 = vmatprep.subr.bf16.mxu0 0
      %789 = vmatpush1.bf16.msra.mxu0 0
      %790 = vmatprep.mubr.bf16.mxu0 0
      %791 = vmatmul.mubr.bf16.gmra.mrb[0].mxu0 %v582
      %v792 = vpop.f32.mrb[0].mxu0
      %v793 = vadd.f32 %v324, %v792
      %v794 = vpop.f32.mrb[0].mxu0
      %v795 = vpop.f32.mrb[0].mxu0
      %v796 = vadd.f32 %v324, %v795
      %v797 = vpop.f32.mrb[0].mxu0
      %798 = vmatprep.mubr.bf16.mxu0 0
      %799 = vmatmul.mubr.bf16.gmra.mrb[0].mxu0 %v583
      %v800 = vpop.f32.mrb[0].mxu0
      %v801 = vadd.f32 %v324, %v800
      %v802 = vpop.f32.mrb[0].mxu0
      %v803 = vpop.f32.mrb[0].mxu0
      %v804 = vadd.f32 %v324, %v803
      %v805 = vpop.f32.mrb[0].mxu0
      %806 = vmatprep.mubr.bf16.mxu0 0
      %807 = vmatmul.mubr.bf16.gmra.mrb[0].mxu0 %v584
      %v808 = vpop.f32.mrb[0].mxu0
      %v809 = vadd.f32 %v324, %v808
      %v810 = vpop.f32.mrb[0].mxu0
      %v811 = vpop.f32.mrb[0].mxu0
      %v812 = vadd.f32 %v324, %v811
      %v813 = vpop.f32.mrb[0].mxu0
      %814 = vmatprep.mubr.bf16.mxu0 0
      %815 = vmatmul.mubr.bf16.gmra.mrb[0].mxu0 %v585
      %v816 = vpop.f32.mrb[0].mxu0
      %v817 = vadd.f32 %v324, %v816
      %v818 = vpop.f32.mrb[0].mxu0
      %v819 = vpop.f32.mrb[0].mxu0
      %v820 = vadd.f32 %v324, %v819
      %v821 = vpop.f32.mrb[0].mxu0
      %822 = vmatprep.mubr.bf16.mxu0 0
      %823 = vmatmul.mubr.bf16.gmra.mrb[0].mxu0 %v586
      %v824 = vpop.f32.mrb[0].mxu0
      %v825 = vadd.f32 %v324, %v824
      %v826 = vpop.f32.mrb[0].mxu0
      %v827 = vpop.f32.mrb[0].mxu0
      %v828 = vadd.f32 %v324, %v827
      %v829 = vpop.f32.mrb[0].mxu0
      %830 = vmatprep.mubr.bf16.mxu0 0
      %831 = vmatmul.mubr.bf16.gmra.mrb[0].mxu0 %v587
      %v832 = vpop.f32.mrb[0].mxu0
      %v833 = vadd.f32 %v324, %v832
      %v834 = vpop.f32.mrb[0].mxu0
      %v835 = vpop.f32.mrb[0].mxu0
      %v836 = vadd.f32 %v324, %v835
      %v837 = vpop.f32.mrb[0].mxu0
      %838 = vmatprep.mubr.bf16.mxu0 0
      %839 = vmatmul.mubr.bf16.gmra.mrb[0].mxu0 %v588
      %v840 = vpop.f32.mrb[0].mxu0
      %v841 = vadd.f32 %v324, %v840
      %v842 = vpop.f32.mrb[0].mxu0
      %v843 = vpop.f32.mrb[0].mxu0
      %v844 = vadd.f32 %v324, %v843
      %v845 = vpop.f32.mrb[0].mxu0
      %846 = vmatprep.mubr.bf16.mxu0 0
      %847 = vmatmul.mubr.bf16.gmra.mrb[0].mxu0 %v589
      %v848 = vpop.f32.mrb[0].mxu0
      %v849 = vadd.f32 %v324, %v848
      %v850 = vpop.f32.mrb[0].mxu0
      %v851 = vpop.f32.mrb[0].mxu0
      %v852 = vadd.f32 %v324, %v851
      %v853 = vpop.f32.mrb[0].mxu0
      %854 = vmatprep.mubr.bf16.mxu0 0
      %855 = vmatmul.mubr.bf16.gmra.mrb[0].mxu0 %v590
      %v856 = vpop.f32.mrb[0].mxu0
      %v857 = vadd.f32 %v324, %v856
      %v858 = vpop.f32.mrb[0].mxu0
      %v859 = vpop.f32.mrb[0].mxu0
      %v860 = vadd.f32 %v324, %v859
      %v861 = vpop.f32.mrb[0].mxu0
      %862 = vmatprep.mubr.bf16.mxu0 0
      %863 = vmatmul.mubr.bf16.gmra.mrb[0].mxu0 %v591
      %v864 = vpop.f32.mrb[0].mxu0
      %v865 = vadd.f32 %v324, %v864
      %v866 = vpop.f32.mrb[0].mxu0
      %v867 = vpop.f32.mrb[0].mxu0
      %v868 = vadd.f32 %v324, %v867
      %v869 = vpop.f32.mrb[0].mxu0
      %870 = vmatprep.mubr.bf16.mxu0 0
      %871 = vmatmul.mubr.bf16.gmra.mrb[0].mxu0 %v592
      %v872 = vpop.f32.mrb[0].mxu0
      %v873 = vadd.f32 %v324, %v872
      %v874 = vpop.f32.mrb[0].mxu0
      %v875 = vpop.f32.mrb[0].mxu0
      %v876 = vadd.f32 %v324, %v875
      %v877 = vpop.f32.mrb[0].mxu0
      %878 = vmatprep.mubr.bf16.mxu0 0
      %879 = vmatmul.mubr.bf16.gmra.mrb[0].mxu0 %v593
      %v880 = vpop.f32.mrb[0].mxu0
      %v881 = vadd.f32 %v324, %v880
      %v882 = vpop.f32.mrb[0].mxu0
      %v883 = vpop.f32.mrb[0].mxu0
      %v884 = vadd.f32 %v324, %v883
      %v885 = vpop.f32.mrb[0].mxu0
      %886 = vmatprep.mubr.bf16.mxu0 0
      %887 = vmatmul.mubr.bf16.gmra.mrb[0].mxu0 %v594
      %v888 = vpop.f32.mrb[0].mxu0
      %v889 = vadd.f32 %v324, %v888
      %v890 = vpop.f32.mrb[0].mxu0
      %v891 = vpop.f32.mrb[0].mxu0
      %v892 = vadd.f32 %v324, %v891
      %v893 = vpop.f32.mrb[0].mxu0
      %894 = vmatprep.mubr.bf16.mxu0 0
      %895 = vmatmul.mubr.bf16.gmra.mrb[0].mxu0 %v595
      %v896 = vpop.f32.mrb[0].mxu0
      %v897 = vadd.f32 %v324, %v896
      %v898 = vpop.f32.mrb[0].mxu0
      %v899 = vpop.f32.mrb[0].mxu0
      %v900 = vadd.f32 %v324, %v899
      %v901 = vpop.f32.mrb[0].mxu0
      %902 = vmatprep.mubr.bf16.mxu0 0
      %903 = vmatmul.mubr.bf16.gmra.mrb[0].mxu0 %v596
      %v904 = vpop.f32.mrb[0].mxu0
      %v905 = vadd.f32 %v324, %v904
      %v906 = vpop.f32.mrb[0].mxu0
      %v907 = vpop.f32.mrb[0].mxu0
      %v908 = vadd.f32 %v324, %v907
      %v909 = vpop.f32.mrb[0].mxu0
      %910 = vmatprep.mubr.bf16.mxu0 0
      %911 = vmatmul.mubr.bf16.gmra.mrb[0].mxu0 %v597
      %v912 = vpop.f32.mrb[0].mxu0
      %v913 = vadd.f32 %v324, %v912
      %v914 = vpop.f32.mrb[0].mxu0
      %v915 = vpop.f32.mrb[0].mxu0
      %v916 = vadd.f32 %v324, %v915
      %v917 = vpop.f32.mrb[0].mxu0
      %918 = vmatprep.mubr.bf16.mxu0 0
      %919 = vmatmul.mubr.bf16.gmra.mrb[0].mxu0 %v598
      %v920 = vpop.f32.mrb[0].mxu0
      %v921 = vadd.f32 %v324, %v920
      %v922 = vpop.f32.mrb[0].mxu0
      %v923 = vpop.f32.mrb[0].mxu0
      %v924 = vadd.f32 %v324, %v923
      %v925 = vpop.f32.mrb[0].mxu0
      %926 = vmatprep.mubr.bf16.mxu0 0
      %927 = vmatmul.mubr.bf16.gmra.mrb[0].mxu0 %v599
      %v928 = vpop.f32.mrb[0].mxu0
      %v929 = vadd.f32 %v324, %v928
      %v930 = vpop.f32.mrb[0].mxu0
      %v931 = vpop.f32.mrb[0].mxu0
      %v932 = vadd.f32 %v324, %v931
      %v933 = vpop.f32.mrb[0].mxu0
      %934 = vmatprep.mubr.bf16.mxu0 0
      %935 = vmatmul.mubr.bf16.gmra.mrb[0].mxu0 %v600
      %v936 = vpop.f32.mrb[0].mxu0
      %v937 = vadd.f32 %v324, %v936
      %v938 = vpop.f32.mrb[0].mxu0
      %v939 = vpop.f32.mrb[0].mxu0
      %v940 = vadd.f32 %v324, %v939
      %v941 = vpop.f32.mrb[0].mxu0
      %942 = vmatprep.mubr.bf16.mxu0 0
      %943 = vmatmul.mubr.bf16.gmra.mrb[0].mxu0 %v601
      %v944 = vpop.f32.mrb[0].mxu0
      %v945 = vadd.f32 %v324, %v944
      %v946 = vpop.f32.mrb[0].mxu0
      %v947 = vpop.f32.mrb[0].mxu0
      %v948 = vadd.f32 %v324, %v947
      %v949 = vpop.f32.mrb[0].mxu0
      %950 = vmatprep.mubr.bf16.mxu0 0
      %951 = vmatmul.mubr.bf16.gmra.mrb[0].mxu0 %v602
      %v952 = vpop.f32.mrb[0].mxu0
      %v953 = vadd.f32 %v324, %v952
      %v954 = vpop.f32.mrb[0].mxu0
      %v955 = vpop.f32.mrb[0].mxu0
      %v956 = vadd.f32 %v324, %v955
      %v957 = vpop.f32.mrb[0].mxu0
      %958 = vmatprep.mubr.bf16.mxu0 0
      %959 = vmatmul.mubr.bf16.gmra.mrb[0].mxu0 %v603
      %v960 = vpop.f32.mrb[0].mxu0
      %v961 = vadd.f32 %v324, %v960
      %v962 = vpop.f32.mrb[0].mxu0
      %v963 = vpop.f32.mrb[0].mxu0
      %v964 = vadd.f32 %v324, %v963
      %v965 = vpop.f32.mrb[0].mxu0
      %966 = vmatprep.mubr.bf16.mxu0 0
      %967 = vmatmul.mubr.bf16.gmra.mrb[0].mxu0 %v604
      %v968 = vpop.f32.mrb[0].mxu0
      %v969 = vadd.f32 %v324, %v968
      %v970 = vpop.f32.mrb[0].mxu0
      %v971 = vpop.f32.mrb[0].mxu0
      %v972 = vadd.f32 %v324, %v971
      %v973 = vpop.f32.mrb[0].mxu0
      %974 = vmatprep.mubr.bf16.mxu0 0
      %975 = vmatmul.mubr.bf16.gmra.mrb[0].mxu0 %v605
      %v976 = vpop.f32.mrb[0].mxu0
      %v977 = vadd.f32 %v324, %v976
      %v978 = vpop.f32.mrb[0].mxu0
      %v979 = vpop.f32.mrb[0].mxu0
      %v980 = vadd.f32 %v324, %v979
      %v981 = vpop.f32.mrb[0].mxu0
      %982 = vmatprep.mubr.bf16.mxu0 0
      %983 = vmatmul.mubr.bf16.gmra.mrb[0].mxu0 %v606
      %v984 = vpop.f32.mrb[0].mxu0
      %v985 = vadd.f32 %v324, %v984
      %v986 = vpop.f32.mrb[0].mxu0
      %v987 = vpop.f32.mrb[0].mxu0
      %v988 = vadd.f32 %v324, %v987
      %v989 = vpop.f32.mrb[0].mxu0
      %990 = vmatprep.mubr.bf16.mxu0 0
      %991 = vmatmul.mubr.bf16.gmra.mrb[0].mxu0 %v607
      %v992 = vpop.f32.mrb[0].mxu0
      %v993 = vadd.f32 %v324, %v992
      %v994 = vpop.f32.mrb[0].mxu0
      %v995 = vpop.f32.mrb[0].mxu0
      %v996 = vadd.f32 %v324, %v995
      %v997 = vpop.f32.mrb[0].mxu0
      %998 = vmatprep.mubr.bf16.mxu0 0
      %999 = vmatmul.mubr.bf16.gmra.mrb[0].mxu0 %v608
      %v1000 = vpop.f32.mrb[0].mxu0
      %v1001 = vadd.f32 %v324, %v1000
      %v1002 = vpop.f32.mrb[0].mxu0
      %v1003 = vpop.f32.mrb[0].mxu0
      %v1004 = vadd.f32 %v324, %v1003
      %v1005 = vpop.f32.mrb[0].mxu0
      %1006 = vmatprep.mubr.bf16.mxu0 0
      %1007 = vmatmul.mubr.bf16.gmra.mrb[0].mxu0 %v609
      %v1008 = vpop.f32.mrb[0].mxu0
      %v1009 = vadd.f32 %v324, %v1008
      %v1010 = vpop.f32.mrb[0].mxu0
      %v1011 = vpop.f32.mrb[0].mxu0
      %v1012 = vadd.f32 %v324, %v1011
      %v1013 = vpop.f32.mrb[0].mxu0
      %1014 = vmatprep.mubr.bf16.mxu0 0
      %1015 = vmatmul.mubr.bf16.gmra.mrb[0].mxu0 %v610
      %v1016 = vpop.f32.mrb[0].mxu0
      %v1017 = vadd.f32 %v324, %v1016
      %v1018 = vpop.f32.mrb[0].mxu0
      %v1019 = vpop.f32.mrb[0].mxu0
      %v1020 = vadd.f32 %v324, %v1019
      %v1021 = vpop.f32.mrb[0].mxu0
      %1022 = vmatprep.mubr.bf16.mxu0 0
      %1023 = vmatmul.mubr.bf16.gmra.mrb[0].mxu0 %v611
      %v1024 = vpop.f32.mrb[0].mxu0
      %v1025 = vadd.f32 %v324, %v1024
      %v1026 = vpop.f32.mrb[0].mxu0
      %v1027 = vpop.f32.mrb[0].mxu0
      %v1028 = vadd.f32 %v324, %v1027
      %v1029 = vpop.f32.mrb[0].mxu0
      %1030 = vmatprep.mubr.bf16.mxu0 0
      %1031 = vmatmul.mubr.bf16.gmra.mrb[0].mxu0 %v612
      %v1032 = vpop.f32.mrb[0].mxu0
      %v1033 = vadd.f32 %v324, %v1032
      %v1034 = vpop.f32.mrb[0].mxu0
      %v1035 = vpop.f32.mrb[0].mxu0
      %v1036 = vadd.f32 %v324, %v1035
      %v1037 = vpop.f32.mrb[0].mxu0
      %1038 = vmatprep.mubr.bf16.mxu0 0
      %1039 = vmatmul.mubr.bf16.gmra.mrb[0].mxu0 %v613
      %v1040 = vpop.f32.mrb[0].mxu0
      %v1041 = vadd.f32 %v324, %v1040
      %v1042 = vpop.f32.mrb[0].mxu0
      %v1043 = vpop.f32.mrb[0].mxu0
      %v1044 = vadd.f32 %v324, %v1043
      %v1045 = vpop.f32.mrb[0].mxu0
      %1046 = vmatprep.mubr.bf16.mxu0 0
      %1047 = vmatmul.mubr.bf16.gmra.mrb[0].mxu0 %v614
      %v1048 = vpop.f32.mrb[0].mxu0
      %v1049 = vadd.f32 %v324, %v1048
      %v1050 = vpop.f32.mrb[0].mxu0
      %v1051 = vpop.f32.mrb[0].mxu0
      %v1052 = vadd.f32 %v324, %v1051
      %v1053 = vpop.f32.mrb[0].mxu0
      %1054 = vmatprep.mubr.bf16.mxu0 0
      %1055 = vmatmul.mubr.bf16.gmra.mrb[0].mxu0 %v615
      %v1056 = vpop.f32.mrb[0].mxu0
      %v1057 = vadd.f32 %v324, %v1056
      %v1058 = vpop.f32.mrb[0].mxu0
      %v1059 = vpop.f32.mrb[0].mxu0
      %v1060 = vadd.f32 %v324, %v1059
      %v1061 = vpop.f32.mrb[0].mxu0
      %1062 = vmatprep.mubr.bf16.mxu0 0
      %1063 = vmatmul.mubr.bf16.gmra.mrb[0].mxu0 %v616
      %v1064 = vpop.f32.mrb[0].mxu0
      %v1065 = vadd.f32 %v324, %v1064
      %v1066 = vpop.f32.mrb[0].mxu0
      %v1067 = vpop.f32.mrb[0].mxu0
      %v1068 = vadd.f32 %v324, %v1067
      %v1069 = vpop.f32.mrb[0].mxu0
      %1070 = vmatprep.mubr.bf16.mxu0 0
      %1071 = vmatmul.mubr.bf16.gmra.mrb[0].mxu0 %v617
      %v1072 = vpop.f32.mrb[0].mxu0
      %v1073 = vadd.f32 %v324, %v1072
      %v1074 = vpop.f32.mrb[0].mxu0
      %v1075 = vpop.f32.mrb[0].mxu0
      %v1076 = vadd.f32 %v324, %v1075
      %v1077 = vpop.f32.mrb[0].mxu0
      %1078 = vmatprep.mubr.bf16.mxu0 0
      %1079 = vmatmul.mubr.bf16.gmra.mrb[0].mxu0 %v618
      %v1080 = vpop.f32.mrb[0].mxu0
      %v1081 = vadd.f32 %v324, %v1080
      %v1082 = vpop.f32.mrb[0].mxu0
      %v1083 = vpop.f32.mrb[0].mxu0
      %v1084 = vadd.f32 %v324, %v1083
      %v1085 = vpop.f32.mrb[0].mxu0
      %1086 = vmatprep.mubr.bf16.mxu0 0
      %1087 = vmatmul.mubr.bf16.gmra.mrb[0].mxu0 %v619
      %v1088 = vpop.f32.mrb[0].mxu0
      %v1089 = vadd.f32 %v324, %v1088
      %v1090 = vpop.f32.mrb[0].mxu0
      %v1091 = vpop.f32.mrb[0].mxu0
      %v1092 = vadd.f32 %v324, %v1091
      %v1093 = vpop.f32.mrb[0].mxu0
      %1094 = vmatprep.mubr.bf16.mxu0 0
      %1095 = vmatmul.mubr.bf16.gmra.mrb[0].mxu0 %v620
      %v1096 = vpop.f32.mrb[0].mxu0
      %v1097 = vadd.f32 %v324, %v1096
      %v1098 = vpop.f32.mrb[0].mxu0
      %v1099 = vpop.f32.mrb[0].mxu0
      %v1100 = vadd.f32 %v324, %v1099
      %v1101 = vpop.f32.mrb[0].mxu0
      %1102 = vmatprep.mubr.bf16.mxu0 0
      %1103 = vmatmul.mubr.bf16.gmra.mrb[0].mxu0 %v621
      %v1104 = vpop.f32.mrb[0].mxu0
      %v1105 = vadd.f32 %v324, %v1104
      %v1106 = vpop.f32.mrb[0].mxu0
      %v1107 = vpop.f32.mrb[0].mxu0
      %v1108 = vadd.f32 %v324, %v1107
      %v1109 = vpop.f32.mrb[0].mxu0
      %1110 = vmatprep.mubr.bf16.mxu0 0
      %1111 = vmatmul.mubr.bf16.gmra.mrb[0].mxu0 %v622
      %v1112 = vpop.f32.mrb[0].mxu0
      %v1113 = vadd.f32 %v324, %v1112
      %v1114 = vpop.f32.mrb[0].mxu0
      %v1115 = vpop.f32.mrb[0].mxu0
      %v1116 = vadd.f32 %v324, %v1115
      %v1117 = vpop.f32.mrb[0].mxu0
      %1118 = vmatprep.mubr.bf16.mxu0 0
      %1119 = vmatmul.mubr.bf16.gmra.mrb[0].mxu0 %v623
      %v1120 = vpop.f32.mrb[0].mxu0
      %v1121 = vadd.f32 %v324, %v1120
      %v1122 = vpop.f32.mrb[0].mxu0
      %v1123 = vpop.f32.mrb[0].mxu0
      %v1124 = vadd.f32 %v324, %v1123
      %v1125 = vpop.f32.mrb[0].mxu0
      %1126 = vmatprep.mubr.bf16.mxu0 0
      %1127 = vmatmul.mubr.bf16.gmra.mrb[0].mxu0 %v624
      %v1128 = vpop.f32.mrb[0].mxu0
      %v1129 = vadd.f32 %v324, %v1128
      %v1130 = vpop.f32.mrb[0].mxu0
      %v1131 = vpop.f32.mrb[0].mxu0
      %v1132 = vadd.f32 %v324, %v1131
      %v1133 = vpop.f32.mrb[0].mxu0
      %1134 = vmatprep.mubr.bf16.mxu0 0
      %1135 = vmatmul.mubr.bf16.gmra.mrb[0].mxu0 %v625
      %v1136 = vpop.f32.mrb[0].mxu0
      %v1137 = vadd.f32 %v324, %v1136
      %v1138 = vpop.f32.mrb[0].mxu0
      %v1139 = vpop.f32.mrb[0].mxu0
      %v1140 = vadd.f32 %v324, %v1139
      %v1141 = vpop.f32.mrb[0].mxu0
      %1142 = vmatprep.mubr.bf16.mxu0 0
      %1143 = vmatmul.mubr.bf16.gmra.mrb[0].mxu0 %v626
      %v1144 = vpop.f32.mrb[0].mxu0
      %v1145 = vadd.f32 %v324, %v1144
      %v1146 = vpop.f32.mrb[0].mxu0
      %v1147 = vpop.f32.mrb[0].mxu0
      %v1148 = vadd.f32 %v324, %v1147
      %v1149 = vpop.f32.mrb[0].mxu0
      %1150 = vmatprep.mubr.bf16.mxu0 0
      %1151 = vmatmul.mubr.bf16.gmra.mrb[0].mxu0 %v627
      %v1152 = vpop.f32.mrb[0].mxu0
      %v1153 = vadd.f32 %v324, %v1152
      %v1154 = vpop.f32.mrb[0].mxu0
      %v1155 = vpop.f32.mrb[0].mxu0
      %v1156 = vadd.f32 %v324, %v1155
      %v1157 = vpop.f32.mrb[0].mxu0
      %1158 = vmatprep.mubr.bf16.mxu0 0
      %1159 = vmatmul.mubr.bf16.gmra.mrb[0].mxu0 %v628
      %v1160 = vpop.f32.mrb[0].mxu0
      %v1161 = vadd.f32 %v324, %v1160
      %v1162 = vpop.f32.mrb[0].mxu0
      %v1163 = vpop.f32.mrb[0].mxu0
      %v1164 = vadd.f32 %v324, %v1163
      %v1165 = vpop.f32.mrb[0].mxu0
      %1166 = vmatprep.mubr.bf16.mxu0 0
      %1167 = vmatmul.mubr.bf16.gmra.mrb[0].mxu0 %v629
      %v1168 = vpop.f32.mrb[0].mxu0
      %v1169 = vadd.f32 %v324, %v1168
      %v1170 = vpop.f32.mrb[0].mxu0
      %v1171 = vpop.f32.mrb[0].mxu0
      %v1172 = vadd.f32 %v324, %v1171
      %v1173 = vpop.f32.mrb[0].mxu0
      %1174 = vmatprep.mubr.bf16.mxu0 0
      %1175 = vmatmul.mubr.bf16.gmra.mrb[0].mxu0 %v630
      %v1176 = vpop.f32.mrb[0].mxu0
      %v1177 = vadd.f32 %v324, %v1176
      %v1178 = vpop.f32.mrb[0].mxu0
      %v1179 = vpop.f32.mrb[0].mxu0
      %v1180 = vadd.f32 %v324, %v1179
      %v1181 = vpop.f32.mrb[0].mxu0
      %1182 = vmatprep.mubr.bf16.mxu0 0
      %1183 = vmatmul.mubr.bf16.gmra.mrb[0].mxu0 %v631
      %v1184 = vpop.f32.mrb[0].mxu0
      %v1185 = vadd.f32 %v324, %v1184
      %v1186 = vpop.f32.mrb[0].mxu0
      %v1187 = vpop.f32.mrb[0].mxu0
      %v1188 = vadd.f32 %v324, %v1187
      %v1189 = vpop.f32.mrb[0].mxu0
      %1190 = vmatprep.mubr.bf16.mxu0 0
      %1191 = vmatmul.mubr.bf16.gmra.mrb[0].mxu0 %v632
      %v1192 = vpop.f32.mrb[0].mxu0
      %v1193 = vadd.f32 %v324, %v1192
      %v1194 = vpop.f32.mrb[0].mxu0
      %v1195 = vpop.f32.mrb[0].mxu0
      %v1196 = vadd.f32 %v324, %v1195
      %v1197 = vpop.f32.mrb[0].mxu0
      %1198 = vmatprep.mubr.bf16.mxu0 0
      %1199 = vmatmul.mubr.bf16.gmra.mrb[0].mxu0 %v633
      %v1200 = vpop.f32.mrb[0].mxu0
      %v1201 = vadd.f32 %v324, %v1200
      %v1202 = vpop.f32.mrb[0].mxu0
      %v1203 = vpop.f32.mrb[0].mxu0
      %v1204 = vadd.f32 %v324, %v1203
      %v1205 = vpop.f32.mrb[0].mxu0
      %1206 = vmatprep.mubr.bf16.mxu0 0
      %1207 = vmatmul.mubr.bf16.gmra.mrb[0].mxu0 %v634
      %v1208 = vpop.f32.mrb[0].mxu0
      %v1209 = vadd.f32 %v324, %v1208
      %v1210 = vpop.f32.mrb[0].mxu0
      %v1211 = vpop.f32.mrb[0].mxu0
      %v1212 = vadd.f32 %v324, %v1211
      %v1213 = vpop.f32.mrb[0].mxu0
      %1214 = vmatprep.mubr.bf16.mxu0 0
      %1215 = vmatmul.mubr.bf16.gmra.mrb[0].mxu0 %v635
      %v1216 = vpop.f32.mrb[0].mxu0
      %v1217 = vadd.f32 %v324, %v1216
      %v1218 = vpop.f32.mrb[0].mxu0
      %v1219 = vpop.f32.mrb[0].mxu0
      %v1220 = vadd.f32 %v324, %v1219
      %v1221 = vpop.f32.mrb[0].mxu0
      %1222 = vmatprep.mubr.bf16.mxu0 0
      %1223 = vmatmul.mubr.bf16.gmra.mrb[0].mxu0 %v636
      %v1224 = vpop.f32.mrb[0].mxu0
      %v1225 = vadd.f32 %v324, %v1224
      %v1226 = vpop.f32.mrb[0].mxu0
      %v1227 = vpop.f32.mrb[0].mxu0
      %v1228 = vadd.f32 %v324, %v1227
      %v1229 = vpop.f32.mrb[0].mxu0
      %1230 = vmatprep.mubr.bf16.mxu0 0
      %1231 = vmatmul.mubr.bf16.gmra.mrb[0].mxu0 %v637
      %v1232 = vpop.f32.mrb[0].mxu0
      %v1233 = vadd.f32 %v324, %v1232
      %v1234 = vpop.f32.mrb[0].mxu0
      %v1235 = vpop.f32.mrb[0].mxu0
      %v1236 = vadd.f32 %v324, %v1235
      %v1237 = vpop.f32.mrb[0].mxu0
      %1238 = vmatprep.mubr.bf16.mxu0 0
      %1239 = vmatmul.mubr.bf16.gmra.mrb[0].mxu0 %v638
      %v1240 = vpop.f32.mrb[0].mxu0
      %v1241 = vadd.f32 %v324, %v1240
      %v1242 = vpop.f32.mrb[0].mxu0
      %v1243 = vpop.f32.mrb[0].mxu0
      %v1244 = vadd.f32 %v324, %v1243
      %v1245 = vpop.f32.mrb[0].mxu0
      %1246 = vmatprep.mubr.bf16.mxu0 0
      %1247 = vmatmul.mubr.bf16.gmra.mrb[0].mxu0 %v639
      %v1248 = vpop.f32.mrb[0].mxu0
      %v1249 = vadd.f32 %v324, %v1248
      %v1250 = vpop.f32.mrb[0].mxu0
      %v1251 = vpop.f32.mrb[0].mxu0
      %v1252 = vadd.f32 %v324, %v1251
      %v1253 = vpop.f32.mrb[0].mxu0
      %1254 = vmatprep.mubr.bf16.mxu0 0
      %1255 = vmatmul.mubr.bf16.gmra.mrb[0].mxu0 %v640
      %v1256 = vpop.f32.mrb[0].mxu0
      %v1257 = vadd.f32 %v324, %v1256
      %v1258 = vpop.f32.mrb[0].mxu0
      %v1259 = vpop.f32.mrb[0].mxu0
      %v1260 = vadd.f32 %v324, %v1259
      %v1261 = vpop.f32.mrb[0].mxu0
      %1262 = vmatprep.mubr.bf16.mxu0 0
      %1263 = vmatmul.mubr.bf16.gmra.mrb[0].mxu0 %v641
      %v1264 = vpop.f32.mrb[0].mxu0
      %v1265 = vadd.f32 %v324, %v1264
      %v1266 = vpop.f32.mrb[0].mxu0
      %v1267 = vpop.f32.mrb[0].mxu0
      %v1268 = vadd.f32 %v324, %v1267
      %v1269 = vpop.f32.mrb[0].mxu0
      %1270 = vmatprep.mubr.bf16.mxu0 0
      %1271 = vmatmul.mubr.bf16.gmra.mrb[0].mxu0 %v642
      %v1272 = vpop.f32.mrb[0].mxu0
      %v1273 = vadd.f32 %v324, %v1272
      %v1274 = vpop.f32.mrb[0].mxu0
      %v1275 = vpop.f32.mrb[0].mxu0
      %v1276 = vadd.f32 %v324, %v1275
      %v1277 = vpop.f32.mrb[0].mxu0
      %1278 = vmatprep.mubr.bf16.mxu0 0
      %1279 = vmatmul.mubr.bf16.gmra.mrb[0].mxu0 %v643
      %v1280 = vpop.f32.mrb[0].mxu0
      %v1281 = vadd.f32 %v324, %v1280
      %v1282 = vpop.f32.mrb[0].mxu0
      %v1283 = vpop.f32.mrb[0].mxu0
      %v1284 = vadd.f32 %v324, %v1283
      %v1285 = vpop.f32.mrb[0].mxu0
      %1286 = vmatprep.mubr.bf16.mxu0 0
      %1287 = vmatmul.mubr.bf16.gmra.mrb[0].mxu0 %v644
      %v1288 = vpop.f32.mrb[0].mxu0
      %v1289 = vadd.f32 %v324, %v1288
      %v1290 = vpop.f32.mrb[0].mxu0
      %v1291 = vpop.f32.mrb[0].mxu0
      %v1292 = vadd.f32 %v324, %v1291
      %v1293 = vpop.f32.mrb[0].mxu0
      %1294 = vmatprep.mubr.bf16.mxu0 0
      %1295 = vmatmul.mubr.bf16.gmra.mrb[0].mxu0 %v645
      %v1296 = vpop.f32.mrb[0].mxu0
      %v1297 = vadd.f32 %v324, %v1296
      %v1298 = vpop.f32.mrb[0].mxu0
      %v1299 = vpop.f32.mrb[0].mxu0
      %v1300 = vadd.f32 %v324, %v1299
      %v1301 = vpop.f32.mrb[0].mxu0
      %1302 = vdwg.mxu0
      %v1303 = vmax.f32 %v793, 0.0
      %v1304 = vmax.f32 %v796, 0.0
      %v1305 = vmax.f32 %v801, 0.0
      %v1306 = vmax.f32 %v804, 0.0
      %v1307 = vmax.f32 %v809, 0.0
      %v1308 = vmax.f32 %v812, 0.0
      %v1309 = vmax.f32 %v817, 0.0
      %v1310 = vmax.f32 %v820, 0.0
      %v1311 = vmax.f32 %v825, 0.0
      %v1312 = vmax.f32 %v828, 0.0
      %v1313 = vmax.f32 %v833, 0.0
      %v1314 = vmax.f32 %v836, 0.0
      %v1315 = vmax.f32 %v841, 0.0
      %v1316 = vmax.f32 %v844, 0.0
      %v1317 = vmax.f32 %v849, 0.0
      %v1318 = vmax.f32 %v852, 0.0
      %v1319 = vmax.f32 %v857, 0.0
      %v1320 = vmax.f32 %v860, 0.0
      %v1321 = vmax.f32 %v865, 0.0
      %v1322 = vmax.f32 %v868, 0.0
      %v1323 = vmax.f32 %v873, 0.0
      %v1324 = vmax.f32 %v876, 0.0
      %v1325 = vmax.f32 %v881, 0.0
      %v1326 = vmax.f32 %v884, 0.0
      %v1327 = vmax.f32 %v889, 0.0
      %v1328 = vmax.f32 %v892, 0.0
      %v1329 = vmax.f32 %v897, 0.0
      %v1330 = vmax.f32 %v900, 0.0
      %v1331 = vmax.f32 %v905, 0.0
      %v1332 = vmax.f32 %v908, 0.0
      %v1333 = vmax.f32 %v913, 0.0
      %v1334 = vmax.f32 %v916, 0.0
      %v1335 = vmax.f32 %v921, 0.0
      %v1336 = vmax.f32 %v924, 0.0
      %v1337 = vmax.f32 %v929, 0.0
      %v1338 = vmax.f32 %v932, 0.0
      %v1339 = vmax.f32 %v937, 0.0
      %v1340 = vmax.f32 %v940, 0.0
      %v1341 = vmax.f32 %v945, 0.0
      %v1342 = vmax.f32 %v948, 0.0
      %v1343 = vmax.f32 %v953, 0.0
      %v1344 = vmax.f32 %v956, 0.0
      %v1345 = vmax.f32 %v961, 0.0
      %v1346 = vmax.f32 %v964, 0.0
      %v1347 = vmax.f32 %v969, 0.0
      %v1348 = vmax.f32 %v972, 0.0
      %v1349 = vmax.f32 %v977, 0.0
      %v1350 = vmax.f32 %v980, 0.0
      %v1351 = vmax.f32 %v985, 0.0
      %v1352 = vmax.f32 %v988, 0.0
      %v1353 = vmax.f32 %v993, 0.0
      %v1354 = vmax.f32 %v996, 0.0
      %v1355 = vmax.f32 %v1001, 0.0
      %v1356 = vmax.f32 %v1004, 0.0
      %v1357 = vmax.f32 %v1009, 0.0
      %v1358 = vmax.f32 %v1012, 0.0
      %v1359 = vmax.f32 %v1017, 0.0
      %v1360 = vmax.f32 %v1020, 0.0
      %v1361 = vmax.f32 %v1025, 0.0
      %v1362 = vmax.f32 %v1028, 0.0
      %v1363 = vmax.f32 %v1033, 0.0
      %v1364 = vmax.f32 %v1036, 0.0
      %v1365 = vmax.f32 %v1041, 0.0
      %v1366 = vmax.f32 %v1044, 0.0
      %v1367 = vmax.f32 %v1049, 0.0
      %v1368 = vmax.f32 %v1052, 0.0
      %v1369 = vmax.f32 %v1057, 0.0
      %v1370 = vmax.f32 %v1060, 0.0
      %v1371 = vmax.f32 %v1065, 0.0
      %v1372 = vmax.f32 %v1068, 0.0
      %v1373 = vmax.f32 %v1073, 0.0
      %v1374 = vmax.f32 %v1076, 0.0
      %v1375 = vmax.f32 %v1081, 0.0
      %v1376 = vmax.f32 %v1084, 0.0
      %v1377 = vmax.f32 %v1089, 0.0
      %v1378 = vmax.f32 %v1092, 0.0
      %v1379 = vmax.f32 %v1097, 0.0
      %v1380 = vmax.f32 %v1100, 0.0
      %v1381 = vmax.f32 %v1105, 0.0
      %v1382 = vmax.f32 %v1108, 0.0
      %v1383 = vmax.f32 %v1113, 0.0
      %v1384 = vmax.f32 %v1116, 0.0
      %v1385 = vmax.f32 %v1121, 0.0
      %v1386 = vmax.f32 %v1124, 0.0
      %v1387 = vmax.f32 %v1129, 0.0
      %v1388 = vmax.f32 %v1132, 0.0
      %v1389 = vmax.f32 %v1137, 0.0
      %v1390 = vmax.f32 %v1140, 0.0
      %v1391 = vmax.f32 %v1145, 0.0
      %v1392 = vmax.f32 %v1148, 0.0
      %v1393 = vmax.f32 %v1153, 0.0
      %v1394 = vmax.f32 %v1156, 0.0
      %v1395 = vmax.f32 %v1161, 0.0
      %v1396 = vmax.f32 %v1164, 0.0
      %v1397 = vmax.f32 %v1169, 0.0
      %v1398 = vmax.f32 %v1172, 0.0
      %v1399 = vmax.f32 %v1177, 0.0
      %v1400 = vmax.f32 %v1180, 0.0
      %v1401 = vmax.f32 %v1185, 0.0
      %v1402 = vmax.f32 %v1188, 0.0
      %v1403 = vmax.f32 %v1193, 0.0
      %v1404 = vmax.f32 %v1196, 0.0
      %v1405 = vmax.f32 %v1201, 0.0
      %v1406 = vmax.f32 %v1204, 0.0
      %v1407 = vmax.f32 %v1209, 0.0
      %v1408 = vmax.f32 %v1212, 0.0
      %v1409 = vmax.f32 %v1217, 0.0
      %v1410 = vmax.f32 %v1220, 0.0
      %v1411 = vmax.f32 %v1225, 0.0
      %v1412 = vmax.f32 %v1228, 0.0
      %v1413 = vmax.f32 %v1233, 0.0
      %v1414 = vmax.f32 %v1236, 0.0
      %v1415 = vmax.f32 %v1241, 0.0
      %v1416 = vmax.f32 %v1244, 0.0
      %v1417 = vmax.f32 %v1249, 0.0
      %v1418 = vmax.f32 %v1252, 0.0
      %v1419 = vmax.f32 %v1257, 0.0
      %v1420 = vmax.f32 %v1260, 0.0
      %v1421 = vmax.f32 %v1265, 0.0
      %v1422 = vmax.f32 %v1268, 0.0
      %v1423 = vmax.f32 %v1273, 0.0
      %v1424 = vmax.f32 %v1276, 0.0
      %v1425 = vmax.f32 %v1281, 0.0
      %v1426 = vmax.f32 %v1284, 0.0
      %v1427 = vmax.f32 %v1289, 0.0
      %v1428 = vmax.f32 %v1292, 0.0
      %v1429 = vmax.f32 %v1297, 0.0
      %v1430 = vmax.f32 %v1300, 0.0
      %v1431 = vpack.c.bf16 %v1304, %v1303
      %v1432 = vpack.c.bf16 %v1306, %v1305
      %v1433 = vpack.c.bf16 %v1308, %v1307
      %v1434 = vpack.c.bf16 %v1310, %v1309
      %v1435 = vpack.c.bf16 %v1312, %v1311
      %v1436 = vpack.c.bf16 %v1314, %v1313
      %v1437 = vpack.c.bf16 %v1316, %v1315
      %v1438 = vpack.c.bf16 %v1318, %v1317
      %v1439 = vpack.c.bf16 %v1320, %v1319
      %v1440 = vpack.c.bf16 %v1322, %v1321
      %v1441 = vpack.c.bf16 %v1324, %v1323
      %v1442 = vpack.c.bf16 %v1326, %v1325
      %v1443 = vpack.c.bf16 %v1328, %v1327
      %v1444 = vpack.c.bf16 %v1330, %v1329
      %v1445 = vpack.c.bf16 %v1332, %v1331
      %v1446 = vpack.c.bf16 %v1334, %v1333
      %v1447 = vpack.c.bf16 %v1336, %v1335
      %v1448 = vpack.c.bf16 %v1338, %v1337
      %v1449 = vpack.c.bf16 %v1340, %v1339
      %v1450 = vpack.c.bf16 %v1342, %v1341
      %v1451 = vpack.c.bf16 %v1344, %v1343
      %v1452 = vpack.c.bf16 %v1346, %v1345
      %v1453 = vpack.c.bf16 %v1348, %v1347
      %v1454 = vpack.c.bf16 %v1350, %v1349
      %v1455 = vpack.c.bf16 %v1352, %v1351
      %v1456 = vpack.c.bf16 %v1354, %v1353
      %v1457 = vpack.c.bf16 %v1356, %v1355
      %v1458 = vpack.c.bf16 %v1358, %v1357
      %v1459 = vpack.c.bf16 %v1360, %v1359
      %v1460 = vpack.c.bf16 %v1362, %v1361
      %v1461 = vpack.c.bf16 %v1364, %v1363
      %v1462 = vpack.c.bf16 %v1366, %v1365
      %v1463 = vpack.c.bf16 %v1368, %v1367
      %v1464 = vpack.c.bf16 %v1370, %v1369
      %v1465 = vpack.c.bf16 %v1372, %v1371
      %v1466 = vpack.c.bf16 %v1374, %v1373
      %v1467 = vpack.c.bf16 %v1376, %v1375
      %v1468 = vpack.c.bf16 %v1378, %v1377
      %v1469 = vpack.c.bf16 %v1380, %v1379
      %v1470 = vpack.c.bf16 %v1382, %v1381
      %v1471 = vpack.c.bf16 %v1384, %v1383
      %v1472 = vpack.c.bf16 %v1386, %v1385
      %v1473 = vpack.c.bf16 %v1388, %v1387
      %v1474 = vpack.c.bf16 %v1390, %v1389
      %v1475 = vpack.c.bf16 %v1392, %v1391
      %v1476 = vpack.c.bf16 %v1394, %v1393
      %v1477 = vpack.c.bf16 %v1396, %v1395
      %v1478 = vpack.c.bf16 %v1398, %v1397
      %v1479 = vpack.c.bf16 %v1400, %v1399
      %v1480 = vpack.c.bf16 %v1402, %v1401
      %v1481 = vpack.c.bf16 %v1404, %v1403
      %v1482 = vpack.c.bf16 %v1406, %v1405
      %v1483 = vpack.c.bf16 %v1408, %v1407
      %v1484 = vpack.c.bf16 %v1410, %v1409
      %v1485 = vpack.c.bf16 %v1412, %v1411
      %v1486 = vpack.c.bf16 %v1414, %v1413
      %v1487 = vpack.c.bf16 %v1416, %v1415
      %v1488 = vpack.c.bf16 %v1418, %v1417
      %v1489 = vpack.c.bf16 %v1420, %v1419
      %v1490 = vpack.c.bf16 %v1422, %v1421
      %v1491 = vpack.c.bf16 %v1424, %v1423
      %v1492 = vpack.c.bf16 %v1426, %v1425
      %v1493 = vpack.c.bf16 %v1428, %v1427
      %v1494 = vpack.c.bf16 %v1430, %v1429
      %v1559 = vunpack.c.l.b16 %v1431
      %v1560 = vunpack.c.h.b16 %v1431
      %v1561 = vunpack.c.l.b16 %v1432
      %v1562 = vunpack.c.h.b16 %v1432
      %v1563 = vunpack.c.l.b16 %v1433
      %v1564 = vunpack.c.h.b16 %v1433
      %v1565 = vunpack.c.l.b16 %v1434
      %v1566 = vunpack.c.h.b16 %v1434
      %v1567 = vunpack.c.l.b16 %v1435
      %v1568 = vunpack.c.h.b16 %v1435
      %v1569 = vunpack.c.l.b16 %v1436
      %v1570 = vunpack.c.h.b16 %v1436
      %v1571 = vunpack.c.l.b16 %v1437
      %v1572 = vunpack.c.h.b16 %v1437
      %v1573 = vunpack.c.l.b16 %v1438
      %v1574 = vunpack.c.h.b16 %v1438
      %v1575 = vunpack.c.l.b16 %v1439
      %v1576 = vunpack.c.h.b16 %v1439
      %v1577 = vunpack.c.l.b16 %v1440
      %v1578 = vunpack.c.h.b16 %v1440
      %v1579 = vunpack.c.l.b16 %v1441
      %v1580 = vunpack.c.h.b16 %v1441
      %v1581 = vunpack.c.l.b16 %v1442
      %v1582 = vunpack.c.h.b16 %v1442
      %v1583 = vunpack.c.l.b16 %v1443
      %v1584 = vunpack.c.h.b16 %v1443
      %v1585 = vunpack.c.l.b16 %v1444
      %v1586 = vunpack.c.h.b16 %v1444
      %v1587 = vunpack.c.l.b16 %v1445
      %v1588 = vunpack.c.h.b16 %v1445
      %v1589 = vunpack.c.l.b16 %v1446
      %v1590 = vunpack.c.h.b16 %v1446
      %v1591 = vunpack.c.l.b16 %v1447
      %v1592 = vunpack.c.h.b16 %v1447
      %v1593 = vunpack.c.l.b16 %v1448
      %v1594 = vunpack.c.h.b16 %v1448
      %v1595 = vunpack.c.l.b16 %v1449
      %v1596 = vunpack.c.h.b16 %v1449
      %v1597 = vunpack.c.l.b16 %v1450
      %v1598 = vunpack.c.h.b16 %v1450
      %v1599 = vunpack.c.l.b16 %v1451
      %v1600 = vunpack.c.h.b16 %v1451
      %v1601 = vunpack.c.l.b16 %v1452
      %v1602 = vunpack.c.h.b16 %v1452
      %v1603 = vunpack.c.l.b16 %v1453
      %v1604 = vunpack.c.h.b16 %v1453
      %v1605 = vunpack.c.l.b16 %v1454
      %v1606 = vunpack.c.h.b16 %v1454
      %v1607 = vunpack.c.l.b16 %v1455
      %v1608 = vunpack.c.h.b16 %v1455
      %v1609 = vunpack.c.l.b16 %v1456
      %v1610 = vunpack.c.h.b16 %v1456
      %v1611 = vunpack.c.l.b16 %v1457
      %v1612 = vunpack.c.h.b16 %v1457
      %v1613 = vunpack.c.l.b16 %v1458
      %v1614 = vunpack.c.h.b16 %v1458
      %v1615 = vunpack.c.l.b16 %v1459
      %v1616 = vunpack.c.h.b16 %v1459
      %v1617 = vunpack.c.l.b16 %v1460
      %v1618 = vunpack.c.h.b16 %v1460
      %v1619 = vunpack.c.l.b16 %v1461
      %v1620 = vunpack.c.h.b16 %v1461
      %v1621 = vunpack.c.l.b16 %v1462
      %v1622 = vunpack.c.h.b16 %v1462
      %v1623 = vunpack.c.l.b16 %v1463
      %v1624 = vunpack.c.h.b16 %v1463
      %v1625 = vunpack.c.l.b16 %v1464
      %v1626 = vunpack.c.h.b16 %v1464
      %v1627 = vunpack.c.l.b16 %v1465
      %v1628 = vunpack.c.h.b16 %v1465
      %v1629 = vunpack.c.l.b16 %v1466
      %v1630 = vunpack.c.h.b16 %v1466
      %v1631 = vunpack.c.l.b16 %v1467
      %v1632 = vunpack.c.h.b16 %v1467
      %v1633 = vunpack.c.l.b16 %v1468
      %v1634 = vunpack.c.h.b16 %v1468
      %v1635 = vunpack.c.l.b16 %v1469
      %v1636 = vunpack.c.h.b16 %v1469
      %v1637 = vunpack.c.l.b16 %v1470
      %v1638 = vunpack.c.h.b16 %v1470
      %v1639 = vunpack.c.l.b16 %v1471
      %v1640 = vunpack.c.h.b16 %v1471
      %v1641 = vunpack.c.l.b16 %v1472
      %v1642 = vunpack.c.h.b16 %v1472
      %v1643 = vunpack.c.l.b16 %v1473
      %v1644 = vunpack.c.h.b16 %v1473
      %v1645 = vunpack.c.l.b16 %v1474
      %v1646 = vunpack.c.h.b16 %v1474
      %v1647 = vunpack.c.l.b16 %v1475
      %v1648 = vunpack.c.h.b16 %v1475
      %v1649 = vunpack.c.l.b16 %v1476
      %v1650 = vunpack.c.h.b16 %v1476
      %v1651 = vunpack.c.l.b16 %v1477
      %v1652 = vunpack.c.h.b16 %v1477
      %v1653 = vunpack.c.l.b16 %v1478
      %v1654 = vunpack.c.h.b16 %v1478
      %v1655 = vunpack.c.l.b16 %v1479
      %v1656 = vunpack.c.h.b16 %v1479
      %v1657 = vunpack.c.l.b16 %v1480
      %v1658 = vunpack.c.h.b16 %v1480
      %v1659 = vunpack.c.l.b16 %v1481
      %v1660 = vunpack.c.h.b16 %v1481
      %v1661 = vunpack.c.l.b16 %v1482
      %v1662 = vunpack.c.h.b16 %v1482
      %v1663 = vunpack.c.l.b16 %v1483
      %v1664 = vunpack.c.h.b16 %v1483
      %v1665 = vunpack.c.l.b16 %v1484
      %v1666 = vunpack.c.h.b16 %v1484
      %v1667 = vunpack.c.l.b16 %v1485
      %v1668 = vunpack.c.h.b16 %v1485
      %v1669 = vunpack.c.l.b16 %v1486
      %v1670 = vunpack.c.h.b16 %v1486
      %v1671 = vunpack.c.l.b16 %v1487
      %v1672 = vunpack.c.h.b16 %v1487
      %v1673 = vunpack.c.l.b16 %v1488
      %v1674 = vunpack.c.h.b16 %v1488
      %v1675 = vunpack.c.l.b16 %v1489
      %v1676 = vunpack.c.h.b16 %v1489
      %v1677 = vunpack.c.l.b16 %v1490
      %v1678 = vunpack.c.h.b16 %v1490
      %v1679 = vunpack.c.l.b16 %v1491
      %v1680 = vunpack.c.h.b16 %v1491
      %v1681 = vunpack.c.l.b16 %v1492
      %v1682 = vunpack.c.h.b16 %v1492
      %v1683 = vunpack.c.l.b16 %v1493
      %v1684 = vunpack.c.h.b16 %v1493
      %v1685 = vunpack.c.l.b16 %v1494
      %v1686 = vunpack.c.h.b16 %v1494
      %v1687 = vpack.c.b16 %v1559, %v1559
      %v1688 = vpack.c.b16 %v1560, %v1560
      %v1689 = vpack.c.b16 %v1561, %v1561
      %v1690 = vpack.c.b16 %v1562, %v1562
      %v1691 = vpack.c.b16 %v1563, %v1563
      %v1692 = vpack.c.b16 %v1564, %v1564
      %v1693 = vpack.c.b16 %v1565, %v1565
      %v1694 = vpack.c.b16 %v1566, %v1566
      %v1695 = vpack.c.b16 %v1567, %v1567
      %v1696 = vpack.c.b16 %v1568, %v1568
      %v1697 = vpack.c.b16 %v1569, %v1569
      %v1698 = vpack.c.b16 %v1570, %v1570
      %v1699 = vpack.c.b16 %v1571, %v1571
      %v1700 = vpack.c.b16 %v1572, %v1572
      %v1701 = vpack.c.b16 %v1573, %v1573
      %v1702 = vpack.c.b16 %v1574, %v1574
      %v1703 = vpack.c.b16 %v1575, %v1575
      %v1704 = vpack.c.b16 %v1576, %v1576
      %v1705 = vpack.c.b16 %v1577, %v1577
      %v1706 = vpack.c.b16 %v1578, %v1578
      %v1707 = vpack.c.b16 %v1579, %v1579
      %v1708 = vpack.c.b16 %v1580, %v1580
      %v1709 = vpack.c.b16 %v1581, %v1581
      %v1710 = vpack.c.b16 %v1582, %v1582
      %v1711 = vpack.c.b16 %v1583, %v1583
      %v1712 = vpack.c.b16 %v1584, %v1584
      %v1713 = vpack.c.b16 %v1585, %v1585
      %v1714 = vpack.c.b16 %v1586, %v1586
      %v1715 = vpack.c.b16 %v1587, %v1587
      %v1716 = vpack.c.b16 %v1588, %v1588
      %v1717 = vpack.c.b16 %v1589, %v1589
      %v1718 = vpack.c.b16 %v1590, %v1590
      %v1719 = vpack.c.b16 %v1591, %v1591
      %v1720 = vpack.c.b16 %v1592, %v1592
      %v1721 = vpack.c.b16 %v1593, %v1593
      %v1722 = vpack.c.b16 %v1594, %v1594
      %v1723 = vpack.c.b16 %v1595, %v1595
      %v1724 = vpack.c.b16 %v1596, %v1596
      %v1725 = vpack.c.b16 %v1597, %v1597
      %v1726 = vpack.c.b16 %v1598, %v1598
      %v1727 = vpack.c.b16 %v1599, %v1599
      %v1728 = vpack.c.b16 %v1600, %v1600
      %v1729 = vpack.c.b16 %v1601, %v1601
      %v1730 = vpack.c.b16 %v1602, %v1602
      %v1731 = vpack.c.b16 %v1603, %v1603
      %v1732 = vpack.c.b16 %v1604, %v1604
      %v1733 = vpack.c.b16 %v1605, %v1605
      %v1734 = vpack.c.b16 %v1606, %v1606
      %v1735 = vpack.c.b16 %v1607, %v1607
      %v1736 = vpack.c.b16 %v1608, %v1608
      %v1737 = vpack.c.b16 %v1609, %v1609
      %v1738 = vpack.c.b16 %v1610, %v1610
      %v1739 = vpack.c.b16 %v1611, %v1611
      %v1740 = vpack.c.b16 %v1612, %v1612
      %v1741 = vpack.c.b16 %v1613, %v1613
      %v1742 = vpack.c.b16 %v1614, %v1614
      %v1743 = vpack.c.b16 %v1615, %v1615
      %v1744 = vpack.c.b16 %v1616, %v1616
      %v1745 = vpack.c.b16 %v1617, %v1617
      %v1746 = vpack.c.b16 %v1618, %v1618
      %v1747 = vpack.c.b16 %v1619, %v1619
      %v1748 = vpack.c.b16 %v1620, %v1620
      %v1749 = vpack.c.b16 %v1621, %v1621
      %v1750 = vpack.c.b16 %v1622, %v1622
      %v1751 = vpack.c.b16 %v1623, %v1623
      %v1752 = vpack.c.b16 %v1624, %v1624
      %v1753 = vpack.c.b16 %v1625, %v1625
      %v1754 = vpack.c.b16 %v1626, %v1626
      %v1755 = vpack.c.b16 %v1627, %v1627
      %v1756 = vpack.c.b16 %v1628, %v1628
      %v1757 = vpack.c.b16 %v1629, %v1629
      %v1758 = vpack.c.b16 %v1630, %v1630
      %v1759 = vpack.c.b16 %v1631, %v1631
      %v1760 = vpack.c.b16 %v1632, %v1632
      %v1761 = vpack.c.b16 %v1633, %v1633
      %v1762 = vpack.c.b16 %v1634, %v1634
      %v1763 = vpack.c.b16 %v1635, %v1635
      %v1764 = vpack.c.b16 %v1636, %v1636
      %v1765 = vpack.c.b16 %v1637, %v1637
      %v1766 = vpack.c.b16 %v1638, %v1638
      %v1767 = vpack.c.b16 %v1639, %v1639
      %v1768 = vpack.c.b16 %v1640, %v1640
      %v1769 = vpack.c.b16 %v1641, %v1641
      %v1770 = vpack.c.b16 %v1642, %v1642
      %v1771 = vpack.c.b16 %v1643, %v1643
      %v1772 = vpack.c.b16 %v1644, %v1644
      %v1773 = vpack.c.b16 %v1645, %v1645
      %v1774 = vpack.c.b16 %v1646, %v1646
      %v1775 = vpack.c.b16 %v1647, %v1647
      %v1776 = vpack.c.b16 %v1648, %v1648
      %v1777 = vpack.c.b16 %v1649, %v1649
      %v1778 = vpack.c.b16 %v1650, %v1650
      %v1779 = vpack.c.b16 %v1651, %v1651
      %v1780 = vpack.c.b16 %v1652, %v1652
      %v1781 = vpack.c.b16 %v1653, %v1653
      %v1782 = vpack.c.b16 %v1654, %v1654
      %v1783 = vpack.c.b16 %v1655, %v1655
      %v1784 = vpack.c.b16 %v1656, %v1656
      %v1785 = vpack.c.b16 %v1657, %v1657
      %v1786 = vpack.c.b16 %v1658, %v1658
      %v1787 = vpack.c.b16 %v1659, %v1659
      %v1788 = vpack.c.b16 %v1660, %v1660
      %v1789 = vpack.c.b16 %v1661, %v1661
      %v1790 = vpack.c.b16 %v1662, %v1662
      %v1791 = vpack.c.b16 %v1663, %v1663
      %v1792 = vpack.c.b16 %v1664, %v1664
      %v1793 = vpack.c.b16 %v1665, %v1665
      %v1794 = vpack.c.b16 %v1666, %v1666
      %v1795 = vpack.c.b16 %v1667, %v1667
      %v1796 = vpack.c.b16 %v1668, %v1668
      %v1797 = vpack.c.b16 %v1669, %v1669
      %v1798 = vpack.c.b16 %v1670, %v1670
      %v1799 = vpack.c.b16 %v1671, %v1671
      %v1800 = vpack.c.b16 %v1672, %v1672
      %v1801 = vpack.c.b16 %v1673, %v1673
      %v1802 = vpack.c.b16 %v1674, %v1674
      %v1803 = vpack.c.b16 %v1675, %v1675
      %v1804 = vpack.c.b16 %v1676, %v1676
      %v1805 = vpack.c.b16 %v1677, %v1677
      %v1806 = vpack.c.b16 %v1678, %v1678
      %v1807 = vpack.c.b16 %v1679, %v1679
      %v1808 = vpack.c.b16 %v1680, %v1680
      %v1809 = vpack.c.b16 %v1681, %v1681
      %v1810 = vpack.c.b16 %v1682, %v1682
      %v1811 = vpack.c.b16 %v1683, %v1683
      %v1812 = vpack.c.b16 %v1684, %v1684
      %v1813 = vpack.c.b16 %v1685, %v1685
      %v1814 = vpack.c.b16 %v1686, %v1686
      %1943 = vst [vmem:[%s172] sm:$0xf] %v1687
      %1944 = vst [vmem:[%s172 + $0x4] sm:$0xf] %v1688
      %1945 = vst [vmem:[%s172 + $0x8] sm:$0xf] %v1689
      %1946 = vst [vmem:[%s172 + $0xc] sm:$0xf] %v1690
      %1947 = vst [vmem:[%s172 + $0x10] sm:$0xf] %v1691
      %1948 = vst [vmem:[%s172 + $0x14] sm:$0xf] %v1692
      %1949 = vst [vmem:[%s172 + $0x18] sm:$0xf] %v1693
      %1950 = vst [vmem:[%s172 + $0x1c] sm:$0xf] %v1694
      %1951 = vst [vmem:[%s172 + $0x20] sm:$0xf] %v1695
      %1952 = vst [vmem:[%s172 + $0x24] sm:$0xf] %v1696
      %1953 = vst [vmem:[%s172 + $0x28] sm:$0xf] %v1697
      %1954 = vst [vmem:[%s172 + $0x2c] sm:$0xf] %v1698
      %1955 = vst [vmem:[%s172 + $0x30] sm:$0xf] %v1699
      %1956 = vst [vmem:[%s172 + $0x34] sm:$0xf] %v1700
      %1957 = vst [vmem:[%s172 + $0x38] sm:$0xf] %v1701
      %1958 = vst [vmem:[%s172 + $0x3c] sm:$0xf] %v1702
      %1959 = vst [vmem:[%s172 + $0x40] sm:$0xf] %v1703
      %1960 = vst [vmem:[%s172 + $0x44] sm:$0xf] %v1704
      %1961 = vst [vmem:[%s172 + $0x48] sm:$0xf] %v1705
      %1962 = vst [vmem:[%s172 + $0x4c] sm:$0xf] %v1706
      %1963 = vst [vmem:[%s172 + $0x50] sm:$0xf] %v1707
      %1964 = vst [vmem:[%s172 + $0x54] sm:$0xf] %v1708
      %1965 = vst [vmem:[%s172 + $0x58] sm:$0xf] %v1709
      %1966 = vst [vmem:[%s172 + $0x5c] sm:$0xf] %v1710
      %1967 = vst [vmem:[%s172 + $0x60] sm:$0xf] %v1711
      %1968 = vst [vmem:[%s172 + $0x64] sm:$0xf] %v1712
      %1969 = vst [vmem:[%s172 + $0x68] sm:$0xf] %v1713
      %1970 = vst [vmem:[%s172 + $0x6c] sm:$0xf] %v1714
      %1971 = vst [vmem:[%s172 + $0x70] sm:$0xf] %v1715
      %1972 = vst [vmem:[%s172 + $0x74] sm:$0xf] %v1716
      %1973 = vst [vmem:[%s172 + $0x78] sm:$0xf] %v1717
      %1974 = vst [vmem:[%s172 + $0x7c] sm:$0xf] %v1718
      %1975 = vst [vmem:[%s172 + $0x80] sm:$0xf] %v1719
      %1976 = vst [vmem:[%s172 + $0x84] sm:$0xf] %v1720
      %1977 = vst [vmem:[%s172 + $0x88] sm:$0xf] %v1721
      %1978 = vst [vmem:[%s172 + $0x8c] sm:$0xf] %v1722
      %1979 = vst [vmem:[%s172 + $0x90] sm:$0xf] %v1723
      %1980 = vst [vmem:[%s172 + $0x94] sm:$0xf] %v1724
      %1981 = vst [vmem:[%s172 + $0x98] sm:$0xf] %v1725
      %1982 = vst [vmem:[%s172 + $0x9c] sm:$0xf] %v1726
      %1983 = vst [vmem:[%s172 + $0xa0] sm:$0xf] %v1727
      %1984 = vst [vmem:[%s172 + $0xa4] sm:$0xf] %v1728
      %1985 = vst [vmem:[%s172 + $0xa8] sm:$0xf] %v1729
      %1986 = vst [vmem:[%s172 + $0xac] sm:$0xf] %v1730
      %1987 = vst [vmem:[%s172 + $0xb0] sm:$0xf] %v1731
      %1988 = vst [vmem:[%s172 + $0xb4] sm:$0xf] %v1732
      %1989 = vst [vmem:[%s172 + $0xb8] sm:$0xf] %v1733
      %1990 = vst [vmem:[%s172 + $0xbc] sm:$0xf] %v1734
      %1991 = vst [vmem:[%s172 + $0xc0] sm:$0xf] %v1735
      %1992 = vst [vmem:[%s172 + $0xc4] sm:$0xf] %v1736
      %1993 = vst [vmem:[%s172 + $0xc8] sm:$0xf] %v1737
      %1994 = vst [vmem:[%s172 + $0xcc] sm:$0xf] %v1738
      %1995 = vst [vmem:[%s172 + $0xd0] sm:$0xf] %v1739
      %1996 = vst [vmem:[%s172 + $0xd4] sm:$0xf] %v1740
      %1997 = vst [vmem:[%s172 + $0xd8] sm:$0xf] %v1741
      %1998 = vst [vmem:[%s172 + $0xdc] sm:$0xf] %v1742
      %1999 = vst [vmem:[%s172 + $0xe0] sm:$0xf] %v1743
      %2000 = vst [vmem:[%s172 + $0xe4] sm:$0xf] %v1744
      %2001 = vst [vmem:[%s172 + $0xe8] sm:$0xf] %v1745
      %2002 = vst [vmem:[%s172 + $0xec] sm:$0xf] %v1746
      %2003 = vst [vmem:[%s172 + $0xf0] sm:$0xf] %v1747
      %2004 = vst [vmem:[%s172 + $0xf4] sm:$0xf] %v1748
      %2005 = vst [vmem:[%s172 + $0xf8] sm:$0xf] %v1749
      %2006 = vst [vmem:[%s172 + $0xfc] sm:$0xf] %v1750
      %2007 = vst [vmem:[%s172 + $0x100] sm:$0xf] %v1751
      %2008 = vst [vmem:[%s172 + $0x104] sm:$0xf] %v1752
      %2009 = vst [vmem:[%s172 + $0x108] sm:$0xf] %v1753
      %2010 = vst [vmem:[%s172 + $0x10c] sm:$0xf] %v1754
      %2011 = vst [vmem:[%s172 + $0x110] sm:$0xf] %v1755
      %2012 = vst [vmem:[%s172 + $0x114] sm:$0xf] %v1756
      %2013 = vst [vmem:[%s172 + $0x118] sm:$0xf] %v1757
      %2014 = vst [vmem:[%s172 + $0x11c] sm:$0xf] %v1758
      %2015 = vst [vmem:[%s172 + $0x120] sm:$0xf] %v1759
      %2016 = vst [vmem:[%s172 + $0x124] sm:$0xf] %v1760
      %2017 = vst [vmem:[%s172 + $0x128] sm:$0xf] %v1761
      %2018 = vst [vmem:[%s172 + $0x12c] sm:$0xf] %v1762
      %2019 = vst [vmem:[%s172 + $0x130] sm:$0xf] %v1763
      %2020 = vst [vmem:[%s172 + $0x134] sm:$0xf] %v1764
      %2021 = vst [vmem:[%s172 + $0x138] sm:$0xf] %v1765
      %2022 = vst [vmem:[%s172 + $0x13c] sm:$0xf] %v1766
      %2023 = vst [vmem:[%s172 + $0x140] sm:$0xf] %v1767
      %2024 = vst [vmem:[%s172 + $0x144] sm:$0xf] %v1768
      %2025 = vst [vmem:[%s172 + $0x148] sm:$0xf] %v1769
      %2026 = vst [vmem:[%s172 + $0x14c] sm:$0xf] %v1770
      %2027 = vst [vmem:[%s172 + $0x150] sm:$0xf] %v1771
      %2028 = vst [vmem:[%s172 + $0x154] sm:$0xf] %v1772
      %2029 = vst [vmem:[%s172 + $0x158] sm:$0xf] %v1773
      %2030 = vst [vmem:[%s172 + $0x15c] sm:$0xf] %v1774
      %2031 = vst [vmem:[%s172 + $0x160] sm:$0xf] %v1775
      %2032 = vst [vmem:[%s172 + $0x164] sm:$0xf] %v1776
      %2033 = vst [vmem:[%s172 + $0x168] sm:$0xf] %v1777
      %2034 = vst [vmem:[%s172 + $0x16c] sm:$0xf] %v1778
      %2035 = vst [vmem:[%s172 + $0x170] sm:$0xf] %v1779
      %2036 = vst [vmem:[%s172 + $0x174] sm:$0xf] %v1780
      %2037 = vst [vmem:[%s172 + $0x178] sm:$0xf] %v1781
      %2038 = vst [vmem:[%s172 + $0x17c] sm:$0xf] %v1782
      %2039 = vst [vmem:[%s172 + $0x180] sm:$0xf] %v1783
      %2040 = vst [vmem:[%s172 + $0x184] sm:$0xf] %v1784
      %2041 = vst [vmem:[%s172 + $0x188] sm:$0xf] %v1785
      %2042 = vst [vmem:[%s172 + $0x18c] sm:$0xf] %v1786
      %2043 = vst [vmem:[%s172 + $0x190] sm:$0xf] %v1787
      %2044 = vst [vmem:[%s172 + $0x194] sm:$0xf] %v1788
      %2045 = vst [vmem:[%s172 + $0x198] sm:$0xf] %v1789
      %2046 = vst [vmem:[%s172 + $0x19c] sm:$0xf] %v1790
      %2047 = vst [vmem:[%s172 + $0x1a0] sm:$0xf] %v1791
      %2048 = vst [vmem:[%s172 + $0x1a4] sm:$0xf] %v1792
      %2049 = vst [vmem:[%s172 + $0x1a8] sm:$0xf] %v1793
      %2050 = vst [vmem:[%s172 + $0x1ac] sm:$0xf] %v1794
      %2051 = vst [vmem:[%s172 + $0x1b0] sm:$0xf] %v1795
      %2052 = vst [vmem:[%s172 + $0x1b4] sm:$0xf] %v1796
      %2053 = vst [vmem:[%s172 + $0x1b8] sm:$0xf] %v1797
      %2054 = vst [vmem:[%s172 + $0x1bc] sm:$0xf] %v1798
      %2055 = vst [vmem:[%s172 + $0x1c0] sm:$0xf] %v1799
      %2056 = vst [vmem:[%s172 + $0x1c4] sm:$0xf] %v1800
      %2057 = vst [vmem:[%s172 + $0x1c8] sm:$0xf] %v1801
      %2058 = vst [vmem:[%s172 + $0x1cc] sm:$0xf] %v1802
      %2059 = vst [vmem:[%s172 + $0x1d0] sm:$0xf] %v1803
      %2060 = vst [vmem:[%s172 + $0x1d4] sm:$0xf] %v1804
      %2061 = vst [vmem:[%s172 + $0x1d8] sm:$0xf] %v1805
      %2062 = vst [vmem:[%s172 + $0x1dc] sm:$0xf] %v1806
      %2063 = vst [vmem:[%s172 + $0x1e0] sm:$0xf] %v1807
      %2064 = vst [vmem:[%s172 + $0x1e4] sm:$0xf] %v1808
      %2065 = vst [vmem:[%s172 + $0x1e8] sm:$0xf] %v1809
      %2066 = vst [vmem:[%s172 + $0x1ec] sm:$0xf] %v1810
      %2067 = vst [vmem:[%s172 + $0x1f0] sm:$0xf] %v1811
      %2068 = vst [vmem:[%s172 + $0x1f4] sm:$0xf] %v1812
      %2069 = vst [vmem:[%s172 + $0x1f8] sm:$0xf] %v1813
      %2070 = vst [vmem:[%s172 + $0x1fc] sm:$0xf] %v1814
      %s2071 = smul.u32 128, %s14
      %p2072 = scmp.lt.s32.totalorder %s2071, 255
      %s2073 = scalar_select %p2072, %s2071, 255
      %s2074 = smul.addr %s2073, 4
      %s2075 = scalar_lea.vmem %s3, %s2074
      // Predicated region
      $region33: #{deepgcn_slic_v2_forward.7} parent=31 // pred_check
        %p2076 = pneg %p100
      $region34: #{deepgcn_slic_v2_forward.7} parent=31 // pred_check_branch
        %2078 = sbr.rel (%p2076) target = $region36
      $region35: #{deepgcn_slic_v2_forward.7} parent=31 // pred_region
        %s2079 = smul.u32 128, %s14
      $region36: #{deepgcn_slic_v2_forward.7} parent=31 // pred_fallthru
        _
    $region32: #{deepgcn_slic_v2_forward.7} parent=5 // pred_fallthru
      _
    %p2080 = scmp.le.s32.totalorder 2, %s9
    // Predicated region
    $region37: #{deepgcn_slic_v2_forward.7} parent=5 // pred_check
      %p2081 = pneg %p2080
    $region38: #{deepgcn_slic_v2_forward.7} parent=5 // pred_check_branch
      %2083 = sbr.rel (%p2081) target = $region40
    $region39: #{deepgcn_slic_v2_forward.7} parent=5 // pred_region
      %s2084 = ssub.s32 %s9, 2
      // Predicated region
      $region41: #{deepgcn_slic_v2_forward.7} parent=39 // pred_check
        %p2085 = pneg %p106
      $region42: #{deepgcn_slic_v2_forward.7} parent=39 // pred_check_branch
        %2087 = sbr.rel (%p2085) target = $region44
      $region43: #{deepgcn_slic_v2_forward.7} parent=39 // pred_region
        %s2088 = smul.u32 128, %s15
        %p2089 = scmp.lt.s32.totalorder %s2088, 255
        %s2090 = scalar_select %p2089, %s2088, 255
        %s2091 = smul.addr %s2090, 4
        %s2092 = scalar_lea.vmem %s3, %s2091
      $region44: #{deepgcn_slic_v2_forward.7} parent=39 // pred_fallthru
        _
    $region40: #{deepgcn_slic_v2_forward.7} parent=5 // pred_fallthru
      _
  $region6: #{deepgcn_slic_v2_forward.7} parent=0 // loop_footer
    %s13 = sadd.s32 1, %s9
  $region7: #{deepgcn_slic_v2_forward.7} parent=0 // loop_footer_branch
    %8 = sbr.rel target = $region3
  $region8: #{deepgcn_slic_v2_forward.7} parent=0 // loop_exit
    _

// kernel: deepgcn_slic_v2_forward.8
$region0: #{deepgcn_slic_v2_forward.8}
  #allocation0 [shape = 'u32[]', space=smem, size = 0x4, offset = 0x4, fixed_abs, tag = 'smem constant byte address 0x4 - core index']
  #allocation1 [shape = 'u32[144,128]{1,0:T(1,128)}', space=vmem, size = 0x12000, scoped, tag = 'internal scratch']
  %s0 = inlined_call_operand.vmem [shape: bf16[512,1152], index: 0, kind: input, shape index: {}]
  %s1 = inlined_call_operand.vmem [shape: bf16[1152,128], index: 1, kind: input, shape index: {}]
  %s2 = inlined_call_operand.vmem [shape: f32[1,128], index: 2, kind: input, shape index: {}]
  %s3 = inlined_call_operand.vmem [shape: bf16[512,128], index: 3, kind: output, shape index: {}]
  %s4 = sld [smem:[#allocation0]]
  $region45: #{deepgcn_slic_v2_forward.8} parent=0
    _
  %s6 = ssub.s32 1, %s4
  %s7 = scalar_select 0, %s6, %s4
  loop: start=0, step=1, limit=4
  $region2: #{deepgcn_slic_v2_forward.8} parent=0 // loop_pre_header
    _
  $region3: #{deepgcn_slic_v2_forward.8} parent=0 // loop_header
    %s9 = sphi 0, %s13
    %p10 = scmp.ge.s32.totalorder %s9, 4
    %s19 = sphi 0, %s21
    %s22 = sphi 0, %s19
    %s23 = sphi 0, %s22
    %s39 = sphi 0, %s23
    %s43 = sphi 0, %s43
    %s45 = sphi 0, %s43
    %s46 = sphi 0, %s45
    %s60 = sphi 0, %s46
    %s64 = sphi 0, %s64
    %s66 = sphi 0, %s64
    %s67 = sphi 0, %s66
    %s81 = sphi 0, %s67
    %s87 = sphi 0, %s89
    %s90 = sphi 0, %s87
    %s91 = sphi 0, %s90
    %s107 = sphi 0, %s91
  $region4: #{deepgcn_slic_v2_forward.8} parent=0 // loop_header_branch
    %12 = sbr.rel (%p10) target = $region8
  $region5: #{deepgcn_slic_v2_forward.8} parent=0 // loop_body
    %s14 = ssub.s32 %s9, 1
    %s15 = ssub.s32 %s9, 2
    %s16 = sadd.s32 %s9, 1
    %s17 = ssub.s32 %s9, %s16
    %p18 = scmp.eq.s32.totalorder %s17, 0
    %s20 = sadd.s32 %s19, 1
    %s21 = scalar_select %p18, %s19, %s20
    %p24 = pneg %p18
    %p25 = scmp.eq.s32.totalorder %s9, 1
    %p26 = por %p24, %p25
    %p27 = scmp.ne.s32.totalorder %s19, %s22
    %p28 = scmp.eq.s32.totalorder %s9, 0
    %p29 = por %p27, %p28
    %p30 = scmp.ne.s32.totalorder %s19, %s22
    %p31 = scmp.eq.s32.totalorder %s14, 1
    %p32 = por %p30, %p31
    %p33 = scmp.ne.s32.totalorder %s22, %s23
    %p34 = scmp.eq.s32.totalorder %s14, 0
    %p35 = por %p33, %p34
    %p36 = scmp.ne.s32.totalorder %s22, %s23
    %p37 = scmp.eq.s32.totalorder %s15, 1
    %p38 = por %p36, %p37
    %p40 = scmp.ne.s32.totalorder %s23, %s39
    %p41 = scmp.eq.s32.totalorder %s15, 0
    %p42 = por %p40, %p41
    %s44 = sadd.s32 %s43, 1
    %p47 = scmp.eq.s32.totalorder %s9, 1
    %p48 = scmp.ne.s32.totalorder %s43, %s45
    %p49 = scmp.eq.s32.totalorder %s9, 0
    %p50 = por %p48, %p49
    %p51 = scmp.ne.s32.totalorder %s43, %s45
    %p52 = scmp.eq.s32.totalorder %s14, 1
    %p53 = por %p51, %p52
    %p54 = scmp.ne.s32.totalorder %s45, %s46
    %p55 = scmp.eq.s32.totalorder %s14, 0
    %p56 = por %p54, %p55
    %p57 = scmp.ne.s32.totalorder %s45, %s46
    %p58 = scmp.eq.s32.totalorder %s15, 1
    %p59 = por %p57, %p58
    %p61 = scmp.ne.s32.totalorder %s46, %s60
    %p62 = scmp.eq.s32.totalorder %s15, 0
    %p63 = por %p61, %p62
    %s65 = sadd.s32 %s64, 1
    %p68 = scmp.eq.s32.totalorder %s9, 1
    %p69 = scmp.ne.s32.totalorder %s64, %s66
    %p70 = scmp.eq.s32.totalorder %s9, 0
    %p71 = por %p69, %p70
    %p72 = scmp.ne.s32.totalorder %s64, %s66
    %p73 = scmp.eq.s32.totalorder %s14, 1
    %p74 = por %p72, %p73
    %p75 = scmp.ne.s32.totalorder %s66, %s67
    %p76 = scmp.eq.s32.totalorder %s14, 0
    %p77 = por %p75, %p76
    %p78 = scmp.ne.s32.totalorder %s66, %s67
    %p79 = scmp.eq.s32.totalorder %s15, 1
    %p80 = por %p78, %p79
    %p82 = scmp.ne.s32.totalorder %s67, %s81
    %p83 = scmp.eq.s32.totalorder %s15, 0
    %p84 = por %p82, %p83
    %s85 = ssub.s32 %s9, %s16
    %p86 = scmp.eq.s32.totalorder %s85, 0
    %s88 = sadd.s32 %s87, 1
    %s89 = scalar_select %p86, %s87, %s88
    %p92 = pneg %p86
    %p93 = scmp.eq.s32.totalorder %s9, 1
    %p94 = por %p92, %p93
    %p95 = scmp.ne.s32.totalorder %s87, %s90
    %p96 = scmp.eq.s32.totalorder %s9, 0
    %p97 = por %p95, %p96
    %p98 = scmp.ne.s32.totalorder %s87, %s90
    %p99 = scmp.eq.s32.totalorder %s14, 1
    %p100 = por %p98, %p99
    %p101 = scmp.ne.s32.totalorder %s90, %s91
    %p102 = scmp.eq.s32.totalorder %s14, 0
    %p103 = por %p101, %p102
    %p104 = scmp.ne.s32.totalorder %s90, %s91
    %p105 = scmp.eq.s32.totalorder %s15, 1
    %p106 = por %p104, %p105
    %p108 = scmp.ne.s32.totalorder %s91, %s107
    %p109 = scmp.eq.s32.totalorder %s15, 0
    %p110 = por %p108, %p109
    %p111 = scmp.le.s32.totalorder 1, %s9
    %p112 = scmp.lt.s32.totalorder %s9, 3
    %p113 = pnand %p111, %p112
    %p114 = pneg %p113
    // Predicated region
    $region9: #{deepgcn_slic_v2_forward.8} parent=5 // pred_check
      _
    $region10: #{deepgcn_slic_v2_forward.8} parent=5 // pred_check_branch
      %116 = sbr.rel (%p113) target = $region12
    $region11: #{deepgcn_slic_v2_forward.8} parent=5 // pred_region
      %s117 = ssub.s32 %s9, 1
      // Predicated region
      $region13: #{deepgcn_slic_v2_forward.8} parent=11 // pred_check
        %p118 = pneg %p56
      $region14: #{deepgcn_slic_v2_forward.8} parent=11 // pred_check_branch
        %120 = sbr.rel (%p118) target = $region16
      $region15: #{deepgcn_slic_v2_forward.8} parent=11 // pred_region
        _
      $region16: #{deepgcn_slic_v2_forward.8} parent=11 // pred_fallthru
        _
      // Predicated region
      $region17: #{deepgcn_slic_v2_forward.8} parent=11 // pred_check
        %p121 = pneg %p77
      $region18: #{deepgcn_slic_v2_forward.8} parent=11 // pred_check_branch
        %123 = sbr.rel (%p121) target = $region20
      $region19: #{deepgcn_slic_v2_forward.8} parent=11 // pred_region
        _
      $region20: #{deepgcn_slic_v2_forward.8} parent=11 // pred_fallthru
        _
    $region12: #{deepgcn_slic_v2_forward.8} parent=5 // pred_fallthru
      _
    %p124 = scmp.lt.s32.totalorder %s9, 2
    // Predicated region
    $region21: #{deepgcn_slic_v2_forward.8} parent=5 // pred_check
      %p125 = pneg %p124
    $region22: #{deepgcn_slic_v2_forward.8} parent=5 // pred_check_branch
      %127 = sbr.rel (%p125) target = $region24
    $region23: #{deepgcn_slic_v2_forward.8} parent=5 // pred_region
      // Predicated region
      $region25: #{deepgcn_slic_v2_forward.8} parent=23 // pred_check
        %p128 = pneg %p29
      $region26: #{deepgcn_slic_v2_forward.8} parent=23 // pred_check_branch
        %130 = sbr.rel (%p128) target = $region28
      $region27: #{deepgcn_slic_v2_forward.8} parent=23 // pred_region
        %s131 = smul.u32 32, %s9
        %p132 = scmp.lt.s32.totalorder %s131, 63
        %s133 = scalar_select %p132, %s131, 63
        %s134 = smul.addr %s133, 9
        %s135 = smul.addr %s134, 4
        %s136 = scalar_lea.vmem %s0, %s135
        %s137 = smul.u32 32, %s9
      $region28: #{deepgcn_slic_v2_forward.8} parent=23 // pred_fallthru
        _
    $region24: #{deepgcn_slic_v2_forward.8} parent=5 // pred_fallthru
      _
    %p138 = scmp.le.s32.totalorder 1, %s9
    %p139 = scmp.lt.s32.totalorder %s9, 3
    %p140 = pnand %p138, %p139
    %p141 = pneg %p140
    // Predicated region
    $region29: #{deepgcn_slic_v2_forward.8} parent=5 // pred_check
      _
    $region30: #{deepgcn_slic_v2_forward.8} parent=5 // pred_check_branch
      %143 = sbr.rel (%p140) target = $region32
    $region31: #{deepgcn_slic_v2_forward.8} parent=5 // pred_region
      %s144 = ssub.s32 %s9, 1
      %s145 = smul.u32 32, %s14
      %p146 = scmp.lt.s32.totalorder %s145, 63
      %s147 = scalar_select %p146, %s145, 63
      %s148 = smul.addr %s147, 9
      %s149 = smul.addr %s148, 4
      %s150 = scalar_lea.vmem %s0, %s149
      %p151 = pneg %p35
      %p152 = pneg %p32
      %p153 = pneg %p56
      %p154 = pneg %p53
      %p155 = pneg %p77
      %p156 = pneg %p74
      %p157 = pneg %p103
      %p158 = pneg %p100
      %s159 = smul.u32 32, %s14
      %p160 = scmp.lt.s32.totalorder %s159, 63
      %s161 = scalar_select %p160, %s159, 63
      %s162 = smul.addr %s161, 4
      %s163 = scalar_lea.vmem %s3, %s162
      %s164 = smul.u32 32, %s14
      %p165 = scmp.lt.s32.totalorder %s164, 63
      %s166 = scalar_select %p165, %s164, 63
      %s167 = smul.addr %s166, 9
      %s168 = smul.addr %s167, 4
      %s169 = scalar_lea.vmem %s0, %s168
      %s170 = smul.u32 32, %s14
      %s171 = smul.u32 32, %s14
      %p172 = scmp.lt.s32.totalorder %s171, 63
      %s173 = scalar_select %p172, %s171, 63
      %s174 = smul.addr %s173, 4
      %s175 = scalar_lea.vmem %s3, %s174
      %s176 = smul.u32 32, %s14
      %v178 = vld [vmem:[%s169] sm:$0xff]
      %v179 = vld [vmem:[%s169 + $0x8] sm:$0xff]
      %v180 = vld [vmem:[%s169 + $0x10] sm:$0xff]
      %v181 = vld [vmem:[%s169 + $0x18] sm:$0xff]
      %v182 = vld [vmem:[%s169 + $0x20] sm:$0xf]
      %v183 = vld [vmem:[%s169 + $0x24] sm:$0xff]
      %v184 = vld [vmem:[%s169 + $0x2c] sm:$0xff]
      %v185 = vld [vmem:[%s169 + $0x34] sm:$0xff]
      %v186 = vld [vmem:[%s169 + $0x3c] sm:$0xff]
      %v187 = vld [vmem:[%s169 + $0x44] sm:$0xf]
      %v188 = vld [vmem:[%s169 + $0x48] sm:$0xff]
      %v189 = vld [vmem:[%s169 + $0x50] sm:$0xff]
      %v190 = vld [vmem:[%s169 + $0x58] sm:$0xff]
      %v191 = vld [vmem:[%s169 + $0x60] sm:$0xff]
      %v192 = vld [vmem:[%s169 + $0x68] sm:$0xf]
      %v193 = vld [vmem:[%s169 + $0x6c] sm:$0xff]
      %v194 = vld [vmem:[%s169 + $0x74] sm:$0xff]
      %v195 = vld [vmem:[%s169 + $0x7c] sm:$0xff]
      %v196 = vld [vmem:[%s169 + $0x84] sm:$0xff]
      %v197 = vld [vmem:[%s169 + $0x8c] sm:$0xf]
      %v198 = vld [vmem:[%s169 + $0x90] sm:$0xff]
      %v199 = vld [vmem:[%s169 + $0x98] sm:$0xff]
      %v200 = vld [vmem:[%s169 + $0xa0] sm:$0xff]
      %v201 = vld [vmem:[%s169 + $0xa8] sm:$0xff]
      %v202 = vld [vmem:[%s169 + $0xb0] sm:$0xf]
      %v203 = vld [vmem:[%s169 + $0xb4] sm:$0xff]
      %v204 = vld [vmem:[%s169 + $0xbc] sm:$0xff]
      %v205 = vld [vmem:[%s169 + $0xc4] sm:$0xff]
      %v206 = vld [vmem:[%s169 + $0xcc] sm:$0xff]
      %v207 = vld [vmem:[%s169 + $0xd4] sm:$0xf]
      %v208 = vld [vmem:[%s169 + $0xd8] sm:$0xff]
      %v209 = vld [vmem:[%s169 + $0xe0] sm:$0xff]
      %v210 = vld [vmem:[%s169 + $0xe8] sm:$0xff]
      %v211 = vld [vmem:[%s169 + $0xf0] sm:$0xff]
      %v212 = vld [vmem:[%s169 + $0xf8] sm:$0xf]
      %v213 = vld [vmem:[%s169 + $0xfc] sm:$0xff]
      %v214 = vld [vmem:[%s169 + $0x104] sm:$0xff]
      %v215 = vld [vmem:[%s169 + $0x10c] sm:$0xff]
      %v216 = vld [vmem:[%s169 + $0x114] sm:$0xff]
      %v217 = vld [vmem:[%s169 + $0x11c] sm:$0xf]
      %v218 = vld [vmem:[%s169 + $0x120] sm:$0xff]
      %v219 = vld [vmem:[%s169 + $0x128] sm:$0xff]
      %v220 = vld [vmem:[%s169 + $0x130] sm:$0xff]
      %v221 = vld [vmem:[%s169 + $0x138] sm:$0xff]
      %v222 = vld [vmem:[%s169 + $0x140] sm:$0xf]
      %v223 = vld [vmem:[%s169 + $0x144] sm:$0xff]
      %v224 = vld [vmem:[%s169 + $0x14c] sm:$0xff]
      %v225 = vld [vmem:[%s169 + $0x154] sm:$0xff]
      %v226 = vld [vmem:[%s169 + $0x15c] sm:$0xff]
      %v227 = vld [vmem:[%s169 + $0x164] sm:$0xf]
      %v228 = vld [vmem:[%s169 + $0x168] sm:$0xff]
      %v229 = vld [vmem:[%s169 + $0x170] sm:$0xff]
      %v230 = vld [vmem:[%s169 + $0x178] sm:$0xff]
      %v231 = vld [vmem:[%s169 + $0x180] sm:$0xff]
      %v232 = vld [vmem:[%s169 + $0x188] sm:$0xf]
      %v233 = vld [vmem:[%s169 + $0x18c] sm:$0xff]
      %v234 = vld [vmem:[%s169 + $0x194] sm:$0xff]
      %v235 = vld [vmem:[%s169 + $0x19c] sm:$0xff]
      %v236 = vld [vmem:[%s169 + $0x1a4] sm:$0xff]
      %v237 = vld [vmem:[%s169 + $0x1ac] sm:$0xf]
      %v238 = vld [vmem:[%s169 + $0x1b0] sm:$0xff]
      %v239 = vld [vmem:[%s169 + $0x1b8] sm:$0xff]
      %v240 = vld [vmem:[%s169 + $0x1c0] sm:$0xff]
      %v241 = vld [vmem:[%s169 + $0x1c8] sm:$0xff]
      %v242 = vld [vmem:[%s169 + $0x1d0] sm:$0xf]
      %v243 = vld [vmem:[%s169 + $0x1d4] sm:$0xff]
      %v244 = vld [vmem:[%s169 + $0x1dc] sm:$0xff]
      %v245 = vld [vmem:[%s169 + $0x1e4] sm:$0xff]
      %v246 = vld [vmem:[%s169 + $0x1ec] sm:$0xff]
      %v247 = vld [vmem:[%s169 + $0x1f4] sm:$0xf]
      %v248 = vld [vmem:[%s169 + $0x1f8] sm:$0xff]
      %v249 = vld [vmem:[%s169 + $0x200] sm:$0xff]
      %v250 = vld [vmem:[%s169 + $0x208] sm:$0xff]
      %v251 = vld [vmem:[%s169 + $0x210] sm:$0xff]
      %v252 = vld [vmem:[%s169 + $0x218] sm:$0xf]
      %v253 = vld [vmem:[%s169 + $0x21c] sm:$0xff]
      %v254 = vld [vmem:[%s169 + $0x224] sm:$0xff]
      %v255 = vld [vmem:[%s169 + $0x22c] sm:$0xff]
      %v256 = vld [vmem:[%s169 + $0x234] sm:$0xff]
      %v257 = vld [vmem:[%s169 + $0x23c] sm:$0xf]
      %v258 = vld [vmem:[%s169 + $0x240] sm:$0xff]
      %v259 = vld [vmem:[%s169 + $0x248] sm:$0xff]
      %v260 = vld [vmem:[%s169 + $0x250] sm:$0xff]
      %v261 = vld [vmem:[%s169 + $0x258] sm:$0xff]
      %v262 = vld [vmem:[%s169 + $0x260] sm:$0xf]
      %v263 = vld [vmem:[%s169 + $0x264] sm:$0xff]
      %v264 = vld [vmem:[%s169 + $0x26c] sm:$0xff]
      %v265 = vld [vmem:[%s169 + $0x274] sm:$0xff]
      %v266 = vld [vmem:[%s169 + $0x27c] sm:$0xff]
      %v267 = vld [vmem:[%s169 + $0x284] sm:$0xf]
      %v268 = vld [vmem:[%s169 + $0x288] sm:$0xff]
      %v269 = vld [vmem:[%s169 + $0x290] sm:$0xff]
      %v270 = vld [vmem:[%s169 + $0x298] sm:$0xff]
      %v271 = vld [vmem:[%s169 + $0x2a0] sm:$0xff]
      %v272 = vld [vmem:[%s169 + $0x2a8] sm:$0xf]
      %v273 = vld [vmem:[%s169 + $0x2ac] sm:$0xff]
      %v274 = vld [vmem:[%s169 + $0x2b4] sm:$0xff]
      %v275 = vld [vmem:[%s169 + $0x2bc] sm:$0xff]
      %v276 = vld [vmem:[%s169 + $0x2c4] sm:$0xff]
      %v277 = vld [vmem:[%s169 + $0x2cc] sm:$0xf]
      %v278 = vld [vmem:[%s169 + $0x2d0] sm:$0xff]
      %v279 = vld [vmem:[%s169 + $0x2d8] sm:$0xff]
      %v280 = vld [vmem:[%s169 + $0x2e0] sm:$0xff]
      %v281 = vld [vmem:[%s169 + $0x2e8] sm:$0xff]
      %v282 = vld [vmem:[%s169 + $0x2f0] sm:$0xf]
      %v283 = vld [vmem:[%s169 + $0x2f4] sm:$0xff]
      %v284 = vld [vmem:[%s169 + $0x2fc] sm:$0xff]
      %v285 = vld [vmem:[%s169 + $0x304] sm:$0xff]
      %v286 = vld [vmem:[%s169 + $0x30c] sm:$0xff]
      %v287 = vld [vmem:[%s169 + $0x314] sm:$0xf]
      %v288 = vld [vmem:[%s169 + $0x318] sm:$0xff]
      %v289 = vld [vmem:[%s169 + $0x320] sm:$0xff]
      %v290 = vld [vmem:[%s169 + $0x328] sm:$0xff]
      %v291 = vld [vmem:[%s169 + $0x330] sm:$0xff]
      %v292 = vld [vmem:[%s169 + $0x338] sm:$0xf]
      %v293 = vld [vmem:[%s169 + $0x33c] sm:$0xff]
      %v294 = vld [vmem:[%s169 + $0x344] sm:$0xff]
      %v295 = vld [vmem:[%s169 + $0x34c] sm:$0xff]
      %v296 = vld [vmem:[%s169 + $0x354] sm:$0xff]
      %v297 = vld [vmem:[%s169 + $0x35c] sm:$0xf]
      %v298 = vld [vmem:[%s169 + $0x360] sm:$0xff]
      %v299 = vld [vmem:[%s169 + $0x368] sm:$0xff]
      %v300 = vld [vmem:[%s169 + $0x370] sm:$0xff]
      %v301 = vld [vmem:[%s169 + $0x378] sm:$0xff]
      %v302 = vld [vmem:[%s169 + $0x380] sm:$0xf]
      %v303 = vld [vmem:[%s169 + $0x384] sm:$0xff]
      %v304 = vld [vmem:[%s169 + $0x38c] sm:$0xff]
      %v305 = vld [vmem:[%s169 + $0x394] sm:$0xff]
      %v306 = vld [vmem:[%s169 + $0x39c] sm:$0xff]
      %v307 = vld [vmem:[%s169 + $0x3a4] sm:$0xf]
      %v308 = vld [vmem:[%s169 + $0x3a8] sm:$0xff]
      %v309 = vld [vmem:[%s169 + $0x3b0] sm:$0xff]
      %v310 = vld [vmem:[%s169 + $0x3b8] sm:$0xff]
      %v311 = vld [vmem:[%s169 + $0x3c0] sm:$0xff]
      %v312 = vld [vmem:[%s169 + $0x3c8] sm:$0xf]
      %v313 = vld [vmem:[%s169 + $0x3cc] sm:$0xff]
      %v314 = vld [vmem:[%s169 + $0x3d4] sm:$0xff]
      %v315 = vld [vmem:[%s169 + $0x3dc] sm:$0xff]
      %v316 = vld [vmem:[%s169 + $0x3e4] sm:$0xff]
      %v317 = vld [vmem:[%s169 + $0x3ec] sm:$0xf]
      %v318 = vld [vmem:[%s169 + $0x3f0] sm:$0xff]
      %v319 = vld [vmem:[%s169 + $0x3f8] sm:$0xff]
      %v320 = vld [vmem:[%s169 + $0x400] sm:$0xff]
      %v321 = vld [vmem:[%s169 + $0x408] sm:$0xff]
      %v322 = vld [vmem:[%s169 + $0x410] sm:$0xf]
      %v323 = vld [vmem:[%s169 + $0x414] sm:$0xff]
      %v324 = vld [vmem:[%s169 + $0x41c] sm:$0xff]
      %v325 = vld [vmem:[%s169 + $0x424] sm:$0xff]
      %v326 = vld [vmem:[%s169 + $0x42c] sm:$0xff]
      %v327 = vld [vmem:[%s169 + $0x434] sm:$0xf]
      %v328 = vld [vmem:[%s169 + $0x438] sm:$0xff]
      %v329 = vld [vmem:[%s169 + $0x440] sm:$0xff]
      %v330 = vld [vmem:[%s169 + $0x448] sm:$0xff]
      %v331 = vld [vmem:[%s169 + $0x450] sm:$0xff]
      %v332 = vld [vmem:[%s169 + $0x458] sm:$0xf]
      %v333 = vld [vmem:[%s169 + $0x45c] sm:$0xff]
      %v334 = vld [vmem:[%s169 + $0x464] sm:$0xff]
      %v335 = vld [vmem:[%s169 + $0x46c] sm:$0xff]
      %v336 = vld [vmem:[%s169 + $0x474] sm:$0xff]
      %v337 = vld [vmem:[%s169 + $0x47c] sm:$0xf]
      %v338 = vld [vmem:[%s1] sm:$0xf]
      %v339 = vld [vmem:[%s1 + $0x4] sm:$0xf]
      %v340 = vld [vmem:[%s1 + $0x8] sm:$0xf]
      %v341 = vld [vmem:[%s1 + $0xc] sm:$0xf]
      %v342 = vld [vmem:[%s1 + $0x10] sm:$0xf]
      %v343 = vld [vmem:[%s1 + $0x14] sm:$0xf]
      %v344 = vld [vmem:[%s1 + $0x18] sm:$0xf]
      %v345 = vld [vmem:[%s1 + $0x1c] sm:$0xf]
      %v346 = vld [vmem:[%s1 + $0x20] sm:$0xf]
      %v347 = vld [vmem:[%s1 + $0x24] sm:$0xf]
      %v348 = vld [vmem:[%s1 + $0x28] sm:$0xf]
      %v349 = vld [vmem:[%s1 + $0x2c] sm:$0xf]
      %v350 = vld [vmem:[%s1 + $0x30] sm:$0xf]
      %v351 = vld [vmem:[%s1 + $0x34] sm:$0xf]
      %v352 = vld [vmem:[%s1 + $0x38] sm:$0xf]
      %v353 = vld [vmem:[%s1 + $0x3c] sm:$0xf]
      %v354 = vld [vmem:[%s1 + $0x40] sm:$0xf]
      %v355 = vld [vmem:[%s1 + $0x44] sm:$0xf]
      %v356 = vld [vmem:[%s1 + $0x48] sm:$0xf]
      %v357 = vld [vmem:[%s1 + $0x4c] sm:$0xf]
      %v358 = vld [vmem:[%s1 + $0x50] sm:$0xf]
      %v359 = vld [vmem:[%s1 + $0x54] sm:$0xf]
      %v360 = vld [vmem:[%s1 + $0x58] sm:$0xf]
      %v361 = vld [vmem:[%s1 + $0x5c] sm:$0xf]
      %v362 = vld [vmem:[%s1 + $0x60] sm:$0xf]
      %v363 = vld [vmem:[%s1 + $0x64] sm:$0xf]
      %v364 = vld [vmem:[%s1 + $0x68] sm:$0xf]
      %v365 = vld [vmem:[%s1 + $0x6c] sm:$0xf]
      %v366 = vld [vmem:[%s1 + $0x70] sm:$0xf]
      %v367 = vld [vmem:[%s1 + $0x74] sm:$0xf]
      %v368 = vld [vmem:[%s1 + $0x78] sm:$0xf]
      %v369 = vld [vmem:[%s1 + $0x7c] sm:$0xf]
      %v370 = vld [vmem:[%s1 + $0x80] sm:$0xf]
      %v371 = vld [vmem:[%s1 + $0x84] sm:$0xf]
      %v372 = vld [vmem:[%s1 + $0x88] sm:$0xf]
      %v373 = vld [vmem:[%s1 + $0x8c] sm:$0xf]
      %v374 = vld [vmem:[%s1 + $0x90] sm:$0xf]
      %v375 = vld [vmem:[%s1 + $0x94] sm:$0xf]
      %v376 = vld [vmem:[%s1 + $0x98] sm:$0xf]
      %v377 = vld [vmem:[%s1 + $0x9c] sm:$0xf]
      %v378 = vld [vmem:[%s1 + $0xa0] sm:$0xf]
      %v379 = vld [vmem:[%s1 + $0xa4] sm:$0xf]
      %v380 = vld [vmem:[%s1 + $0xa8] sm:$0xf]
      %v381 = vld [vmem:[%s1 + $0xac] sm:$0xf]
      %v382 = vld [vmem:[%s1 + $0xb0] sm:$0xf]
      %v383 = vld [vmem:[%s1 + $0xb4] sm:$0xf]
      %v384 = vld [vmem:[%s1 + $0xb8] sm:$0xf]
      %v385 = vld [vmem:[%s1 + $0xbc] sm:$0xf]
      %v386 = vld [vmem:[%s1 + $0xc0] sm:$0xf]
      %v387 = vld [vmem:[%s1 + $0xc4] sm:$0xf]
      %v388 = vld [vmem:[%s1 + $0xc8] sm:$0xf]
      %v389 = vld [vmem:[%s1 + $0xcc] sm:$0xf]
      %v390 = vld [vmem:[%s1 + $0xd0] sm:$0xf]
      %v391 = vld [vmem:[%s1 + $0xd4] sm:$0xf]
      %v392 = vld [vmem:[%s1 + $0xd8] sm:$0xf]
      %v393 = vld [vmem:[%s1 + $0xdc] sm:$0xf]
      %v394 = vld [vmem:[%s1 + $0xe0] sm:$0xf]
      %v395 = vld [vmem:[%s1 + $0xe4] sm:$0xf]
      %v396 = vld [vmem:[%s1 + $0xe8] sm:$0xf]
      %v397 = vld [vmem:[%s1 + $0xec] sm:$0xf]
      %v398 = vld [vmem:[%s1 + $0xf0] sm:$0xf]
      %v399 = vld [vmem:[%s1 + $0xf4] sm:$0xf]
      %v400 = vld [vmem:[%s1 + $0xf8] sm:$0xf]
      %v401 = vld [vmem:[%s1 + $0xfc] sm:$0xf]
      %v402 = vld [vmem:[%s1 + $0x100] sm:$0xf]
      %v403 = vld [vmem:[%s1 + $0x104] sm:$0xf]
      %v404 = vld [vmem:[%s1 + $0x108] sm:$0xf]
      %v405 = vld [vmem:[%s1 + $0x10c] sm:$0xf]
      %v406 = vld [vmem:[%s1 + $0x110] sm:$0xf]
      %v407 = vld [vmem:[%s1 + $0x114] sm:$0xf]
      %v408 = vld [vmem:[%s1 + $0x118] sm:$0xf]
      %v409 = vld [vmem:[%s1 + $0x11c] sm:$0xf]
      %v410 = vld [vmem:[%s1 + $0x120] sm:$0xf]
      %v411 = vld [vmem:[%s1 + $0x124] sm:$0xf]
      %v412 = vld [vmem:[%s1 + $0x128] sm:$0xf]
      %v413 = vld [vmem:[%s1 + $0x12c] sm:$0xf]
      %v414 = vld [vmem:[%s1 + $0x130] sm:$0xf]
      %v415 = vld [vmem:[%s1 + $0x134] sm:$0xf]
      %v416 = vld [vmem:[%s1 + $0x138] sm:$0xf]
      %v417 = vld [vmem:[%s1 + $0x13c] sm:$0xf]
      %v418 = vld [vmem:[%s1 + $0x140] sm:$0xf]
      %v419 = vld [vmem:[%s1 + $0x144] sm:$0xf]
      %v420 = vld [vmem:[%s1 + $0x148] sm:$0xf]
      %v421 = vld [vmem:[%s1 + $0x14c] sm:$0xf]
      %v422 = vld [vmem:[%s1 + $0x150] sm:$0xf]
      %v423 = vld [vmem:[%s1 + $0x154] sm:$0xf]
      %v424 = vld [vmem:[%s1 + $0x158] sm:$0xf]
      %v425 = vld [vmem:[%s1 + $0x15c] sm:$0xf]
      %v426 = vld [vmem:[%s1 + $0x160] sm:$0xf]
      %v427 = vld [vmem:[%s1 + $0x164] sm:$0xf]
      %v428 = vld [vmem:[%s1 + $0x168] sm:$0xf]
      %v429 = vld [vmem:[%s1 + $0x16c] sm:$0xf]
      %v430 = vld [vmem:[%s1 + $0x170] sm:$0xf]
      %v431 = vld [vmem:[%s1 + $0x174] sm:$0xf]
      %v432 = vld [vmem:[%s1 + $0x178] sm:$0xf]
      %v433 = vld [vmem:[%s1 + $0x17c] sm:$0xf]
      %v434 = vld [vmem:[%s1 + $0x180] sm:$0xf]
      %v435 = vld [vmem:[%s1 + $0x184] sm:$0xf]
      %v436 = vld [vmem:[%s1 + $0x188] sm:$0xf]
      %v437 = vld [vmem:[%s1 + $0x18c] sm:$0xf]
      %v438 = vld [vmem:[%s1 + $0x190] sm:$0xf]
      %v439 = vld [vmem:[%s1 + $0x194] sm:$0xf]
      %v440 = vld [vmem:[%s1 + $0x198] sm:$0xf]
      %v441 = vld [vmem:[%s1 + $0x19c] sm:$0xf]
      %v442 = vld [vmem:[%s1 + $0x1a0] sm:$0xf]
      %v443 = vld [vmem:[%s1 + $0x1a4] sm:$0xf]
      %v444 = vld [vmem:[%s1 + $0x1a8] sm:$0xf]
      %v445 = vld [vmem:[%s1 + $0x1ac] sm:$0xf]
      %v446 = vld [vmem:[%s1 + $0x1b0] sm:$0xf]
      %v447 = vld [vmem:[%s1 + $0x1b4] sm:$0xf]
      %v448 = vld [vmem:[%s1 + $0x1b8] sm:$0xf]
      %v449 = vld [vmem:[%s1 + $0x1bc] sm:$0xf]
      %v450 = vld [vmem:[%s1 + $0x1c0] sm:$0xf]
      %v451 = vld [vmem:[%s1 + $0x1c4] sm:$0xf]
      %v452 = vld [vmem:[%s1 + $0x1c8] sm:$0xf]
      %v453 = vld [vmem:[%s1 + $0x1cc] sm:$0xf]
      %v454 = vld [vmem:[%s1 + $0x1d0] sm:$0xf]
      %v455 = vld [vmem:[%s1 + $0x1d4] sm:$0xf]
      %v456 = vld [vmem:[%s1 + $0x1d8] sm:$0xf]
      %v457 = vld [vmem:[%s1 + $0x1dc] sm:$0xf]
      %v458 = vld [vmem:[%s1 + $0x1e0] sm:$0xf]
      %v459 = vld [vmem:[%s1 + $0x1e4] sm:$0xf]
      %v460 = vld [vmem:[%s1 + $0x1e8] sm:$0xf]
      %v461 = vld [vmem:[%s1 + $0x1ec] sm:$0xf]
      %v462 = vld [vmem:[%s1 + $0x1f0] sm:$0xf]
      %v463 = vld [vmem:[%s1 + $0x1f4] sm:$0xf]
      %v464 = vld [vmem:[%s1 + $0x1f8] sm:$0xf]
      %v465 = vld [vmem:[%s1 + $0x1fc] sm:$0xf]
      %v466 = vld [vmem:[%s1 + $0x200] sm:$0xf]
      %v467 = vld [vmem:[%s1 + $0x204] sm:$0xf]
      %v468 = vld [vmem:[%s1 + $0x208] sm:$0xf]
      %v469 = vld [vmem:[%s1 + $0x20c] sm:$0xf]
      %v470 = vld [vmem:[%s1 + $0x210] sm:$0xf]
      %v471 = vld [vmem:[%s1 + $0x214] sm:$0xf]
      %v472 = vld [vmem:[%s1 + $0x218] sm:$0xf]
      %v473 = vld [vmem:[%s1 + $0x21c] sm:$0xf]
      %v474 = vld [vmem:[%s1 + $0x220] sm:$0xf]
      %v475 = vld [vmem:[%s1 + $0x224] sm:$0xf]
      %v476 = vld [vmem:[%s1 + $0x228] sm:$0xf]
      %v477 = vld [vmem:[%s1 + $0x22c] sm:$0xf]
      %v478 = vld [vmem:[%s1 + $0x230] sm:$0xf]
      %v479 = vld [vmem:[%s1 + $0x234] sm:$0xf]
      %v480 = vld [vmem:[%s1 + $0x238] sm:$0xf]
      %v481 = vld [vmem:[%s1 + $0x23c] sm:$0xf]
      %v482 = vld [vmem:[%s2] sm:$0x1]
      %v484 = vlaneseq
      %v485 = vshrl.u32 %v484, 7
      %v486 = vsub.s32 0, %v485
      %v487 = vrot.slane %v482, %v486
      %v649 = vunpack.c.l.b16 %v178
      %v650 = vunpack.c.h.b16 %v178
      %v651 = vunpack.c.l.b16 %v179
      %v652 = vunpack.c.h.b16 %v179
      %v653 = vunpack.c.l.b16 %v180
      %v654 = vunpack.c.h.b16 %v180
      %v655 = vunpack.c.l.b16 %v181
      %v656 = vunpack.c.h.b16 %v181
      %v657 = vunpack.c.l.b16 %v182
      %v658 = vunpack.c.l.b16 %v183
      %v659 = vunpack.c.h.b16 %v183
      %v660 = vunpack.c.l.b16 %v184
      %v661 = vunpack.c.h.b16 %v184
      %v662 = vunpack.c.l.b16 %v185
      %v663 = vunpack.c.h.b16 %v185
      %v664 = vunpack.c.l.b16 %v186
      %v665 = vunpack.c.h.b16 %v186
      %v666 = vunpack.c.l.b16 %v187
      %v667 = vunpack.c.l.b16 %v188
      %v668 = vunpack.c.h.b16 %v188
      %v669 = vunpack.c.l.b16 %v189
      %v670 = vunpack.c.h.b16 %v189
      %v671 = vunpack.c.l.b16 %v190
      %v672 = vunpack.c.h.b16 %v190
      %v673 = vunpack.c.l.b16 %v191
      %v674 = vunpack.c.h.b16 %v191
      %v675 = vunpack.c.l.b16 %v192
      %v676 = vunpack.c.l.b16 %v193
      %v677 = vunpack.c.h.b16 %v193
      %v678 = vunpack.c.l.b16 %v194
      %v679 = vunpack.c.h.b16 %v194
      %v680 = vunpack.c.l.b16 %v195
      %v681 = vunpack.c.h.b16 %v195
      %v682 = vunpack.c.l.b16 %v196
      %v683 = vunpack.c.h.b16 %v196
      %v684 = vunpack.c.l.b16 %v197
      %v685 = vunpack.c.l.b16 %v198
      %v686 = vunpack.c.h.b16 %v198
      %v687 = vunpack.c.l.b16 %v199
      %v688 = vunpack.c.h.b16 %v199
      %v689 = vunpack.c.l.b16 %v200
      %v690 = vunpack.c.h.b16 %v200
      %v691 = vunpack.c.l.b16 %v201
      %v692 = vunpack.c.h.b16 %v201
      %v693 = vunpack.c.l.b16 %v202
      %v694 = vunpack.c.l.b16 %v203
      %v695 = vunpack.c.h.b16 %v203
      %v696 = vunpack.c.l.b16 %v204
      %v697 = vunpack.c.h.b16 %v204
      %v698 = vunpack.c.l.b16 %v205
      %v699 = vunpack.c.h.b16 %v205
      %v700 = vunpack.c.l.b16 %v206
      %v701 = vunpack.c.h.b16 %v206
      %v702 = vunpack.c.l.b16 %v207
      %v703 = vunpack.c.l.b16 %v208
      %v704 = vunpack.c.h.b16 %v208
      %v705 = vunpack.c.l.b16 %v209
      %v706 = vunpack.c.h.b16 %v209
      %v707 = vunpack.c.l.b16 %v210
      %v708 = vunpack.c.h.b16 %v210
      %v709 = vunpack.c.l.b16 %v211
      %v710 = vunpack.c.h.b16 %v211
      %v711 = vunpack.c.l.b16 %v212
      %v712 = vunpack.c.l.b16 %v213
      %v713 = vunpack.c.h.b16 %v213
      %v714 = vunpack.c.l.b16 %v214
      %v715 = vunpack.c.h.b16 %v214
      %v716 = vunpack.c.l.b16 %v215
      %v717 = vunpack.c.h.b16 %v215
      %v718 = vunpack.c.l.b16 %v216
      %v719 = vunpack.c.h.b16 %v216
      %v720 = vunpack.c.l.b16 %v217
      %v721 = vunpack.c.l.b16 %v218
      %v722 = vunpack.c.h.b16 %v218
      %v723 = vunpack.c.l.b16 %v219
      %v724 = vunpack.c.h.b16 %v219
      %v725 = vunpack.c.l.b16 %v220
      %v726 = vunpack.c.h.b16 %v220
      %v727 = vunpack.c.l.b16 %v221
      %v728 = vunpack.c.h.b16 %v221
      %v729 = vunpack.c.l.b16 %v222
      %v730 = vunpack.c.l.b16 %v223
      %v731 = vunpack.c.h.b16 %v223
      %v732 = vunpack.c.l.b16 %v224
      %v733 = vunpack.c.h.b16 %v224
      %v734 = vunpack.c.l.b16 %v225
      %v735 = vunpack.c.h.b16 %v225
      %v736 = vunpack.c.l.b16 %v226
      %v737 = vunpack.c.h.b16 %v226
      %v738 = vunpack.c.l.b16 %v227
      %v739 = vunpack.c.l.b16 %v228
      %v740 = vunpack.c.h.b16 %v228
      %v741 = vunpack.c.l.b16 %v229
      %v742 = vunpack.c.h.b16 %v229
      %v743 = vunpack.c.l.b16 %v230
      %v744 = vunpack.c.h.b16 %v230
      %v745 = vunpack.c.l.b16 %v231
      %v746 = vunpack.c.h.b16 %v231
      %v747 = vunpack.c.l.b16 %v232
      %v748 = vunpack.c.l.b16 %v233
      %v749 = vunpack.c.h.b16 %v233
      %v750 = vunpack.c.l.b16 %v234
      %v751 = vunpack.c.h.b16 %v234
      %v752 = vunpack.c.l.b16 %v235
      %v753 = vunpack.c.h.b16 %v235
      %v754 = vunpack.c.l.b16 %v236
      %v755 = vunpack.c.h.b16 %v236
      %v756 = vunpack.c.l.b16 %v237
      %v757 = vunpack.c.l.b16 %v238
      %v758 = vunpack.c.h.b16 %v238
      %v759 = vunpack.c.l.b16 %v239
      %v760 = vunpack.c.h.b16 %v239
      %v761 = vunpack.c.l.b16 %v240
      %v762 = vunpack.c.h.b16 %v240
      %v763 = vunpack.c.l.b16 %v241
      %v764 = vunpack.c.h.b16 %v241
      %v765 = vunpack.c.l.b16 %v242
      %v766 = vunpack.c.l.b16 %v243
      %v767 = vunpack.c.h.b16 %v243
      %v768 = vunpack.c.l.b16 %v244
      %v769 = vunpack.c.h.b16 %v244
      %v770 = vunpack.c.l.b16 %v245
      %v771 = vunpack.c.h.b16 %v245
      %v772 = vunpack.c.l.b16 %v246
      %v773 = vunpack.c.h.b16 %v246
      %v774 = vunpack.c.l.b16 %v247
      %v775 = vunpack.c.l.b16 %v248
      %v776 = vunpack.c.h.b16 %v248
      %v777 = vunpack.c.l.b16 %v249
      %v778 = vunpack.c.h.b16 %v249
      %v779 = vunpack.c.l.b16 %v250
      %v780 = vunpack.c.h.b16 %v250
      %v781 = vunpack.c.l.b16 %v251
      %v782 = vunpack.c.h.b16 %v251
      %v783 = vunpack.c.l.b16 %v252
      %v784 = vunpack.c.l.b16 %v253
      %v785 = vunpack.c.h.b16 %v253
      %v786 = vunpack.c.l.b16 %v254
      %v787 = vunpack.c.h.b16 %v254
      %v788 = vunpack.c.l.b16 %v255
      %v789 = vunpack.c.h.b16 %v255
      %v790 = vunpack.c.l.b16 %v256
      %v791 = vunpack.c.h.b16 %v256
      %v792 = vunpack.c.l.b16 %v257
      %v793 = vunpack.c.l.b16 %v258
      %v794 = vunpack.c.h.b16 %v258
      %v795 = vunpack.c.l.b16 %v259
      %v796 = vunpack.c.h.b16 %v259
      %v797 = vunpack.c.l.b16 %v260
      %v798 = vunpack.c.h.b16 %v260
      %v799 = vunpack.c.l.b16 %v261
      %v800 = vunpack.c.h.b16 %v261
      %v801 = vunpack.c.l.b16 %v262
      %v802 = vunpack.c.l.b16 %v263
      %v803 = vunpack.c.h.b16 %v263
      %v804 = vunpack.c.l.b16 %v264
      %v805 = vunpack.c.h.b16 %v264
      %v806 = vunpack.c.l.b16 %v265
      %v807 = vunpack.c.h.b16 %v265
      %v808 = vunpack.c.l.b16 %v266
      %v809 = vunpack.c.h.b16 %v266
      %v810 = vunpack.c.l.b16 %v267
      %v811 = vunpack.c.l.b16 %v268
      %v812 = vunpack.c.h.b16 %v268
      %v813 = vunpack.c.l.b16 %v269
      %v814 = vunpack.c.h.b16 %v269
      %v815 = vunpack.c.l.b16 %v270
      %v816 = vunpack.c.h.b16 %v270
      %v817 = vunpack.c.l.b16 %v271
      %v818 = vunpack.c.h.b16 %v271
      %v819 = vunpack.c.l.b16 %v272
      %v820 = vunpack.c.l.b16 %v273
      %v821 = vunpack.c.h.b16 %v273
      %v822 = vunpack.c.l.b16 %v274
      %v823 = vunpack.c.h.b16 %v274
      %v824 = vunpack.c.l.b16 %v275
      %v825 = vunpack.c.h.b16 %v275
      %v826 = vunpack.c.l.b16 %v276
      %v827 = vunpack.c.h.b16 %v276
      %v828 = vunpack.c.l.b16 %v277
      %v829 = vunpack.c.l.b16 %v278
      %v830 = vunpack.c.h.b16 %v278
      %v831 = vunpack.c.l.b16 %v279
      %v832 = vunpack.c.h.b16 %v279
      %v833 = vunpack.c.l.b16 %v280
      %v834 = vunpack.c.h.b16 %v280
      %v835 = vunpack.c.l.b16 %v281
      %v836 = vunpack.c.h.b16 %v281
      %v837 = vunpack.c.l.b16 %v282
      %v838 = vunpack.c.l.b16 %v283
      %v839 = vunpack.c.h.b16 %v283
      %v840 = vunpack.c.l.b16 %v284
      %v841 = vunpack.c.h.b16 %v284
      %v842 = vunpack.c.l.b16 %v285
      %v843 = vunpack.c.h.b16 %v285
      %v844 = vunpack.c.l.b16 %v286
      %v845 = vunpack.c.h.b16 %v286
      %v846 = vunpack.c.l.b16 %v287
      %v847 = vunpack.c.l.b16 %v288
      %v848 = vunpack.c.h.b16 %v288
      %v849 = vunpack.c.l.b16 %v289
      %v850 = vunpack.c.h.b16 %v289
      %v851 = vunpack.c.l.b16 %v290
      %v852 = vunpack.c.h.b16 %v290
      %v853 = vunpack.c.l.b16 %v291
      %v854 = vunpack.c.h.b16 %v291
      %v855 = vunpack.c.l.b16 %v292
      %v856 = vunpack.c.l.b16 %v293
      %v857 = vunpack.c.h.b16 %v293
      %v858 = vunpack.c.l.b16 %v294
      %v859 = vunpack.c.h.b16 %v294
      %v860 = vunpack.c.l.b16 %v295
      %v861 = vunpack.c.h.b16 %v295
      %v862 = vunpack.c.l.b16 %v296
      %v863 = vunpack.c.h.b16 %v296
      %v864 = vunpack.c.l.b16 %v297
      %v865 = vunpack.c.l.b16 %v298
      %v866 = vunpack.c.h.b16 %v298
      %v867 = vunpack.c.l.b16 %v299
      %v868 = vunpack.c.h.b16 %v299
      %v869 = vunpack.c.l.b16 %v300
      %v870 = vunpack.c.h.b16 %v300
      %v871 = vunpack.c.l.b16 %v301
      %v872 = vunpack.c.h.b16 %v301
      %v873 = vunpack.c.l.b16 %v302
      %v874 = vunpack.c.l.b16 %v303
      %v875 = vunpack.c.h.b16 %v303
      %v876 = vunpack.c.l.b16 %v304
      %v877 = vunpack.c.h.b16 %v304
      %v878 = vunpack.c.l.b16 %v305
      %v879 = vunpack.c.h.b16 %v305
      %v880 = vunpack.c.l.b16 %v306
      %v881 = vunpack.c.h.b16 %v306
      %v882 = vunpack.c.l.b16 %v307
      %v883 = vunpack.c.l.b16 %v308
      %v884 = vunpack.c.h.b16 %v308
      %v885 = vunpack.c.l.b16 %v309
      %v886 = vunpack.c.h.b16 %v309
      %v887 = vunpack.c.l.b16 %v310
      %v888 = vunpack.c.h.b16 %v310
      %v889 = vunpack.c.l.b16 %v311
      %v890 = vunpack.c.h.b16 %v311
      %v891 = vunpack.c.l.b16 %v312
      %v892 = vunpack.c.l.b16 %v313
      %v893 = vunpack.c.h.b16 %v313
      %v894 = vunpack.c.l.b16 %v314
      %v895 = vunpack.c.h.b16 %v314
      %v896 = vunpack.c.l.b16 %v315
      %v897 = vunpack.c.h.b16 %v315
      %v898 = vunpack.c.l.b16 %v316
      %v899 = vunpack.c.h.b16 %v316
      %v900 = vunpack.c.l.b16 %v317
      %v901 = vunpack.c.l.b16 %v318
      %v902 = vunpack.c.h.b16 %v318
      %v903 = vunpack.c.l.b16 %v319
      %v904 = vunpack.c.h.b16 %v319
      %v905 = vunpack.c.l.b16 %v320
      %v906 = vunpack.c.h.b16 %v320
      %v907 = vunpack.c.l.b16 %v321
      %v908 = vunpack.c.h.b16 %v321
      %v909 = vunpack.c.l.b16 %v322
      %v910 = vunpack.c.l.b16 %v323
      %v911 = vunpack.c.h.b16 %v323
      %v912 = vunpack.c.l.b16 %v324
      %v913 = vunpack.c.h.b16 %v324
      %v914 = vunpack.c.l.b16 %v325
      %v915 = vunpack.c.h.b16 %v325
      %v916 = vunpack.c.l.b16 %v326
      %v917 = vunpack.c.h.b16 %v326
      %v918 = vunpack.c.l.b16 %v327
      %v919 = vunpack.c.l.b16 %v328
      %v920 = vunpack.c.h.b16 %v328
      %v921 = vunpack.c.l.b16 %v329
      %v922 = vunpack.c.h.b16 %v329
      %v923 = vunpack.c.l.b16 %v330
      %v924 = vunpack.c.h.b16 %v330
      %v925 = vunpack.c.l.b16 %v331
      %v926 = vunpack.c.h.b16 %v331
      %v927 = vunpack.c.l.b16 %v332
      %v928 = vunpack.c.l.b16 %v333
      %v929 = vunpack.c.h.b16 %v333
      %v930 = vunpack.c.l.b16 %v334
      %v931 = vunpack.c.h.b16 %v334
      %v932 = vunpack.c.l.b16 %v335
      %v933 = vunpack.c.h.b16 %v335
      %v934 = vunpack.c.l.b16 %v336
      %v935 = vunpack.c.h.b16 %v336
      %v936 = vunpack.c.l.b16 %v337
      %v937 = vpack.c.b16 %v658, %v649
      %v938 = vpack.c.b16 %v659, %v650
      %v939 = vpack.c.b16 %v660, %v651
      %v940 = vpack.c.b16 %v661, %v652
      %v941 = vpack.c.b16 %v662, %v653
      %v942 = vpack.c.b16 %v663, %v654
      %v943 = vpack.c.b16 %v664, %v655
      %v944 = vpack.c.b16 %v665, %v656
      %v945 = vpack.c.b16 %v666, %v657
      %v946 = vpack.c.b16 %v676, %v667
      %v947 = vpack.c.b16 %v677, %v668
      %v948 = vpack.c.b16 %v678, %v669
      %v949 = vpack.c.b16 %v679, %v670
      %v950 = vpack.c.b16 %v680, %v671
      %v951 = vpack.c.b16 %v681, %v672
      %v952 = vpack.c.b16 %v682, %v673
      %v953 = vpack.c.b16 %v683, %v674
      %v954 = vpack.c.b16 %v684, %v675
      %v955 = vpack.c.b16 %v694, %v685
      %v956 = vpack.c.b16 %v695, %v686
      %v957 = vpack.c.b16 %v696, %v687
      %v958 = vpack.c.b16 %v697, %v688
      %v959 = vpack.c.b16 %v698, %v689
      %v960 = vpack.c.b16 %v699, %v690
      %v961 = vpack.c.b16 %v700, %v691
      %v962 = vpack.c.b16 %v701, %v692
      %v963 = vpack.c.b16 %v702, %v693
      %v964 = vpack.c.b16 %v712, %v703
      %v965 = vpack.c.b16 %v713, %v704
      %v966 = vpack.c.b16 %v714, %v705
      %v967 = vpack.c.b16 %v715, %v706
      %v968 = vpack.c.b16 %v716, %v707
      %v969 = vpack.c.b16 %v717, %v708
      %v970 = vpack.c.b16 %v718, %v709
      %v971 = vpack.c.b16 %v719, %v710
      %v972 = vpack.c.b16 %v720, %v711
      %v973 = vpack.c.b16 %v730, %v721
      %v974 = vpack.c.b16 %v731, %v722
      %v975 = vpack.c.b16 %v732, %v723
      %v976 = vpack.c.b16 %v733, %v724
      %v977 = vpack.c.b16 %v734, %v725
      %v978 = vpack.c.b16 %v735, %v726
      %v979 = vpack.c.b16 %v736, %v727
      %v980 = vpack.c.b16 %v737, %v728
      %v981 = vpack.c.b16 %v738, %v729
      %v982 = vpack.c.b16 %v748, %v739
      %v983 = vpack.c.b16 %v749, %v740
      %v984 = vpack.c.b16 %v750, %v741
      %v985 = vpack.c.b16 %v751, %v742
      %v986 = vpack.c.b16 %v752, %v743
      %v987 = vpack.c.b16 %v753, %v744
      %v988 = vpack.c.b16 %v754, %v745
      %v989 = vpack.c.b16 %v755, %v746
      %v990 = vpack.c.b16 %v756, %v747
      %v991 = vpack.c.b16 %v766, %v757
      %v992 = vpack.c.b16 %v767, %v758
      %v993 = vpack.c.b16 %v768, %v759
      %v994 = vpack.c.b16 %v769, %v760
      %v995 = vpack.c.b16 %v770, %v761
      %v996 = vpack.c.b16 %v771, %v762
      %v997 = vpack.c.b16 %v772, %v763
      %v998 = vpack.c.b16 %v773, %v764
      %v999 = vpack.c.b16 %v774, %v765
      %v1000 = vpack.c.b16 %v784, %v775
      %v1001 = vpack.c.b16 %v785, %v776
      %v1002 = vpack.c.b16 %v786, %v777
      %v1003 = vpack.c.b16 %v787, %v778
      %v1004 = vpack.c.b16 %v788, %v779
      %v1005 = vpack.c.b16 %v789, %v780
      %v1006 = vpack.c.b16 %v790, %v781
      %v1007 = vpack.c.b16 %v791, %v782
      %v1008 = vpack.c.b16 %v792, %v783
      %v1009 = vpack.c.b16 %v802, %v793
      %v1010 = vpack.c.b16 %v803, %v794
      %v1011 = vpack.c.b16 %v804, %v795
      %v1012 = vpack.c.b16 %v805, %v796
      %v1013 = vpack.c.b16 %v806, %v797
      %v1014 = vpack.c.b16 %v807, %v798
      %v1015 = vpack.c.b16 %v808, %v799
      %v1016 = vpack.c.b16 %v809, %v800
      %v1017 = vpack.c.b16 %v810, %v801
      %v1018 = vpack.c.b16 %v820, %v811
      %v1019 = vpack.c.b16 %v821, %v812
      %v1020 = vpack.c.b16 %v822, %v813
      %v1021 = vpack.c.b16 %v823, %v814
      %v1022 = vpack.c.b16 %v824, %v815
      %v1023 = vpack.c.b16 %v825, %v816
      %v1024 = vpack.c.b16 %v826, %v817
      %v1025 = vpack.c.b16 %v827, %v818
      %v1026 = vpack.c.b16 %v828, %v819
      %v1027 = vpack.c.b16 %v838, %v829
      %v1028 = vpack.c.b16 %v839, %v830
      %v1029 = vpack.c.b16 %v840, %v831
      %v1030 = vpack.c.b16 %v841, %v832
      %v1031 = vpack.c.b16 %v842, %v833
      %v1032 = vpack.c.b16 %v843, %v834
      %v1033 = vpack.c.b16 %v844, %v835
      %v1034 = vpack.c.b16 %v845, %v836
      %v1035 = vpack.c.b16 %v846, %v837
      %v1036 = vpack.c.b16 %v856, %v847
      %v1037 = vpack.c.b16 %v857, %v848
      %v1038 = vpack.c.b16 %v858, %v849
      %v1039 = vpack.c.b16 %v859, %v850
      %v1040 = vpack.c.b16 %v860, %v851
      %v1041 = vpack.c.b16 %v861, %v852
      %v1042 = vpack.c.b16 %v862, %v853
      %v1043 = vpack.c.b16 %v863, %v854
      %v1044 = vpack.c.b16 %v864, %v855
      %v1045 = vpack.c.b16 %v874, %v865
      %v1046 = vpack.c.b16 %v875, %v866
      %v1047 = vpack.c.b16 %v876, %v867
      %v1048 = vpack.c.b16 %v877, %v868
      %v1049 = vpack.c.b16 %v878, %v869
      %v1050 = vpack.c.b16 %v879, %v870
      %v1051 = vpack.c.b16 %v880, %v871
      %v1052 = vpack.c.b16 %v881, %v872
      %v1053 = vpack.c.b16 %v882, %v873
      %v1054 = vpack.c.b16 %v892, %v883
      %v1055 = vpack.c.b16 %v893, %v884
      %v1056 = vpack.c.b16 %v894, %v885
      %v1057 = vpack.c.b16 %v895, %v886
      %v1058 = vpack.c.b16 %v896, %v887
      %v1059 = vpack.c.b16 %v897, %v888
      %v1060 = vpack.c.b16 %v898, %v889
      %v1061 = vpack.c.b16 %v899, %v890
      %v1062 = vpack.c.b16 %v900, %v891
      %v1063 = vpack.c.b16 %v910, %v901
      %v1064 = vpack.c.b16 %v911, %v902
      %v1065 = vpack.c.b16 %v912, %v903
      %v1066 = vpack.c.b16 %v913, %v904
      %v1067 = vpack.c.b16 %v914, %v905
      %v1068 = vpack.c.b16 %v915, %v906
      %v1069 = vpack.c.b16 %v916, %v907
      %v1070 = vpack.c.b16 %v917, %v908
      %v1071 = vpack.c.b16 %v918, %v909
      %v1072 = vpack.c.b16 %v928, %v919
      %v1073 = vpack.c.b16 %v929, %v920
      %v1074 = vpack.c.b16 %v930, %v921
      %v1075 = vpack.c.b16 %v931, %v922
      %v1076 = vpack.c.b16 %v932, %v923
      %v1077 = vpack.c.b16 %v933, %v924
      %v1078 = vpack.c.b16 %v934, %v925
      %v1079 = vpack.c.b16 %v935, %v926
      %v1080 = vpack.c.b16 %v936, %v927
      %v1369 = vunpack.c.l.b16 %v338
      %v1370 = vunpack.c.l.b16 %v339
      %v1371 = vunpack.c.l.b16 %v340
      %v1372 = vunpack.c.l.b16 %v341
      %v1373 = vunpack.c.l.b16 %v342
      %v1374 = vunpack.c.l.b16 %v343
      %v1375 = vunpack.c.l.b16 %v344
      %v1376 = vunpack.c.l.b16 %v345
      %v1377 = vunpack.c.l.b16 %v346
      %v1378 = vunpack.c.l.b16 %v347
      %v1379 = vunpack.c.l.b16 %v348
      %v1380 = vunpack.c.l.b16 %v349
      %v1381 = vunpack.c.l.b16 %v350
      %v1382 = vunpack.c.l.b16 %v351
      %v1383 = vunpack.c.l.b16 %v352
      %v1384 = vunpack.c.l.b16 %v353
      %v1385 = vunpack.c.l.b16 %v354
      %v1386 = vunpack.c.l.b16 %v355
      %v1387 = vunpack.c.l.b16 %v356
      %v1388 = vunpack.c.l.b16 %v357
      %v1389 = vunpack.c.l.b16 %v358
      %v1390 = vunpack.c.l.b16 %v359
      %v1391 = vunpack.c.l.b16 %v360
      %v1392 = vunpack.c.l.b16 %v361
      %v1393 = vunpack.c.l.b16 %v362
      %v1394 = vunpack.c.l.b16 %v363
      %v1395 = vunpack.c.l.b16 %v364
      %v1396 = vunpack.c.l.b16 %v365
      %v1397 = vunpack.c.l.b16 %v366
      %v1398 = vunpack.c.l.b16 %v367
      %v1399 = vunpack.c.l.b16 %v368
      %v1400 = vunpack.c.l.b16 %v369
      %v1401 = vunpack.c.l.b16 %v370
      %v1402 = vunpack.c.l.b16 %v371
      %v1403 = vunpack.c.l.b16 %v372
      %v1404 = vunpack.c.l.b16 %v373
      %v1405 = vunpack.c.l.b16 %v374
      %v1406 = vunpack.c.l.b16 %v375
      %v1407 = vunpack.c.l.b16 %v376
      %v1408 = vunpack.c.l.b16 %v377
      %v1409 = vunpack.c.l.b16 %v378
      %v1410 = vunpack.c.l.b16 %v379
      %v1411 = vunpack.c.l.b16 %v380
      %v1412 = vunpack.c.l.b16 %v381
      %v1413 = vunpack.c.l.b16 %v382
      %v1414 = vunpack.c.l.b16 %v383
      %v1415 = vunpack.c.l.b16 %v384
      %v1416 = vunpack.c.l.b16 %v385
      %v1417 = vunpack.c.l.b16 %v386
      %v1418 = vunpack.c.l.b16 %v387
      %v1419 = vunpack.c.l.b16 %v388
      %v1420 = vunpack.c.l.b16 %v389
      %v1421 = vunpack.c.l.b16 %v390
      %v1422 = vunpack.c.l.b16 %v391
      %v1423 = vunpack.c.l.b16 %v392
      %v1424 = vunpack.c.l.b16 %v393
      %v1425 = vunpack.c.l.b16 %v394
      %v1426 = vunpack.c.l.b16 %v395
      %v1427 = vunpack.c.l.b16 %v396
      %v1428 = vunpack.c.l.b16 %v397
      %v1429 = vunpack.c.l.b16 %v398
      %v1430 = vunpack.c.l.b16 %v399
      %v1431 = vunpack.c.l.b16 %v400
      %v1432 = vunpack.c.l.b16 %v401
      %v1433 = vunpack.c.l.b16 %v402
      %v1434 = vunpack.c.l.b16 %v403
      %v1435 = vunpack.c.l.b16 %v404
      %v1436 = vunpack.c.l.b16 %v405
      %v1437 = vunpack.c.l.b16 %v406
      %v1438 = vunpack.c.l.b16 %v407
      %v1439 = vunpack.c.l.b16 %v408
      %v1440 = vunpack.c.l.b16 %v409
      %v1441 = vunpack.c.l.b16 %v410
      %v1442 = vunpack.c.l.b16 %v411
      %v1443 = vunpack.c.l.b16 %v412
      %v1444 = vunpack.c.l.b16 %v413
      %v1445 = vunpack.c.l.b16 %v414
      %v1446 = vunpack.c.l.b16 %v415
      %v1447 = vunpack.c.l.b16 %v416
      %v1448 = vunpack.c.l.b16 %v417
      %v1449 = vunpack.c.l.b16 %v418
      %v1450 = vunpack.c.l.b16 %v419
      %v1451 = vunpack.c.l.b16 %v420
      %v1452 = vunpack.c.l.b16 %v421
      %v1453 = vunpack.c.l.b16 %v422
      %v1454 = vunpack.c.l.b16 %v423
      %v1455 = vunpack.c.l.b16 %v424
      %v1456 = vunpack.c.l.b16 %v425
      %v1457 = vunpack.c.l.b16 %v426
      %v1458 = vunpack.c.l.b16 %v427
      %v1459 = vunpack.c.l.b16 %v428
      %v1460 = vunpack.c.l.b16 %v429
      %v1461 = vunpack.c.l.b16 %v430
      %v1462 = vunpack.c.l.b16 %v431
      %v1463 = vunpack.c.l.b16 %v432
      %v1464 = vunpack.c.l.b16 %v433
      %v1465 = vunpack.c.l.b16 %v434
      %v1466 = vunpack.c.l.b16 %v435
      %v1467 = vunpack.c.l.b16 %v436
      %v1468 = vunpack.c.l.b16 %v437
      %v1469 = vunpack.c.l.b16 %v438
      %v1470 = vunpack.c.l.b16 %v439
      %v1471 = vunpack.c.l.b16 %v440
      %v1472 = vunpack.c.l.b16 %v441
      %v1473 = vunpack.c.l.b16 %v442
      %v1474 = vunpack.c.l.b16 %v443
      %v1475 = vunpack.c.l.b16 %v444
      %v1476 = vunpack.c.l.b16 %v445
      %v1477 = vunpack.c.l.b16 %v446
      %v1478 = vunpack.c.l.b16 %v447
      %v1479 = vunpack.c.l.b16 %v448
      %v1480 = vunpack.c.l.b16 %v449
      %v1481 = vunpack.c.l.b16 %v450
      %v1482 = vunpack.c.l.b16 %v451
      %v1483 = vunpack.c.l.b16 %v452
      %v1484 = vunpack.c.l.b16 %v453
      %v1485 = vunpack.c.l.b16 %v454
      %v1486 = vunpack.c.l.b16 %v455
      %v1487 = vunpack.c.l.b16 %v456
      %v1488 = vunpack.c.l.b16 %v457
      %v1489 = vunpack.c.l.b16 %v458
      %v1490 = vunpack.c.l.b16 %v459
      %v1491 = vunpack.c.l.b16 %v460
      %v1492 = vunpack.c.l.b16 %v461
      %v1493 = vunpack.c.l.b16 %v462
      %v1494 = vunpack.c.l.b16 %v463
      %v1495 = vunpack.c.l.b16 %v464
      %v1496 = vunpack.c.l.b16 %v465
      %v1497 = vunpack.c.l.b16 %v466
      %v1498 = vunpack.c.l.b16 %v467
      %v1499 = vunpack.c.l.b16 %v468
      %v1500 = vunpack.c.l.b16 %v469
      %v1501 = vunpack.c.l.b16 %v470
      %v1502 = vunpack.c.l.b16 %v471
      %v1503 = vunpack.c.l.b16 %v472
      %v1504 = vunpack.c.l.b16 %v473
      %v1505 = vunpack.c.l.b16 %v474
      %v1506 = vunpack.c.l.b16 %v475
      %v1507 = vunpack.c.l.b16 %v476
      %v1508 = vunpack.c.l.b16 %v477
      %v1509 = vunpack.c.l.b16 %v478
      %v1510 = vunpack.c.l.b16 %v479
      %v1511 = vunpack.c.l.b16 %v480
      %v1512 = vunpack.c.l.b16 %v481
      %v1513 = vpack.c.b16 %v1370, %v1369
      %v1514 = vpack.c.b16 %v1372, %v1371
      %v1515 = vpack.c.b16 %v1374, %v1373
      %v1516 = vpack.c.b16 %v1376, %v1375
      %v1517 = vpack.c.b16 %v1378, %v1377
      %v1518 = vpack.c.b16 %v1380, %v1379
      %v1519 = vpack.c.b16 %v1382, %v1381
      %v1520 = vpack.c.b16 %v1384, %v1383
      %v1521 = vpack.c.b16 %v1386, %v1385
      %v1522 = vpack.c.b16 %v1388, %v1387
      %v1523 = vpack.c.b16 %v1390, %v1389
      %v1524 = vpack.c.b16 %v1392, %v1391
      %v1525 = vpack.c.b16 %v1394, %v1393
      %v1526 = vpack.c.b16 %v1396, %v1395
      %v1527 = vpack.c.b16 %v1398, %v1397
      %v1528 = vpack.c.b16 %v1400, %v1399
      %v1529 = vpack.c.b16 %v1402, %v1401
      %v1530 = vpack.c.b16 %v1404, %v1403
      %v1531 = vpack.c.b16 %v1406, %v1405
      %v1532 = vpack.c.b16 %v1408, %v1407
      %v1533 = vpack.c.b16 %v1410, %v1409
      %v1534 = vpack.c.b16 %v1412, %v1411
      %v1535 = vpack.c.b16 %v1414, %v1413
      %v1536 = vpack.c.b16 %v1416, %v1415
      %v1537 = vpack.c.b16 %v1418, %v1417
      %v1538 = vpack.c.b16 %v1420, %v1419
      %v1539 = vpack.c.b16 %v1422, %v1421
      %v1540 = vpack.c.b16 %v1424, %v1423
      %v1541 = vpack.c.b16 %v1426, %v1425
      %v1542 = vpack.c.b16 %v1428, %v1427
      %v1543 = vpack.c.b16 %v1430, %v1429
      %v1544 = vpack.c.b16 %v1432, %v1431
      %v1545 = vpack.c.b16 %v1434, %v1433
      %v1546 = vpack.c.b16 %v1436, %v1435
      %v1547 = vpack.c.b16 %v1438, %v1437
      %v1548 = vpack.c.b16 %v1440, %v1439
      %v1549 = vpack.c.b16 %v1442, %v1441
      %v1550 = vpack.c.b16 %v1444, %v1443
      %v1551 = vpack.c.b16 %v1446, %v1445
      %v1552 = vpack.c.b16 %v1448, %v1447
      %v1553 = vpack.c.b16 %v1450, %v1449
      %v1554 = vpack.c.b16 %v1452, %v1451
      %v1555 = vpack.c.b16 %v1454, %v1453
      %v1556 = vpack.c.b16 %v1456, %v1455
      %v1557 = vpack.c.b16 %v1458, %v1457
      %v1558 = vpack.c.b16 %v1460, %v1459
      %v1559 = vpack.c.b16 %v1462, %v1461
      %v1560 = vpack.c.b16 %v1464, %v1463
      %v1561 = vpack.c.b16 %v1466, %v1465
      %v1562 = vpack.c.b16 %v1468, %v1467
      %v1563 = vpack.c.b16 %v1470, %v1469
      %v1564 = vpack.c.b16 %v1472, %v1471
      %v1565 = vpack.c.b16 %v1474, %v1473
      %v1566 = vpack.c.b16 %v1476, %v1475
      %v1567 = vpack.c.b16 %v1478, %v1477
      %v1568 = vpack.c.b16 %v1480, %v1479
      %v1569 = vpack.c.b16 %v1482, %v1481
      %v1570 = vpack.c.b16 %v1484, %v1483
      %v1571 = vpack.c.b16 %v1486, %v1485
      %v1572 = vpack.c.b16 %v1488, %v1487
      %v1573 = vpack.c.b16 %v1490, %v1489
      %v1574 = vpack.c.b16 %v1492, %v1491
      %v1575 = vpack.c.b16 %v1494, %v1493
      %v1576 = vpack.c.b16 %v1496, %v1495
      %v1577 = vpack.c.b16 %v1498, %v1497
      %v1578 = vpack.c.b16 %v1500, %v1499
      %v1579 = vpack.c.b16 %v1502, %v1501
      %v1580 = vpack.c.b16 %v1504, %v1503
      %v1581 = vpack.c.b16 %v1506, %v1505
      %v1582 = vpack.c.b16 %v1508, %v1507
      %v1583 = vpack.c.b16 %v1510, %v1509
      %v1584 = vpack.c.b16 %v1512, %v1511
      %1657 = vmatprep.subr.bf16.mxu0 0
      %1658 = vmatpush1.bf16.msra.mxu0 %v1513
      %1659 = vmatprep.subr.bf16.mxu0 0
      %1660 = vmatpush1.bf16.msra.mxu0 %v1514
      %1661 = vmatprep.subr.bf16.mxu0 0
      %1662 = vmatpush1.bf16.msra.mxu0 %v1515
      %1663 = vmatprep.subr.bf16.mxu0 0
      %1664 = vmatpush1.bf16.msra.mxu0 %v1516
      %1665 = vmatprep.subr.bf16.mxu0 0
      %1666 = vmatpush1.bf16.msra.mxu0 %v1517
      %1667 = vmatprep.subr.bf16.mxu0 0
      %1668 = vmatpush1.bf16.msra.mxu0 %v1518
      %1669 = vmatprep.subr.bf16.mxu0 0
      %1670 = vmatpush1.bf16.msra.mxu0 %v1519
      %1671 = vmatprep.subr.bf16.mxu0 0
      %1672 = vmatpush1.bf16.msra.mxu0 %v1520
      %1673 = vmatprep.subr.bf16.mxu0 0
      %1674 = vmatpush1.bf16.msra.mxu0 %v1521
      %1675 = vmatprep.subr.bf16.mxu0 0
      %1676 = vmatpush1.bf16.msra.mxu0 %v1522
      %1677 = vmatprep.subr.bf16.mxu0 0
      %1678 = vmatpush1.bf16.msra.mxu0 %v1523
      %1679 = vmatprep.subr.bf16.mxu0 0
      %1680 = vmatpush1.bf16.msra.mxu0 %v1524
      %1681 = vmatprep.subr.bf16.mxu0 0
      %1682 = vmatpush1.bf16.msra.mxu0 %v1525
      %1683 = vmatprep.subr.bf16.mxu0 0
      %1684 = vmatpush1.bf16.msra.mxu0 %v1526
      %1685 = vmatprep.subr.bf16.mxu0 0
      %1686 = vmatpush1.bf16.msra.mxu0 %v1527
      %1687 = vmatprep.subr.bf16.mxu0 0
      %1688 = vmatpush1.bf16.msra.mxu0 %v1528
      %1689 = vmatprep.mubr.bf16.mxu0 %v938
      %1690 = vmatmul.mubr.bf16.gmra.mrb[0].mxu0 %v937
      %v1691 = vpop.f32.mrb[0].mxu0
      %v1692 = vadd.f32 %v487, %v1691
      %v1693 = vpop.f32.mrb[0].mxu0
      %v1694 = vpop.f32.mrb[0].mxu0
      %v1695 = vadd.f32 %v487, %v1694
      %v1696 = vpop.f32.mrb[0].mxu0
      %1697 = vmatprep.mubr.bf16.mxu0 %v947
      %1698 = vmatmul.mubr.bf16.gmra.mrb[0].mxu0 %v946
      %v1699 = vpop.f32.mrb[0].mxu0
      %v1700 = vadd.f32 %v487, %v1699
      %v1701 = vpop.f32.mrb[0].mxu0
      %v1702 = vpop.f32.mrb[0].mxu0
      %v1703 = vadd.f32 %v487, %v1702
      %v1704 = vpop.f32.mrb[0].mxu0
      %1705 = vmatprep.mubr.bf16.mxu0 %v956
      %1706 = vmatmul.mubr.bf16.gmra.mrb[0].mxu0 %v955
      %v1707 = vpop.f32.mrb[0].mxu0
      %v1708 = vadd.f32 %v487, %v1707
      %v1709 = vpop.f32.mrb[0].mxu0
      %v1710 = vpop.f32.mrb[0].mxu0
      %v1711 = vadd.f32 %v487, %v1710
      %v1712 = vpop.f32.mrb[0].mxu0
      %1713 = vmatprep.mubr.bf16.mxu0 %v965
      %1714 = vmatmul.mubr.bf16.gmra.mrb[0].mxu0 %v964
      %v1715 = vpop.f32.mrb[0].mxu0
      %v1716 = vadd.f32 %v487, %v1715
      %v1717 = vpop.f32.mrb[0].mxu0
      %v1718 = vpop.f32.mrb[0].mxu0
      %v1719 = vadd.f32 %v487, %v1718
      %v1720 = vpop.f32.mrb[0].mxu0
      %1721 = vmatprep.mubr.bf16.mxu0 %v974
      %1722 = vmatmul.mubr.bf16.gmra.mrb[0].mxu0 %v973
      %v1723 = vpop.f32.mrb[0].mxu0
      %v1724 = vadd.f32 %v487, %v1723
      %v1725 = vpop.f32.mrb[0].mxu0
      %v1726 = vpop.f32.mrb[0].mxu0
      %v1727 = vadd.f32 %v487, %v1726
      %v1728 = vpop.f32.mrb[0].mxu0
      %1729 = vmatprep.mubr.bf16.mxu0 %v983
      %1730 = vmatmul.mubr.bf16.gmra.mrb[0].mxu0 %v982
      %v1731 = vpop.f32.mrb[0].mxu0
      %v1732 = vadd.f32 %v487, %v1731
      %v1733 = vpop.f32.mrb[0].mxu0
      %v1734 = vpop.f32.mrb[0].mxu0
      %v1735 = vadd.f32 %v487, %v1734
      %v1736 = vpop.f32.mrb[0].mxu0
      %1737 = vmatprep.mubr.bf16.mxu0 %v992
      %1738 = vmatmul.mubr.bf16.gmra.mrb[0].mxu0 %v991
      %v1739 = vpop.f32.mrb[0].mxu0
      %v1740 = vadd.f32 %v487, %v1739
      %v1741 = vpop.f32.mrb[0].mxu0
      %v1742 = vpop.f32.mrb[0].mxu0
      %v1743 = vadd.f32 %v487, %v1742
      %v1744 = vpop.f32.mrb[0].mxu0
      %1745 = vmatprep.mubr.bf16.mxu0 %v1001
      %1746 = vmatmul.mubr.bf16.gmra.mrb[0].mxu0 %v1000
      %v1747 = vpop.f32.mrb[0].mxu0
      %v1748 = vadd.f32 %v487, %v1747
      %v1749 = vpop.f32.mrb[0].mxu0
      %v1750 = vpop.f32.mrb[0].mxu0
      %v1751 = vadd.f32 %v487, %v1750
      %v1752 = vpop.f32.mrb[0].mxu0
      %1753 = vmatprep.mubr.bf16.mxu0 %v1010
      %1754 = vmatmul.mubr.bf16.gmra.mrb[0].mxu0 %v1009
      %v1755 = vpop.f32.mrb[0].mxu0
      %v1756 = vadd.f32 %v487, %v1755
      %v1757 = vpop.f32.mrb[0].mxu0
      %v1758 = vpop.f32.mrb[0].mxu0
      %v1759 = vadd.f32 %v487, %v1758
      %v1760 = vpop.f32.mrb[0].mxu0
      %1761 = vmatprep.mubr.bf16.mxu0 %v1019
      %1762 = vmatmul.mubr.bf16.gmra.mrb[0].mxu0 %v1018
      %v1763 = vpop.f32.mrb[0].mxu0
      %v1764 = vadd.f32 %v487, %v1763
      %v1765 = vpop.f32.mrb[0].mxu0
      %v1766 = vpop.f32.mrb[0].mxu0
      %v1767 = vadd.f32 %v487, %v1766
      %v1768 = vpop.f32.mrb[0].mxu0
      %1769 = vmatprep.mubr.bf16.mxu0 %v1028
      %1770 = vmatmul.mubr.bf16.gmra.mrb[0].mxu0 %v1027
      %v1771 = vpop.f32.mrb[0].mxu0
      %v1772 = vadd.f32 %v487, %v1771
      %v1773 = vpop.f32.mrb[0].mxu0
      %v1774 = vpop.f32.mrb[0].mxu0
      %v1775 = vadd.f32 %v487, %v1774
      %v1776 = vpop.f32.mrb[0].mxu0
      %1777 = vmatprep.mubr.bf16.mxu0 %v1037
      %1778 = vmatmul.mubr.bf16.gmra.mrb[0].mxu0 %v1036
      %v1779 = vpop.f32.mrb[0].mxu0
      %v1780 = vadd.f32 %v487, %v1779
      %v1781 = vpop.f32.mrb[0].mxu0
      %v1782 = vpop.f32.mrb[0].mxu0
      %v1783 = vadd.f32 %v487, %v1782
      %v1784 = vpop.f32.mrb[0].mxu0
      %1785 = vmatprep.mubr.bf16.mxu0 %v1046
      %1786 = vmatmul.mubr.bf16.gmra.mrb[0].mxu0 %v1045
      %v1787 = vpop.f32.mrb[0].mxu0
      %v1788 = vadd.f32 %v487, %v1787
      %v1789 = vpop.f32.mrb[0].mxu0
      %v1790 = vpop.f32.mrb[0].mxu0
      %v1791 = vadd.f32 %v487, %v1790
      %v1792 = vpop.f32.mrb[0].mxu0
      %1793 = vmatprep.mubr.bf16.mxu0 %v1055
      %1794 = vmatmul.mubr.bf16.gmra.mrb[0].mxu0 %v1054
      %v1795 = vpop.f32.mrb[0].mxu0
      %v1796 = vadd.f32 %v487, %v1795
      %v1797 = vpop.f32.mrb[0].mxu0
      %v1798 = vpop.f32.mrb[0].mxu0
      %v1799 = vadd.f32 %v487, %v1798
      %v1800 = vpop.f32.mrb[0].mxu0
      %1801 = vmatprep.mubr.bf16.mxu0 %v1064
      %1802 = vmatmul.mubr.bf16.gmra.mrb[0].mxu0 %v1063
      %v1803 = vpop.f32.mrb[0].mxu0
      %v1804 = vadd.f32 %v487, %v1803
      %v1805 = vpop.f32.mrb[0].mxu0
      %v1806 = vpop.f32.mrb[0].mxu0
      %v1807 = vadd.f32 %v487, %v1806
      %v1808 = vpop.f32.mrb[0].mxu0
      %1809 = vmatprep.mubr.bf16.mxu0 %v1073
      %1810 = vmatmul.mubr.bf16.gmra.mrb[0].mxu0 %v1072
      %v1811 = vpop.f32.mrb[0].mxu0
      %v1812 = vadd.f32 %v487, %v1811
      %v1813 = vpop.f32.mrb[0].mxu0
      %v1814 = vpop.f32.mrb[0].mxu0
      %v1815 = vadd.f32 %v487, %v1814
      %v1816 = vpop.f32.mrb[0].mxu0
      %1817 = vdwg.mxu0
      %1818 = vmatprep.subr.bf16.mxu0 0
      %1819 = vmatpush1.bf16.msra.mxu0 %v1529
      %1820 = vmatprep.subr.bf16.mxu0 0
      %1821 = vmatpush1.bf16.msra.mxu0 %v1530
      %1822 = vmatprep.subr.bf16.mxu0 0
      %1823 = vmatpush1.bf16.msra.mxu0 %v1531
      %1824 = vmatprep.subr.bf16.mxu0 0
      %1825 = vmatpush1.bf16.msra.mxu0 %v1532
      %1826 = vmatprep.subr.bf16.mxu0 0
      %1827 = vmatpush1.bf16.msra.mxu0 %v1533
      %1828 = vmatprep.subr.bf16.mxu0 0
      %1829 = vmatpush1.bf16.msra.mxu0 %v1534
      %1830 = vmatprep.subr.bf16.mxu0 0
      %1831 = vmatpush1.bf16.msra.mxu0 %v1535
      %1832 = vmatprep.subr.bf16.mxu0 0
      %1833 = vmatpush1.bf16.msra.mxu0 %v1536
      %1834 = vmatprep.subr.bf16.mxu0 0
      %1835 = vmatpush1.bf16.msra.mxu0 %v1537
      %1836 = vmatprep.subr.bf16.mxu0 0
      %1837 = vmatpush1.bf16.msra.mxu0 %v1538
      %1838 = vmatprep.subr.bf16.mxu0 0
      %1839 = vmatpush1.bf16.msra.mxu0 %v1539
      %1840 = vmatprep.subr.bf16.mxu0 0
      %1841 = vmatpush1.bf16.msra.mxu0 %v1540
      %1842 = vmatprep.subr.bf16.mxu0 0
      %1843 = vmatpush1.bf16.msra.mxu0 %v1541
      %1844 = vmatprep.subr.bf16.mxu0 0
      %1845 = vmatpush1.bf16.msra.mxu0 %v1542
      %1846 = vmatprep.subr.bf16.mxu0 0
      %1847 = vmatpush1.bf16.msra.mxu0 %v1543
      %1848 = vmatprep.subr.bf16.mxu0 0
      %1849 = vmatpush1.bf16.msra.mxu0 %v1544
      %1850 = vmatprep.mubr.bf16.mxu0 %v940
      %1851 = vmatmul.mubr.bf16.gmra.mrb[0].mxu0 %v939
      %v1852 = vpop.f32.mrb[0].mxu0
      %v1853 = vadd.f32 %v1692, %v1852
      %v1854 = vpop.f32.mrb[0].mxu0
      %v1855 = vpop.f32.mrb[0].mxu0
      %v1856 = vadd.f32 %v1695, %v1855
      %v1857 = vpop.f32.mrb[0].mxu0
      %1858 = vmatprep.mubr.bf16.mxu0 %v949
      %1859 = vmatmul.mubr.bf16.gmra.mrb[0].mxu0 %v948
      %v1860 = vpop.f32.mrb[0].mxu0
      %v1861 = vadd.f32 %v1700, %v1860
      %v1862 = vpop.f32.mrb[0].mxu0
      %v1863 = vpop.f32.mrb[0].mxu0
      %v1864 = vadd.f32 %v1703, %v1863
      %v1865 = vpop.f32.mrb[0].mxu0
      %1866 = vmatprep.mubr.bf16.mxu0 %v958
      %1867 = vmatmul.mubr.bf16.gmra.mrb[0].mxu0 %v957
      %v1868 = vpop.f32.mrb[0].mxu0
      %v1869 = vadd.f32 %v1708, %v1868
      %v1870 = vpop.f32.mrb[0].mxu0
      %v1871 = vpop.f32.mrb[0].mxu0
      %v1872 = vadd.f32 %v1711, %v1871
      %v1873 = vpop.f32.mrb[0].mxu0
      %1874 = vmatprep.mubr.bf16.mxu0 %v967
      %1875 = vmatmul.mubr.bf16.gmra.mrb[0].mxu0 %v966
      %v1876 = vpop.f32.mrb[0].mxu0
      %v1877 = vadd.f32 %v1716, %v1876
      %v1878 = vpop.f32.mrb[0].mxu0
      %v1879 = vpop.f32.mrb[0].mxu0
      %v1880 = vadd.f32 %v1719, %v1879
      %v1881 = vpop.f32.mrb[0].mxu0
      %1882 = vmatprep.mubr.bf16.mxu0 %v976
      %1883 = vmatmul.mubr.bf16.gmra.mrb[0].mxu0 %v975
      %v1884 = vpop.f32.mrb[0].mxu0
      %v1885 = vadd.f32 %v1724, %v1884
      %v1886 = vpop.f32.mrb[0].mxu0
      %v1887 = vpop.f32.mrb[0].mxu0
      %v1888 = vadd.f32 %v1727, %v1887
      %v1889 = vpop.f32.mrb[0].mxu0
      %1890 = vmatprep.mubr.bf16.mxu0 %v985
      %1891 = vmatmul.mubr.bf16.gmra.mrb[0].mxu0 %v984
      %v1892 = vpop.f32.mrb[0].mxu0
      %v1893 = vadd.f32 %v1732, %v1892
      %v1894 = vpop.f32.mrb[0].mxu0
      %v1895 = vpop.f32.mrb[0].mxu0
      %v1896 = vadd.f32 %v1735, %v1895
      %v1897 = vpop.f32.mrb[0].mxu0
      %1898 = vmatprep.mubr.bf16.mxu0 %v994
      %1899 = vmatmul.mubr.bf16.gmra.mrb[0].mxu0 %v993
      %v1900 = vpop.f32.mrb[0].mxu0
      %v1901 = vadd.f32 %v1740, %v1900
      %v1902 = vpop.f32.mrb[0].mxu0
      %v1903 = vpop.f32.mrb[0].mxu0
      %v1904 = vadd.f32 %v1743, %v1903
      %v1905 = vpop.f32.mrb[0].mxu0
      %1906 = vmatprep.mubr.bf16.mxu0 %v1003
      %1907 = vmatmul.mubr.bf16.gmra.mrb[0].mxu0 %v1002
      %v1908 = vpop.f32.mrb[0].mxu0
      %v1909 = vadd.f32 %v1748, %v1908
      %v1910 = vpop.f32.mrb[0].mxu0
      %v1911 = vpop.f32.mrb[0].mxu0
      %v1912 = vadd.f32 %v1751, %v1911
      %v1913 = vpop.f32.mrb[0].mxu0
      %1914 = vmatprep.mubr.bf16.mxu0 %v1012
      %1915 = vmatmul.mubr.bf16.gmra.mrb[0].mxu0 %v1011
      %v1916 = vpop.f32.mrb[0].mxu0
      %v1917 = vadd.f32 %v1756, %v1916
      %v1918 = vpop.f32.mrb[0].mxu0
      %v1919 = vpop.f32.mrb[0].mxu0
      %v1920 = vadd.f32 %v1759, %v1919
      %v1921 = vpop.f32.mrb[0].mxu0
      %1922 = vmatprep.mubr.bf16.mxu0 %v1021
      %1923 = vmatmul.mubr.bf16.gmra.mrb[0].mxu0 %v1020
      %v1924 = vpop.f32.mrb[0].mxu0
      %v1925 = vadd.f32 %v1764, %v1924
      %v1926 = vpop.f32.mrb[0].mxu0
      %v1927 = vpop.f32.mrb[0].mxu0
      %v1928 = vadd.f32 %v1767, %v1927
      %v1929 = vpop.f32.mrb[0].mxu0
      %1930 = vmatprep.mubr.bf16.mxu0 %v1030
      %1931 = vmatmul.mubr.bf16.gmra.mrb[0].mxu0 %v1029
      %v1932 = vpop.f32.mrb[0].mxu0
      %v1933 = vadd.f32 %v1772, %v1932
      %v1934 = vpop.f32.mrb[0].mxu0
      %v1935 = vpop.f32.mrb[0].mxu0
      %v1936 = vadd.f32 %v1775, %v1935
      %v1937 = vpop.f32.mrb[0].mxu0
      %1938 = vmatprep.mubr.bf16.mxu0 %v1039
      %1939 = vmatmul.mubr.bf16.gmra.mrb[0].mxu0 %v1038
      %v1940 = vpop.f32.mrb[0].mxu0
      %v1941 = vadd.f32 %v1780, %v1940
      %v1942 = vpop.f32.mrb[0].mxu0
      %v1943 = vpop.f32.mrb[0].mxu0
      %v1944 = vadd.f32 %v1783, %v1943
      %v1945 = vpop.f32.mrb[0].mxu0
      %1946 = vmatprep.mubr.bf16.mxu0 %v1048
      %1947 = vmatmul.mubr.bf16.gmra.mrb[0].mxu0 %v1047
      %v1948 = vpop.f32.mrb[0].mxu0
      %v1949 = vadd.f32 %v1788, %v1948
      %v1950 = vpop.f32.mrb[0].mxu0
      %v1951 = vpop.f32.mrb[0].mxu0
      %v1952 = vadd.f32 %v1791, %v1951
      %v1953 = vpop.f32.mrb[0].mxu0
      %1954 = vmatprep.mubr.bf16.mxu0 %v1057
      %1955 = vmatmul.mubr.bf16.gmra.mrb[0].mxu0 %v1056
      %v1956 = vpop.f32.mrb[0].mxu0
      %v1957 = vadd.f32 %v1796, %v1956
      %v1958 = vpop.f32.mrb[0].mxu0
      %v1959 = vpop.f32.mrb[0].mxu0
      %v1960 = vadd.f32 %v1799, %v1959
      %v1961 = vpop.f32.mrb[0].mxu0
      %1962 = vmatprep.mubr.bf16.mxu0 %v1066
      %1963 = vmatmul.mubr.bf16.gmra.mrb[0].mxu0 %v1065
      %v1964 = vpop.f32.mrb[0].mxu0
      %v1965 = vadd.f32 %v1804, %v1964
      %v1966 = vpop.f32.mrb[0].mxu0
      %v1967 = vpop.f32.mrb[0].mxu0
      %v1968 = vadd.f32 %v1807, %v1967
      %v1969 = vpop.f32.mrb[0].mxu0
      %1970 = vmatprep.mubr.bf16.mxu0 %v1075
      %1971 = vmatmul.mubr.bf16.gmra.mrb[0].mxu0 %v1074
      %v1972 = vpop.f32.mrb[0].mxu0
      %v1973 = vadd.f32 %v1812, %v1972
      %v1974 = vpop.f32.mrb[0].mxu0
      %v1975 = vpop.f32.mrb[0].mxu0
      %v1976 = vadd.f32 %v1815, %v1975
      %v1977 = vpop.f32.mrb[0].mxu0
      %1978 = vdwg.mxu0
      %1979 = vmatprep.subr.bf16.mxu0 0
      %1980 = vmatpush1.bf16.msra.mxu0 %v1545
      %1981 = vmatprep.subr.bf16.mxu0 0
      %1982 = vmatpush1.bf16.msra.mxu0 %v1546
      %1983 = vmatprep.subr.bf16.mxu0 0
      %1984 = vmatpush1.bf16.msra.mxu0 %v1547
      %1985 = vmatprep.subr.bf16.mxu0 0
      %1986 = vmatpush1.bf16.msra.mxu0 %v1548
      %1987 = vmatprep.subr.bf16.mxu0 0
      %1988 = vmatpush1.bf16.msra.mxu0 %v1549
      %1989 = vmatprep.subr.bf16.mxu0 0
      %1990 = vmatpush1.bf16.msra.mxu0 %v1550
      %1991 = vmatprep.subr.bf16.mxu0 0
      %1992 = vmatpush1.bf16.msra.mxu0 %v1551
      %1993 = vmatprep.subr.bf16.mxu0 0
      %1994 = vmatpush1.bf16.msra.mxu0 %v1552
      %1995 = vmatprep.subr.bf16.mxu0 0
      %1996 = vmatpush1.bf16.msra.mxu0 %v1553
      %1997 = vmatprep.subr.bf16.mxu0 0
      %1998 = vmatpush1.bf16.msra.mxu0 %v1554
      %1999 = vmatprep.subr.bf16.mxu0 0
      %2000 = vmatpush1.bf16.msra.mxu0 %v1555
      %2001 = vmatprep.subr.bf16.mxu0 0
      %2002 = vmatpush1.bf16.msra.mxu0 %v1556
      %2003 = vmatprep.subr.bf16.mxu0 0
      %2004 = vmatpush1.bf16.msra.mxu0 %v1557
      %2005 = vmatprep.subr.bf16.mxu0 0
      %2006 = vmatpush1.bf16.msra.mxu0 %v1558
      %2007 = vmatprep.subr.bf16.mxu0 0
      %2008 = vmatpush1.bf16.msra.mxu0 %v1559
      %2009 = vmatprep.subr.bf16.mxu0 0
      %2010 = vmatpush1.bf16.msra.mxu0 %v1560
      %2011 = vmatprep.mubr.bf16.mxu0 %v942
      %2012 = vmatmul.mubr.bf16.gmra.mrb[0].mxu0 %v941
      %v2013 = vpop.f32.mrb[0].mxu0
      %v2014 = vadd.f32 %v1853, %v2013
      %v2015 = vpop.f32.mrb[0].mxu0
      %v2016 = vpop.f32.mrb[0].mxu0
      %v2017 = vadd.f32 %v1856, %v2016
      %v2018 = vpop.f32.mrb[0].mxu0
      %2019 = vmatprep.mubr.bf16.mxu0 %v951
      %2020 = vmatmul.mubr.bf16.gmra.mrb[0].mxu0 %v950
      %v2021 = vpop.f32.mrb[0].mxu0
      %v2022 = vadd.f32 %v1861, %v2021
      %v2023 = vpop.f32.mrb[0].mxu0
      %v2024 = vpop.f32.mrb[0].mxu0
      %v2025 = vadd.f32 %v1864, %v2024
      %v2026 = vpop.f32.mrb[0].mxu0
      %2027 = vmatprep.mubr.bf16.mxu0 %v960
      %2028 = vmatmul.mubr.bf16.gmra.mrb[0].mxu0 %v959
      %v2029 = vpop.f32.mrb[0].mxu0
      %v2030 = vadd.f32 %v1869, %v2029
      %v2031 = vpop.f32.mrb[0].mxu0
      %v2032 = vpop.f32.mrb[0].mxu0
      %v2033 = vadd.f32 %v1872, %v2032
      %v2034 = vpop.f32.mrb[0].mxu0
      %2035 = vmatprep.mubr.bf16.mxu0 %v969
      %2036 = vmatmul.mubr.bf16.gmra.mrb[0].mxu0 %v968
      %v2037 = vpop.f32.mrb[0].mxu0
      %v2038 = vadd.f32 %v1877, %v2037
      %v2039 = vpop.f32.mrb[0].mxu0
      %v2040 = vpop.f32.mrb[0].mxu0
      %v2041 = vadd.f32 %v1880, %v2040
      %v2042 = vpop.f32.mrb[0].mxu0
      %2043 = vmatprep.mubr.bf16.mxu0 %v978
      %2044 = vmatmul.mubr.bf16.gmra.mrb[0].mxu0 %v977
      %v2045 = vpop.f32.mrb[0].mxu0
      %v2046 = vadd.f32 %v1885, %v2045
      %v2047 = vpop.f32.mrb[0].mxu0
      %v2048 = vpop.f32.mrb[0].mxu0
      %v2049 = vadd.f32 %v1888, %v2048
      %v2050 = vpop.f32.mrb[0].mxu0
      %2051 = vmatprep.mubr.bf16.mxu0 %v987
      %2052 = vmatmul.mubr.bf16.gmra.mrb[0].mxu0 %v986
      %v2053 = vpop.f32.mrb[0].mxu0
      %v2054 = vadd.f32 %v1893, %v2053
      %v2055 = vpop.f32.mrb[0].mxu0
      %v2056 = vpop.f32.mrb[0].mxu0
      %v2057 = vadd.f32 %v1896, %v2056
      %v2058 = vpop.f32.mrb[0].mxu0
      %2059 = vmatprep.mubr.bf16.mxu0 %v996
      %2060 = vmatmul.mubr.bf16.gmra.mrb[0].mxu0 %v995
      %v2061 = vpop.f32.mrb[0].mxu0
      %v2062 = vadd.f32 %v1901, %v2061
      %v2063 = vpop.f32.mrb[0].mxu0
      %v2064 = vpop.f32.mrb[0].mxu0
      %v2065 = vadd.f32 %v1904, %v2064
      %v2066 = vpop.f32.mrb[0].mxu0
      %2067 = vmatprep.mubr.bf16.mxu0 %v1005
      %2068 = vmatmul.mubr.bf16.gmra.mrb[0].mxu0 %v1004
      %v2069 = vpop.f32.mrb[0].mxu0
      %v2070 = vadd.f32 %v1909, %v2069
      %v2071 = vpop.f32.mrb[0].mxu0
      %v2072 = vpop.f32.mrb[0].mxu0
      %v2073 = vadd.f32 %v1912, %v2072
      %v2074 = vpop.f32.mrb[0].mxu0
      %2075 = vmatprep.mubr.bf16.mxu0 %v1014
      %2076 = vmatmul.mubr.bf16.gmra.mrb[0].mxu0 %v1013
      %v2077 = vpop.f32.mrb[0].mxu0
      %v2078 = vadd.f32 %v1917, %v2077
      %v2079 = vpop.f32.mrb[0].mxu0
      %v2080 = vpop.f32.mrb[0].mxu0
      %v2081 = vadd.f32 %v1920, %v2080
      %v2082 = vpop.f32.mrb[0].mxu0
      %2083 = vmatprep.mubr.bf16.mxu0 %v1023
      %2084 = vmatmul.mubr.bf16.gmra.mrb[0].mxu0 %v1022
      %v2085 = vpop.f32.mrb[0].mxu0
      %v2086 = vadd.f32 %v1925, %v2085
      %v2087 = vpop.f32.mrb[0].mxu0
      %v2088 = vpop.f32.mrb[0].mxu0
      %v2089 = vadd.f32 %v1928, %v2088
      %v2090 = vpop.f32.mrb[0].mxu0
      %2091 = vmatprep.mubr.bf16.mxu0 %v1032
      %2092 = vmatmul.mubr.bf16.gmra.mrb[0].mxu0 %v1031
      %v2093 = vpop.f32.mrb[0].mxu0
      %v2094 = vadd.f32 %v1933, %v2093
      %v2095 = vpop.f32.mrb[0].mxu0
      %v2096 = vpop.f32.mrb[0].mxu0
      %v2097 = vadd.f32 %v1936, %v2096
      %v2098 = vpop.f32.mrb[0].mxu0
      %2099 = vmatprep.mubr.bf16.mxu0 %v1041
      %2100 = vmatmul.mubr.bf16.gmra.mrb[0].mxu0 %v1040
      %v2101 = vpop.f32.mrb[0].mxu0
      %v2102 = vadd.f32 %v1941, %v2101
      %v2103 = vpop.f32.mrb[0].mxu0
      %v2104 = vpop.f32.mrb[0].mxu0
      %v2105 = vadd.f32 %v1944, %v2104
      %v2106 = vpop.f32.mrb[0].mxu0
      %2107 = vmatprep.mubr.bf16.mxu0 %v1050
      %2108 = vmatmul.mubr.bf16.gmra.mrb[0].mxu0 %v1049
      %v2109 = vpop.f32.mrb[0].mxu0
      %v2110 = vadd.f32 %v1949, %v2109
      %v2111 = vpop.f32.mrb[0].mxu0
      %v2112 = vpop.f32.mrb[0].mxu0
      %v2113 = vadd.f32 %v1952, %v2112
      %v2114 = vpop.f32.mrb[0].mxu0
      %2115 = vmatprep.mubr.bf16.mxu0 %v1059
      %2116 = vmatmul.mubr.bf16.gmra.mrb[0].mxu0 %v1058
      %v2117 = vpop.f32.mrb[0].mxu0
      %v2118 = vadd.f32 %v1957, %v2117
      %v2119 = vpop.f32.mrb[0].mxu0
      %v2120 = vpop.f32.mrb[0].mxu0
      %v2121 = vadd.f32 %v1960, %v2120
      %v2122 = vpop.f32.mrb[0].mxu0
      %2123 = vmatprep.mubr.bf16.mxu0 %v1068
      %2124 = vmatmul.mubr.bf16.gmra.mrb[0].mxu0 %v1067
      %v2125 = vpop.f32.mrb[0].mxu0
      %v2126 = vadd.f32 %v1965, %v2125
      %v2127 = vpop.f32.mrb[0].mxu0
      %v2128 = vpop.f32.mrb[0].mxu0
      %v2129 = vadd.f32 %v1968, %v2128
      %v2130 = vpop.f32.mrb[0].mxu0
      %2131 = vmatprep.mubr.bf16.mxu0 %v1077
      %2132 = vmatmul.mubr.bf16.gmra.mrb[0].mxu0 %v1076
      %v2133 = vpop.f32.mrb[0].mxu0
      %v2134 = vadd.f32 %v1973, %v2133
      %v2135 = vpop.f32.mrb[0].mxu0
      %v2136 = vpop.f32.mrb[0].mxu0
      %v2137 = vadd.f32 %v1976, %v2136
      %v2138 = vpop.f32.mrb[0].mxu0
      %2139 = vdwg.mxu0
      %2140 = vmatprep.subr.bf16.mxu0 0
      %2141 = vmatpush1.bf16.msra.mxu0 %v1561
      %2142 = vmatprep.subr.bf16.mxu0 0
      %2143 = vmatpush1.bf16.msra.mxu0 %v1562
      %2144 = vmatprep.subr.bf16.mxu0 0
      %2145 = vmatpush1.bf16.msra.mxu0 %v1563
      %2146 = vmatprep.subr.bf16.mxu0 0
      %2147 = vmatpush1.bf16.msra.mxu0 %v1564
      %2148 = vmatprep.subr.bf16.mxu0 0
      %2149 = vmatpush1.bf16.msra.mxu0 %v1565
      %2150 = vmatprep.subr.bf16.mxu0 0
      %2151 = vmatpush1.bf16.msra.mxu0 %v1566
      %2152 = vmatprep.subr.bf16.mxu0 0
      %2153 = vmatpush1.bf16.msra.mxu0 %v1567
      %2154 = vmatprep.subr.bf16.mxu0 0
      %2155 = vmatpush1.bf16.msra.mxu0 %v1568
      %2156 = vmatprep.subr.bf16.mxu0 0
      %2157 = vmatpush1.bf16.msra.mxu0 %v1569
      %2158 = vmatprep.subr.bf16.mxu0 0
      %2159 = vmatpush1.bf16.msra.mxu0 %v1570
      %2160 = vmatprep.subr.bf16.mxu0 0
      %2161 = vmatpush1.bf16.msra.mxu0 %v1571
      %2162 = vmatprep.subr.bf16.mxu0 0
      %2163 = vmatpush1.bf16.msra.mxu0 %v1572
      %2164 = vmatprep.subr.bf16.mxu0 0
      %2165 = vmatpush1.bf16.msra.mxu0 %v1573
      %2166 = vmatprep.subr.bf16.mxu0 0
      %2167 = vmatpush1.bf16.msra.mxu0 %v1574
      %2168 = vmatprep.subr.bf16.mxu0 0
      %2169 = vmatpush1.bf16.msra.mxu0 %v1575
      %2170 = vmatprep.subr.bf16.mxu0 0
      %2171 = vmatpush1.bf16.msra.mxu0 %v1576
      %2172 = vmatprep.mubr.bf16.mxu0 %v944
      %2173 = vmatmul.mubr.bf16.gmra.mrb[0].mxu0 %v943
      %v2174 = vpop.f32.mrb[0].mxu0
      %v2175 = vadd.f32 %v2014, %v2174
      %v2176 = vpop.f32.mrb[0].mxu0
      %v2177 = vpop.f32.mrb[0].mxu0
      %v2178 = vadd.f32 %v2017, %v2177
      %v2179 = vpop.f32.mrb[0].mxu0
      %2180 = vmatprep.mubr.bf16.mxu0 %v953
      %2181 = vmatmul.mubr.bf16.gmra.mrb[0].mxu0 %v952
      %v2182 = vpop.f32.mrb[0].mxu0
      %v2183 = vadd.f32 %v2022, %v2182
      %v2184 = vpop.f32.mrb[0].mxu0
      %v2185 = vpop.f32.mrb[0].mxu0
      %v2186 = vadd.f32 %v2025, %v2185
      %v2187 = vpop.f32.mrb[0].mxu0
      %2188 = vmatprep.mubr.bf16.mxu0 %v962
      %2189 = vmatmul.mubr.bf16.gmra.mrb[0].mxu0 %v961
      %v2190 = vpop.f32.mrb[0].mxu0
      %v2191 = vadd.f32 %v2030, %v2190
      %v2192 = vpop.f32.mrb[0].mxu0
      %v2193 = vpop.f32.mrb[0].mxu0
      %v2194 = vadd.f32 %v2033, %v2193
      %v2195 = vpop.f32.mrb[0].mxu0
      %2196 = vmatprep.mubr.bf16.mxu0 %v971
      %2197 = vmatmul.mubr.bf16.gmra.mrb[0].mxu0 %v970
      %v2198 = vpop.f32.mrb[0].mxu0
      %v2199 = vadd.f32 %v2038, %v2198
      %v2200 = vpop.f32.mrb[0].mxu0
      %v2201 = vpop.f32.mrb[0].mxu0
      %v2202 = vadd.f32 %v2041, %v2201
      %v2203 = vpop.f32.mrb[0].mxu0
      %2204 = vmatprep.mubr.bf16.mxu0 %v980
      %2205 = vmatmul.mubr.bf16.gmra.mrb[0].mxu0 %v979
      %v2206 = vpop.f32.mrb[0].mxu0
      %v2207 = vadd.f32 %v2046, %v2206
      %v2208 = vpop.f32.mrb[0].mxu0
      %v2209 = vpop.f32.mrb[0].mxu0
      %v2210 = vadd.f32 %v2049, %v2209
      %v2211 = vpop.f32.mrb[0].mxu0
      %2212 = vmatprep.mubr.bf16.mxu0 %v989
      %2213 = vmatmul.mubr.bf16.gmra.mrb[0].mxu0 %v988
      %v2214 = vpop.f32.mrb[0].mxu0
      %v2215 = vadd.f32 %v2054, %v2214
      %v2216 = vpop.f32.mrb[0].mxu0
      %v2217 = vpop.f32.mrb[0].mxu0
      %v2218 = vadd.f32 %v2057, %v2217
      %v2219 = vpop.f32.mrb[0].mxu0
      %2220 = vmatprep.mubr.bf16.mxu0 %v998
      %2221 = vmatmul.mubr.bf16.gmra.mrb[0].mxu0 %v997
      %v2222 = vpop.f32.mrb[0].mxu0
      %v2223 = vadd.f32 %v2062, %v2222
      %v2224 = vpop.f32.mrb[0].mxu0
      %v2225 = vpop.f32.mrb[0].mxu0
      %v2226 = vadd.f32 %v2065, %v2225
      %v2227 = vpop.f32.mrb[0].mxu0
      %2228 = vmatprep.mubr.bf16.mxu0 %v1007
      %2229 = vmatmul.mubr.bf16.gmra.mrb[0].mxu0 %v1006
      %v2230 = vpop.f32.mrb[0].mxu0
      %v2231 = vadd.f32 %v2070, %v2230
      %v2232 = vpop.f32.mrb[0].mxu0
      %v2233 = vpop.f32.mrb[0].mxu0
      %v2234 = vadd.f32 %v2073, %v2233
      %v2235 = vpop.f32.mrb[0].mxu0
      %2236 = vmatprep.mubr.bf16.mxu0 %v1016
      %2237 = vmatmul.mubr.bf16.gmra.mrb[0].mxu0 %v1015
      %v2238 = vpop.f32.mrb[0].mxu0
      %v2239 = vadd.f32 %v2078, %v2238
      %v2240 = vpop.f32.mrb[0].mxu0
      %v2241 = vpop.f32.mrb[0].mxu0
      %v2242 = vadd.f32 %v2081, %v2241
      %v2243 = vpop.f32.mrb[0].mxu0
      %2244 = vmatprep.mubr.bf16.mxu0 %v1025
      %2245 = vmatmul.mubr.bf16.gmra.mrb[0].mxu0 %v1024
      %v2246 = vpop.f32.mrb[0].mxu0
      %v2247 = vadd.f32 %v2086, %v2246
      %v2248 = vpop.f32.mrb[0].mxu0
      %v2249 = vpop.f32.mrb[0].mxu0
      %v2250 = vadd.f32 %v2089, %v2249
      %v2251 = vpop.f32.mrb[0].mxu0
      %2252 = vmatprep.mubr.bf16.mxu0 %v1034
      %2253 = vmatmul.mubr.bf16.gmra.mrb[0].mxu0 %v1033
      %v2254 = vpop.f32.mrb[0].mxu0
      %v2255 = vadd.f32 %v2094, %v2254
      %v2256 = vpop.f32.mrb[0].mxu0
      %v2257 = vpop.f32.mrb[0].mxu0
      %v2258 = vadd.f32 %v2097, %v2257
      %v2259 = vpop.f32.mrb[0].mxu0
      %2260 = vmatprep.mubr.bf16.mxu0 %v1043
      %2261 = vmatmul.mubr.bf16.gmra.mrb[0].mxu0 %v1042
      %v2262 = vpop.f32.mrb[0].mxu0
      %v2263 = vadd.f32 %v2102, %v2262
      %v2264 = vpop.f32.mrb[0].mxu0
      %v2265 = vpop.f32.mrb[0].mxu0
      %v2266 = vadd.f32 %v2105, %v2265
      %v2267 = vpop.f32.mrb[0].mxu0
      %2268 = vmatprep.mubr.bf16.mxu0 %v1052
      %2269 = vmatmul.mubr.bf16.gmra.mrb[0].mxu0 %v1051
      %v2270 = vpop.f32.mrb[0].mxu0
      %v2271 = vadd.f32 %v2110, %v2270
      %v2272 = vpop.f32.mrb[0].mxu0
      %v2273 = vpop.f32.mrb[0].mxu0
      %v2274 = vadd.f32 %v2113, %v2273
      %v2275 = vpop.f32.mrb[0].mxu0
      %2276 = vmatprep.mubr.bf16.mxu0 %v1061
      %2277 = vmatmul.mubr.bf16.gmra.mrb[0].mxu0 %v1060
      %v2278 = vpop.f32.mrb[0].mxu0
      %v2279 = vadd.f32 %v2118, %v2278
      %v2280 = vpop.f32.mrb[0].mxu0
      %v2281 = vpop.f32.mrb[0].mxu0
      %v2282 = vadd.f32 %v2121, %v2281
      %v2283 = vpop.f32.mrb[0].mxu0
      %2284 = vmatprep.mubr.bf16.mxu0 %v1070
      %2285 = vmatmul.mubr.bf16.gmra.mrb[0].mxu0 %v1069
      %v2286 = vpop.f32.mrb[0].mxu0
      %v2287 = vadd.f32 %v2126, %v2286
      %v2288 = vpop.f32.mrb[0].mxu0
      %v2289 = vpop.f32.mrb[0].mxu0
      %v2290 = vadd.f32 %v2129, %v2289
      %v2291 = vpop.f32.mrb[0].mxu0
      %2292 = vmatprep.mubr.bf16.mxu0 %v1079
      %2293 = vmatmul.mubr.bf16.gmra.mrb[0].mxu0 %v1078
      %v2294 = vpop.f32.mrb[0].mxu0
      %v2295 = vadd.f32 %v2134, %v2294
      %v2296 = vpop.f32.mrb[0].mxu0
      %v2297 = vpop.f32.mrb[0].mxu0
      %v2298 = vadd.f32 %v2137, %v2297
      %v2299 = vpop.f32.mrb[0].mxu0
      %2300 = vdwg.mxu0
      %2301 = vmatprep.subr.bf16.mxu0 0
      %2302 = vmatpush1.bf16.msra.mxu0 %v1577
      %2303 = vmatprep.subr.bf16.mxu0 0
      %2304 = vmatpush1.bf16.msra.mxu0 %v1578
      %2305 = vmatprep.subr.bf16.mxu0 0
      %2306 = vmatpush1.bf16.msra.mxu0 %v1579
      %2307 = vmatprep.subr.bf16.mxu0 0
      %2308 = vmatpush1.bf16.msra.mxu0 %v1580
      %2309 = vmatprep.subr.bf16.mxu0 0
      %2310 = vmatpush1.bf16.msra.mxu0 %v1581
      %2311 = vmatprep.subr.bf16.mxu0 0
      %2312 = vmatpush1.bf16.msra.mxu0 %v1582
      %2313 = vmatprep.subr.bf16.mxu0 0
      %2314 = vmatpush1.bf16.msra.mxu0 %v1583
      %2315 = vmatprep.subr.bf16.mxu0 0
      %2316 = vmatpush1.bf16.msra.mxu0 %v1584
      %2317 = vmatprep.subr.bf16.mxu0 0
      %2318 = vmatpush1.bf16.msra.mxu0 0
      %2319 = vmatprep.subr.bf16.mxu0 0
      %2320 = vmatpush1.bf16.msra.mxu0 0
      %2321 = vmatprep.subr.bf16.mxu0 0
      %2322 = vmatpush1.bf16.msra.mxu0 0
      %2323 = vmatprep.subr.bf16.mxu0 0
      %2324 = vmatpush1.bf16.msra.mxu0 0
      %2325 = vmatprep.subr.bf16.mxu0 0
      %2326 = vmatpush1.bf16.msra.mxu0 0
      %2327 = vmatprep.subr.bf16.mxu0 0
      %2328 = vmatpush1.bf16.msra.mxu0 0
      %2329 = vmatprep.subr.bf16.mxu0 0
      %2330 = vmatpush1.bf16.msra.mxu0 0
      %2331 = vmatprep.subr.bf16.mxu0 0
      %2332 = vmatpush1.bf16.msra.mxu0 0
      %2333 = vmatprep.mubr.bf16.mxu0 0
      %2334 = vmatmul.mubr.bf16.gmra.mrb[0].mxu0 %v945
      %v2335 = vpop.f32.mrb[0].mxu0
      %v2336 = vadd.f32 %v2175, %v2335
      %v2337 = vpop.f32.mrb[0].mxu0
      %v2338 = vpop.f32.mrb[0].mxu0
      %v2339 = vadd.f32 %v2178, %v2338
      %v2340 = vpop.f32.mrb[0].mxu0
      %2341 = vmatprep.mubr.bf16.mxu0 0
      %2342 = vmatmul.mubr.bf16.gmra.mrb[0].mxu0 %v954
      %v2343 = vpop.f32.mrb[0].mxu0
      %v2344 = vadd.f32 %v2183, %v2343
      %v2345 = vpop.f32.mrb[0].mxu0
      %v2346 = vpop.f32.mrb[0].mxu0
      %v2347 = vadd.f32 %v2186, %v2346
      %v2348 = vpop.f32.mrb[0].mxu0
      %2349 = vmatprep.mubr.bf16.mxu0 0
      %2350 = vmatmul.mubr.bf16.gmra.mrb[0].mxu0 %v963
      %v2351 = vpop.f32.mrb[0].mxu0
      %v2352 = vadd.f32 %v2191, %v2351
      %v2353 = vpop.f32.mrb[0].mxu0
      %v2354 = vpop.f32.mrb[0].mxu0
      %v2355 = vadd.f32 %v2194, %v2354
      %v2356 = vpop.f32.mrb[0].mxu0
      %2357 = vmatprep.mubr.bf16.mxu0 0
      %2358 = vmatmul.mubr.bf16.gmra.mrb[0].mxu0 %v972
      %v2359 = vpop.f32.mrb[0].mxu0
      %v2360 = vadd.f32 %v2199, %v2359
      %v2361 = vpop.f32.mrb[0].mxu0
      %v2362 = vpop.f32.mrb[0].mxu0
      %v2363 = vadd.f32 %v2202, %v2362
      %v2364 = vpop.f32.mrb[0].mxu0
      %2365 = vmatprep.mubr.bf16.mxu0 0
      %2366 = vmatmul.mubr.bf16.gmra.mrb[0].mxu0 %v981
      %v2367 = vpop.f32.mrb[0].mxu0
      %v2368 = vadd.f32 %v2207, %v2367
      %v2369 = vpop.f32.mrb[0].mxu0
      %v2370 = vpop.f32.mrb[0].mxu0
      %v2371 = vadd.f32 %v2210, %v2370
      %v2372 = vpop.f32.mrb[0].mxu0
      %2373 = vmatprep.mubr.bf16.mxu0 0
      %2374 = vmatmul.mubr.bf16.gmra.mrb[0].mxu0 %v990
      %v2375 = vpop.f32.mrb[0].mxu0
      %v2376 = vadd.f32 %v2215, %v2375
      %v2377 = vpop.f32.mrb[0].mxu0
      %v2378 = vpop.f32.mrb[0].mxu0
      %v2379 = vadd.f32 %v2218, %v2378
      %v2380 = vpop.f32.mrb[0].mxu0
      %2381 = vmatprep.mubr.bf16.mxu0 0
      %2382 = vmatmul.mubr.bf16.gmra.mrb[0].mxu0 %v999
      %v2383 = vpop.f32.mrb[0].mxu0
      %v2384 = vadd.f32 %v2223, %v2383
      %v2385 = vpop.f32.mrb[0].mxu0
      %v2386 = vpop.f32.mrb[0].mxu0
      %v2387 = vadd.f32 %v2226, %v2386
      %v2388 = vpop.f32.mrb[0].mxu0
      %2389 = vmatprep.mubr.bf16.mxu0 0
      %2390 = vmatmul.mubr.bf16.gmra.mrb[0].mxu0 %v1008
      %v2391 = vpop.f32.mrb[0].mxu0
      %v2392 = vadd.f32 %v2231, %v2391
      %v2393 = vpop.f32.mrb[0].mxu0
      %v2394 = vpop.f32.mrb[0].mxu0
      %v2395 = vadd.f32 %v2234, %v2394
      %v2396 = vpop.f32.mrb[0].mxu0
      %2397 = vmatprep.mubr.bf16.mxu0 0
      %2398 = vmatmul.mubr.bf16.gmra.mrb[0].mxu0 %v1017
      %v2399 = vpop.f32.mrb[0].mxu0
      %v2400 = vadd.f32 %v2239, %v2399
      %v2401 = vpop.f32.mrb[0].mxu0
      %v2402 = vpop.f32.mrb[0].mxu0
      %v2403 = vadd.f32 %v2242, %v2402
      %v2404 = vpop.f32.mrb[0].mxu0
      %2405 = vmatprep.mubr.bf16.mxu0 0
      %2406 = vmatmul.mubr.bf16.gmra.mrb[0].mxu0 %v1026
      %v2407 = vpop.f32.mrb[0].mxu0
      %v2408 = vadd.f32 %v2247, %v2407
      %v2409 = vpop.f32.mrb[0].mxu0
      %v2410 = vpop.f32.mrb[0].mxu0
      %v2411 = vadd.f32 %v2250, %v2410
      %v2412 = vpop.f32.mrb[0].mxu0
      %2413 = vmatprep.mubr.bf16.mxu0 0
      %2414 = vmatmul.mubr.bf16.gmra.mrb[0].mxu0 %v1035
      %v2415 = vpop.f32.mrb[0].mxu0
      %v2416 = vadd.f32 %v2255, %v2415
      %v2417 = vpop.f32.mrb[0].mxu0
      %v2418 = vpop.f32.mrb[0].mxu0
      %v2419 = vadd.f32 %v2258, %v2418
      %v2420 = vpop.f32.mrb[0].mxu0
      %2421 = vmatprep.mubr.bf16.mxu0 0
      %2422 = vmatmul.mubr.bf16.gmra.mrb[0].mxu0 %v1044
      %v2423 = vpop.f32.mrb[0].mxu0
      %v2424 = vadd.f32 %v2263, %v2423
      %v2425 = vpop.f32.mrb[0].mxu0
      %v2426 = vpop.f32.mrb[0].mxu0
      %v2427 = vadd.f32 %v2266, %v2426
      %v2428 = vpop.f32.mrb[0].mxu0
      %2429 = vmatprep.mubr.bf16.mxu0 0
      %2430 = vmatmul.mubr.bf16.gmra.mrb[0].mxu0 %v1053
      %v2431 = vpop.f32.mrb[0].mxu0
      %v2432 = vadd.f32 %v2271, %v2431
      %v2433 = vpop.f32.mrb[0].mxu0
      %v2434 = vpop.f32.mrb[0].mxu0
      %v2435 = vadd.f32 %v2274, %v2434
      %v2436 = vpop.f32.mrb[0].mxu0
      %2437 = vmatprep.mubr.bf16.mxu0 0
      %2438 = vmatmul.mubr.bf16.gmra.mrb[0].mxu0 %v1062
      %v2439 = vpop.f32.mrb[0].mxu0
      %v2440 = vadd.f32 %v2279, %v2439
      %v2441 = vpop.f32.mrb[0].mxu0
      %v2442 = vpop.f32.mrb[0].mxu0
      %v2443 = vadd.f32 %v2282, %v2442
      %v2444 = vpop.f32.mrb[0].mxu0
      %2445 = vmatprep.mubr.bf16.mxu0 0
      %2446 = vmatmul.mubr.bf16.gmra.mrb[0].mxu0 %v1071
      %v2447 = vpop.f32.mrb[0].mxu0
      %v2448 = vadd.f32 %v2287, %v2447
      %v2449 = vpop.f32.mrb[0].mxu0
      %v2450 = vpop.f32.mrb[0].mxu0
      %v2451 = vadd.f32 %v2290, %v2450
      %v2452 = vpop.f32.mrb[0].mxu0
      %2453 = vmatprep.mubr.bf16.mxu0 0
      %2454 = vmatmul.mubr.bf16.gmra.mrb[0].mxu0 %v1080
      %v2455 = vpop.f32.mrb[0].mxu0
      %v2456 = vadd.f32 %v2295, %v2455
      %v2457 = vpop.f32.mrb[0].mxu0
      %v2458 = vpop.f32.mrb[0].mxu0
      %v2459 = vadd.f32 %v2298, %v2458
      %v2460 = vpop.f32.mrb[0].mxu0
      %2461 = vdwg.mxu0
      %v2462 = vmax.f32 %v2336, 0.0
      %v2463 = vmax.f32 %v2339, 0.0
      %v2464 = vmax.f32 %v2344, 0.0
      %v2465 = vmax.f32 %v2347, 0.0
      %v2466 = vmax.f32 %v2352, 0.0
      %v2467 = vmax.f32 %v2355, 0.0
      %v2468 = vmax.f32 %v2360, 0.0
      %v2469 = vmax.f32 %v2363, 0.0
      %v2470 = vmax.f32 %v2368, 0.0
      %v2471 = vmax.f32 %v2371, 0.0
      %v2472 = vmax.f32 %v2376, 0.0
      %v2473 = vmax.f32 %v2379, 0.0
      %v2474 = vmax.f32 %v2384, 0.0
      %v2475 = vmax.f32 %v2387, 0.0
      %v2476 = vmax.f32 %v2392, 0.0
      %v2477 = vmax.f32 %v2395, 0.0
      %v2478 = vmax.f32 %v2400, 0.0
      %v2479 = vmax.f32 %v2403, 0.0
      %v2480 = vmax.f32 %v2408, 0.0
      %v2481 = vmax.f32 %v2411, 0.0
      %v2482 = vmax.f32 %v2416, 0.0
      %v2483 = vmax.f32 %v2419, 0.0
      %v2484 = vmax.f32 %v2424, 0.0
      %v2485 = vmax.f32 %v2427, 0.0
      %v2486 = vmax.f32 %v2432, 0.0
      %v2487 = vmax.f32 %v2435, 0.0
      %v2488 = vmax.f32 %v2440, 0.0
      %v2489 = vmax.f32 %v2443, 0.0
      %v2490 = vmax.f32 %v2448, 0.0
      %v2491 = vmax.f32 %v2451, 0.0
      %v2492 = vmax.f32 %v2456, 0.0
      %v2493 = vmax.f32 %v2459, 0.0
      %v2494 = vpack.c.bf16 %v2463, %v2462
      %v2495 = vpack.c.bf16 %v2465, %v2464
      %v2496 = vpack.c.bf16 %v2467, %v2466
      %v2497 = vpack.c.bf16 %v2469, %v2468
      %v2498 = vpack.c.bf16 %v2471, %v2470
      %v2499 = vpack.c.bf16 %v2473, %v2472
      %v2500 = vpack.c.bf16 %v2475, %v2474
      %v2501 = vpack.c.bf16 %v2477, %v2476
      %v2502 = vpack.c.bf16 %v2479, %v2478
      %v2503 = vpack.c.bf16 %v2481, %v2480
      %v2504 = vpack.c.bf16 %v2483, %v2482
      %v2505 = vpack.c.bf16 %v2485, %v2484
      %v2506 = vpack.c.bf16 %v2487, %v2486
      %v2507 = vpack.c.bf16 %v2489, %v2488
      %v2508 = vpack.c.bf16 %v2491, %v2490
      %v2509 = vpack.c.bf16 %v2493, %v2492
      %v2526 = vunpack.c.l.b16 %v2494
      %v2527 = vunpack.c.h.b16 %v2494
      %v2528 = vunpack.c.l.b16 %v2495
      %v2529 = vunpack.c.h.b16 %v2495
      %v2530 = vunpack.c.l.b16 %v2496
      %v2531 = vunpack.c.h.b16 %v2496
      %v2532 = vunpack.c.l.b16 %v2497
      %v2533 = vunpack.c.h.b16 %v2497
      %v2534 = vunpack.c.l.b16 %v2498
      %v2535 = vunpack.c.h.b16 %v2498
      %v2536 = vunpack.c.l.b16 %v2499
      %v2537 = vunpack.c.h.b16 %v2499
      %v2538 = vunpack.c.l.b16 %v2500
      %v2539 = vunpack.c.h.b16 %v2500
      %v2540 = vunpack.c.l.b16 %v2501
      %v2541 = vunpack.c.h.b16 %v2501
      %v2542 = vunpack.c.l.b16 %v2502
      %v2543 = vunpack.c.h.b16 %v2502
      %v2544 = vunpack.c.l.b16 %v2503
      %v2545 = vunpack.c.h.b16 %v2503
      %v2546 = vunpack.c.l.b16 %v2504
      %v2547 = vunpack.c.h.b16 %v2504
      %v2548 = vunpack.c.l.b16 %v2505
      %v2549 = vunpack.c.h.b16 %v2505
      %v2550 = vunpack.c.l.b16 %v2506
      %v2551 = vunpack.c.h.b16 %v2506
      %v2552 = vunpack.c.l.b16 %v2507
      %v2553 = vunpack.c.h.b16 %v2507
      %v2554 = vunpack.c.l.b16 %v2508
      %v2555 = vunpack.c.h.b16 %v2508
      %v2556 = vunpack.c.l.b16 %v2509
      %v2557 = vunpack.c.h.b16 %v2509
      %v2558 = vpack.c.b16 %v2526, %v2526
      %v2559 = vpack.c.b16 %v2527, %v2527
      %v2560 = vpack.c.b16 %v2528, %v2528
      %v2561 = vpack.c.b16 %v2529, %v2529
      %v2562 = vpack.c.b16 %v2530, %v2530
      %v2563 = vpack.c.b16 %v2531, %v2531
      %v2564 = vpack.c.b16 %v2532, %v2532
      %v2565 = vpack.c.b16 %v2533, %v2533
      %v2566 = vpack.c.b16 %v2534, %v2534
      %v2567 = vpack.c.b16 %v2535, %v2535
      %v2568 = vpack.c.b16 %v2536, %v2536
      %v2569 = vpack.c.b16 %v2537, %v2537
      %v2570 = vpack.c.b16 %v2538, %v2538
      %v2571 = vpack.c.b16 %v2539, %v2539
      %v2572 = vpack.c.b16 %v2540, %v2540
      %v2573 = vpack.c.b16 %v2541, %v2541
      %v2574 = vpack.c.b16 %v2542, %v2542
      %v2575 = vpack.c.b16 %v2543, %v2543
      %v2576 = vpack.c.b16 %v2544, %v2544
      %v2577 = vpack.c.b16 %v2545, %v2545
      %v2578 = vpack.c.b16 %v2546, %v2546
      %v2579 = vpack.c.b16 %v2547, %v2547
      %v2580 = vpack.c.b16 %v2548, %v2548
      %v2581 = vpack.c.b16 %v2549, %v2549
      %v2582 = vpack.c.b16 %v2550, %v2550
      %v2583 = vpack.c.b16 %v2551, %v2551
      %v2584 = vpack.c.b16 %v2552, %v2552
      %v2585 = vpack.c.b16 %v2553, %v2553
      %v2586 = vpack.c.b16 %v2554, %v2554
      %v2587 = vpack.c.b16 %v2555, %v2555
      %v2588 = vpack.c.b16 %v2556, %v2556
      %v2589 = vpack.c.b16 %v2557, %v2557
      %2622 = vst [vmem:[%s175] sm:$0xf] %v2558
      %2623 = vst [vmem:[%s175 + $0x4] sm:$0xf] %v2559
      %2624 = vst [vmem:[%s175 + $0x8] sm:$0xf] %v2560
      %2625 = vst [vmem:[%s175 + $0xc] sm:$0xf] %v2561
      %2626 = vst [vmem:[%s175 + $0x10] sm:$0xf] %v2562
      %2627 = vst [vmem:[%s175 + $0x14] sm:$0xf] %v2563
      %2628 = vst [vmem:[%s175 + $0x18] sm:$0xf] %v2564
      %2629 = vst [vmem:[%s175 + $0x1c] sm:$0xf] %v2565
      %2630 = vst [vmem:[%s175 + $0x20] sm:$0xf] %v2566
      %2631 = vst [vmem:[%s175 + $0x24] sm:$0xf] %v2567
      %2632 = vst [vmem:[%s175 + $0x28] sm:$0xf] %v2568
      %2633 = vst [vmem:[%s175 + $0x2c] sm:$0xf] %v2569
      %2634 = vst [vmem:[%s175 + $0x30] sm:$0xf] %v2570
      %2635 = vst [vmem:[%s175 + $0x34] sm:$0xf] %v2571
      %2636 = vst [vmem:[%s175 + $0x38] sm:$0xf] %v2572
      %2637 = vst [vmem:[%s175 + $0x3c] sm:$0xf] %v2573
      %2638 = vst [vmem:[%s175 + $0x40] sm:$0xf] %v2574
      %2639 = vst [vmem:[%s175 + $0x44] sm:$0xf] %v2575
      %2640 = vst [vmem:[%s175 + $0x48] sm:$0xf] %v2576
      %2641 = vst [vmem:[%s175 + $0x4c] sm:$0xf] %v2577
      %2642 = vst [vmem:[%s175 + $0x50] sm:$0xf] %v2578
      %2643 = vst [vmem:[%s175 + $0x54] sm:$0xf] %v2579
      %2644 = vst [vmem:[%s175 + $0x58] sm:$0xf] %v2580
      %2645 = vst [vmem:[%s175 + $0x5c] sm:$0xf] %v2581
      %2646 = vst [vmem:[%s175 + $0x60] sm:$0xf] %v2582
      %2647 = vst [vmem:[%s175 + $0x64] sm:$0xf] %v2583
      %2648 = vst [vmem:[%s175 + $0x68] sm:$0xf] %v2584
      %2649 = vst [vmem:[%s175 + $0x6c] sm:$0xf] %v2585
      %2650 = vst [vmem:[%s175 + $0x70] sm:$0xf] %v2586
      %2651 = vst [vmem:[%s175 + $0x74] sm:$0xf] %v2587
      %2652 = vst [vmem:[%s175 + $0x78] sm:$0xf] %v2588
      %2653 = vst [vmem:[%s175 + $0x7c] sm:$0xf] %v2589
      %s2654 = smul.u32 32, %s14
      %p2655 = scmp.lt.s32.totalorder %s2654, 63
      %s2656 = scalar_select %p2655, %s2654, 63
      %s2657 = smul.addr %s2656, 4
      %s2658 = scalar_lea.vmem %s3, %s2657
      // Predicated region
      $region33: #{deepgcn_slic_v2_forward.8} parent=31 // pred_check
        %p2659 = pneg %p100
      $region34: #{deepgcn_slic_v2_forward.8} parent=31 // pred_check_branch
        %2661 = sbr.rel (%p2659) target = $region36
      $region35: #{deepgcn_slic_v2_forward.8} parent=31 // pred_region
        %s2662 = smul.u32 32, %s14
      $region36: #{deepgcn_slic_v2_forward.8} parent=31 // pred_fallthru
        _
    $region32: #{deepgcn_slic_v2_forward.8} parent=5 // pred_fallthru
      _
    %p2663 = scmp.le.s32.totalorder 2, %s9
    // Predicated region
    $region37: #{deepgcn_slic_v2_forward.8} parent=5 // pred_check
      %p2664 = pneg %p2663
    $region38: #{deepgcn_slic_v2_forward.8} parent=5 // pred_check_branch
      %2666 = sbr.rel (%p2664) target = $region40
    $region39: #{deepgcn_slic_v2_forward.8} parent=5 // pred_region
      %s2667 = ssub.s32 %s9, 2
      // Predicated region
      $region41: #{deepgcn_slic_v2_forward.8} parent=39 // pred_check
        %p2668 = pneg %p106
      $region42: #{deepgcn_slic_v2_forward.8} parent=39 // pred_check_branch
        %2670 = sbr.rel (%p2668) target = $region44
      $region43: #{deepgcn_slic_v2_forward.8} parent=39 // pred_region
        %s2671 = smul.u32 32, %s15
        %p2672 = scmp.lt.s32.totalorder %s2671, 63
        %s2673 = scalar_select %p2672, %s2671, 63
        %s2674 = smul.addr %s2673, 4
        %s2675 = scalar_lea.vmem %s3, %s2674
      $region44: #{deepgcn_slic_v2_forward.8} parent=39 // pred_fallthru
        _
    $region40: #{deepgcn_slic_v2_forward.8} parent=5 // pred_fallthru
      _
  $region6: #{deepgcn_slic_v2_forward.8} parent=0 // loop_footer
    %s13 = sadd.s32 1, %s9
  $region7: #{deepgcn_slic_v2_forward.8} parent=0 // loop_footer_branch
    %8 = sbr.rel target = $region3
  $region8: #{deepgcn_slic_v2_forward.8} parent=0 // loop_exit
    _

// kernel: deepgcn_slic_v2_forward.12
$region0: #{deepgcn_slic_v2_forward.12}
  #allocation0 [shape = 'u32[]', space=smem, size = 0x4, offset = 0x4, fixed_abs, tag = 'smem constant byte address 0x4 - core index']
  #allocation1 [shape = 'u32[144,128]{1,0:T(1,128)}', space=vmem, size = 0x12000, scoped, tag = 'internal scratch']
  %s0 = inlined_call_operand.vmem [shape: bf16[2,196,196], index: 0, kind: input, shape index: {}]
  %s1 = inlined_call_operand.vmem [shape: bf16[2,196,128], index: 1, kind: input, shape index: {}]
  %s2 = inlined_call_operand.vmem [shape: bf16[2,196,128], index: 2, kind: output, shape index: {}]
  %s3 = sld [smem:[#allocation0]]
  $region41: #{deepgcn_slic_v2_forward.12} parent=0
    _
  %s5 = ssub.s32 1, %s3
  %s6 = scalar_select 0, %s5, %s3
  loop: start=0, step=1, limit=4
  $region2: #{deepgcn_slic_v2_forward.12} parent=0 // loop_pre_header
    _
  $region3: #{deepgcn_slic_v2_forward.12} parent=0 // loop_header
    %s8 = sphi 0, %s12
    %p9 = scmp.ge.s32.totalorder %s8, 4
    %s18 = sphi 0, %s20
    %s21 = sphi 0, %s18
    %s22 = sphi 0, %s21
    %s38 = sphi 0, %s22
    %s44 = sphi 0, %s46
    %s47 = sphi 0, %s44
    %s48 = sphi 0, %s47
    %s64 = sphi 0, %s48
    %s70 = sphi 0, %s72
    %s73 = sphi 0, %s70
    %s74 = sphi 0, %s73
    %s90 = sphi 0, %s74
  $region4: #{deepgcn_slic_v2_forward.12} parent=0 // loop_header_branch
    %11 = sbr.rel (%p9) target = $region8
  $region5: #{deepgcn_slic_v2_forward.12} parent=0 // loop_body
    %s13 = ssub.s32 %s8, 1
    %s14 = ssub.s32 %s8, 2
    %s15 = sadd.s32 %s8, 1
    %s16 = ssub.s32 %s8, %s15
    %p17 = scmp.eq.s32.totalorder %s16, 0
    %s19 = sadd.s32 %s18, 1
    %s20 = scalar_select %p17, %s18, %s19
    %p23 = pneg %p17
    %p24 = scmp.eq.s32.totalorder %s8, 1
    %p25 = por %p23, %p24
    %p26 = scmp.ne.s32.totalorder %s18, %s21
    %p27 = scmp.eq.s32.totalorder %s8, 0
    %p28 = por %p26, %p27
    %p29 = scmp.ne.s32.totalorder %s18, %s21
    %p30 = scmp.eq.s32.totalorder %s13, 1
    %p31 = por %p29, %p30
    %p32 = scmp.ne.s32.totalorder %s21, %s22
    %p33 = scmp.eq.s32.totalorder %s13, 0
    %p34 = por %p32, %p33
    %p35 = scmp.ne.s32.totalorder %s21, %s22
    %p36 = scmp.eq.s32.totalorder %s14, 1
    %p37 = por %p35, %p36
    %p39 = scmp.ne.s32.totalorder %s22, %s38
    %p40 = scmp.eq.s32.totalorder %s14, 0
    %p41 = por %p39, %p40
    %s42 = ssub.s32 %s8, %s15
    %p43 = scmp.eq.s32.totalorder %s42, 0
    %s45 = sadd.s32 %s44, 1
    %s46 = scalar_select %p43, %s44, %s45
    %p49 = pneg %p43
    %p50 = scmp.eq.s32.totalorder %s8, 1
    %p51 = por %p49, %p50
    %p52 = scmp.ne.s32.totalorder %s44, %s47
    %p53 = scmp.eq.s32.totalorder %s8, 0
    %p54 = por %p52, %p53
    %p55 = scmp.ne.s32.totalorder %s44, %s47
    %p56 = scmp.eq.s32.totalorder %s13, 1
    %p57 = por %p55, %p56
    %p58 = scmp.ne.s32.totalorder %s47, %s48
    %p59 = scmp.eq.s32.totalorder %s13, 0
    %p60 = por %p58, %p59
    %p61 = scmp.ne.s32.totalorder %s47, %s48
    %p62 = scmp.eq.s32.totalorder %s14, 1
    %p63 = por %p61, %p62
    %p65 = scmp.ne.s32.totalorder %s48, %s64
    %p66 = scmp.eq.s32.totalorder %s14, 0
    %p67 = por %p65, %p66
    %s68 = ssub.s32 %s8, %s15
    %p69 = scmp.eq.s32.totalorder %s68, 0
    %s71 = sadd.s32 %s70, 1
    %s72 = scalar_select %p69, %s70, %s71
    %p75 = pneg %p69
    %p76 = scmp.eq.s32.totalorder %s8, 1
    %p77 = por %p75, %p76
    %p78 = scmp.ne.s32.totalorder %s70, %s73
    %p79 = scmp.eq.s32.totalorder %s8, 0
    %p80 = por %p78, %p79
    %p81 = scmp.ne.s32.totalorder %s70, %s73
    %p82 = scmp.eq.s32.totalorder %s13, 1
    %p83 = por %p81, %p82
    %p84 = scmp.ne.s32.totalorder %s73, %s74
    %p85 = scmp.eq.s32.totalorder %s13, 0
    %p86 = por %p84, %p85
    %p87 = scmp.ne.s32.totalorder %s73, %s74
    %p88 = scmp.eq.s32.totalorder %s14, 1
    %p89 = por %p87, %p88
    %p91 = scmp.ne.s32.totalorder %s74, %s90
    %p92 = scmp.eq.s32.totalorder %s14, 0
    %p93 = por %p91, %p92
    %p94 = scmp.le.s32.totalorder 1, %s8
    %p95 = scmp.lt.s32.totalorder %s8, 3
    %p96 = pnand %p94, %p95
    %p97 = pneg %p96
    // Predicated region
    $region9: #{deepgcn_slic_v2_forward.12} parent=5 // pred_check
      _
    $region10: #{deepgcn_slic_v2_forward.12} parent=5 // pred_check_branch
      %99 = sbr.rel (%p96) target = $region12
    $region11: #{deepgcn_slic_v2_forward.12} parent=5 // pred_region
      %s100 = ssub.s32 %s8, 1
    $region12: #{deepgcn_slic_v2_forward.12} parent=5 // pred_fallthru
      _
    %p101 = scmp.lt.s32.totalorder %s8, 2
    // Predicated region
    $region13: #{deepgcn_slic_v2_forward.12} parent=5 // pred_check
      %p102 = pneg %p101
    $region14: #{deepgcn_slic_v2_forward.12} parent=5 // pred_check_branch
      %104 = sbr.rel (%p102) target = $region16
    $region15: #{deepgcn_slic_v2_forward.12} parent=5 // pred_region
      // Predicated region
      $region17: #{deepgcn_slic_v2_forward.12} parent=15 // pred_check
        %p105 = pneg %p28
      $region18: #{deepgcn_slic_v2_forward.12} parent=15 // pred_check_branch
        %107 = sbr.rel (%p105) target = $region20
      $region19: #{deepgcn_slic_v2_forward.12} parent=15 // pred_region
        %p108 = scmp.lt.s32.totalorder %s8, 1
        %s109 = scalar_select %p108, %s8, 1
        %s110 = smul.addr %s109, 50
        %s111 = smul.addr %s110, 4
        %s112 = scalar_lea.vmem %s0, %s111
      $region20: #{deepgcn_slic_v2_forward.12} parent=15 // pred_fallthru
        _
      // Predicated region
      $region21: #{deepgcn_slic_v2_forward.12} parent=15 // pred_check
        %p113 = pneg %p54
      $region22: #{deepgcn_slic_v2_forward.12} parent=15 // pred_check_branch
        %115 = sbr.rel (%p113) target = $region24
      $region23: #{deepgcn_slic_v2_forward.12} parent=15 // pred_region
        %p116 = scmp.lt.s32.totalorder %s8, 1
        %s117 = scalar_select %p116, %s8, 1
        %s118 = smul.addr %s117, 25
        %s119 = smul.addr %s118, 4
        %s120 = scalar_lea.vmem %s1, %s119
      $region24: #{deepgcn_slic_v2_forward.12} parent=15 // pred_fallthru
        _
    $region16: #{deepgcn_slic_v2_forward.12} parent=5 // pred_fallthru
      _
    %p121 = scmp.le.s32.totalorder 1, %s8
    %p122 = scmp.lt.s32.totalorder %s8, 3
    %p123 = pnand %p121, %p122
    %p124 = pneg %p123
    // Predicated region
    $region25: #{deepgcn_slic_v2_forward.12} parent=5 // pred_check
      _
    $region26: #{deepgcn_slic_v2_forward.12} parent=5 // pred_check_branch
      %126 = sbr.rel (%p123) target = $region28
    $region27: #{deepgcn_slic_v2_forward.12} parent=5 // pred_region
      %s127 = ssub.s32 %s8, 1
      %p128 = scmp.lt.s32.totalorder %s13, 1
      %s129 = scalar_select %p128, %s13, 1
      %s130 = smul.addr %s129, 50
      %s131 = smul.addr %s130, 4
      %s132 = scalar_lea.vmem %s0, %s131
      %p133 = pneg %p34
      %p134 = pneg %p31
      %p135 = scmp.lt.s32.totalorder %s13, 1
      %s136 = scalar_select %p135, %s13, 1
      %s137 = smul.addr %s136, 25
      %s138 = smul.addr %s137, 4
      %s139 = scalar_lea.vmem %s1, %s138
      %p140 = pneg %p60
      %p141 = pneg %p57
      %p142 = pneg %p86
      %p143 = pneg %p83
      %p144 = scmp.lt.s32.totalorder %s13, 1
      %s145 = scalar_select %p144, %s13, 1
      %s146 = smul.addr %s145, 25
      %s147 = smul.addr %s146, 4
      %s148 = scalar_lea.vmem %s2, %s147
      %p149 = scmp.lt.s32.totalorder %s13, 1
      %s150 = scalar_select %p149, %s13, 1
      %s151 = smul.addr %s150, 50
      %s152 = smul.addr %s151, 4
      %s153 = scalar_lea.vmem %s0, %s152
      %p154 = scmp.lt.s32.totalorder %s13, 1
      %s155 = scalar_select %p154, %s13, 1
      %s156 = smul.addr %s155, 25
      %s157 = smul.addr %s156, 4
      %s158 = scalar_lea.vmem %s1, %s157
      %p159 = scmp.lt.s32.totalorder %s13, 1
      %s160 = scalar_select %p159, %s13, 1
      %s161 = smul.addr %s160, 25
      %s162 = smul.addr %s161, 4
      %s163 = scalar_lea.vmem %s2, %s162
      %v165 = vld [vmem:[%s153] sm:$0xff]
      %v166 = vld [vmem:[%s153 + $0x8] sm:$0xff]
      %v167 = vld [vmem:[%s153 + $0x10] sm:$0xff]
      %v168 = vld [vmem:[%s153 + $0x18] sm:$0xff]
      %v169 = vld [vmem:[%s153 + $0x20] sm:$0xff]
      %v170 = vld [vmem:[%s153 + $0x28] sm:$0xff]
      %v171 = vld [vmem:[%s153 + $0x30] sm:$0xff]
      %v172 = vld [vmem:[%s153 + $0x38] sm:$0xff]
      %v173 = vld [vmem:[%s153 + $0x40] sm:$0xff]
      %v174 = vld [vmem:[%s153 + $0x48] sm:$0xff]
      %v175 = vld [vmem:[%s153 + $0x50] sm:$0xff]
      %v176 = vld [vmem:[%s153 + $0x58] sm:$0xff]
      %v177 = vld [vmem:[%s153 + $0x60] sm:$0xff]
      %v178 = vld [vmem:[%s153 + $0x68] sm:$0xff]
      %v179 = vld [vmem:[%s153 + $0x70] sm:$0xff]
      %v180 = vld [vmem:[%s153 + $0x78] sm:$0xff]
      %v181 = vld [vmem:[%s153 + $0x80] sm:$0xff]
      %v182 = vld [vmem:[%s153 + $0x88] sm:$0xff]
      %v183 = vld [vmem:[%s153 + $0x90] sm:$0xff]
      %v184 = vld [vmem:[%s153 + $0x98] sm:$0xff]
      %v185 = vld [vmem:[%s153 + $0xa0] sm:$0xff]
      %v186 = vld [vmem:[%s153 + $0xa8] sm:$0xff]
      %v187 = vld [vmem:[%s153 + $0xb0] sm:$0xff]
      %v188 = vld [vmem:[%s153 + $0xb8] sm:$0xff]
      %v189 = vld [vmem:[%s153 + $0xc0] sm:$0x33]
      %v190 = vld [vmem:[%s158] sm:$0xf]
      %v191 = vld [vmem:[%s158 + $0x4] sm:$0xf]
      %v192 = vld [vmem:[%s158 + $0x8] sm:$0xf]
      %v193 = vld [vmem:[%s158 + $0xc] sm:$0xf]
      %v194 = vld [vmem:[%s158 + $0x10] sm:$0xf]
      %v195 = vld [vmem:[%s158 + $0x14] sm:$0xf]
      %v196 = vld [vmem:[%s158 + $0x18] sm:$0xf]
      %v197 = vld [vmem:[%s158 + $0x1c] sm:$0xf]
      %v198 = vld [vmem:[%s158 + $0x20] sm:$0xf]
      %v199 = vld [vmem:[%s158 + $0x24] sm:$0xf]
      %v200 = vld [vmem:[%s158 + $0x28] sm:$0xf]
      %v201 = vld [vmem:[%s158 + $0x2c] sm:$0xf]
      %v202 = vld [vmem:[%s158 + $0x30] sm:$0xf]
      %v203 = vld [vmem:[%s158 + $0x34] sm:$0xf]
      %v204 = vld [vmem:[%s158 + $0x38] sm:$0xf]
      %v205 = vld [vmem:[%s158 + $0x3c] sm:$0xf]
      %v206 = vld [vmem:[%s158 + $0x40] sm:$0xf]
      %v207 = vld [vmem:[%s158 + $0x44] sm:$0xf]
      %v208 = vld [vmem:[%s158 + $0x48] sm:$0xf]
      %v209 = vld [vmem:[%s158 + $0x4c] sm:$0xf]
      %v210 = vld [vmem:[%s158 + $0x50] sm:$0xf]
      %v211 = vld [vmem:[%s158 + $0x54] sm:$0xf]
      %v212 = vld [vmem:[%s158 + $0x58] sm:$0xf]
      %v213 = vld [vmem:[%s158 + $0x5c] sm:$0xf]
      %v214 = vld [vmem:[%s158 + $0x60] sm:$0x3]
      %v240 = vunpack.c.l.b16 %v165
      %v241 = vunpack.c.h.b16 %v165
      %v242 = vunpack.c.l.b16 %v166
      %v243 = vunpack.c.h.b16 %v166
      %v244 = vunpack.c.l.b16 %v167
      %v245 = vunpack.c.h.b16 %v167
      %v246 = vunpack.c.l.b16 %v168
      %v247 = vunpack.c.h.b16 %v168
      %v248 = vunpack.c.l.b16 %v169
      %v249 = vunpack.c.h.b16 %v169
      %v250 = vunpack.c.l.b16 %v170
      %v251 = vunpack.c.h.b16 %v170
      %v252 = vunpack.c.l.b16 %v171
      %v253 = vunpack.c.h.b16 %v171
      %v254 = vunpack.c.l.b16 %v172
      %v255 = vunpack.c.h.b16 %v172
      %v256 = vunpack.c.l.b16 %v173
      %v257 = vunpack.c.h.b16 %v173
      %v258 = vunpack.c.l.b16 %v174
      %v259 = vunpack.c.h.b16 %v174
      %v260 = vunpack.c.l.b16 %v175
      %v261 = vunpack.c.h.b16 %v175
      %v262 = vunpack.c.l.b16 %v176
      %v263 = vunpack.c.h.b16 %v176
      %v264 = vunpack.c.l.b16 %v177
      %v265 = vunpack.c.h.b16 %v177
      %v266 = vunpack.c.l.b16 %v178
      %v267 = vunpack.c.h.b16 %v178
      %v268 = vunpack.c.l.b16 %v179
      %v269 = vunpack.c.h.b16 %v179
      %v270 = vunpack.c.l.b16 %v180
      %v271 = vunpack.c.h.b16 %v180
      %v272 = vunpack.c.l.b16 %v181
      %v273 = vunpack.c.h.b16 %v181
      %v274 = vunpack.c.l.b16 %v182
      %v275 = vunpack.c.h.b16 %v182
      %v276 = vunpack.c.l.b16 %v183
      %v277 = vunpack.c.h.b16 %v183
      %v278 = vunpack.c.l.b16 %v184
      %v279 = vunpack.c.h.b16 %v184
      %v280 = vunpack.c.l.b16 %v185
      %v281 = vunpack.c.h.b16 %v185
      %v282 = vunpack.c.l.b16 %v186
      %v283 = vunpack.c.h.b16 %v186
      %v284 = vunpack.c.l.b16 %v187
      %v285 = vunpack.c.h.b16 %v187
      %v286 = vunpack.c.l.b16 %v188
      %v287 = vunpack.c.h.b16 %v188
      %v288 = vunpack.c.l.b16 %v189
      %v289 = vunpack.c.h.b16 %v189
      %v290 = vpack.c.b16 %v242, %v240
      %v291 = vpack.c.b16 %v243, %v241
      %v292 = vpack.c.b16 %v246, %v244
      %v293 = vpack.c.b16 %v247, %v245
      %v294 = vpack.c.b16 %v250, %v248
      %v295 = vpack.c.b16 %v251, %v249
      %v296 = vpack.c.b16 %v254, %v252
      %v297 = vpack.c.b16 %v255, %v253
      %v298 = vpack.c.b16 %v258, %v256
      %v299 = vpack.c.b16 %v259, %v257
      %v300 = vpack.c.b16 %v262, %v260
      %v301 = vpack.c.b16 %v263, %v261
      %v302 = vpack.c.b16 %v266, %v264
      %v303 = vpack.c.b16 %v267, %v265
      %v304 = vpack.c.b16 %v270, %v268
      %v305 = vpack.c.b16 %v271, %v269
      %v306 = vpack.c.b16 %v274, %v272
      %v307 = vpack.c.b16 %v275, %v273
      %v308 = vpack.c.b16 %v278, %v276
      %v309 = vpack.c.b16 %v279, %v277
      %v310 = vpack.c.b16 %v282, %v280
      %v311 = vpack.c.b16 %v283, %v281
      %v312 = vpack.c.b16 %v286, %v284
      %v313 = vpack.c.b16 %v287, %v285
      %v314 = vpack.c.b16 %v288, %v288
      %v315 = vpack.c.b16 %v289, %v289
      %v354 = vunpack.c.l.b16 %v190
      %v355 = vunpack.c.l.b16 %v191
      %v356 = vunpack.c.l.b16 %v192
      %v357 = vunpack.c.l.b16 %v193
      %v358 = vunpack.c.l.b16 %v194
      %v359 = vunpack.c.l.b16 %v195
      %v360 = vunpack.c.l.b16 %v196
      %v361 = vunpack.c.l.b16 %v197
      %v362 = vunpack.c.l.b16 %v198
      %v363 = vunpack.c.l.b16 %v199
      %v364 = vunpack.c.l.b16 %v200
      %v365 = vunpack.c.l.b16 %v201
      %v366 = vunpack.c.l.b16 %v202
      %v367 = vunpack.c.l.b16 %v203
      %v368 = vunpack.c.l.b16 %v204
      %v369 = vunpack.c.l.b16 %v205
      %v370 = vunpack.c.l.b16 %v206
      %v371 = vunpack.c.l.b16 %v207
      %v372 = vunpack.c.l.b16 %v208
      %v373 = vunpack.c.l.b16 %v209
      %v374 = vunpack.c.l.b16 %v210
      %v375 = vunpack.c.l.b16 %v211
      %v376 = vunpack.c.l.b16 %v212
      %v377 = vunpack.c.l.b16 %v213
      %v378 = vunpack.c.l.b16 %v214
      %v379 = vpack.c.b16 %v355, %v354
      %v380 = vpack.c.b16 %v357, %v356
      %v381 = vpack.c.b16 %v359, %v358
      %v382 = vpack.c.b16 %v361, %v360
      %v383 = vpack.c.b16 %v363, %v362
      %v384 = vpack.c.b16 %v365, %v364
      %v385 = vpack.c.b16 %v367, %v366
      %v386 = vpack.c.b16 %v369, %v368
      %v387 = vpack.c.b16 %v371, %v370
      %v388 = vpack.c.b16 %v373, %v372
      %v389 = vpack.c.b16 %v375, %v374
      %v390 = vpack.c.b16 %v377, %v376
      %v391 = vpack.c.b16 %v378, %v378
      %vm404 = vcmask 556032
      %v406 = vsel %vm404, %v291, 0
      %v409 = vsel %vm404, %v293, 0
      %v412 = vsel %vm404, %v295, 0
      %v415 = vsel %vm404, %v297, 0
      %v418 = vsel %vm404, %v299, 0
      %v421 = vsel %vm404, %v301, 0
      %v424 = vsel %vm404, %v303, 0
      %v427 = vsel %vm404, %v305, 0
      %v430 = vsel %vm404, %v307, 0
      %v433 = vsel %vm404, %v309, 0
      %v436 = vsel %vm404, %v311, 0
      %v439 = vsel %vm404, %v313, 0
      %v442 = vsel %vm404, %v315, 0
      %vm444 = vcmask 1041408
      %v446 = vsel %vm444, %v391, 0
      %448 = vmatprep.subr.bf16.mxu0 0
      %449 = vmatpush1.bf16.msra.mxu0 %v379
      %450 = vmatprep.subr.bf16.mxu0 0
      %451 = vmatpush1.bf16.msra.mxu0 %v380
      %452 = vmatprep.subr.bf16.mxu0 0
      %453 = vmatpush1.bf16.msra.mxu0 %v381
      %454 = vmatprep.subr.bf16.mxu0 0
      %455 = vmatpush1.bf16.msra.mxu0 %v382
      %456 = vmatprep.subr.bf16.mxu0 0
      %457 = vmatpush1.bf16.msra.mxu0 %v383
      %458 = vmatprep.subr.bf16.mxu0 0
      %459 = vmatpush1.bf16.msra.mxu0 %v384
      %460 = vmatprep.subr.bf16.mxu0 0
      %461 = vmatpush1.bf16.msra.mxu0 %v385
      %462 = vmatprep.subr.bf16.mxu0 0
      %463 = vmatpush1.bf16.msra.mxu0 %v386
      %464 = vmatprep.subr.bf16.mxu0 0
      %465 = vmatpush1.bf16.msra.mxu0 %v387
      %466 = vmatprep.subr.bf16.mxu0 0
      %467 = vmatpush1.bf16.msra.mxu0 %v388
      %468 = vmatprep.subr.bf16.mxu0 0
      %469 = vmatpush1.bf16.msra.mxu0 %v389
      %470 = vmatprep.subr.bf16.mxu0 0
      %471 = vmatpush1.bf16.msra.mxu0 %v390
      %472 = vmatprep.subr.bf16.mxu0 0
      %473 = vmatpush1.bf16.msra.mxu0 %v446
      %474 = vmatprep.subr.bf16.mxu0 0
      %475 = vmatpush1.bf16.msra.mxu0 0
      %476 = vmatprep.subr.bf16.mxu0 0
      %477 = vmatpush1.bf16.msra.mxu0 0
      %478 = vmatprep.subr.bf16.mxu0 0
      %479 = vmatpush1.bf16.msra.mxu0 0
      %480 = vmatprep.mubr.bf16.mxu0 %v406
      %481 = vmatmul.mubr.bf16.gmra.mrb[0].mxu0 %v290
      %v482 = vpop.f32.mrb[0].mxu0
      %v483 = vadd.f32 0.0, %v482
      %v484 = vpop.f32.mrb[0].mxu0
      %v485 = vpop.f32.mrb[0].mxu0
      %v486 = vadd.f32 0.0, %v485
      %v487 = vpop.f32.mrb[0].mxu0
      %488 = vmatprep.mubr.bf16.mxu0 %v409
      %489 = vmatmul.mubr.bf16.gmra.mrb[0].mxu0 %v292
      %v490 = vpop.f32.mrb[0].mxu0
      %v491 = vadd.f32 0.0, %v490
      %v492 = vpop.f32.mrb[0].mxu0
      %v493 = vpop.f32.mrb[0].mxu0
      %v494 = vadd.f32 0.0, %v493
      %v495 = vpop.f32.mrb[0].mxu0
      %496 = vmatprep.mubr.bf16.mxu0 %v412
      %497 = vmatmul.mubr.bf16.gmra.mrb[0].mxu0 %v294
      %v498 = vpop.f32.mrb[0].mxu0
      %v499 = vadd.f32 0.0, %v498
      %v500 = vpop.f32.mrb[0].mxu0
      %v501 = vpop.f32.mrb[0].mxu0
      %v502 = vadd.f32 0.0, %v501
      %v503 = vpop.f32.mrb[0].mxu0
      %504 = vmatprep.mubr.bf16.mxu0 %v415
      %505 = vmatmul.mubr.bf16.gmra.mrb[0].mxu0 %v296
      %v506 = vpop.f32.mrb[0].mxu0
      %v507 = vadd.f32 0.0, %v506
      %v508 = vpop.f32.mrb[0].mxu0
      %v509 = vpop.f32.mrb[0].mxu0
      %v510 = vadd.f32 0.0, %v509
      %v511 = vpop.f32.mrb[0].mxu0
      %512 = vmatprep.mubr.bf16.mxu0 %v418
      %513 = vmatmul.mubr.bf16.gmra.mrb[0].mxu0 %v298
      %v514 = vpop.f32.mrb[0].mxu0
      %v515 = vadd.f32 0.0, %v514
      %v516 = vpop.f32.mrb[0].mxu0
      %v517 = vpop.f32.mrb[0].mxu0
      %v518 = vadd.f32 0.0, %v517
      %v519 = vpop.f32.mrb[0].mxu0
      %520 = vmatprep.mubr.bf16.mxu0 %v421
      %521 = vmatmul.mubr.bf16.gmra.mrb[0].mxu0 %v300
      %v522 = vpop.f32.mrb[0].mxu0
      %v523 = vadd.f32 0.0, %v522
      %v524 = vpop.f32.mrb[0].mxu0
      %v525 = vpop.f32.mrb[0].mxu0
      %v526 = vadd.f32 0.0, %v525
      %v527 = vpop.f32.mrb[0].mxu0
      %528 = vmatprep.mubr.bf16.mxu0 %v424
      %529 = vmatmul.mubr.bf16.gmra.mrb[0].mxu0 %v302
      %v530 = vpop.f32.mrb[0].mxu0
      %v531 = vadd.f32 0.0, %v530
      %v532 = vpop.f32.mrb[0].mxu0
      %v533 = vpop.f32.mrb[0].mxu0
      %v534 = vadd.f32 0.0, %v533
      %v535 = vpop.f32.mrb[0].mxu0
      %536 = vmatprep.mubr.bf16.mxu0 %v427
      %537 = vmatmul.mubr.bf16.gmra.mrb[0].mxu0 %v304
      %v538 = vpop.f32.mrb[0].mxu0
      %v539 = vadd.f32 0.0, %v538
      %v540 = vpop.f32.mrb[0].mxu0
      %v541 = vpop.f32.mrb[0].mxu0
      %v542 = vadd.f32 0.0, %v541
      %v543 = vpop.f32.mrb[0].mxu0
      %544 = vmatprep.mubr.bf16.mxu0 %v430
      %545 = vmatmul.mubr.bf16.gmra.mrb[0].mxu0 %v306
      %v546 = vpop.f32.mrb[0].mxu0
      %v547 = vadd.f32 0.0, %v546
      %v548 = vpop.f32.mrb[0].mxu0
      %v549 = vpop.f32.mrb[0].mxu0
      %v550 = vadd.f32 0.0, %v549
      %v551 = vpop.f32.mrb[0].mxu0
      %552 = vmatprep.mubr.bf16.mxu0 %v433
      %553 = vmatmul.mubr.bf16.gmra.mrb[0].mxu0 %v308
      %v554 = vpop.f32.mrb[0].mxu0
      %v555 = vadd.f32 0.0, %v554
      %v556 = vpop.f32.mrb[0].mxu0
      %v557 = vpop.f32.mrb[0].mxu0
      %v558 = vadd.f32 0.0, %v557
      %v559 = vpop.f32.mrb[0].mxu0
      %560 = vmatprep.mubr.bf16.mxu0 %v436
      %561 = vmatmul.mubr.bf16.gmra.mrb[0].mxu0 %v310
      %v562 = vpop.f32.mrb[0].mxu0
      %v563 = vadd.f32 0.0, %v562
      %v564 = vpop.f32.mrb[0].mxu0
      %v565 = vpop.f32.mrb[0].mxu0
      %v566 = vadd.f32 0.0, %v565
      %v567 = vpop.f32.mrb[0].mxu0
      %568 = vmatprep.mubr.bf16.mxu0 %v439
      %569 = vmatmul.mubr.bf16.gmra.mrb[0].mxu0 %v312
      %v570 = vpop.f32.mrb[0].mxu0
      %v571 = vadd.f32 0.0, %v570
      %v572 = vpop.f32.mrb[0].mxu0
      %v573 = vpop.f32.mrb[0].mxu0
      %v574 = vadd.f32 0.0, %v573
      %v575 = vpop.f32.mrb[0].mxu0
      %576 = vmatprep.mubr.bf16.mxu0 %v442
      %577 = vmatmul.mubr.bf16.gmra.mrb[0].mxu0 %v314
      %v578 = vpop.f32.mrb[0].mxu0
      %v579 = vadd.f32 0.0, %v578
      %v580 = vpop.f32.mrb[0].mxu0
      %v581 = vpop.f32.mrb[0].mxu0
      %v582 = vpop.f32.mrb[0].mxu0
      %583 = vdwg.mxu0
      %v584 = vunpack.c.l.bf16 %v165
      %v585 = vunpack.c.h.bf16 %v165
      %v586 = vunpack.c.l.bf16 %v166
      %v587 = vunpack.c.h.bf16 %v166
      %v588 = vunpack.c.l.bf16 %v167
      %v589 = vunpack.c.h.bf16 %v167
      %v590 = vunpack.c.l.bf16 %v168
      %v591 = vunpack.c.h.bf16 %v168
      %v592 = vunpack.c.l.bf16 %v169
      %v593 = vunpack.c.h.bf16 %v169
      %v594 = vunpack.c.l.bf16 %v170
      %v595 = vunpack.c.h.bf16 %v170
      %v596 = vunpack.c.l.bf16 %v171
      %v597 = vunpack.c.h.bf16 %v171
      %v598 = vunpack.c.l.bf16 %v172
      %v599 = vunpack.c.h.bf16 %v172
      %v600 = vunpack.c.l.bf16 %v173
      %v601 = vunpack.c.h.bf16 %v173
      %v602 = vunpack.c.l.bf16 %v174
      %v603 = vunpack.c.h.bf16 %v174
      %v604 = vunpack.c.l.bf16 %v175
      %v605 = vunpack.c.h.bf16 %v175
      %v606 = vunpack.c.l.bf16 %v176
      %v607 = vunpack.c.h.bf16 %v176
      %v608 = vunpack.c.l.bf16 %v177
      %v609 = vunpack.c.h.bf16 %v177
      %v610 = vunpack.c.l.bf16 %v178
      %v611 = vunpack.c.h.bf16 %v178
      %v612 = vunpack.c.l.bf16 %v179
      %v613 = vunpack.c.h.bf16 %v179
      %v614 = vunpack.c.l.bf16 %v180
      %v615 = vunpack.c.h.bf16 %v180
      %v616 = vunpack.c.l.bf16 %v181
      %v617 = vunpack.c.h.bf16 %v181
      %v618 = vunpack.c.l.bf16 %v182
      %v619 = vunpack.c.h.bf16 %v182
      %v620 = vunpack.c.l.bf16 %v183
      %v621 = vunpack.c.h.bf16 %v183
      %v622 = vunpack.c.l.bf16 %v184
      %v623 = vunpack.c.h.bf16 %v184
      %v624 = vunpack.c.l.bf16 %v185
      %v625 = vunpack.c.h.bf16 %v185
      %v626 = vunpack.c.l.bf16 %v186
      %v627 = vunpack.c.h.bf16 %v186
      %v628 = vunpack.c.l.bf16 %v187
      %v629 = vunpack.c.h.bf16 %v187
      %v630 = vunpack.c.l.bf16 %v188
      %v631 = vunpack.c.h.bf16 %v188
      %v632 = vunpack.c.l.bf16 %v189
      %v633 = vunpack.c.h.bf16 %v189
      %v634 = vsel %vm404, %v585, 0.0
      %v635 = vadd.f32 %v584, %v634
      %636 = vadd.xlane.f32.xlu0 %v635
      %v637 = vpop.xlane.xlu0 %636
      %v638 = vsel %vm404, %v587, 0.0
      %v639 = vadd.f32 %v586, %v638
      %640 = vadd.xlane.f32.xlu0 %v639
      %v641 = vpop.xlane.xlu0 %640
      %v642 = vsel %vm404, %v589, 0.0
      %v643 = vadd.f32 %v588, %v642
      %644 = vadd.xlane.f32.xlu0 %v643
      %v645 = vpop.xlane.xlu0 %644
      %v646 = vsel %vm404, %v591, 0.0
      %v647 = vadd.f32 %v590, %v646
      %648 = vadd.xlane.f32.xlu0 %v647
      %v649 = vpop.xlane.xlu0 %648
      %v650 = vsel %vm404, %v593, 0.0
      %v651 = vadd.f32 %v592, %v650
      %652 = vadd.xlane.f32.xlu0 %v651
      %v653 = vpop.xlane.xlu0 %652
      %v654 = vsel %vm404, %v595, 0.0
      %v655 = vadd.f32 %v594, %v654
      %656 = vadd.xlane.f32.xlu0 %v655
      %v657 = vpop.xlane.xlu0 %656
      %v658 = vsel %vm404, %v597, 0.0
      %v659 = vadd.f32 %v596, %v658
      %660 = vadd.xlane.f32.xlu0 %v659
      %v661 = vpop.xlane.xlu0 %660
      %v662 = vsel %vm404, %v599, 0.0
      %v663 = vadd.f32 %v598, %v662
      %664 = vadd.xlane.f32.xlu0 %v663
      %v665 = vpop.xlane.xlu0 %664
      %v666 = vsel %vm404, %v601, 0.0
      %v667 = vadd.f32 %v600, %v666
      %668 = vadd.xlane.f32.xlu0 %v667
      %v669 = vpop.xlane.xlu0 %668
      %v670 = vsel %vm404, %v603, 0.0
      %v671 = vadd.f32 %v602, %v670
      %672 = vadd.xlane.f32.xlu0 %v671
      %v673 = vpop.xlane.xlu0 %672
      %v674 = vsel %vm404, %v605, 0.0
      %v675 = vadd.f32 %v604, %v674
      %676 = vadd.xlane.f32.xlu0 %v675
      %v677 = vpop.xlane.xlu0 %676
      %v678 = vsel %vm404, %v607, 0.0
      %v679 = vadd.f32 %v606, %v678
      %680 = vadd.xlane.f32.xlu0 %v679
      %v681 = vpop.xlane.xlu0 %680
      %v682 = vsel %vm404, %v609, 0.0
      %v683 = vadd.f32 %v608, %v682
      %684 = vadd.xlane.f32.xlu0 %v683
      %v685 = vpop.xlane.xlu0 %684
      %v686 = vsel %vm404, %v611, 0.0
      %v687 = vadd.f32 %v610, %v686
      %688 = vadd.xlane.f32.xlu0 %v687
      %v689 = vpop.xlane.xlu0 %688
      %v690 = vsel %vm404, %v613, 0.0
      %v691 = vadd.f32 %v612, %v690
      %692 = vadd.xlane.f32.xlu0 %v691
      %v693 = vpop.xlane.xlu0 %692
      %v694 = vsel %vm404, %v615, 0.0
      %v695 = vadd.f32 %v614, %v694
      %696 = vadd.xlane.f32.xlu0 %v695
      %v697 = vpop.xlane.xlu0 %696
      %v698 = vsel %vm404, %v617, 0.0
      %v699 = vadd.f32 %v616, %v698
      %700 = vadd.xlane.f32.xlu0 %v699
      %v701 = vpop.xlane.xlu0 %700
      %v702 = vsel %vm404, %v619, 0.0
      %v703 = vadd.f32 %v618, %v702
      %704 = vadd.xlane.f32.xlu0 %v703
      %v705 = vpop.xlane.xlu0 %704
      %v706 = vsel %vm404, %v621, 0.0
      %v707 = vadd.f32 %v620, %v706
      %708 = vadd.xlane.f32.xlu0 %v707
      %v709 = vpop.xlane.xlu0 %708
      %v710 = vsel %vm404, %v623, 0.0
      %v711 = vadd.f32 %v622, %v710
      %712 = vadd.xlane.f32.xlu0 %v711
      %v713 = vpop.xlane.xlu0 %712
      %v714 = vsel %vm404, %v625, 0.0
      %v715 = vadd.f32 %v624, %v714
      %716 = vadd.xlane.f32.xlu0 %v715
      %v717 = vpop.xlane.xlu0 %716
      %v718 = vsel %vm404, %v627, 0.0
      %v719 = vadd.f32 %v626, %v718
      %720 = vadd.xlane.f32.xlu0 %v719
      %v721 = vpop.xlane.xlu0 %720
      %v722 = vsel %vm404, %v629, 0.0
      %v723 = vadd.f32 %v628, %v722
      %724 = vadd.xlane.f32.xlu0 %v723
      %v725 = vpop.xlane.xlu0 %724
      %v726 = vsel %vm404, %v631, 0.0
      %v727 = vadd.f32 %v630, %v726
      %728 = vadd.xlane.f32.xlu0 %v727
      %v729 = vpop.xlane.xlu0 %728
      %vm730 = vcmask 1043456
      %v731 = vsel %vm730, %v632, 0.0
      %vm732 = vcmask 551936
      %v733 = vsel %vm732, %v633, 0.0
      %v734 = vadd.f32 %v731, %v733
      %735 = vadd.xlane.f32.xlu0 %v734
      %v736 = vpop.xlane.xlu0 %735
      %vm737 = vcmp.gt.f32.partialorder %v637, 0.5
      %vm738 = vcmp.gt.f32.partialorder %v641, 0.5
      %vm739 = vcmp.gt.f32.partialorder %v645, 0.5
      %vm740 = vcmp.gt.f32.partialorder %v649, 0.5
      %vm741 = vcmp.gt.f32.partialorder %v653, 0.5
      %vm742 = vcmp.gt.f32.partialorder %v657, 0.5
      %vm743 = vcmp.gt.f32.partialorder %v661, 0.5
      %vm744 = vcmp.gt.f32.partialorder %v665, 0.5
      %vm745 = vcmp.gt.f32.partialorder %v669, 0.5
      %vm746 = vcmp.gt.f32.partialorder %v673, 0.5
      %vm747 = vcmp.gt.f32.partialorder %v677, 0.5
      %vm748 = vcmp.gt.f32.partialorder %v681, 0.5
      %vm749 = vcmp.gt.f32.partialorder %v685, 0.5
      %vm750 = vcmp.gt.f32.partialorder %v689, 0.5
      %vm751 = vcmp.gt.f32.partialorder %v693, 0.5
      %vm752 = vcmp.gt.f32.partialorder %v697, 0.5
      %vm753 = vcmp.gt.f32.partialorder %v701, 0.5
      %vm754 = vcmp.gt.f32.partialorder %v705, 0.5
      %vm755 = vcmp.gt.f32.partialorder %v709, 0.5
      %vm756 = vcmp.gt.f32.partialorder %v713, 0.5
      %vm757 = vcmp.gt.f32.partialorder %v717, 0.5
      %vm758 = vcmp.gt.f32.partialorder %v721, 0.5
      %vm759 = vcmp.gt.f32.partialorder %v725, 0.5
      %vm760 = vcmp.gt.f32.partialorder %v729, 0.5
      %vm761 = vcmp.gt.f32.partialorder %v736, 0.5
      %v762 = vrcp.pop %v637
      %v763 = vmul.f32 1.0, %v762
      %v764 = vrcp.pop %v641
      %v765 = vmul.f32 1.0, %v764
      %v766 = vrcp.pop %v645
      %v767 = vmul.f32 1.0, %v766
      %v768 = vrcp.pop %v649
      %v769 = vmul.f32 1.0, %v768
      %v770 = vrcp.pop %v653
      %v771 = vmul.f32 1.0, %v770
      %v772 = vrcp.pop %v657
      %v773 = vmul.f32 1.0, %v772
      %v774 = vrcp.pop %v661
      %v775 = vmul.f32 1.0, %v774
      %v776 = vrcp.pop %v665
      %v777 = vmul.f32 1.0, %v776
      %v778 = vrcp.pop %v669
      %v779 = vmul.f32 1.0, %v778
      %v780 = vrcp.pop %v673
      %v781 = vmul.f32 1.0, %v780
      %v782 = vrcp.pop %v677
      %v783 = vmul.f32 1.0, %v782
      %v784 = vrcp.pop %v681
      %v785 = vmul.f32 1.0, %v784
      %v786 = vrcp.pop %v685
      %v787 = vmul.f32 1.0, %v786
      %v788 = vrcp.pop %v689
      %v789 = vmul.f32 1.0, %v788
      %v790 = vrcp.pop %v693
      %v791 = vmul.f32 1.0, %v790
      %v792 = vrcp.pop %v697
      %v793 = vmul.f32 1.0, %v792
      %v794 = vrcp.pop %v701
      %v795 = vmul.f32 1.0, %v794
      %v796 = vrcp.pop %v705
      %v797 = vmul.f32 1.0, %v796
      %v798 = vrcp.pop %v709
      %v799 = vmul.f32 1.0, %v798
      %v800 = vrcp.pop %v713
      %v801 = vmul.f32 1.0, %v800
      %v802 = vrcp.pop %v717
      %v803 = vmul.f32 1.0, %v802
      %v804 = vrcp.pop %v721
      %v805 = vmul.f32 1.0, %v804
      %v806 = vrcp.pop %v725
      %v807 = vmul.f32 1.0, %v806
      %v808 = vrcp.pop %v729
      %v809 = vmul.f32 1.0, %v808
      %v810 = vrcp.pop %v736
      %v811 = vmul.f32 1.0, %v810
      %v812 = vsel %vm737, %v763, 0.0
      %v813 = vsel %vm738, %v765, 0.0
      %v814 = vsel %vm739, %v767, 0.0
      %v815 = vsel %vm740, %v769, 0.0
      %v816 = vsel %vm741, %v771, 0.0
      %v817 = vsel %vm742, %v773, 0.0
      %v818 = vsel %vm743, %v775, 0.0
      %v819 = vsel %vm744, %v777, 0.0
      %v820 = vsel %vm745, %v779, 0.0
      %v821 = vsel %vm746, %v781, 0.0
      %v822 = vsel %vm747, %v783, 0.0
      %v823 = vsel %vm748, %v785, 0.0
      %v824 = vsel %vm749, %v787, 0.0
      %v825 = vsel %vm750, %v789, 0.0
      %v826 = vsel %vm751, %v791, 0.0
      %v827 = vsel %vm752, %v793, 0.0
      %v828 = vsel %vm753, %v795, 0.0
      %v829 = vsel %vm754, %v797, 0.0
      %v830 = vsel %vm755, %v799, 0.0
      %v831 = vsel %vm756, %v801, 0.0
      %v832 = vsel %vm757, %v803, 0.0
      %v833 = vsel %vm758, %v805, 0.0
      %v834 = vsel %vm759, %v807, 0.0
      %v835 = vsel %vm760, %v809, 0.0
      %v836 = vsel %vm761, %v811, 0.0
      %v837 = vmul.f32 %v483, %v812
      %v838 = vmul.f32 %v486, %v813
      %v839 = vmul.f32 %v491, %v814
      %v840 = vmul.f32 %v494, %v815
      %v841 = vmul.f32 %v499, %v816
      %v842 = vmul.f32 %v502, %v817
      %v843 = vmul.f32 %v507, %v818
      %v844 = vmul.f32 %v510, %v819
      %v845 = vmul.f32 %v515, %v820
      %v846 = vmul.f32 %v518, %v821
      %v847 = vmul.f32 %v523, %v822
      %v848 = vmul.f32 %v526, %v823
      %v849 = vmul.f32 %v531, %v824
      %v850 = vmul.f32 %v534, %v825
      %v851 = vmul.f32 %v539, %v826
      %v852 = vmul.f32 %v542, %v827
      %v853 = vmul.f32 %v547, %v828
      %v854 = vmul.f32 %v550, %v829
      %v855 = vmul.f32 %v555, %v830
      %v856 = vmul.f32 %v558, %v831
      %v857 = vmul.f32 %v563, %v832
      %v858 = vmul.f32 %v566, %v833
      %v859 = vmul.f32 %v571, %v834
      %v860 = vmul.f32 %v574, %v835
      %v861 = vmul.f32 %v579, %v836
      %v862 = vpack.c.bf16 %v838, %v837
      %v863 = vpack.c.bf16 %v840, %v839
      %v864 = vpack.c.bf16 %v842, %v841
      %v865 = vpack.c.bf16 %v844, %v843
      %v866 = vpack.c.bf16 %v846, %v845
      %v867 = vpack.c.bf16 %v848, %v847
      %v868 = vpack.c.bf16 %v850, %v849
      %v869 = vpack.c.bf16 %v852, %v851
      %v870 = vpack.c.bf16 %v854, %v853
      %v871 = vpack.c.bf16 %v856, %v855
      %v872 = vpack.c.bf16 %v858, %v857
      %v873 = vpack.c.bf16 %v860, %v859
      %v874 = vpack.c.bf16 %v861, %v861
      %v888 = vunpack.c.l.b16 %v862
      %v889 = vunpack.c.h.b16 %v862
      %v890 = vunpack.c.l.b16 %v863
      %v891 = vunpack.c.h.b16 %v863
      %v892 = vunpack.c.l.b16 %v864
      %v893 = vunpack.c.h.b16 %v864
      %v894 = vunpack.c.l.b16 %v865
      %v895 = vunpack.c.h.b16 %v865
      %v896 = vunpack.c.l.b16 %v866
      %v897 = vunpack.c.h.b16 %v866
      %v898 = vunpack.c.l.b16 %v867
      %v899 = vunpack.c.h.b16 %v867
      %v900 = vunpack.c.l.b16 %v868
      %v901 = vunpack.c.h.b16 %v868
      %v902 = vunpack.c.l.b16 %v869
      %v903 = vunpack.c.h.b16 %v869
      %v904 = vunpack.c.l.b16 %v870
      %v905 = vunpack.c.h.b16 %v870
      %v906 = vunpack.c.l.b16 %v871
      %v907 = vunpack.c.h.b16 %v871
      %v908 = vunpack.c.l.b16 %v872
      %v909 = vunpack.c.h.b16 %v872
      %v910 = vunpack.c.l.b16 %v873
      %v911 = vunpack.c.h.b16 %v873
      %v912 = vunpack.c.l.b16 %v874
      %v913 = vpack.c.b16 %v888, %v888
      %v914 = vpack.c.b16 %v889, %v889
      %v915 = vpack.c.b16 %v890, %v890
      %v916 = vpack.c.b16 %v891, %v891
      %v917 = vpack.c.b16 %v892, %v892
      %v918 = vpack.c.b16 %v893, %v893
      %v919 = vpack.c.b16 %v894, %v894
      %v920 = vpack.c.b16 %v895, %v895
      %v921 = vpack.c.b16 %v896, %v896
      %v922 = vpack.c.b16 %v897, %v897
      %v923 = vpack.c.b16 %v898, %v898
      %v924 = vpack.c.b16 %v899, %v899
      %v925 = vpack.c.b16 %v900, %v900
      %v926 = vpack.c.b16 %v901, %v901
      %v927 = vpack.c.b16 %v902, %v902
      %v928 = vpack.c.b16 %v903, %v903
      %v929 = vpack.c.b16 %v904, %v904
      %v930 = vpack.c.b16 %v905, %v905
      %v931 = vpack.c.b16 %v906, %v906
      %v932 = vpack.c.b16 %v907, %v907
      %v933 = vpack.c.b16 %v908, %v908
      %v934 = vpack.c.b16 %v909, %v909
      %v935 = vpack.c.b16 %v910, %v910
      %v936 = vpack.c.b16 %v911, %v911
      %v937 = vpack.c.b16 %v912, %v912
      %963 = vst [vmem:[%s163] sm:$0xf] %v913
      %964 = vst [vmem:[%s163 + $0x4] sm:$0xf] %v914
      %965 = vst [vmem:[%s163 + $0x8] sm:$0xf] %v915
      %966 = vst [vmem:[%s163 + $0xc] sm:$0xf] %v916
      %967 = vst [vmem:[%s163 + $0x10] sm:$0xf] %v917
      %968 = vst [vmem:[%s163 + $0x14] sm:$0xf] %v918
      %969 = vst [vmem:[%s163 + $0x18] sm:$0xf] %v919
      %970 = vst [vmem:[%s163 + $0x1c] sm:$0xf] %v920
      %971 = vst [vmem:[%s163 + $0x20] sm:$0xf] %v921
      %972 = vst [vmem:[%s163 + $0x24] sm:$0xf] %v922
      %973 = vst [vmem:[%s163 + $0x28] sm:$0xf] %v923
      %974 = vst [vmem:[%s163 + $0x2c] sm:$0xf] %v924
      %975 = vst [vmem:[%s163 + $0x30] sm:$0xf] %v925
      %976 = vst [vmem:[%s163 + $0x34] sm:$0xf] %v926
      %977 = vst [vmem:[%s163 + $0x38] sm:$0xf] %v927
      %978 = vst [vmem:[%s163 + $0x3c] sm:$0xf] %v928
      %979 = vst [vmem:[%s163 + $0x40] sm:$0xf] %v929
      %980 = vst [vmem:[%s163 + $0x44] sm:$0xf] %v930
      %981 = vst [vmem:[%s163 + $0x48] sm:$0xf] %v931
      %982 = vst [vmem:[%s163 + $0x4c] sm:$0xf] %v932
      %983 = vst [vmem:[%s163 + $0x50] sm:$0xf] %v933
      %984 = vst [vmem:[%s163 + $0x54] sm:$0xf] %v934
      %985 = vst [vmem:[%s163 + $0x58] sm:$0xf] %v935
      %986 = vst [vmem:[%s163 + $0x5c] sm:$0xf] %v936
      %987 = vst [vmem:[%s163 + $0x60] sm:$0x3] %v937
      %p988 = scmp.lt.s32.totalorder %s13, 1
      %s989 = scalar_select %p988, %s13, 1
      %s990 = smul.addr %s989, 25
      %s991 = smul.addr %s990, 4
      %s992 = scalar_lea.vmem %s2, %s991
      // Predicated region
      $region29: #{deepgcn_slic_v2_forward.12} parent=27 // pred_check
        %p993 = pneg %p83
      $region30: #{deepgcn_slic_v2_forward.12} parent=27 // pred_check_branch
        %995 = sbr.rel (%p993) target = $region32
      $region31: #{deepgcn_slic_v2_forward.12} parent=27 // pred_region
        _
      $region32: #{deepgcn_slic_v2_forward.12} parent=27 // pred_fallthru
        _
    $region28: #{deepgcn_slic_v2_forward.12} parent=5 // pred_fallthru
      _
    %p996 = scmp.le.s32.totalorder 2, %s8
    // Predicated region
    $region33: #{deepgcn_slic_v2_forward.12} parent=5 // pred_check
      %p997 = pneg %p996
    $region34: #{deepgcn_slic_v2_forward.12} parent=5 // pred_check_branch
      %999 = sbr.rel (%p997) target = $region36
    $region35: #{deepgcn_slic_v2_forward.12} parent=5 // pred_region
      %s1000 = ssub.s32 %s8, 2
      // Predicated region
      $region37: #{deepgcn_slic_v2_forward.12} parent=35 // pred_check
        %p1001 = pneg %p89
      $region38: #{deepgcn_slic_v2_forward.12} parent=35 // pred_check_branch
        %1003 = sbr.rel (%p1001) target = $region40
      $region39: #{deepgcn_slic_v2_forward.12} parent=35 // pred_region
        %p1004 = scmp.lt.s32.totalorder %s14, 1
        %s1005 = scalar_select %p1004, %s14, 1
        %s1006 = smul.addr %s1005, 25
        %s1007 = smul.addr %s1006, 4
        %s1008 = scalar_lea.vmem %s2, %s1007
      $region40: #{deepgcn_slic_v2_forward.12} parent=35 // pred_fallthru
        _
    $region36: #{deepgcn_slic_v2_forward.12} parent=5 // pred_fallthru
      _
  $region6: #{deepgcn_slic_v2_forward.12} parent=0 // loop_footer
    %s12 = sadd.s32 1, %s8
  $region7: #{deepgcn_slic_v2_forward.12} parent=0 // loop_footer_branch
    %7 = sbr.rel target = $region3
  $region8: #{deepgcn_slic_v2_forward.12} parent=0 // loop_exit
    _

// kernel: deepgcn_slic_v2_forward.11
$region0: #{deepgcn_slic_v2_forward.11}
  #allocation0 [shape = 'u32[]', space=smem, size = 0x4, offset = 0x4, fixed_abs, tag = 'smem constant byte address 0x4 - core index']
  #allocation1 [shape = 'u32[144,128]{1,0:T(1,128)}', space=vmem, size = 0x12000, scoped, tag = 'internal scratch']
  %s0 = inlined_call_operand.vmem [shape: bf16[392,1152], index: 0, kind: input, shape index: {}]
  %s1 = inlined_call_operand.vmem [shape: bf16[1152,128], index: 1, kind: input, shape index: {}]
  %s2 = inlined_call_operand.vmem [shape: f32[1,128], index: 2, kind: input, shape index: {}]
  %s3 = inlined_call_operand.vmem [shape: bf16[392,128], index: 3, kind: output, shape index: {}]
  %s4 = sld [smem:[#allocation0]]
  $region22: #{deepgcn_slic_v2_forward.11} parent=0
    _
  %s6 = ssub.s32 1, %s4
  %s7 = scalar_select 0, %s6, %s4
  // Predicated region
  $region2: #{deepgcn_slic_v2_forward.11} parent=0 // pred_check
    _
  $region3: #{deepgcn_slic_v2_forward.11} parent=0 // pred_check_branch
    %9 = sbr.rel (0) target = $region5
  $region4: #{deepgcn_slic_v2_forward.11} parent=0 // pred_region
    _
  $region5: #{deepgcn_slic_v2_forward.11} parent=0 // pred_fallthru
    _
  // Predicated region
  $region6: #{deepgcn_slic_v2_forward.11} parent=0 // pred_check
    _
  $region7: #{deepgcn_slic_v2_forward.11} parent=0 // pred_check_branch
    %11 = sbr.rel (0) target = $region9
  $region8: #{deepgcn_slic_v2_forward.11} parent=0 // pred_region
    _
  $region9: #{deepgcn_slic_v2_forward.11} parent=0 // pred_fallthru
    _
  // Predicated region
  $region10: #{deepgcn_slic_v2_forward.11} parent=0 // pred_check
    _
  $region11: #{deepgcn_slic_v2_forward.11} parent=0 // pred_check_branch
    %13 = sbr.rel (0) target = $region13
  $region12: #{deepgcn_slic_v2_forward.11} parent=0 // pred_region
    _
  $region13: #{deepgcn_slic_v2_forward.11} parent=0 // pred_fallthru
    _
  %v15 = vld [vmem:[%s0] sm:$0xff]
  %v16 = vld [vmem:[%s0 + $0x8] sm:$0xff]
  %v17 = vld [vmem:[%s0 + $0x10] sm:$0xff]
  %v18 = vld [vmem:[%s0 + $0x18] sm:$0xff]
  %v19 = vld [vmem:[%s0 + $0x20] sm:$0xf]
  %v20 = vld [vmem:[%s0 + $0x24] sm:$0xff]
  %v21 = vld [vmem:[%s0 + $0x2c] sm:$0xff]
  %v22 = vld [vmem:[%s0 + $0x34] sm:$0xff]
  %v23 = vld [vmem:[%s0 + $0x3c] sm:$0xff]
  %v24 = vld [vmem:[%s0 + $0x44] sm:$0xf]
  %v25 = vld [vmem:[%s0 + $0x48] sm:$0xff]
  %v26 = vld [vmem:[%s0 + $0x50] sm:$0xff]
  %v27 = vld [vmem:[%s0 + $0x58] sm:$0xff]
  %v28 = vld [vmem:[%s0 + $0x60] sm:$0xff]
  %v29 = vld [vmem:[%s0 + $0x68] sm:$0xf]
  %v30 = vld [vmem:[%s0 + $0x6c] sm:$0xff]
  %v31 = vld [vmem:[%s0 + $0x74] sm:$0xff]
  %v32 = vld [vmem:[%s0 + $0x7c] sm:$0xff]
  %v33 = vld [vmem:[%s0 + $0x84] sm:$0xff]
  %v34 = vld [vmem:[%s0 + $0x8c] sm:$0xf]
  %v35 = vld [vmem:[%s0 + $0x90] sm:$0xff]
  %v36 = vld [vmem:[%s0 + $0x98] sm:$0xff]
  %v37 = vld [vmem:[%s0 + $0xa0] sm:$0xff]
  %v38 = vld [vmem:[%s0 + $0xa8] sm:$0xff]
  %v39 = vld [vmem:[%s0 + $0xb0] sm:$0xf]
  %v40 = vld [vmem:[%s0 + $0xb4] sm:$0xff]
  %v41 = vld [vmem:[%s0 + $0xbc] sm:$0xff]
  %v42 = vld [vmem:[%s0 + $0xc4] sm:$0xff]
  %v43 = vld [vmem:[%s0 + $0xcc] sm:$0xff]
  %v44 = vld [vmem:[%s0 + $0xd4] sm:$0xf]
  %v45 = vld [vmem:[%s0 + $0xd8] sm:$0xff]
  %v46 = vld [vmem:[%s0 + $0xe0] sm:$0xff]
  %v47 = vld [vmem:[%s0 + $0xe8] sm:$0xff]
  %v48 = vld [vmem:[%s0 + $0xf0] sm:$0xff]
  %v49 = vld [vmem:[%s0 + $0xf8] sm:$0xf]
  %v50 = vld [vmem:[%s0 + $0xfc] sm:$0xff]
  %v51 = vld [vmem:[%s0 + $0x104] sm:$0xff]
  %v52 = vld [vmem:[%s0 + $0x10c] sm:$0xff]
  %v53 = vld [vmem:[%s0 + $0x114] sm:$0xff]
  %v54 = vld [vmem:[%s0 + $0x11c] sm:$0xf]
  %v55 = vld [vmem:[%s0 + $0x120] sm:$0xff]
  %v56 = vld [vmem:[%s0 + $0x128] sm:$0xff]
  %v57 = vld [vmem:[%s0 + $0x130] sm:$0xff]
  %v58 = vld [vmem:[%s0 + $0x138] sm:$0xff]
  %v59 = vld [vmem:[%s0 + $0x140] sm:$0xf]
  %v60 = vld [vmem:[%s0 + $0x144] sm:$0xff]
  %v61 = vld [vmem:[%s0 + $0x14c] sm:$0xff]
  %v62 = vld [vmem:[%s0 + $0x154] sm:$0xff]
  %v63 = vld [vmem:[%s0 + $0x15c] sm:$0xff]
  %v64 = vld [vmem:[%s0 + $0x164] sm:$0xf]
  %v65 = vld [vmem:[%s0 + $0x168] sm:$0xff]
  %v66 = vld [vmem:[%s0 + $0x170] sm:$0xff]
  %v67 = vld [vmem:[%s0 + $0x178] sm:$0xff]
  %v68 = vld [vmem:[%s0 + $0x180] sm:$0xff]
  %v69 = vld [vmem:[%s0 + $0x188] sm:$0xf]
  %v70 = vld [vmem:[%s0 + $0x18c] sm:$0xff]
  %v71 = vld [vmem:[%s0 + $0x194] sm:$0xff]
  %v72 = vld [vmem:[%s0 + $0x19c] sm:$0xff]
  %v73 = vld [vmem:[%s0 + $0x1a4] sm:$0xff]
  %v74 = vld [vmem:[%s0 + $0x1ac] sm:$0xf]
  %v75 = vld [vmem:[%s0 + $0x1b0] sm:$0xff]
  %v76 = vld [vmem:[%s0 + $0x1b8] sm:$0xff]
  %v77 = vld [vmem:[%s0 + $0x1c0] sm:$0xff]
  %v78 = vld [vmem:[%s0 + $0x1c8] sm:$0xff]
  %v79 = vld [vmem:[%s0 + $0x1d0] sm:$0xf]
  %v80 = vld [vmem:[%s0 + $0x1d4] sm:$0xff]
  %v81 = vld [vmem:[%s0 + $0x1dc] sm:$0xff]
  %v82 = vld [vmem:[%s0 + $0x1e4] sm:$0xff]
  %v83 = vld [vmem:[%s0 + $0x1ec] sm:$0xff]
  %v84 = vld [vmem:[%s0 + $0x1f4] sm:$0xf]
  %v85 = vld [vmem:[%s0 + $0x1f8] sm:$0xff]
  %v86 = vld [vmem:[%s0 + $0x200] sm:$0xff]
  %v87 = vld [vmem:[%s0 + $0x208] sm:$0xff]
  %v88 = vld [vmem:[%s0 + $0x210] sm:$0xff]
  %v89 = vld [vmem:[%s0 + $0x218] sm:$0xf]
  %v90 = vld [vmem:[%s0 + $0x21c] sm:$0xff]
  %v91 = vld [vmem:[%s0 + $0x224] sm:$0xff]
  %v92 = vld [vmem:[%s0 + $0x22c] sm:$0xff]
  %v93 = vld [vmem:[%s0 + $0x234] sm:$0xff]
  %v94 = vld [vmem:[%s0 + $0x23c] sm:$0xf]
  %v95 = vld [vmem:[%s0 + $0x240] sm:$0xff]
  %v96 = vld [vmem:[%s0 + $0x248] sm:$0xff]
  %v97 = vld [vmem:[%s0 + $0x250] sm:$0xff]
  %v98 = vld [vmem:[%s0 + $0x258] sm:$0xff]
  %v99 = vld [vmem:[%s0 + $0x260] sm:$0xf]
  %v100 = vld [vmem:[%s0 + $0x264] sm:$0xff]
  %v101 = vld [vmem:[%s0 + $0x26c] sm:$0xff]
  %v102 = vld [vmem:[%s0 + $0x274] sm:$0xff]
  %v103 = vld [vmem:[%s0 + $0x27c] sm:$0xff]
  %v104 = vld [vmem:[%s0 + $0x284] sm:$0xf]
  %v105 = vld [vmem:[%s0 + $0x288] sm:$0xff]
  %v106 = vld [vmem:[%s0 + $0x290] sm:$0xff]
  %v107 = vld [vmem:[%s0 + $0x298] sm:$0xff]
  %v108 = vld [vmem:[%s0 + $0x2a0] sm:$0xff]
  %v109 = vld [vmem:[%s0 + $0x2a8] sm:$0xf]
  %v110 = vld [vmem:[%s0 + $0x2ac] sm:$0xff]
  %v111 = vld [vmem:[%s0 + $0x2b4] sm:$0xff]
  %v112 = vld [vmem:[%s0 + $0x2bc] sm:$0xff]
  %v113 = vld [vmem:[%s0 + $0x2c4] sm:$0xff]
  %v114 = vld [vmem:[%s0 + $0x2cc] sm:$0xf]
  %v115 = vld [vmem:[%s0 + $0x2d0] sm:$0xff]
  %v116 = vld [vmem:[%s0 + $0x2d8] sm:$0xff]
  %v117 = vld [vmem:[%s0 + $0x2e0] sm:$0xff]
  %v118 = vld [vmem:[%s0 + $0x2e8] sm:$0xff]
  %v119 = vld [vmem:[%s0 + $0x2f0] sm:$0xf]
  %v120 = vld [vmem:[%s0 + $0x2f4] sm:$0xff]
  %v121 = vld [vmem:[%s0 + $0x2fc] sm:$0xff]
  %v122 = vld [vmem:[%s0 + $0x304] sm:$0xff]
  %v123 = vld [vmem:[%s0 + $0x30c] sm:$0xff]
  %v124 = vld [vmem:[%s0 + $0x314] sm:$0xf]
  %v125 = vld [vmem:[%s0 + $0x318] sm:$0xff]
  %v126 = vld [vmem:[%s0 + $0x320] sm:$0xff]
  %v127 = vld [vmem:[%s0 + $0x328] sm:$0xff]
  %v128 = vld [vmem:[%s0 + $0x330] sm:$0xff]
  %v129 = vld [vmem:[%s0 + $0x338] sm:$0xf]
  %v130 = vld [vmem:[%s0 + $0x33c] sm:$0xff]
  %v131 = vld [vmem:[%s0 + $0x344] sm:$0xff]
  %v132 = vld [vmem:[%s0 + $0x34c] sm:$0xff]
  %v133 = vld [vmem:[%s0 + $0x354] sm:$0xff]
  %v134 = vld [vmem:[%s0 + $0x35c] sm:$0xf]
  %v135 = vld [vmem:[%s0 + $0x360] sm:$0xff]
  %v136 = vld [vmem:[%s0 + $0x368] sm:$0xff]
  %v137 = vld [vmem:[%s0 + $0x370] sm:$0xff]
  %v138 = vld [vmem:[%s0 + $0x378] sm:$0xff]
  %v139 = vld [vmem:[%s0 + $0x380] sm:$0xf]
  %v140 = vld [vmem:[%s0 + $0x384] sm:$0xff]
  %v141 = vld [vmem:[%s0 + $0x38c] sm:$0xff]
  %v142 = vld [vmem:[%s0 + $0x394] sm:$0xff]
  %v143 = vld [vmem:[%s0 + $0x39c] sm:$0xff]
  %v144 = vld [vmem:[%s0 + $0x3a4] sm:$0xf]
  %v145 = vld [vmem:[%s0 + $0x3a8] sm:$0xff]
  %v146 = vld [vmem:[%s0 + $0x3b0] sm:$0xff]
  %v147 = vld [vmem:[%s0 + $0x3b8] sm:$0xff]
  %v148 = vld [vmem:[%s0 + $0x3c0] sm:$0xff]
  %v149 = vld [vmem:[%s0 + $0x3c8] sm:$0xf]
  %v150 = vld [vmem:[%s0 + $0x3cc] sm:$0xff]
  %v151 = vld [vmem:[%s0 + $0x3d4] sm:$0xff]
  %v152 = vld [vmem:[%s0 + $0x3dc] sm:$0xff]
  %v153 = vld [vmem:[%s0 + $0x3e4] sm:$0xff]
  %v154 = vld [vmem:[%s0 + $0x3ec] sm:$0xf]
  %v155 = vld [vmem:[%s0 + $0x3f0] sm:$0xff]
  %v156 = vld [vmem:[%s0 + $0x3f8] sm:$0xff]
  %v157 = vld [vmem:[%s0 + $0x400] sm:$0xff]
  %v158 = vld [vmem:[%s0 + $0x408] sm:$0xff]
  %v159 = vld [vmem:[%s0 + $0x410] sm:$0xf]
  %v160 = vld [vmem:[%s0 + $0x414] sm:$0xff]
  %v161 = vld [vmem:[%s0 + $0x41c] sm:$0xff]
  %v162 = vld [vmem:[%s0 + $0x424] sm:$0xff]
  %v163 = vld [vmem:[%s0 + $0x42c] sm:$0xff]
  %v164 = vld [vmem:[%s0 + $0x434] sm:$0xf]
  %v165 = vld [vmem:[%s0 + $0x438] sm:$0xff]
  %v166 = vld [vmem:[%s0 + $0x440] sm:$0xff]
  %v167 = vld [vmem:[%s0 + $0x448] sm:$0xff]
  %v168 = vld [vmem:[%s0 + $0x450] sm:$0xff]
  %v169 = vld [vmem:[%s0 + $0x458] sm:$0xf]
  %v170 = vld [vmem:[%s0 + $0x45c] sm:$0xff]
  %v171 = vld [vmem:[%s0 + $0x464] sm:$0xff]
  %v172 = vld [vmem:[%s0 + $0x46c] sm:$0xff]
  %v173 = vld [vmem:[%s0 + $0x474] sm:$0xff]
  %v174 = vld [vmem:[%s0 + $0x47c] sm:$0xf]
  %v175 = vld [vmem:[%s0 + $0x480] sm:$0xff]
  %v176 = vld [vmem:[%s0 + $0x488] sm:$0xff]
  %v177 = vld [vmem:[%s0 + $0x490] sm:$0xff]
  %v178 = vld [vmem:[%s0 + $0x498] sm:$0xff]
  %v179 = vld [vmem:[%s0 + $0x4a0] sm:$0xf]
  %v180 = vld [vmem:[%s0 + $0x4a4] sm:$0xff]
  %v181 = vld [vmem:[%s0 + $0x4ac] sm:$0xff]
  %v182 = vld [vmem:[%s0 + $0x4b4] sm:$0xff]
  %v183 = vld [vmem:[%s0 + $0x4bc] sm:$0xff]
  %v184 = vld [vmem:[%s0 + $0x4c4] sm:$0xf]
  %v185 = vld [vmem:[%s0 + $0x4c8] sm:$0xff]
  %v186 = vld [vmem:[%s0 + $0x4d0] sm:$0xff]
  %v187 = vld [vmem:[%s0 + $0x4d8] sm:$0xff]
  %v188 = vld [vmem:[%s0 + $0x4e0] sm:$0xff]
  %v189 = vld [vmem:[%s0 + $0x4e8] sm:$0xf]
  %v190 = vld [vmem:[%s0 + $0x4ec] sm:$0xff]
  %v191 = vld [vmem:[%s0 + $0x4f4] sm:$0xff]
  %v192 = vld [vmem:[%s0 + $0x4fc] sm:$0xff]
  %v193 = vld [vmem:[%s0 + $0x504] sm:$0xff]
  %v194 = vld [vmem:[%s0 + $0x50c] sm:$0xf]
  %v195 = vld [vmem:[%s0 + $0x510] sm:$0xff]
  %v196 = vld [vmem:[%s0 + $0x518] sm:$0xff]
  %v197 = vld [vmem:[%s0 + $0x520] sm:$0xff]
  %v198 = vld [vmem:[%s0 + $0x528] sm:$0xff]
  %v199 = vld [vmem:[%s0 + $0x530] sm:$0xf]
  %v200 = vld [vmem:[%s0 + $0x534] sm:$0xff]
  %v201 = vld [vmem:[%s0 + $0x53c] sm:$0xff]
  %v202 = vld [vmem:[%s0 + $0x544] sm:$0xff]
  %v203 = vld [vmem:[%s0 + $0x54c] sm:$0xff]
  %v204 = vld [vmem:[%s0 + $0x554] sm:$0xf]
  %v205 = vld [vmem:[%s0 + $0x558] sm:$0xff]
  %v206 = vld [vmem:[%s0 + $0x560] sm:$0xff]
  %v207 = vld [vmem:[%s0 + $0x568] sm:$0xff]
  %v208 = vld [vmem:[%s0 + $0x570] sm:$0xff]
  %v209 = vld [vmem:[%s0 + $0x578] sm:$0xf]
  %v210 = vld [vmem:[%s0 + $0x57c] sm:$0xff]
  %v211 = vld [vmem:[%s0 + $0x584] sm:$0xff]
  %v212 = vld [vmem:[%s0 + $0x58c] sm:$0xff]
  %v213 = vld [vmem:[%s0 + $0x594] sm:$0xff]
  %v214 = vld [vmem:[%s0 + $0x59c] sm:$0xf]
  %v215 = vld [vmem:[%s0 + $0x5a0] sm:$0xff]
  %v216 = vld [vmem:[%s0 + $0x5a8] sm:$0xff]
  %v217 = vld [vmem:[%s0 + $0x5b0] sm:$0xff]
  %v218 = vld [vmem:[%s0 + $0x5b8] sm:$0xff]
  %v219 = vld [vmem:[%s0 + $0x5c0] sm:$0xf]
  %v220 = vld [vmem:[%s0 + $0x5c4] sm:$0xff]
  %v221 = vld [vmem:[%s0 + $0x5cc] sm:$0xff]
  %v222 = vld [vmem:[%s0 + $0x5d4] sm:$0xff]
  %v223 = vld [vmem:[%s0 + $0x5dc] sm:$0xff]
  %v224 = vld [vmem:[%s0 + $0x5e4] sm:$0xf]
  %v225 = vld [vmem:[%s0 + $0x5e8] sm:$0xff]
  %v226 = vld [vmem:[%s0 + $0x5f0] sm:$0xff]
  %v227 = vld [vmem:[%s0 + $0x5f8] sm:$0xff]
  %v228 = vld [vmem:[%s0 + $0x600] sm:$0xff]
  %v229 = vld [vmem:[%s0 + $0x608] sm:$0xf]
  %v230 = vld [vmem:[%s0 + $0x60c] sm:$0xff]
  %v231 = vld [vmem:[%s0 + $0x614] sm:$0xff]
  %v232 = vld [vmem:[%s0 + $0x61c] sm:$0xff]
  %v233 = vld [vmem:[%s0 + $0x624] sm:$0xff]
  %v234 = vld [vmem:[%s0 + $0x62c] sm:$0xf]
  %v235 = vld [vmem:[%s0 + $0x630] sm:$0xff]
  %v236 = vld [vmem:[%s0 + $0x638] sm:$0xff]
  %v237 = vld [vmem:[%s0 + $0x640] sm:$0xff]
  %v238 = vld [vmem:[%s0 + $0x648] sm:$0xff]
  %v239 = vld [vmem:[%s0 + $0x650] sm:$0xf]
  %v240 = vld [vmem:[%s0 + $0x654] sm:$0xff]
  %v241 = vld [vmem:[%s0 + $0x65c] sm:$0xff]
  %v242 = vld [vmem:[%s0 + $0x664] sm:$0xff]
  %v243 = vld [vmem:[%s0 + $0x66c] sm:$0xff]
  %v244 = vld [vmem:[%s0 + $0x674] sm:$0xf]
  %v245 = vld [vmem:[%s0 + $0x678] sm:$0xff]
  %v246 = vld [vmem:[%s0 + $0x680] sm:$0xff]
  %v247 = vld [vmem:[%s0 + $0x688] sm:$0xff]
  %v248 = vld [vmem:[%s0 + $0x690] sm:$0xff]
  %v249 = vld [vmem:[%s0 + $0x698] sm:$0xf]
  %v250 = vld [vmem:[%s0 + $0x69c] sm:$0xff]
  %v251 = vld [vmem:[%s0 + $0x6a4] sm:$0xff]
  %v252 = vld [vmem:[%s0 + $0x6ac] sm:$0xff]
  %v253 = vld [vmem:[%s0 + $0x6b4] sm:$0xff]
  %v254 = vld [vmem:[%s0 + $0x6bc] sm:$0xf]
  %v255 = vld [vmem:[%s0 + $0x6c0] sm:$0xff]
  %v256 = vld [vmem:[%s0 + $0x6c8] sm:$0xff]
  %v257 = vld [vmem:[%s0 + $0x6d0] sm:$0xff]
  %v258 = vld [vmem:[%s0 + $0x6d8] sm:$0xff]
  %v259 = vld [vmem:[%s0 + $0x6e0] sm:$0xf]
  %v260 = vld [vmem:[%s1] sm:$0xf]
  %v261 = vld [vmem:[%s1 + $0x4] sm:$0xf]
  %v262 = vld [vmem:[%s1 + $0x8] sm:$0xf]
  %v263 = vld [vmem:[%s1 + $0xc] sm:$0xf]
  %v264 = vld [vmem:[%s1 + $0x10] sm:$0xf]
  %v265 = vld [vmem:[%s1 + $0x14] sm:$0xf]
  %v266 = vld [vmem:[%s1 + $0x18] sm:$0xf]
  %v267 = vld [vmem:[%s1 + $0x1c] sm:$0xf]
  %v268 = vld [vmem:[%s1 + $0x20] sm:$0xf]
  %v269 = vld [vmem:[%s1 + $0x24] sm:$0xf]
  %v270 = vld [vmem:[%s1 + $0x28] sm:$0xf]
  %v271 = vld [vmem:[%s1 + $0x2c] sm:$0xf]
  %v272 = vld [vmem:[%s1 + $0x30] sm:$0xf]
  %v273 = vld [vmem:[%s1 + $0x34] sm:$0xf]
  %v274 = vld [vmem:[%s1 + $0x38] sm:$0xf]
  %v275 = vld [vmem:[%s1 + $0x3c] sm:$0xf]
  %v276 = vld [vmem:[%s1 + $0x40] sm:$0xf]
  %v277 = vld [vmem:[%s1 + $0x44] sm:$0xf]
  %v278 = vld [vmem:[%s1 + $0x48] sm:$0xf]
  %v279 = vld [vmem:[%s1 + $0x4c] sm:$0xf]
  %v280 = vld [vmem:[%s1 + $0x50] sm:$0xf]
  %v281 = vld [vmem:[%s1 + $0x54] sm:$0xf]
  %v282 = vld [vmem:[%s1 + $0x58] sm:$0xf]
  %v283 = vld [vmem:[%s1 + $0x5c] sm:$0xf]
  %v284 = vld [vmem:[%s1 + $0x60] sm:$0xf]
  %v285 = vld [vmem:[%s1 + $0x64] sm:$0xf]
  %v286 = vld [vmem:[%s1 + $0x68] sm:$0xf]
  %v287 = vld [vmem:[%s1 + $0x6c] sm:$0xf]
  %v288 = vld [vmem:[%s1 + $0x70] sm:$0xf]
  %v289 = vld [vmem:[%s1 + $0x74] sm:$0xf]
  %v290 = vld [vmem:[%s1 + $0x78] sm:$0xf]
  %v291 = vld [vmem:[%s1 + $0x7c] sm:$0xf]
  %v292 = vld [vmem:[%s1 + $0x80] sm:$0xf]
  %v293 = vld [vmem:[%s1 + $0x84] sm:$0xf]
  %v294 = vld [vmem:[%s1 + $0x88] sm:$0xf]
  %v295 = vld [vmem:[%s1 + $0x8c] sm:$0xf]
  %v296 = vld [vmem:[%s1 + $0x90] sm:$0xf]
  %v297 = vld [vmem:[%s1 + $0x94] sm:$0xf]
  %v298 = vld [vmem:[%s1 + $0x98] sm:$0xf]
  %v299 = vld [vmem:[%s1 + $0x9c] sm:$0xf]
  %v300 = vld [vmem:[%s1 + $0xa0] sm:$0xf]
  %v301 = vld [vmem:[%s1 + $0xa4] sm:$0xf]
  %v302 = vld [vmem:[%s1 + $0xa8] sm:$0xf]
  %v303 = vld [vmem:[%s1 + $0xac] sm:$0xf]
  %v304 = vld [vmem:[%s1 + $0xb0] sm:$0xf]
  %v305 = vld [vmem:[%s1 + $0xb4] sm:$0xf]
  %v306 = vld [vmem:[%s1 + $0xb8] sm:$0xf]
  %v307 = vld [vmem:[%s1 + $0xbc] sm:$0xf]
  %v308 = vld [vmem:[%s1 + $0xc0] sm:$0xf]
  %v309 = vld [vmem:[%s1 + $0xc4] sm:$0xf]
  %v310 = vld [vmem:[%s1 + $0xc8] sm:$0xf]
  %v311 = vld [vmem:[%s1 + $0xcc] sm:$0xf]
  %v312 = vld [vmem:[%s1 + $0xd0] sm:$0xf]
  %v313 = vld [vmem:[%s1 + $0xd4] sm:$0xf]
  %v314 = vld [vmem:[%s1 + $0xd8] sm:$0xf]
  %v315 = vld [vmem:[%s1 + $0xdc] sm:$0xf]
  %v316 = vld [vmem:[%s1 + $0xe0] sm:$0xf]
  %v317 = vld [vmem:[%s1 + $0xe4] sm:$0xf]
  %v318 = vld [vmem:[%s1 + $0xe8] sm:$0xf]
  %v319 = vld [vmem:[%s1 + $0xec] sm:$0xf]
  %v320 = vld [vmem:[%s1 + $0xf0] sm:$0xf]
  %v321 = vld [vmem:[%s1 + $0xf4] sm:$0xf]
  %v322 = vld [vmem:[%s1 + $0xf8] sm:$0xf]
  %v323 = vld [vmem:[%s1 + $0xfc] sm:$0xf]
  %v324 = vld [vmem:[%s1 + $0x100] sm:$0xf]
  %v325 = vld [vmem:[%s1 + $0x104] sm:$0xf]
  %v326 = vld [vmem:[%s1 + $0x108] sm:$0xf]
  %v327 = vld [vmem:[%s1 + $0x10c] sm:$0xf]
  %v328 = vld [vmem:[%s1 + $0x110] sm:$0xf]
  %v329 = vld [vmem:[%s1 + $0x114] sm:$0xf]
  %v330 = vld [vmem:[%s1 + $0x118] sm:$0xf]
  %v331 = vld [vmem:[%s1 + $0x11c] sm:$0xf]
  %v332 = vld [vmem:[%s1 + $0x120] sm:$0xf]
  %v333 = vld [vmem:[%s1 + $0x124] sm:$0xf]
  %v334 = vld [vmem:[%s1 + $0x128] sm:$0xf]
  %v335 = vld [vmem:[%s1 + $0x12c] sm:$0xf]
  %v336 = vld [vmem:[%s1 + $0x130] sm:$0xf]
  %v337 = vld [vmem:[%s1 + $0x134] sm:$0xf]
  %v338 = vld [vmem:[%s1 + $0x138] sm:$0xf]
  %v339 = vld [vmem:[%s1 + $0x13c] sm:$0xf]
  %v340 = vld [vmem:[%s1 + $0x140] sm:$0xf]
  %v341 = vld [vmem:[%s1 + $0x144] sm:$0xf]
  %v342 = vld [vmem:[%s1 + $0x148] sm:$0xf]
  %v343 = vld [vmem:[%s1 + $0x14c] sm:$0xf]
  %v344 = vld [vmem:[%s1 + $0x150] sm:$0xf]
  %v345 = vld [vmem:[%s1 + $0x154] sm:$0xf]
  %v346 = vld [vmem:[%s1 + $0x158] sm:$0xf]
  %v347 = vld [vmem:[%s1 + $0x15c] sm:$0xf]
  %v348 = vld [vmem:[%s1 + $0x160] sm:$0xf]
  %v349 = vld [vmem:[%s1 + $0x164] sm:$0xf]
  %v350 = vld [vmem:[%s1 + $0x168] sm:$0xf]
  %v351 = vld [vmem:[%s1 + $0x16c] sm:$0xf]
  %v352 = vld [vmem:[%s1 + $0x170] sm:$0xf]
  %v353 = vld [vmem:[%s1 + $0x174] sm:$0xf]
  %v354 = vld [vmem:[%s1 + $0x178] sm:$0xf]
  %v355 = vld [vmem:[%s1 + $0x17c] sm:$0xf]
  %v356 = vld [vmem:[%s1 + $0x180] sm:$0xf]
  %v357 = vld [vmem:[%s1 + $0x184] sm:$0xf]
  %v358 = vld [vmem:[%s1 + $0x188] sm:$0xf]
  %v359 = vld [vmem:[%s1 + $0x18c] sm:$0xf]
  %v360 = vld [vmem:[%s1 + $0x190] sm:$0xf]
  %v361 = vld [vmem:[%s1 + $0x194] sm:$0xf]
  %v362 = vld [vmem:[%s1 + $0x198] sm:$0xf]
  %v363 = vld [vmem:[%s1 + $0x19c] sm:$0xf]
  %v364 = vld [vmem:[%s1 + $0x1a0] sm:$0xf]
  %v365 = vld [vmem:[%s1 + $0x1a4] sm:$0xf]
  %v366 = vld [vmem:[%s1 + $0x1a8] sm:$0xf]
  %v367 = vld [vmem:[%s1 + $0x1ac] sm:$0xf]
  %v368 = vld [vmem:[%s1 + $0x1b0] sm:$0xf]
  %v369 = vld [vmem:[%s1 + $0x1b4] sm:$0xf]
  %v370 = vld [vmem:[%s1 + $0x1b8] sm:$0xf]
  %v371 = vld [vmem:[%s1 + $0x1bc] sm:$0xf]
  %v372 = vld [vmem:[%s1 + $0x1c0] sm:$0xf]
  %v373 = vld [vmem:[%s1 + $0x1c4] sm:$0xf]
  %v374 = vld [vmem:[%s1 + $0x1c8] sm:$0xf]
  %v375 = vld [vmem:[%s1 + $0x1cc] sm:$0xf]
  %v376 = vld [vmem:[%s1 + $0x1d0] sm:$0xf]
  %v377 = vld [vmem:[%s1 + $0x1d4] sm:$0xf]
  %v378 = vld [vmem:[%s1 + $0x1d8] sm:$0xf]
  %v379 = vld [vmem:[%s1 + $0x1dc] sm:$0xf]
  %v380 = vld [vmem:[%s1 + $0x1e0] sm:$0xf]
  %v381 = vld [vmem:[%s1 + $0x1e4] sm:$0xf]
  %v382 = vld [vmem:[%s1 + $0x1e8] sm:$0xf]
  %v383 = vld [vmem:[%s1 + $0x1ec] sm:$0xf]
  %v384 = vld [vmem:[%s1 + $0x1f0] sm:$0xf]
  %v385 = vld [vmem:[%s1 + $0x1f4] sm:$0xf]
  %v386 = vld [vmem:[%s1 + $0x1f8] sm:$0xf]
  %v387 = vld [vmem:[%s1 + $0x1fc] sm:$0xf]
  %v388 = vld [vmem:[%s1 + $0x200] sm:$0xf]
  %v389 = vld [vmem:[%s1 + $0x204] sm:$0xf]
  %v390 = vld [vmem:[%s1 + $0x208] sm:$0xf]
  %v391 = vld [vmem:[%s1 + $0x20c] sm:$0xf]
  %v392 = vld [vmem:[%s1 + $0x210] sm:$0xf]
  %v393 = vld [vmem:[%s1 + $0x214] sm:$0xf]
  %v394 = vld [vmem:[%s1 + $0x218] sm:$0xf]
  %v395 = vld [vmem:[%s1 + $0x21c] sm:$0xf]
  %v396 = vld [vmem:[%s1 + $0x220] sm:$0xf]
  %v397 = vld [vmem:[%s1 + $0x224] sm:$0xf]
  %v398 = vld [vmem:[%s1 + $0x228] sm:$0xf]
  %v399 = vld [vmem:[%s1 + $0x22c] sm:$0xf]
  %v400 = vld [vmem:[%s1 + $0x230] sm:$0xf]
  %v401 = vld [vmem:[%s1 + $0x234] sm:$0xf]
  %v402 = vld [vmem:[%s1 + $0x238] sm:$0xf]
  %v403 = vld [vmem:[%s1 + $0x23c] sm:$0xf]
  %v404 = vld [vmem:[%s2] sm:$0x1]
  %v406 = vlaneseq
  %v407 = vshrl.u32 %v406, 7
  %v408 = vsub.s32 0, %v407
  %v409 = vrot.slane %v404, %v408
  %v656 = vunpack.c.l.b16 %v15
  %v657 = vunpack.c.h.b16 %v15
  %v658 = vunpack.c.l.b16 %v16
  %v659 = vunpack.c.h.b16 %v16
  %v660 = vunpack.c.l.b16 %v17
  %v661 = vunpack.c.h.b16 %v17
  %v662 = vunpack.c.l.b16 %v18
  %v663 = vunpack.c.h.b16 %v18
  %v664 = vunpack.c.l.b16 %v19
  %v665 = vunpack.c.l.b16 %v20
  %v666 = vunpack.c.h.b16 %v20
  %v667 = vunpack.c.l.b16 %v21
  %v668 = vunpack.c.h.b16 %v21
  %v669 = vunpack.c.l.b16 %v22
  %v670 = vunpack.c.h.b16 %v22
  %v671 = vunpack.c.l.b16 %v23
  %v672 = vunpack.c.h.b16 %v23
  %v673 = vunpack.c.l.b16 %v24
  %v674 = vunpack.c.l.b16 %v25
  %v675 = vunpack.c.h.b16 %v25
  %v676 = vunpack.c.l.b16 %v26
  %v677 = vunpack.c.h.b16 %v26
  %v678 = vunpack.c.l.b16 %v27
  %v679 = vunpack.c.h.b16 %v27
  %v680 = vunpack.c.l.b16 %v28
  %v681 = vunpack.c.h.b16 %v28
  %v682 = vunpack.c.l.b16 %v29
  %v683 = vunpack.c.l.b16 %v30
  %v684 = vunpack.c.h.b16 %v30
  %v685 = vunpack.c.l.b16 %v31
  %v686 = vunpack.c.h.b16 %v31
  %v687 = vunpack.c.l.b16 %v32
  %v688 = vunpack.c.h.b16 %v32
  %v689 = vunpack.c.l.b16 %v33
  %v690 = vunpack.c.h.b16 %v33
  %v691 = vunpack.c.l.b16 %v34
  %v692 = vunpack.c.l.b16 %v35
  %v693 = vunpack.c.h.b16 %v35
  %v694 = vunpack.c.l.b16 %v36
  %v695 = vunpack.c.h.b16 %v36
  %v696 = vunpack.c.l.b16 %v37
  %v697 = vunpack.c.h.b16 %v37
  %v698 = vunpack.c.l.b16 %v38
  %v699 = vunpack.c.h.b16 %v38
  %v700 = vunpack.c.l.b16 %v39
  %v701 = vunpack.c.l.b16 %v40
  %v702 = vunpack.c.h.b16 %v40
  %v703 = vunpack.c.l.b16 %v41
  %v704 = vunpack.c.h.b16 %v41
  %v705 = vunpack.c.l.b16 %v42
  %v706 = vunpack.c.h.b16 %v42
  %v707 = vunpack.c.l.b16 %v43
  %v708 = vunpack.c.h.b16 %v43
  %v709 = vunpack.c.l.b16 %v44
  %v710 = vunpack.c.l.b16 %v45
  %v711 = vunpack.c.h.b16 %v45
  %v712 = vunpack.c.l.b16 %v46
  %v713 = vunpack.c.h.b16 %v46
  %v714 = vunpack.c.l.b16 %v47
  %v715 = vunpack.c.h.b16 %v47
  %v716 = vunpack.c.l.b16 %v48
  %v717 = vunpack.c.h.b16 %v48
  %v718 = vunpack.c.l.b16 %v49
  %v719 = vunpack.c.l.b16 %v50
  %v720 = vunpack.c.h.b16 %v50
  %v721 = vunpack.c.l.b16 %v51
  %v722 = vunpack.c.h.b16 %v51
  %v723 = vunpack.c.l.b16 %v52
  %v724 = vunpack.c.h.b16 %v52
  %v725 = vunpack.c.l.b16 %v53
  %v726 = vunpack.c.h.b16 %v53
  %v727 = vunpack.c.l.b16 %v54
  %v728 = vunpack.c.l.b16 %v55
  %v729 = vunpack.c.h.b16 %v55
  %v730 = vunpack.c.l.b16 %v56
  %v731 = vunpack.c.h.b16 %v56
  %v732 = vunpack.c.l.b16 %v57
  %v733 = vunpack.c.h.b16 %v57
  %v734 = vunpack.c.l.b16 %v58
  %v735 = vunpack.c.h.b16 %v58
  %v736 = vunpack.c.l.b16 %v59
  %v737 = vunpack.c.l.b16 %v60
  %v738 = vunpack.c.h.b16 %v60
  %v739 = vunpack.c.l.b16 %v61
  %v740 = vunpack.c.h.b16 %v61
  %v741 = vunpack.c.l.b16 %v62
  %v742 = vunpack.c.h.b16 %v62
  %v743 = vunpack.c.l.b16 %v63
  %v744 = vunpack.c.h.b16 %v63
  %v745 = vunpack.c.l.b16 %v64
  %v746 = vunpack.c.l.b16 %v65
  %v747 = vunpack.c.h.b16 %v65
  %v748 = vunpack.c.l.b16 %v66
  %v749 = vunpack.c.h.b16 %v66
  %v750 = vunpack.c.l.b16 %v67
  %v751 = vunpack.c.h.b16 %v67
  %v752 = vunpack.c.l.b16 %v68
  %v753 = vunpack.c.h.b16 %v68
  %v754 = vunpack.c.l.b16 %v69
  %v755 = vunpack.c.l.b16 %v70
  %v756 = vunpack.c.h.b16 %v70
  %v757 = vunpack.c.l.b16 %v71
  %v758 = vunpack.c.h.b16 %v71
  %v759 = vunpack.c.l.b16 %v72
  %v760 = vunpack.c.h.b16 %v72
  %v761 = vunpack.c.l.b16 %v73
  %v762 = vunpack.c.h.b16 %v73
  %v763 = vunpack.c.l.b16 %v74
  %v764 = vunpack.c.l.b16 %v75
  %v765 = vunpack.c.h.b16 %v75
  %v766 = vunpack.c.l.b16 %v76
  %v767 = vunpack.c.h.b16 %v76
  %v768 = vunpack.c.l.b16 %v77
  %v769 = vunpack.c.h.b16 %v77
  %v770 = vunpack.c.l.b16 %v78
  %v771 = vunpack.c.h.b16 %v78
  %v772 = vunpack.c.l.b16 %v79
  %v773 = vunpack.c.l.b16 %v80
  %v774 = vunpack.c.h.b16 %v80
  %v775 = vunpack.c.l.b16 %v81
  %v776 = vunpack.c.h.b16 %v81
  %v777 = vunpack.c.l.b16 %v82
  %v778 = vunpack.c.h.b16 %v82
  %v779 = vunpack.c.l.b16 %v83
  %v780 = vunpack.c.h.b16 %v83
  %v781 = vunpack.c.l.b16 %v84
  %v782 = vunpack.c.l.b16 %v85
  %v783 = vunpack.c.h.b16 %v85
  %v784 = vunpack.c.l.b16 %v86
  %v785 = vunpack.c.h.b16 %v86
  %v786 = vunpack.c.l.b16 %v87
  %v787 = vunpack.c.h.b16 %v87
  %v788 = vunpack.c.l.b16 %v88
  %v789 = vunpack.c.h.b16 %v88
  %v790 = vunpack.c.l.b16 %v89
  %v791 = vunpack.c.l.b16 %v90
  %v792 = vunpack.c.h.b16 %v90
  %v793 = vunpack.c.l.b16 %v91
  %v794 = vunpack.c.h.b16 %v91
  %v795 = vunpack.c.l.b16 %v92
  %v796 = vunpack.c.h.b16 %v92
  %v797 = vunpack.c.l.b16 %v93
  %v798 = vunpack.c.h.b16 %v93
  %v799 = vunpack.c.l.b16 %v94
  %v800 = vunpack.c.l.b16 %v95
  %v801 = vunpack.c.h.b16 %v95
  %v802 = vunpack.c.l.b16 %v96
  %v803 = vunpack.c.h.b16 %v96
  %v804 = vunpack.c.l.b16 %v97
  %v805 = vunpack.c.h.b16 %v97
  %v806 = vunpack.c.l.b16 %v98
  %v807 = vunpack.c.h.b16 %v98
  %v808 = vunpack.c.l.b16 %v99
  %v809 = vunpack.c.l.b16 %v100
  %v810 = vunpack.c.h.b16 %v100
  %v811 = vunpack.c.l.b16 %v101
  %v812 = vunpack.c.h.b16 %v101
  %v813 = vunpack.c.l.b16 %v102
  %v814 = vunpack.c.h.b16 %v102
  %v815 = vunpack.c.l.b16 %v103
  %v816 = vunpack.c.h.b16 %v103
  %v817 = vunpack.c.l.b16 %v104
  %v818 = vunpack.c.l.b16 %v105
  %v819 = vunpack.c.h.b16 %v105
  %v820 = vunpack.c.l.b16 %v106
  %v821 = vunpack.c.h.b16 %v106
  %v822 = vunpack.c.l.b16 %v107
  %v823 = vunpack.c.h.b16 %v107
  %v824 = vunpack.c.l.b16 %v108
  %v825 = vunpack.c.h.b16 %v108
  %v826 = vunpack.c.l.b16 %v109
  %v827 = vunpack.c.l.b16 %v110
  %v828 = vunpack.c.h.b16 %v110
  %v829 = vunpack.c.l.b16 %v111
  %v830 = vunpack.c.h.b16 %v111
  %v831 = vunpack.c.l.b16 %v112
  %v832 = vunpack.c.h.b16 %v112
  %v833 = vunpack.c.l.b16 %v113
  %v834 = vunpack.c.h.b16 %v113
  %v835 = vunpack.c.l.b16 %v114
  %v836 = vunpack.c.l.b16 %v115
  %v837 = vunpack.c.h.b16 %v115
  %v838 = vunpack.c.l.b16 %v116
  %v839 = vunpack.c.h.b16 %v116
  %v840 = vunpack.c.l.b16 %v117
  %v841 = vunpack.c.h.b16 %v117
  %v842 = vunpack.c.l.b16 %v118
  %v843 = vunpack.c.h.b16 %v118
  %v844 = vunpack.c.l.b16 %v119
  %v845 = vunpack.c.l.b16 %v120
  %v846 = vunpack.c.h.b16 %v120
  %v847 = vunpack.c.l.b16 %v121
  %v848 = vunpack.c.h.b16 %v121
  %v849 = vunpack.c.l.b16 %v122
  %v850 = vunpack.c.h.b16 %v122
  %v851 = vunpack.c.l.b16 %v123
  %v852 = vunpack.c.h.b16 %v123
  %v853 = vunpack.c.l.b16 %v124
  %v854 = vunpack.c.l.b16 %v125
  %v855 = vunpack.c.h.b16 %v125
  %v856 = vunpack.c.l.b16 %v126
  %v857 = vunpack.c.h.b16 %v126
  %v858 = vunpack.c.l.b16 %v127
  %v859 = vunpack.c.h.b16 %v127
  %v860 = vunpack.c.l.b16 %v128
  %v861 = vunpack.c.h.b16 %v128
  %v862 = vunpack.c.l.b16 %v129
  %v863 = vunpack.c.l.b16 %v130
  %v864 = vunpack.c.h.b16 %v130
  %v865 = vunpack.c.l.b16 %v131
  %v866 = vunpack.c.h.b16 %v131
  %v867 = vunpack.c.l.b16 %v132
  %v868 = vunpack.c.h.b16 %v132
  %v869 = vunpack.c.l.b16 %v133
  %v870 = vunpack.c.h.b16 %v133
  %v871 = vunpack.c.l.b16 %v134
  %v872 = vunpack.c.l.b16 %v135
  %v873 = vunpack.c.h.b16 %v135
  %v874 = vunpack.c.l.b16 %v136
  %v875 = vunpack.c.h.b16 %v136
  %v876 = vunpack.c.l.b16 %v137
  %v877 = vunpack.c.h.b16 %v137
  %v878 = vunpack.c.l.b16 %v138
  %v879 = vunpack.c.h.b16 %v138
  %v880 = vunpack.c.l.b16 %v139
  %v881 = vunpack.c.l.b16 %v140
  %v882 = vunpack.c.h.b16 %v140
  %v883 = vunpack.c.l.b16 %v141
  %v884 = vunpack.c.h.b16 %v141
  %v885 = vunpack.c.l.b16 %v142
  %v886 = vunpack.c.h.b16 %v142
  %v887 = vunpack.c.l.b16 %v143
  %v888 = vunpack.c.h.b16 %v143
  %v889 = vunpack.c.l.b16 %v144
  %v890 = vunpack.c.l.b16 %v145
  %v891 = vunpack.c.h.b16 %v145
  %v892 = vunpack.c.l.b16 %v146
  %v893 = vunpack.c.h.b16 %v146
  %v894 = vunpack.c.l.b16 %v147
  %v895 = vunpack.c.h.b16 %v147
  %v896 = vunpack.c.l.b16 %v148
  %v897 = vunpack.c.h.b16 %v148
  %v898 = vunpack.c.l.b16 %v149
  %v899 = vunpack.c.l.b16 %v150
  %v900 = vunpack.c.h.b16 %v150
  %v901 = vunpack.c.l.b16 %v151
  %v902 = vunpack.c.h.b16 %v151
  %v903 = vunpack.c.l.b16 %v152
  %v904 = vunpack.c.h.b16 %v152
  %v905 = vunpack.c.l.b16 %v153
  %v906 = vunpack.c.h.b16 %v153
  %v907 = vunpack.c.l.b16 %v154
  %v908 = vunpack.c.l.b16 %v155
  %v909 = vunpack.c.h.b16 %v155
  %v910 = vunpack.c.l.b16 %v156
  %v911 = vunpack.c.h.b16 %v156
  %v912 = vunpack.c.l.b16 %v157
  %v913 = vunpack.c.h.b16 %v157
  %v914 = vunpack.c.l.b16 %v158
  %v915 = vunpack.c.h.b16 %v158
  %v916 = vunpack.c.l.b16 %v159
  %v917 = vunpack.c.l.b16 %v160
  %v918 = vunpack.c.h.b16 %v160
  %v919 = vunpack.c.l.b16 %v161
  %v920 = vunpack.c.h.b16 %v161
  %v921 = vunpack.c.l.b16 %v162
  %v922 = vunpack.c.h.b16 %v162
  %v923 = vunpack.c.l.b16 %v163
  %v924 = vunpack.c.h.b16 %v163
  %v925 = vunpack.c.l.b16 %v164
  %v926 = vunpack.c.l.b16 %v165
  %v927 = vunpack.c.h.b16 %v165
  %v928 = vunpack.c.l.b16 %v166
  %v929 = vunpack.c.h.b16 %v166
  %v930 = vunpack.c.l.b16 %v167
  %v931 = vunpack.c.h.b16 %v167
  %v932 = vunpack.c.l.b16 %v168
  %v933 = vunpack.c.h.b16 %v168
  %v934 = vunpack.c.l.b16 %v169
  %v935 = vunpack.c.l.b16 %v170
  %v936 = vunpack.c.h.b16 %v170
  %v937 = vunpack.c.l.b16 %v171
  %v938 = vunpack.c.h.b16 %v171
  %v939 = vunpack.c.l.b16 %v172
  %v940 = vunpack.c.h.b16 %v172
  %v941 = vunpack.c.l.b16 %v173
  %v942 = vunpack.c.h.b16 %v173
  %v943 = vunpack.c.l.b16 %v174
  %v944 = vunpack.c.l.b16 %v175
  %v945 = vunpack.c.h.b16 %v175
  %v946 = vunpack.c.l.b16 %v176
  %v947 = vunpack.c.h.b16 %v176
  %v948 = vunpack.c.l.b16 %v177
  %v949 = vunpack.c.h.b16 %v177
  %v950 = vunpack.c.l.b16 %v178
  %v951 = vunpack.c.h.b16 %v178
  %v952 = vunpack.c.l.b16 %v179
  %v953 = vunpack.c.l.b16 %v180
  %v954 = vunpack.c.h.b16 %v180
  %v955 = vunpack.c.l.b16 %v181
  %v956 = vunpack.c.h.b16 %v181
  %v957 = vunpack.c.l.b16 %v182
  %v958 = vunpack.c.h.b16 %v182
  %v959 = vunpack.c.l.b16 %v183
  %v960 = vunpack.c.h.b16 %v183
  %v961 = vunpack.c.l.b16 %v184
  %v962 = vunpack.c.l.b16 %v185
  %v963 = vunpack.c.h.b16 %v185
  %v964 = vunpack.c.l.b16 %v186
  %v965 = vunpack.c.h.b16 %v186
  %v966 = vunpack.c.l.b16 %v187
  %v967 = vunpack.c.h.b16 %v187
  %v968 = vunpack.c.l.b16 %v188
  %v969 = vunpack.c.h.b16 %v188
  %v970 = vunpack.c.l.b16 %v189
  %v971 = vunpack.c.l.b16 %v190
  %v972 = vunpack.c.h.b16 %v190
  %v973 = vunpack.c.l.b16 %v191
  %v974 = vunpack.c.h.b16 %v191
  %v975 = vunpack.c.l.b16 %v192
  %v976 = vunpack.c.h.b16 %v192
  %v977 = vunpack.c.l.b16 %v193
  %v978 = vunpack.c.h.b16 %v193
  %v979 = vunpack.c.l.b16 %v194
  %v980 = vunpack.c.l.b16 %v195
  %v981 = vunpack.c.h.b16 %v195
  %v982 = vunpack.c.l.b16 %v196
  %v983 = vunpack.c.h.b16 %v196
  %v984 = vunpack.c.l.b16 %v197
  %v985 = vunpack.c.h.b16 %v197
  %v986 = vunpack.c.l.b16 %v198
  %v987 = vunpack.c.h.b16 %v198
  %v988 = vunpack.c.l.b16 %v199
  %v989 = vunpack.c.l.b16 %v200
  %v990 = vunpack.c.h.b16 %v200
  %v991 = vunpack.c.l.b16 %v201
  %v992 = vunpack.c.h.b16 %v201
  %v993 = vunpack.c.l.b16 %v202
  %v994 = vunpack.c.h.b16 %v202
  %v995 = vunpack.c.l.b16 %v203
  %v996 = vunpack.c.h.b16 %v203
  %v997 = vunpack.c.l.b16 %v204
  %v998 = vunpack.c.l.b16 %v205
  %v999 = vunpack.c.h.b16 %v205
  %v1000 = vunpack.c.l.b16 %v206
  %v1001 = vunpack.c.h.b16 %v206
  %v1002 = vunpack.c.l.b16 %v207
  %v1003 = vunpack.c.h.b16 %v207
  %v1004 = vunpack.c.l.b16 %v208
  %v1005 = vunpack.c.h.b16 %v208
  %v1006 = vunpack.c.l.b16 %v209
  %v1007 = vunpack.c.l.b16 %v210
  %v1008 = vunpack.c.h.b16 %v210
  %v1009 = vunpack.c.l.b16 %v211
  %v1010 = vunpack.c.h.b16 %v211
  %v1011 = vunpack.c.l.b16 %v212
  %v1012 = vunpack.c.h.b16 %v212
  %v1013 = vunpack.c.l.b16 %v213
  %v1014 = vunpack.c.h.b16 %v213
  %v1015 = vunpack.c.l.b16 %v214
  %v1016 = vunpack.c.l.b16 %v215
  %v1017 = vunpack.c.h.b16 %v215
  %v1018 = vunpack.c.l.b16 %v216
  %v1019 = vunpack.c.h.b16 %v216
  %v1020 = vunpack.c.l.b16 %v217
  %v1021 = vunpack.c.h.b16 %v217
  %v1022 = vunpack.c.l.b16 %v218
  %v1023 = vunpack.c.h.b16 %v218
  %v1024 = vunpack.c.l.b16 %v219
  %v1025 = vunpack.c.l.b16 %v220
  %v1026 = vunpack.c.h.b16 %v220
  %v1027 = vunpack.c.l.b16 %v221
  %v1028 = vunpack.c.h.b16 %v221
  %v1029 = vunpack.c.l.b16 %v222
  %v1030 = vunpack.c.h.b16 %v222
  %v1031 = vunpack.c.l.b16 %v223
  %v1032 = vunpack.c.h.b16 %v223
  %v1033 = vunpack.c.l.b16 %v224
  %v1034 = vunpack.c.l.b16 %v225
  %v1035 = vunpack.c.h.b16 %v225
  %v1036 = vunpack.c.l.b16 %v226
  %v1037 = vunpack.c.h.b16 %v226
  %v1038 = vunpack.c.l.b16 %v227
  %v1039 = vunpack.c.h.b16 %v227
  %v1040 = vunpack.c.l.b16 %v228
  %v1041 = vunpack.c.h.b16 %v228
  %v1042 = vunpack.c.l.b16 %v229
  %v1043 = vunpack.c.l.b16 %v230
  %v1044 = vunpack.c.h.b16 %v230
  %v1045 = vunpack.c.l.b16 %v231
  %v1046 = vunpack.c.h.b16 %v231
  %v1047 = vunpack.c.l.b16 %v232
  %v1048 = vunpack.c.h.b16 %v232
  %v1049 = vunpack.c.l.b16 %v233
  %v1050 = vunpack.c.h.b16 %v233
  %v1051 = vunpack.c.l.b16 %v234
  %v1052 = vunpack.c.l.b16 %v235
  %v1053 = vunpack.c.h.b16 %v235
  %v1054 = vunpack.c.l.b16 %v236
  %v1055 = vunpack.c.h.b16 %v236
  %v1056 = vunpack.c.l.b16 %v237
  %v1057 = vunpack.c.h.b16 %v237
  %v1058 = vunpack.c.l.b16 %v238
  %v1059 = vunpack.c.h.b16 %v238
  %v1060 = vunpack.c.l.b16 %v239
  %v1061 = vunpack.c.l.b16 %v240
  %v1062 = vunpack.c.h.b16 %v240
  %v1063 = vunpack.c.l.b16 %v241
  %v1064 = vunpack.c.h.b16 %v241
  %v1065 = vunpack.c.l.b16 %v242
  %v1066 = vunpack.c.h.b16 %v242
  %v1067 = vunpack.c.l.b16 %v243
  %v1068 = vunpack.c.h.b16 %v243
  %v1069 = vunpack.c.l.b16 %v244
  %v1070 = vunpack.c.l.b16 %v245
  %v1071 = vunpack.c.h.b16 %v245
  %v1072 = vunpack.c.l.b16 %v246
  %v1073 = vunpack.c.h.b16 %v246
  %v1074 = vunpack.c.l.b16 %v247
  %v1075 = vunpack.c.h.b16 %v247
  %v1076 = vunpack.c.l.b16 %v248
  %v1077 = vunpack.c.h.b16 %v248
  %v1078 = vunpack.c.l.b16 %v249
  %v1079 = vunpack.c.l.b16 %v250
  %v1080 = vunpack.c.h.b16 %v250
  %v1081 = vunpack.c.l.b16 %v251
  %v1082 = vunpack.c.h.b16 %v251
  %v1083 = vunpack.c.l.b16 %v252
  %v1084 = vunpack.c.h.b16 %v252
  %v1085 = vunpack.c.l.b16 %v253
  %v1086 = vunpack.c.h.b16 %v253
  %v1087 = vunpack.c.l.b16 %v254
  %v1088 = vunpack.c.l.b16 %v255
  %v1089 = vunpack.c.h.b16 %v255
  %v1090 = vunpack.c.l.b16 %v256
  %v1091 = vunpack.c.h.b16 %v256
  %v1092 = vunpack.c.l.b16 %v257
  %v1093 = vunpack.c.h.b16 %v257
  %v1094 = vunpack.c.l.b16 %v258
  %v1095 = vunpack.c.h.b16 %v258
  %v1096 = vunpack.c.l.b16 %v259
  %v1097 = vpack.c.b16 %v665, %v656
  %v1098 = vpack.c.b16 %v666, %v657
  %v1099 = vpack.c.b16 %v667, %v658
  %v1100 = vpack.c.b16 %v668, %v659
  %v1101 = vpack.c.b16 %v669, %v660
  %v1102 = vpack.c.b16 %v670, %v661
  %v1103 = vpack.c.b16 %v671, %v662
  %v1104 = vpack.c.b16 %v672, %v663
  %v1105 = vpack.c.b16 %v673, %v664
  %v1106 = vpack.c.b16 %v683, %v674
  %v1107 = vpack.c.b16 %v684, %v675
  %v1108 = vpack.c.b16 %v685, %v676
  %v1109 = vpack.c.b16 %v686, %v677
  %v1110 = vpack.c.b16 %v687, %v678
  %v1111 = vpack.c.b16 %v688, %v679
  %v1112 = vpack.c.b16 %v689, %v680
  %v1113 = vpack.c.b16 %v690, %v681
  %v1114 = vpack.c.b16 %v691, %v682
  %v1115 = vpack.c.b16 %v701, %v692
  %v1116 = vpack.c.b16 %v702, %v693
  %v1117 = vpack.c.b16 %v703, %v694
  %v1118 = vpack.c.b16 %v704, %v695
  %v1119 = vpack.c.b16 %v705, %v696
  %v1120 = vpack.c.b16 %v706, %v697
  %v1121 = vpack.c.b16 %v707, %v698
  %v1122 = vpack.c.b16 %v708, %v699
  %v1123 = vpack.c.b16 %v709, %v700
  %v1124 = vpack.c.b16 %v719, %v710
  %v1125 = vpack.c.b16 %v720, %v711
  %v1126 = vpack.c.b16 %v721, %v712
  %v1127 = vpack.c.b16 %v722, %v713
  %v1128 = vpack.c.b16 %v723, %v714
  %v1129 = vpack.c.b16 %v724, %v715
  %v1130 = vpack.c.b16 %v725, %v716
  %v1131 = vpack.c.b16 %v726, %v717
  %v1132 = vpack.c.b16 %v727, %v718
  %v1133 = vpack.c.b16 %v737, %v728
  %v1134 = vpack.c.b16 %v738, %v729
  %v1135 = vpack.c.b16 %v739, %v730
  %v1136 = vpack.c.b16 %v740, %v731
  %v1137 = vpack.c.b16 %v741, %v732
  %v1138 = vpack.c.b16 %v742, %v733
  %v1139 = vpack.c.b16 %v743, %v734
  %v1140 = vpack.c.b16 %v744, %v735
  %v1141 = vpack.c.b16 %v745, %v736
  %v1142 = vpack.c.b16 %v755, %v746
  %v1143 = vpack.c.b16 %v756, %v747
  %v1144 = vpack.c.b16 %v757, %v748
  %v1145 = vpack.c.b16 %v758, %v749
  %v1146 = vpack.c.b16 %v759, %v750
  %v1147 = vpack.c.b16 %v760, %v751
  %v1148 = vpack.c.b16 %v761, %v752
  %v1149 = vpack.c.b16 %v762, %v753
  %v1150 = vpack.c.b16 %v763, %v754
  %v1151 = vpack.c.b16 %v773, %v764
  %v1152 = vpack.c.b16 %v774, %v765
  %v1153 = vpack.c.b16 %v775, %v766
  %v1154 = vpack.c.b16 %v776, %v767
  %v1155 = vpack.c.b16 %v777, %v768
  %v1156 = vpack.c.b16 %v778, %v769
  %v1157 = vpack.c.b16 %v779, %v770
  %v1158 = vpack.c.b16 %v780, %v771
  %v1159 = vpack.c.b16 %v781, %v772
  %v1160 = vpack.c.b16 %v791, %v782
  %v1161 = vpack.c.b16 %v792, %v783
  %v1162 = vpack.c.b16 %v793, %v784
  %v1163 = vpack.c.b16 %v794, %v785
  %v1164 = vpack.c.b16 %v795, %v786
  %v1165 = vpack.c.b16 %v796, %v787
  %v1166 = vpack.c.b16 %v797, %v788
  %v1167 = vpack.c.b16 %v798, %v789
  %v1168 = vpack.c.b16 %v799, %v790
  %v1169 = vpack.c.b16 %v809, %v800
  %v1170 = vpack.c.b16 %v810, %v801
  %v1171 = vpack.c.b16 %v811, %v802
  %v1172 = vpack.c.b16 %v812, %v803
  %v1173 = vpack.c.b16 %v813, %v804
  %v1174 = vpack.c.b16 %v814, %v805
  %v1175 = vpack.c.b16 %v815, %v806
  %v1176 = vpack.c.b16 %v816, %v807
  %v1177 = vpack.c.b16 %v817, %v808
  %v1178 = vpack.c.b16 %v827, %v818
  %v1179 = vpack.c.b16 %v828, %v819
  %v1180 = vpack.c.b16 %v829, %v820
  %v1181 = vpack.c.b16 %v830, %v821
  %v1182 = vpack.c.b16 %v831, %v822
  %v1183 = vpack.c.b16 %v832, %v823
  %v1184 = vpack.c.b16 %v833, %v824
  %v1185 = vpack.c.b16 %v834, %v825
  %v1186 = vpack.c.b16 %v835, %v826
  %v1187 = vpack.c.b16 %v845, %v836
  %v1188 = vpack.c.b16 %v846, %v837
  %v1189 = vpack.c.b16 %v847, %v838
  %v1190 = vpack.c.b16 %v848, %v839
  %v1191 = vpack.c.b16 %v849, %v840
  %v1192 = vpack.c.b16 %v850, %v841
  %v1193 = vpack.c.b16 %v851, %v842
  %v1194 = vpack.c.b16 %v852, %v843
  %v1195 = vpack.c.b16 %v853, %v844
  %v1196 = vpack.c.b16 %v863, %v854
  %v1197 = vpack.c.b16 %v864, %v855
  %v1198 = vpack.c.b16 %v865, %v856
  %v1199 = vpack.c.b16 %v866, %v857
  %v1200 = vpack.c.b16 %v867, %v858
  %v1201 = vpack.c.b16 %v868, %v859
  %v1202 = vpack.c.b16 %v869, %v860
  %v1203 = vpack.c.b16 %v870, %v861
  %v1204 = vpack.c.b16 %v871, %v862
  %v1205 = vpack.c.b16 %v881, %v872
  %v1206 = vpack.c.b16 %v882, %v873
  %v1207 = vpack.c.b16 %v883, %v874
  %v1208 = vpack.c.b16 %v884, %v875
  %v1209 = vpack.c.b16 %v885, %v876
  %v1210 = vpack.c.b16 %v886, %v877
  %v1211 = vpack.c.b16 %v887, %v878
  %v1212 = vpack.c.b16 %v888, %v879
  %v1213 = vpack.c.b16 %v889, %v880
  %v1214 = vpack.c.b16 %v899, %v890
  %v1215 = vpack.c.b16 %v900, %v891
  %v1216 = vpack.c.b16 %v901, %v892
  %v1217 = vpack.c.b16 %v902, %v893
  %v1218 = vpack.c.b16 %v903, %v894
  %v1219 = vpack.c.b16 %v904, %v895
  %v1220 = vpack.c.b16 %v905, %v896
  %v1221 = vpack.c.b16 %v906, %v897
  %v1222 = vpack.c.b16 %v907, %v898
  %v1223 = vpack.c.b16 %v917, %v908
  %v1224 = vpack.c.b16 %v918, %v909
  %v1225 = vpack.c.b16 %v919, %v910
  %v1226 = vpack.c.b16 %v920, %v911
  %v1227 = vpack.c.b16 %v921, %v912
  %v1228 = vpack.c.b16 %v922, %v913
  %v1229 = vpack.c.b16 %v923, %v914
  %v1230 = vpack.c.b16 %v924, %v915
  %v1231 = vpack.c.b16 %v925, %v916
  %v1232 = vpack.c.b16 %v935, %v926
  %v1233 = vpack.c.b16 %v936, %v927
  %v1234 = vpack.c.b16 %v937, %v928
  %v1235 = vpack.c.b16 %v938, %v929
  %v1236 = vpack.c.b16 %v939, %v930
  %v1237 = vpack.c.b16 %v940, %v931
  %v1238 = vpack.c.b16 %v941, %v932
  %v1239 = vpack.c.b16 %v942, %v933
  %v1240 = vpack.c.b16 %v943, %v934
  %v1241 = vpack.c.b16 %v953, %v944
  %v1242 = vpack.c.b16 %v954, %v945
  %v1243 = vpack.c.b16 %v955, %v946
  %v1244 = vpack.c.b16 %v956, %v947
  %v1245 = vpack.c.b16 %v957, %v948
  %v1246 = vpack.c.b16 %v958, %v949
  %v1247 = vpack.c.b16 %v959, %v950
  %v1248 = vpack.c.b16 %v960, %v951
  %v1249 = vpack.c.b16 %v961, %v952
  %v1250 = vpack.c.b16 %v971, %v962
  %v1251 = vpack.c.b16 %v972, %v963
  %v1252 = vpack.c.b16 %v973, %v964
  %v1253 = vpack.c.b16 %v974, %v965
  %v1254 = vpack.c.b16 %v975, %v966
  %v1255 = vpack.c.b16 %v976, %v967
  %v1256 = vpack.c.b16 %v977, %v968
  %v1257 = vpack.c.b16 %v978, %v969
  %v1258 = vpack.c.b16 %v979, %v970
  %v1259 = vpack.c.b16 %v989, %v980
  %v1260 = vpack.c.b16 %v990, %v981
  %v1261 = vpack.c.b16 %v991, %v982
  %v1262 = vpack.c.b16 %v992, %v983
  %v1263 = vpack.c.b16 %v993, %v984
  %v1264 = vpack.c.b16 %v994, %v985
  %v1265 = vpack.c.b16 %v995, %v986
  %v1266 = vpack.c.b16 %v996, %v987
  %v1267 = vpack.c.b16 %v997, %v988
  %v1268 = vpack.c.b16 %v1007, %v998
  %v1269 = vpack.c.b16 %v1008, %v999
  %v1270 = vpack.c.b16 %v1009, %v1000
  %v1271 = vpack.c.b16 %v1010, %v1001
  %v1272 = vpack.c.b16 %v1011, %v1002
  %v1273 = vpack.c.b16 %v1012, %v1003
  %v1274 = vpack.c.b16 %v1013, %v1004
  %v1275 = vpack.c.b16 %v1014, %v1005
  %v1276 = vpack.c.b16 %v1015, %v1006
  %v1277 = vpack.c.b16 %v1025, %v1016
  %v1278 = vpack.c.b16 %v1026, %v1017
  %v1279 = vpack.c.b16 %v1027, %v1018
  %v1280 = vpack.c.b16 %v1028, %v1019
  %v1281 = vpack.c.b16 %v1029, %v1020
  %v1282 = vpack.c.b16 %v1030, %v1021
  %v1283 = vpack.c.b16 %v1031, %v1022
  %v1284 = vpack.c.b16 %v1032, %v1023
  %v1285 = vpack.c.b16 %v1033, %v1024
  %v1286 = vpack.c.b16 %v1043, %v1034
  %v1287 = vpack.c.b16 %v1044, %v1035
  %v1288 = vpack.c.b16 %v1045, %v1036
  %v1289 = vpack.c.b16 %v1046, %v1037
  %v1290 = vpack.c.b16 %v1047, %v1038
  %v1291 = vpack.c.b16 %v1048, %v1039
  %v1292 = vpack.c.b16 %v1049, %v1040
  %v1293 = vpack.c.b16 %v1050, %v1041
  %v1294 = vpack.c.b16 %v1051, %v1042
  %v1295 = vpack.c.b16 %v1061, %v1052
  %v1296 = vpack.c.b16 %v1062, %v1053
  %v1297 = vpack.c.b16 %v1063, %v1054
  %v1298 = vpack.c.b16 %v1064, %v1055
  %v1299 = vpack.c.b16 %v1065, %v1056
  %v1300 = vpack.c.b16 %v1066, %v1057
  %v1301 = vpack.c.b16 %v1067, %v1058
  %v1302 = vpack.c.b16 %v1068, %v1059
  %v1303 = vpack.c.b16 %v1069, %v1060
  %v1304 = vpack.c.b16 %v1079, %v1070
  %v1305 = vpack.c.b16 %v1080, %v1071
  %v1306 = vpack.c.b16 %v1081, %v1072
  %v1307 = vpack.c.b16 %v1082, %v1073
  %v1308 = vpack.c.b16 %v1083, %v1074
  %v1309 = vpack.c.b16 %v1084, %v1075
  %v1310 = vpack.c.b16 %v1085, %v1076
  %v1311 = vpack.c.b16 %v1086, %v1077
  %v1312 = vpack.c.b16 %v1087, %v1078
  %v1313 = vpack.c.b16 %v1088, %v1088
  %v1314 = vpack.c.b16 %v1089, %v1089
  %v1315 = vpack.c.b16 %v1090, %v1090
  %v1316 = vpack.c.b16 %v1091, %v1091
  %v1317 = vpack.c.b16 %v1092, %v1092
  %v1318 = vpack.c.b16 %v1093, %v1093
  %v1319 = vpack.c.b16 %v1094, %v1094
  %v1320 = vpack.c.b16 %v1095, %v1095
  %v1321 = vpack.c.b16 %v1096, %v1096
  %v1691 = vunpack.c.l.b16 %v260
  %v1692 = vunpack.c.l.b16 %v261
  %v1693 = vunpack.c.l.b16 %v262
  %v1694 = vunpack.c.l.b16 %v263
  %v1695 = vunpack.c.l.b16 %v264
  %v1696 = vunpack.c.l.b16 %v265
  %v1697 = vunpack.c.l.b16 %v266
  %v1698 = vunpack.c.l.b16 %v267
  %v1699 = vunpack.c.l.b16 %v268
  %v1700 = vunpack.c.l.b16 %v269
  %v1701 = vunpack.c.l.b16 %v270
  %v1702 = vunpack.c.l.b16 %v271
  %v1703 = vunpack.c.l.b16 %v272
  %v1704 = vunpack.c.l.b16 %v273
  %v1705 = vunpack.c.l.b16 %v274
  %v1706 = vunpack.c.l.b16 %v275
  %v1707 = vunpack.c.l.b16 %v276
  %v1708 = vunpack.c.l.b16 %v277
  %v1709 = vunpack.c.l.b16 %v278
  %v1710 = vunpack.c.l.b16 %v279
  %v1711 = vunpack.c.l.b16 %v280
  %v1712 = vunpack.c.l.b16 %v281
  %v1713 = vunpack.c.l.b16 %v282
  %v1714 = vunpack.c.l.b16 %v283
  %v1715 = vunpack.c.l.b16 %v284
  %v1716 = vunpack.c.l.b16 %v285
  %v1717 = vunpack.c.l.b16 %v286
  %v1718 = vunpack.c.l.b16 %v287
  %v1719 = vunpack.c.l.b16 %v288
  %v1720 = vunpack.c.l.b16 %v289
  %v1721 = vunpack.c.l.b16 %v290
  %v1722 = vunpack.c.l.b16 %v291
  %v1723 = vunpack.c.l.b16 %v292
  %v1724 = vunpack.c.l.b16 %v293
  %v1725 = vunpack.c.l.b16 %v294
  %v1726 = vunpack.c.l.b16 %v295
  %v1727 = vunpack.c.l.b16 %v296
  %v1728 = vunpack.c.l.b16 %v297
  %v1729 = vunpack.c.l.b16 %v298
  %v1730 = vunpack.c.l.b16 %v299
  %v1731 = vunpack.c.l.b16 %v300
  %v1732 = vunpack.c.l.b16 %v301
  %v1733 = vunpack.c.l.b16 %v302
  %v1734 = vunpack.c.l.b16 %v303
  %v1735 = vunpack.c.l.b16 %v304
  %v1736 = vunpack.c.l.b16 %v305
  %v1737 = vunpack.c.l.b16 %v306
  %v1738 = vunpack.c.l.b16 %v307
  %v1739 = vunpack.c.l.b16 %v308
  %v1740 = vunpack.c.l.b16 %v309
  %v1741 = vunpack.c.l.b16 %v310
  %v1742 = vunpack.c.l.b16 %v311
  %v1743 = vunpack.c.l.b16 %v312
  %v1744 = vunpack.c.l.b16 %v313
  %v1745 = vunpack.c.l.b16 %v314
  %v1746 = vunpack.c.l.b16 %v315
  %v1747 = vunpack.c.l.b16 %v316
  %v1748 = vunpack.c.l.b16 %v317
  %v1749 = vunpack.c.l.b16 %v318
  %v1750 = vunpack.c.l.b16 %v319
  %v1751 = vunpack.c.l.b16 %v320
  %v1752 = vunpack.c.l.b16 %v321
  %v1753 = vunpack.c.l.b16 %v322
  %v1754 = vunpack.c.l.b16 %v323
  %v1755 = vunpack.c.l.b16 %v324
  %v1756 = vunpack.c.l.b16 %v325
  %v1757 = vunpack.c.l.b16 %v326
  %v1758 = vunpack.c.l.b16 %v327
  %v1759 = vunpack.c.l.b16 %v328
  %v1760 = vunpack.c.l.b16 %v329
  %v1761 = vunpack.c.l.b16 %v330
  %v1762 = vunpack.c.l.b16 %v331
  %v1763 = vunpack.c.l.b16 %v332
  %v1764 = vunpack.c.l.b16 %v333
  %v1765 = vunpack.c.l.b16 %v334
  %v1766 = vunpack.c.l.b16 %v335
  %v1767 = vunpack.c.l.b16 %v336
  %v1768 = vunpack.c.l.b16 %v337
  %v1769 = vunpack.c.l.b16 %v338
  %v1770 = vunpack.c.l.b16 %v339
  %v1771 = vunpack.c.l.b16 %v340
  %v1772 = vunpack.c.l.b16 %v341
  %v1773 = vunpack.c.l.b16 %v342
  %v1774 = vunpack.c.l.b16 %v343
  %v1775 = vunpack.c.l.b16 %v344
  %v1776 = vunpack.c.l.b16 %v345
  %v1777 = vunpack.c.l.b16 %v346
  %v1778 = vunpack.c.l.b16 %v347
  %v1779 = vunpack.c.l.b16 %v348
  %v1780 = vunpack.c.l.b16 %v349
  %v1781 = vunpack.c.l.b16 %v350
  %v1782 = vunpack.c.l.b16 %v351
  %v1783 = vunpack.c.l.b16 %v352
  %v1784 = vunpack.c.l.b16 %v353
  %v1785 = vunpack.c.l.b16 %v354
  %v1786 = vunpack.c.l.b16 %v355
  %v1787 = vunpack.c.l.b16 %v356
  %v1788 = vunpack.c.l.b16 %v357
  %v1789 = vunpack.c.l.b16 %v358
  %v1790 = vunpack.c.l.b16 %v359
  %v1791 = vunpack.c.l.b16 %v360
  %v1792 = vunpack.c.l.b16 %v361
  %v1793 = vunpack.c.l.b16 %v362
  %v1794 = vunpack.c.l.b16 %v363
  %v1795 = vunpack.c.l.b16 %v364
  %v1796 = vunpack.c.l.b16 %v365
  %v1797 = vunpack.c.l.b16 %v366
  %v1798 = vunpack.c.l.b16 %v367
  %v1799 = vunpack.c.l.b16 %v368
  %v1800 = vunpack.c.l.b16 %v369
  %v1801 = vunpack.c.l.b16 %v370
  %v1802 = vunpack.c.l.b16 %v371
  %v1803 = vunpack.c.l.b16 %v372
  %v1804 = vunpack.c.l.b16 %v373
  %v1805 = vunpack.c.l.b16 %v374
  %v1806 = vunpack.c.l.b16 %v375
  %v1807 = vunpack.c.l.b16 %v376
  %v1808 = vunpack.c.l.b16 %v377
  %v1809 = vunpack.c.l.b16 %v378
  %v1810 = vunpack.c.l.b16 %v379
  %v1811 = vunpack.c.l.b16 %v380
  %v1812 = vunpack.c.l.b16 %v381
  %v1813 = vunpack.c.l.b16 %v382
  %v1814 = vunpack.c.l.b16 %v383
  %v1815 = vunpack.c.l.b16 %v384
  %v1816 = vunpack.c.l.b16 %v385
  %v1817 = vunpack.c.l.b16 %v386
  %v1818 = vunpack.c.l.b16 %v387
  %v1819 = vunpack.c.l.b16 %v388
  %v1820 = vunpack.c.l.b16 %v389
  %v1821 = vunpack.c.l.b16 %v390
  %v1822 = vunpack.c.l.b16 %v391
  %v1823 = vunpack.c.l.b16 %v392
  %v1824 = vunpack.c.l.b16 %v393
  %v1825 = vunpack.c.l.b16 %v394
  %v1826 = vunpack.c.l.b16 %v395
  %v1827 = vunpack.c.l.b16 %v396
  %v1828 = vunpack.c.l.b16 %v397
  %v1829 = vunpack.c.l.b16 %v398
  %v1830 = vunpack.c.l.b16 %v399
  %v1831 = vunpack.c.l.b16 %v400
  %v1832 = vunpack.c.l.b16 %v401
  %v1833 = vunpack.c.l.b16 %v402
  %v1834 = vunpack.c.l.b16 %v403
  %v1835 = vpack.c.b16 %v1692, %v1691
  %v1836 = vpack.c.b16 %v1694, %v1693
  %v1837 = vpack.c.b16 %v1696, %v1695
  %v1838 = vpack.c.b16 %v1698, %v1697
  %v1839 = vpack.c.b16 %v1700, %v1699
  %v1840 = vpack.c.b16 %v1702, %v1701
  %v1841 = vpack.c.b16 %v1704, %v1703
  %v1842 = vpack.c.b16 %v1706, %v1705
  %v1843 = vpack.c.b16 %v1708, %v1707
  %v1844 = vpack.c.b16 %v1710, %v1709
  %v1845 = vpack.c.b16 %v1712, %v1711
  %v1846 = vpack.c.b16 %v1714, %v1713
  %v1847 = vpack.c.b16 %v1716, %v1715
  %v1848 = vpack.c.b16 %v1718, %v1717
  %v1849 = vpack.c.b16 %v1720, %v1719
  %v1850 = vpack.c.b16 %v1722, %v1721
  %v1851 = vpack.c.b16 %v1724, %v1723
  %v1852 = vpack.c.b16 %v1726, %v1725
  %v1853 = vpack.c.b16 %v1728, %v1727
  %v1854 = vpack.c.b16 %v1730, %v1729
  %v1855 = vpack.c.b16 %v1732, %v1731
  %v1856 = vpack.c.b16 %v1734, %v1733
  %v1857 = vpack.c.b16 %v1736, %v1735
  %v1858 = vpack.c.b16 %v1738, %v1737
  %v1859 = vpack.c.b16 %v1740, %v1739
  %v1860 = vpack.c.b16 %v1742, %v1741
  %v1861 = vpack.c.b16 %v1744, %v1743
  %v1862 = vpack.c.b16 %v1746, %v1745
  %v1863 = vpack.c.b16 %v1748, %v1747
  %v1864 = vpack.c.b16 %v1750, %v1749
  %v1865 = vpack.c.b16 %v1752, %v1751
  %v1866 = vpack.c.b16 %v1754, %v1753
  %v1867 = vpack.c.b16 %v1756, %v1755
  %v1868 = vpack.c.b16 %v1758, %v1757
  %v1869 = vpack.c.b16 %v1760, %v1759
  %v1870 = vpack.c.b16 %v1762, %v1761
  %v1871 = vpack.c.b16 %v1764, %v1763
  %v1872 = vpack.c.b16 %v1766, %v1765
  %v1873 = vpack.c.b16 %v1768, %v1767
  %v1874 = vpack.c.b16 %v1770, %v1769
  %v1875 = vpack.c.b16 %v1772, %v1771
  %v1876 = vpack.c.b16 %v1774, %v1773
  %v1877 = vpack.c.b16 %v1776, %v1775
  %v1878 = vpack.c.b16 %v1778, %v1777
  %v1879 = vpack.c.b16 %v1780, %v1779
  %v1880 = vpack.c.b16 %v1782, %v1781
  %v1881 = vpack.c.b16 %v1784, %v1783
  %v1882 = vpack.c.b16 %v1786, %v1785
  %v1883 = vpack.c.b16 %v1788, %v1787
  %v1884 = vpack.c.b16 %v1790, %v1789
  %v1885 = vpack.c.b16 %v1792, %v1791
  %v1886 = vpack.c.b16 %v1794, %v1793
  %v1887 = vpack.c.b16 %v1796, %v1795
  %v1888 = vpack.c.b16 %v1798, %v1797
  %v1889 = vpack.c.b16 %v1800, %v1799
  %v1890 = vpack.c.b16 %v1802, %v1801
  %v1891 = vpack.c.b16 %v1804, %v1803
  %v1892 = vpack.c.b16 %v1806, %v1805
  %v1893 = vpack.c.b16 %v1808, %v1807
  %v1894 = vpack.c.b16 %v1810, %v1809
  %v1895 = vpack.c.b16 %v1812, %v1811
  %v1896 = vpack.c.b16 %v1814, %v1813
  %v1897 = vpack.c.b16 %v1816, %v1815
  %v1898 = vpack.c.b16 %v1818, %v1817
  %v1899 = vpack.c.b16 %v1820, %v1819
  %v1900 = vpack.c.b16 %v1822, %v1821
  %v1901 = vpack.c.b16 %v1824, %v1823
  %v1902 = vpack.c.b16 %v1826, %v1825
  %v1903 = vpack.c.b16 %v1828, %v1827
  %v1904 = vpack.c.b16 %v1830, %v1829
  %v1905 = vpack.c.b16 %v1832, %v1831
  %v1906 = vpack.c.b16 %v1834, %v1833
  %1979 = vmatprep.subr.bf16.mxu0 0
  %1980 = vmatpush1.bf16.msra.mxu0 %v1835
  %1981 = vmatprep.subr.bf16.mxu0 0
  %1982 = vmatpush1.bf16.msra.mxu0 %v1836
  %1983 = vmatprep.subr.bf16.mxu0 0
  %1984 = vmatpush1.bf16.msra.mxu0 %v1837
  %1985 = vmatprep.subr.bf16.mxu0 0
  %1986 = vmatpush1.bf16.msra.mxu0 %v1838
  %1987 = vmatprep.subr.bf16.mxu0 0
  %1988 = vmatpush1.bf16.msra.mxu0 %v1839
  %1989 = vmatprep.subr.bf16.mxu0 0
  %1990 = vmatpush1.bf16.msra.mxu0 %v1840
  %1991 = vmatprep.subr.bf16.mxu0 0
  %1992 = vmatpush1.bf16.msra.mxu0 %v1841
  %1993 = vmatprep.subr.bf16.mxu0 0
  %1994 = vmatpush1.bf16.msra.mxu0 %v1842
  %1995 = vmatprep.subr.bf16.mxu0 0
  %1996 = vmatpush1.bf16.msra.mxu0 %v1843
  %1997 = vmatprep.subr.bf16.mxu0 0
  %1998 = vmatpush1.bf16.msra.mxu0 %v1844
  %1999 = vmatprep.subr.bf16.mxu0 0
  %2000 = vmatpush1.bf16.msra.mxu0 %v1845
  %2001 = vmatprep.subr.bf16.mxu0 0
  %2002 = vmatpush1.bf16.msra.mxu0 %v1846
  %2003 = vmatprep.subr.bf16.mxu0 0
  %2004 = vmatpush1.bf16.msra.mxu0 %v1847
  %2005 = vmatprep.subr.bf16.mxu0 0
  %2006 = vmatpush1.bf16.msra.mxu0 %v1848
  %2007 = vmatprep.subr.bf16.mxu0 0
  %2008 = vmatpush1.bf16.msra.mxu0 %v1849
  %2009 = vmatprep.subr.bf16.mxu0 0
  %2010 = vmatpush1.bf16.msra.mxu0 %v1850
  %2011 = vmatprep.mubr.bf16.mxu0 %v1098
  %2012 = vmatmul.mubr.bf16.gmra.mrb[0].mxu0 %v1097
  %v2013 = vpop.f32.mrb[0].mxu0
  %v2014 = vadd.f32 %v409, %v2013
  %v2015 = vpop.f32.mrb[0].mxu0
  %v2016 = vpop.f32.mrb[0].mxu0
  %v2017 = vadd.f32 %v409, %v2016
  %v2018 = vpop.f32.mrb[0].mxu0
  %2019 = vmatprep.mubr.bf16.mxu0 %v1107
  %2020 = vmatmul.mubr.bf16.gmra.mrb[0].mxu0 %v1106
  %v2021 = vpop.f32.mrb[0].mxu0
  %v2022 = vadd.f32 %v409, %v2021
  %v2023 = vpop.f32.mrb[0].mxu0
  %v2024 = vpop.f32.mrb[0].mxu0
  %v2025 = vadd.f32 %v409, %v2024
  %v2026 = vpop.f32.mrb[0].mxu0
  %2027 = vmatprep.mubr.bf16.mxu0 %v1116
  %2028 = vmatmul.mubr.bf16.gmra.mrb[0].mxu0 %v1115
  %v2029 = vpop.f32.mrb[0].mxu0
  %v2030 = vadd.f32 %v409, %v2029
  %v2031 = vpop.f32.mrb[0].mxu0
  %v2032 = vpop.f32.mrb[0].mxu0
  %v2033 = vadd.f32 %v409, %v2032
  %v2034 = vpop.f32.mrb[0].mxu0
  %2035 = vmatprep.mubr.bf16.mxu0 %v1125
  %2036 = vmatmul.mubr.bf16.gmra.mrb[0].mxu0 %v1124
  %v2037 = vpop.f32.mrb[0].mxu0
  %v2038 = vadd.f32 %v409, %v2037
  %v2039 = vpop.f32.mrb[0].mxu0
  %v2040 = vpop.f32.mrb[0].mxu0
  %v2041 = vadd.f32 %v409, %v2040
  %v2042 = vpop.f32.mrb[0].mxu0
  %2043 = vmatprep.mubr.bf16.mxu0 %v1134
  %2044 = vmatmul.mubr.bf16.gmra.mrb[0].mxu0 %v1133
  %v2045 = vpop.f32.mrb[0].mxu0
  %v2046 = vadd.f32 %v409, %v2045
  %v2047 = vpop.f32.mrb[0].mxu0
  %v2048 = vpop.f32.mrb[0].mxu0
  %v2049 = vadd.f32 %v409, %v2048
  %v2050 = vpop.f32.mrb[0].mxu0
  %2051 = vmatprep.mubr.bf16.mxu0 %v1143
  %2052 = vmatmul.mubr.bf16.gmra.mrb[0].mxu0 %v1142
  %v2053 = vpop.f32.mrb[0].mxu0
  %v2054 = vadd.f32 %v409, %v2053
  %v2055 = vpop.f32.mrb[0].mxu0
  %v2056 = vpop.f32.mrb[0].mxu0
  %v2057 = vadd.f32 %v409, %v2056
  %v2058 = vpop.f32.mrb[0].mxu0
  %2059 = vmatprep.mubr.bf16.mxu0 %v1152
  %2060 = vmatmul.mubr.bf16.gmra.mrb[0].mxu0 %v1151
  %v2061 = vpop.f32.mrb[0].mxu0
  %v2062 = vadd.f32 %v409, %v2061
  %v2063 = vpop.f32.mrb[0].mxu0
  %v2064 = vpop.f32.mrb[0].mxu0
  %v2065 = vadd.f32 %v409, %v2064
  %v2066 = vpop.f32.mrb[0].mxu0
  %2067 = vmatprep.mubr.bf16.mxu0 %v1161
  %2068 = vmatmul.mubr.bf16.gmra.mrb[0].mxu0 %v1160
  %v2069 = vpop.f32.mrb[0].mxu0
  %v2070 = vadd.f32 %v409, %v2069
  %v2071 = vpop.f32.mrb[0].mxu0
  %v2072 = vpop.f32.mrb[0].mxu0
  %v2073 = vadd.f32 %v409, %v2072
  %v2074 = vpop.f32.mrb[0].mxu0
  %2075 = vmatprep.mubr.bf16.mxu0 %v1170
  %2076 = vmatmul.mubr.bf16.gmra.mrb[0].mxu0 %v1169
  %v2077 = vpop.f32.mrb[0].mxu0
  %v2078 = vadd.f32 %v409, %v2077
  %v2079 = vpop.f32.mrb[0].mxu0
  %v2080 = vpop.f32.mrb[0].mxu0
  %v2081 = vadd.f32 %v409, %v2080
  %v2082 = vpop.f32.mrb[0].mxu0
  %2083 = vmatprep.mubr.bf16.mxu0 %v1179
  %2084 = vmatmul.mubr.bf16.gmra.mrb[0].mxu0 %v1178
  %v2085 = vpop.f32.mrb[0].mxu0
  %v2086 = vadd.f32 %v409, %v2085
  %v2087 = vpop.f32.mrb[0].mxu0
  %v2088 = vpop.f32.mrb[0].mxu0
  %v2089 = vadd.f32 %v409, %v2088
  %v2090 = vpop.f32.mrb[0].mxu0
  %2091 = vmatprep.mubr.bf16.mxu0 %v1188
  %2092 = vmatmul.mubr.bf16.gmra.mrb[0].mxu0 %v1187
  %v2093 = vpop.f32.mrb[0].mxu0
  %v2094 = vadd.f32 %v409, %v2093
  %v2095 = vpop.f32.mrb[0].mxu0
  %v2096 = vpop.f32.mrb[0].mxu0
  %v2097 = vadd.f32 %v409, %v2096
  %v2098 = vpop.f32.mrb[0].mxu0
  %2099 = vmatprep.mubr.bf16.mxu0 %v1197
  %2100 = vmatmul.mubr.bf16.gmra.mrb[0].mxu0 %v1196
  %v2101 = vpop.f32.mrb[0].mxu0
  %v2102 = vadd.f32 %v409, %v2101
  %v2103 = vpop.f32.mrb[0].mxu0
  %v2104 = vpop.f32.mrb[0].mxu0
  %v2105 = vadd.f32 %v409, %v2104
  %v2106 = vpop.f32.mrb[0].mxu0
  %2107 = vmatprep.mubr.bf16.mxu0 %v1206
  %2108 = vmatmul.mubr.bf16.gmra.mrb[0].mxu0 %v1205
  %v2109 = vpop.f32.mrb[0].mxu0
  %v2110 = vadd.f32 %v409, %v2109
  %v2111 = vpop.f32.mrb[0].mxu0
  %v2112 = vpop.f32.mrb[0].mxu0
  %v2113 = vadd.f32 %v409, %v2112
  %v2114 = vpop.f32.mrb[0].mxu0
  %2115 = vmatprep.mubr.bf16.mxu0 %v1215
  %2116 = vmatmul.mubr.bf16.gmra.mrb[0].mxu0 %v1214
  %v2117 = vpop.f32.mrb[0].mxu0
  %v2118 = vadd.f32 %v409, %v2117
  %v2119 = vpop.f32.mrb[0].mxu0
  %v2120 = vpop.f32.mrb[0].mxu0
  %v2121 = vadd.f32 %v409, %v2120
  %v2122 = vpop.f32.mrb[0].mxu0
  %2123 = vmatprep.mubr.bf16.mxu0 %v1224
  %2124 = vmatmul.mubr.bf16.gmra.mrb[0].mxu0 %v1223
  %v2125 = vpop.f32.mrb[0].mxu0
  %v2126 = vadd.f32 %v409, %v2125
  %v2127 = vpop.f32.mrb[0].mxu0
  %v2128 = vpop.f32.mrb[0].mxu0
  %v2129 = vadd.f32 %v409, %v2128
  %v2130 = vpop.f32.mrb[0].mxu0
  %2131 = vmatprep.mubr.bf16.mxu0 %v1233
  %2132 = vmatmul.mubr.bf16.gmra.mrb[0].mxu0 %v1232
  %v2133 = vpop.f32.mrb[0].mxu0
  %v2134 = vadd.f32 %v409, %v2133
  %v2135 = vpop.f32.mrb[0].mxu0
  %v2136 = vpop.f32.mrb[0].mxu0
  %v2137 = vadd.f32 %v409, %v2136
  %v2138 = vpop.f32.mrb[0].mxu0
  %2139 = vmatprep.mubr.bf16.mxu0 %v1242
  %2140 = vmatmul.mubr.bf16.gmra.mrb[0].mxu0 %v1241
  %v2141 = vpop.f32.mrb[0].mxu0
  %v2142 = vadd.f32 %v409, %v2141
  %v2143 = vpop.f32.mrb[0].mxu0
  %v2144 = vpop.f32.mrb[0].mxu0
  %v2145 = vadd.f32 %v409, %v2144
  %v2146 = vpop.f32.mrb[0].mxu0
  %2147 = vmatprep.mubr.bf16.mxu0 %v1251
  %2148 = vmatmul.mubr.bf16.gmra.mrb[0].mxu0 %v1250
  %v2149 = vpop.f32.mrb[0].mxu0
  %v2150 = vadd.f32 %v409, %v2149
  %v2151 = vpop.f32.mrb[0].mxu0
  %v2152 = vpop.f32.mrb[0].mxu0
  %v2153 = vadd.f32 %v409, %v2152
  %v2154 = vpop.f32.mrb[0].mxu0
  %2155 = vmatprep.mubr.bf16.mxu0 %v1260
  %2156 = vmatmul.mubr.bf16.gmra.mrb[0].mxu0 %v1259
  %v2157 = vpop.f32.mrb[0].mxu0
  %v2158 = vadd.f32 %v409, %v2157
  %v2159 = vpop.f32.mrb[0].mxu0
  %v2160 = vpop.f32.mrb[0].mxu0
  %v2161 = vadd.f32 %v409, %v2160
  %v2162 = vpop.f32.mrb[0].mxu0
  %2163 = vmatprep.mubr.bf16.mxu0 %v1269
  %2164 = vmatmul.mubr.bf16.gmra.mrb[0].mxu0 %v1268
  %v2165 = vpop.f32.mrb[0].mxu0
  %v2166 = vadd.f32 %v409, %v2165
  %v2167 = vpop.f32.mrb[0].mxu0
  %v2168 = vpop.f32.mrb[0].mxu0
  %v2169 = vadd.f32 %v409, %v2168
  %v2170 = vpop.f32.mrb[0].mxu0
  %2171 = vmatprep.mubr.bf16.mxu0 %v1278
  %2172 = vmatmul.mubr.bf16.gmra.mrb[0].mxu0 %v1277
  %v2173 = vpop.f32.mrb[0].mxu0
  %v2174 = vadd.f32 %v409, %v2173
  %v2175 = vpop.f32.mrb[0].mxu0
  %v2176 = vpop.f32.mrb[0].mxu0
  %v2177 = vadd.f32 %v409, %v2176
  %v2178 = vpop.f32.mrb[0].mxu0
  %2179 = vmatprep.mubr.bf16.mxu0 %v1287
  %2180 = vmatmul.mubr.bf16.gmra.mrb[0].mxu0 %v1286
  %v2181 = vpop.f32.mrb[0].mxu0
  %v2182 = vadd.f32 %v409, %v2181
  %v2183 = vpop.f32.mrb[0].mxu0
  %v2184 = vpop.f32.mrb[0].mxu0
  %v2185 = vadd.f32 %v409, %v2184
  %v2186 = vpop.f32.mrb[0].mxu0
  %2187 = vmatprep.mubr.bf16.mxu0 %v1296
  %2188 = vmatmul.mubr.bf16.gmra.mrb[0].mxu0 %v1295
  %v2189 = vpop.f32.mrb[0].mxu0
  %v2190 = vadd.f32 %v409, %v2189
  %v2191 = vpop.f32.mrb[0].mxu0
  %v2192 = vpop.f32.mrb[0].mxu0
  %v2193 = vadd.f32 %v409, %v2192
  %v2194 = vpop.f32.mrb[0].mxu0
  %2195 = vmatprep.mubr.bf16.mxu0 %v1305
  %2196 = vmatmul.mubr.bf16.gmra.mrb[0].mxu0 %v1304
  %v2197 = vpop.f32.mrb[0].mxu0
  %v2198 = vadd.f32 %v409, %v2197
  %v2199 = vpop.f32.mrb[0].mxu0
  %v2200 = vpop.f32.mrb[0].mxu0
  %v2201 = vadd.f32 %v409, %v2200
  %v2202 = vpop.f32.mrb[0].mxu0
  %2203 = vmatprep.mubr.bf16.mxu0 %v1314
  %2204 = vmatmul.mubr.bf16.gmra.mrb[0].mxu0 %v1313
  %v2205 = vpop.f32.mrb[0].mxu0
  %v2206 = vadd.f32 %v409, %v2205
  %v2207 = vpop.f32.mrb[0].mxu0
  %v2208 = vpop.f32.mrb[0].mxu0
  %v2209 = vpop.f32.mrb[0].mxu0
  %2210 = vdwg.mxu0
  %2211 = vmatprep.subr.bf16.mxu0 0
  %2212 = vmatpush1.bf16.msra.mxu0 %v1851
  %2213 = vmatprep.subr.bf16.mxu0 0
  %2214 = vmatpush1.bf16.msra.mxu0 %v1852
  %2215 = vmatprep.subr.bf16.mxu0 0
  %2216 = vmatpush1.bf16.msra.mxu0 %v1853
  %2217 = vmatprep.subr.bf16.mxu0 0
  %2218 = vmatpush1.bf16.msra.mxu0 %v1854
  %2219 = vmatprep.subr.bf16.mxu0 0
  %2220 = vmatpush1.bf16.msra.mxu0 %v1855
  %2221 = vmatprep.subr.bf16.mxu0 0
  %2222 = vmatpush1.bf16.msra.mxu0 %v1856
  %2223 = vmatprep.subr.bf16.mxu0 0
  %2224 = vmatpush1.bf16.msra.mxu0 %v1857
  %2225 = vmatprep.subr.bf16.mxu0 0
  %2226 = vmatpush1.bf16.msra.mxu0 %v1858
  %2227 = vmatprep.subr.bf16.mxu0 0
  %2228 = vmatpush1.bf16.msra.mxu0 %v1859
  %2229 = vmatprep.subr.bf16.mxu0 0
  %2230 = vmatpush1.bf16.msra.mxu0 %v1860
  %2231 = vmatprep.subr.bf16.mxu0 0
  %2232 = vmatpush1.bf16.msra.mxu0 %v1861
  %2233 = vmatprep.subr.bf16.mxu0 0
  %2234 = vmatpush1.bf16.msra.mxu0 %v1862
  %2235 = vmatprep.subr.bf16.mxu0 0
  %2236 = vmatpush1.bf16.msra.mxu0 %v1863
  %2237 = vmatprep.subr.bf16.mxu0 0
  %2238 = vmatpush1.bf16.msra.mxu0 %v1864
  %2239 = vmatprep.subr.bf16.mxu0 0
  %2240 = vmatpush1.bf16.msra.mxu0 %v1865
  %2241 = vmatprep.subr.bf16.mxu0 0
  %2242 = vmatpush1.bf16.msra.mxu0 %v1866
  %2243 = vmatprep.mubr.bf16.mxu0 %v1100
  %2244 = vmatmul.mubr.bf16.gmra.mrb[0].mxu0 %v1099
  %v2245 = vpop.f32.mrb[0].mxu0
  %v2246 = vadd.f32 %v2014, %v2245
  %v2247 = vpop.f32.mrb[0].mxu0
  %v2248 = vpop.f32.mrb[0].mxu0
  %v2249 = vadd.f32 %v2017, %v2248
  %v2250 = vpop.f32.mrb[0].mxu0
  %2251 = vmatprep.mubr.bf16.mxu0 %v1109
  %2252 = vmatmul.mubr.bf16.gmra.mrb[0].mxu0 %v1108
  %v2253 = vpop.f32.mrb[0].mxu0
  %v2254 = vadd.f32 %v2022, %v2253
  %v2255 = vpop.f32.mrb[0].mxu0
  %v2256 = vpop.f32.mrb[0].mxu0
  %v2257 = vadd.f32 %v2025, %v2256
  %v2258 = vpop.f32.mrb[0].mxu0
  %2259 = vmatprep.mubr.bf16.mxu0 %v1118
  %2260 = vmatmul.mubr.bf16.gmra.mrb[0].mxu0 %v1117
  %v2261 = vpop.f32.mrb[0].mxu0
  %v2262 = vadd.f32 %v2030, %v2261
  %v2263 = vpop.f32.mrb[0].mxu0
  %v2264 = vpop.f32.mrb[0].mxu0
  %v2265 = vadd.f32 %v2033, %v2264
  %v2266 = vpop.f32.mrb[0].mxu0
  %2267 = vmatprep.mubr.bf16.mxu0 %v1127
  %2268 = vmatmul.mubr.bf16.gmra.mrb[0].mxu0 %v1126
  %v2269 = vpop.f32.mrb[0].mxu0
  %v2270 = vadd.f32 %v2038, %v2269
  %v2271 = vpop.f32.mrb[0].mxu0
  %v2272 = vpop.f32.mrb[0].mxu0
  %v2273 = vadd.f32 %v2041, %v2272
  %v2274 = vpop.f32.mrb[0].mxu0
  %2275 = vmatprep.mubr.bf16.mxu0 %v1136
  %2276 = vmatmul.mubr.bf16.gmra.mrb[0].mxu0 %v1135
  %v2277 = vpop.f32.mrb[0].mxu0
  %v2278 = vadd.f32 %v2046, %v2277
  %v2279 = vpop.f32.mrb[0].mxu0
  %v2280 = vpop.f32.mrb[0].mxu0
  %v2281 = vadd.f32 %v2049, %v2280
  %v2282 = vpop.f32.mrb[0].mxu0
  %2283 = vmatprep.mubr.bf16.mxu0 %v1145
  %2284 = vmatmul.mubr.bf16.gmra.mrb[0].mxu0 %v1144
  %v2285 = vpop.f32.mrb[0].mxu0
  %v2286 = vadd.f32 %v2054, %v2285
  %v2287 = vpop.f32.mrb[0].mxu0
  %v2288 = vpop.f32.mrb[0].mxu0
  %v2289 = vadd.f32 %v2057, %v2288
  %v2290 = vpop.f32.mrb[0].mxu0
  %2291 = vmatprep.mubr.bf16.mxu0 %v1154
  %2292 = vmatmul.mubr.bf16.gmra.mrb[0].mxu0 %v1153
  %v2293 = vpop.f32.mrb[0].mxu0
  %v2294 = vadd.f32 %v2062, %v2293
  %v2295 = vpop.f32.mrb[0].mxu0
  %v2296 = vpop.f32.mrb[0].mxu0
  %v2297 = vadd.f32 %v2065, %v2296
  %v2298 = vpop.f32.mrb[0].mxu0
  %2299 = vmatprep.mubr.bf16.mxu0 %v1163
  %2300 = vmatmul.mubr.bf16.gmra.mrb[0].mxu0 %v1162
  %v2301 = vpop.f32.mrb[0].mxu0
  %v2302 = vadd.f32 %v2070, %v2301
  %v2303 = vpop.f32.mrb[0].mxu0
  %v2304 = vpop.f32.mrb[0].mxu0
  %v2305 = vadd.f32 %v2073, %v2304
  %v2306 = vpop.f32.mrb[0].mxu0
  %2307 = vmatprep.mubr.bf16.mxu0 %v1172
  %2308 = vmatmul.mubr.bf16.gmra.mrb[0].mxu0 %v1171
  %v2309 = vpop.f32.mrb[0].mxu0
  %v2310 = vadd.f32 %v2078, %v2309
  %v2311 = vpop.f32.mrb[0].mxu0
  %v2312 = vpop.f32.mrb[0].mxu0
  %v2313 = vadd.f32 %v2081, %v2312
  %v2314 = vpop.f32.mrb[0].mxu0
  %2315 = vmatprep.mubr.bf16.mxu0 %v1181
  %2316 = vmatmul.mubr.bf16.gmra.mrb[0].mxu0 %v1180
  %v2317 = vpop.f32.mrb[0].mxu0
  %v2318 = vadd.f32 %v2086, %v2317
  %v2319 = vpop.f32.mrb[0].mxu0
  %v2320 = vpop.f32.mrb[0].mxu0
  %v2321 = vadd.f32 %v2089, %v2320
  %v2322 = vpop.f32.mrb[0].mxu0
  %2323 = vmatprep.mubr.bf16.mxu0 %v1190
  %2324 = vmatmul.mubr.bf16.gmra.mrb[0].mxu0 %v1189
  %v2325 = vpop.f32.mrb[0].mxu0
  %v2326 = vadd.f32 %v2094, %v2325
  %v2327 = vpop.f32.mrb[0].mxu0
  %v2328 = vpop.f32.mrb[0].mxu0
  %v2329 = vadd.f32 %v2097, %v2328
  %v2330 = vpop.f32.mrb[0].mxu0
  %2331 = vmatprep.mubr.bf16.mxu0 %v1199
  %2332 = vmatmul.mubr.bf16.gmra.mrb[0].mxu0 %v1198
  %v2333 = vpop.f32.mrb[0].mxu0
  %v2334 = vadd.f32 %v2102, %v2333
  %v2335 = vpop.f32.mrb[0].mxu0
  %v2336 = vpop.f32.mrb[0].mxu0
  %v2337 = vadd.f32 %v2105, %v2336
  %v2338 = vpop.f32.mrb[0].mxu0
  %2339 = vmatprep.mubr.bf16.mxu0 %v1208
  %2340 = vmatmul.mubr.bf16.gmra.mrb[0].mxu0 %v1207
  %v2341 = vpop.f32.mrb[0].mxu0
  %v2342 = vadd.f32 %v2110, %v2341
  %v2343 = vpop.f32.mrb[0].mxu0
  %v2344 = vpop.f32.mrb[0].mxu0
  %v2345 = vadd.f32 %v2113, %v2344
  %v2346 = vpop.f32.mrb[0].mxu0
  %2347 = vmatprep.mubr.bf16.mxu0 %v1217
  %2348 = vmatmul.mubr.bf16.gmra.mrb[0].mxu0 %v1216
  %v2349 = vpop.f32.mrb[0].mxu0
  %v2350 = vadd.f32 %v2118, %v2349
  %v2351 = vpop.f32.mrb[0].mxu0
  %v2352 = vpop.f32.mrb[0].mxu0
  %v2353 = vadd.f32 %v2121, %v2352
  %v2354 = vpop.f32.mrb[0].mxu0
  %2355 = vmatprep.mubr.bf16.mxu0 %v1226
  %2356 = vmatmul.mubr.bf16.gmra.mrb[0].mxu0 %v1225
  %v2357 = vpop.f32.mrb[0].mxu0
  %v2358 = vadd.f32 %v2126, %v2357
  %v2359 = vpop.f32.mrb[0].mxu0
  %v2360 = vpop.f32.mrb[0].mxu0
  %v2361 = vadd.f32 %v2129, %v2360
  %v2362 = vpop.f32.mrb[0].mxu0
  %2363 = vmatprep.mubr.bf16.mxu0 %v1235
  %2364 = vmatmul.mubr.bf16.gmra.mrb[0].mxu0 %v1234
  %v2365 = vpop.f32.mrb[0].mxu0
  %v2366 = vadd.f32 %v2134, %v2365
  %v2367 = vpop.f32.mrb[0].mxu0
  %v2368 = vpop.f32.mrb[0].mxu0
  %v2369 = vadd.f32 %v2137, %v2368
  %v2370 = vpop.f32.mrb[0].mxu0
  %2371 = vmatprep.mubr.bf16.mxu0 %v1244
  %2372 = vmatmul.mubr.bf16.gmra.mrb[0].mxu0 %v1243
  %v2373 = vpop.f32.mrb[0].mxu0
  %v2374 = vadd.f32 %v2142, %v2373
  %v2375 = vpop.f32.mrb[0].mxu0
  %v2376 = vpop.f32.mrb[0].mxu0
  %v2377 = vadd.f32 %v2145, %v2376
  %v2378 = vpop.f32.mrb[0].mxu0
  %2379 = vmatprep.mubr.bf16.mxu0 %v1253
  %2380 = vmatmul.mubr.bf16.gmra.mrb[0].mxu0 %v1252
  %v2381 = vpop.f32.mrb[0].mxu0
  %v2382 = vadd.f32 %v2150, %v2381
  %v2383 = vpop.f32.mrb[0].mxu0
  %v2384 = vpop.f32.mrb[0].mxu0
  %v2385 = vadd.f32 %v2153, %v2384
  %v2386 = vpop.f32.mrb[0].mxu0
  %2387 = vmatprep.mubr.bf16.mxu0 %v1262
  %2388 = vmatmul.mubr.bf16.gmra.mrb[0].mxu0 %v1261
  %v2389 = vpop.f32.mrb[0].mxu0
  %v2390 = vadd.f32 %v2158, %v2389
  %v2391 = vpop.f32.mrb[0].mxu0
  %v2392 = vpop.f32.mrb[0].mxu0
  %v2393 = vadd.f32 %v2161, %v2392
  %v2394 = vpop.f32.mrb[0].mxu0
  %2395 = vmatprep.mubr.bf16.mxu0 %v1271
  %2396 = vmatmul.mubr.bf16.gmra.mrb[0].mxu0 %v1270
  %v2397 = vpop.f32.mrb[0].mxu0
  %v2398 = vadd.f32 %v2166, %v2397
  %v2399 = vpop.f32.mrb[0].mxu0
  %v2400 = vpop.f32.mrb[0].mxu0
  %v2401 = vadd.f32 %v2169, %v2400
  %v2402 = vpop.f32.mrb[0].mxu0
  %2403 = vmatprep.mubr.bf16.mxu0 %v1280
  %2404 = vmatmul.mubr.bf16.gmra.mrb[0].mxu0 %v1279
  %v2405 = vpop.f32.mrb[0].mxu0
  %v2406 = vadd.f32 %v2174, %v2405
  %v2407 = vpop.f32.mrb[0].mxu0
  %v2408 = vpop.f32.mrb[0].mxu0
  %v2409 = vadd.f32 %v2177, %v2408
  %v2410 = vpop.f32.mrb[0].mxu0
  %2411 = vmatprep.mubr.bf16.mxu0 %v1289
  %2412 = vmatmul.mubr.bf16.gmra.mrb[0].mxu0 %v1288
  %v2413 = vpop.f32.mrb[0].mxu0
  %v2414 = vadd.f32 %v2182, %v2413
  %v2415 = vpop.f32.mrb[0].mxu0
  %v2416 = vpop.f32.mrb[0].mxu0
  %v2417 = vadd.f32 %v2185, %v2416
  %v2418 = vpop.f32.mrb[0].mxu0
  %2419 = vmatprep.mubr.bf16.mxu0 %v1298
  %2420 = vmatmul.mubr.bf16.gmra.mrb[0].mxu0 %v1297
  %v2421 = vpop.f32.mrb[0].mxu0
  %v2422 = vadd.f32 %v2190, %v2421
  %v2423 = vpop.f32.mrb[0].mxu0
  %v2424 = vpop.f32.mrb[0].mxu0
  %v2425 = vadd.f32 %v2193, %v2424
  %v2426 = vpop.f32.mrb[0].mxu0
  %2427 = vmatprep.mubr.bf16.mxu0 %v1307
  %2428 = vmatmul.mubr.bf16.gmra.mrb[0].mxu0 %v1306
  %v2429 = vpop.f32.mrb[0].mxu0
  %v2430 = vadd.f32 %v2198, %v2429
  %v2431 = vpop.f32.mrb[0].mxu0
  %v2432 = vpop.f32.mrb[0].mxu0
  %v2433 = vadd.f32 %v2201, %v2432
  %v2434 = vpop.f32.mrb[0].mxu0
  %2435 = vmatprep.mubr.bf16.mxu0 %v1316
  %2436 = vmatmul.mubr.bf16.gmra.mrb[0].mxu0 %v1315
  %v2437 = vpop.f32.mrb[0].mxu0
  %v2438 = vadd.f32 %v2206, %v2437
  %v2439 = vpop.f32.mrb[0].mxu0
  %v2440 = vpop.f32.mrb[0].mxu0
  %v2441 = vpop.f32.mrb[0].mxu0
  %2442 = vdwg.mxu0
  %2443 = vmatprep.subr.bf16.mxu0 0
  %2444 = vmatpush1.bf16.msra.mxu0 %v1867
  %2445 = vmatprep.subr.bf16.mxu0 0
  %2446 = vmatpush1.bf16.msra.mxu0 %v1868
  %2447 = vmatprep.subr.bf16.mxu0 0
  %2448 = vmatpush1.bf16.msra.mxu0 %v1869
  %2449 = vmatprep.subr.bf16.mxu0 0
  %2450 = vmatpush1.bf16.msra.mxu0 %v1870
  %2451 = vmatprep.subr.bf16.mxu0 0
  %2452 = vmatpush1.bf16.msra.mxu0 %v1871
  %2453 = vmatprep.subr.bf16.mxu0 0
  %2454 = vmatpush1.bf16.msra.mxu0 %v1872
  %2455 = vmatprep.subr.bf16.mxu0 0
  %2456 = vmatpush1.bf16.msra.mxu0 %v1873
  %2457 = vmatprep.subr.bf16.mxu0 0
  %2458 = vmatpush1.bf16.msra.mxu0 %v1874
  %2459 = vmatprep.subr.bf16.mxu0 0
  %2460 = vmatpush1.bf16.msra.mxu0 %v1875
  %2461 = vmatprep.subr.bf16.mxu0 0
  %2462 = vmatpush1.bf16.msra.mxu0 %v1876
  %2463 = vmatprep.subr.bf16.mxu0 0
  %2464 = vmatpush1.bf16.msra.mxu0 %v1877
  %2465 = vmatprep.subr.bf16.mxu0 0
  %2466 = vmatpush1.bf16.msra.mxu0 %v1878
  %2467 = vmatprep.subr.bf16.mxu0 0
  %2468 = vmatpush1.bf16.msra.mxu0 %v1879
  %2469 = vmatprep.subr.bf16.mxu0 0
  %2470 = vmatpush1.bf16.msra.mxu0 %v1880
  %2471 = vmatprep.subr.bf16.mxu0 0
  %2472 = vmatpush1.bf16.msra.mxu0 %v1881
  %2473 = vmatprep.subr.bf16.mxu0 0
  %2474 = vmatpush1.bf16.msra.mxu0 %v1882
  %2475 = vmatprep.mubr.bf16.mxu0 %v1102
  %2476 = vmatmul.mubr.bf16.gmra.mrb[0].mxu0 %v1101
  %v2477 = vpop.f32.mrb[0].mxu0
  %v2478 = vadd.f32 %v2246, %v2477
  %v2479 = vpop.f32.mrb[0].mxu0
  %v2480 = vpop.f32.mrb[0].mxu0
  %v2481 = vadd.f32 %v2249, %v2480
  %v2482 = vpop.f32.mrb[0].mxu0
  %2483 = vmatprep.mubr.bf16.mxu0 %v1111
  %2484 = vmatmul.mubr.bf16.gmra.mrb[0].mxu0 %v1110
  %v2485 = vpop.f32.mrb[0].mxu0
  %v2486 = vadd.f32 %v2254, %v2485
  %v2487 = vpop.f32.mrb[0].mxu0
  %v2488 = vpop.f32.mrb[0].mxu0
  %v2489 = vadd.f32 %v2257, %v2488
  %v2490 = vpop.f32.mrb[0].mxu0
  %2491 = vmatprep.mubr.bf16.mxu0 %v1120
  %2492 = vmatmul.mubr.bf16.gmra.mrb[0].mxu0 %v1119
  %v2493 = vpop.f32.mrb[0].mxu0
  %v2494 = vadd.f32 %v2262, %v2493
  %v2495 = vpop.f32.mrb[0].mxu0
  %v2496 = vpop.f32.mrb[0].mxu0
  %v2497 = vadd.f32 %v2265, %v2496
  %v2498 = vpop.f32.mrb[0].mxu0
  %2499 = vmatprep.mubr.bf16.mxu0 %v1129
  %2500 = vmatmul.mubr.bf16.gmra.mrb[0].mxu0 %v1128
  %v2501 = vpop.f32.mrb[0].mxu0
  %v2502 = vadd.f32 %v2270, %v2501
  %v2503 = vpop.f32.mrb[0].mxu0
  %v2504 = vpop.f32.mrb[0].mxu0
  %v2505 = vadd.f32 %v2273, %v2504
  %v2506 = vpop.f32.mrb[0].mxu0
  %2507 = vmatprep.mubr.bf16.mxu0 %v1138
  %2508 = vmatmul.mubr.bf16.gmra.mrb[0].mxu0 %v1137
  %v2509 = vpop.f32.mrb[0].mxu0
  %v2510 = vadd.f32 %v2278, %v2509
  %v2511 = vpop.f32.mrb[0].mxu0
  %v2512 = vpop.f32.mrb[0].mxu0
  %v2513 = vadd.f32 %v2281, %v2512
  %v2514 = vpop.f32.mrb[0].mxu0
  %2515 = vmatprep.mubr.bf16.mxu0 %v1147
  %2516 = vmatmul.mubr.bf16.gmra.mrb[0].mxu0 %v1146
  %v2517 = vpop.f32.mrb[0].mxu0
  %v2518 = vadd.f32 %v2286, %v2517
  %v2519 = vpop.f32.mrb[0].mxu0
  %v2520 = vpop.f32.mrb[0].mxu0
  %v2521 = vadd.f32 %v2289, %v2520
  %v2522 = vpop.f32.mrb[0].mxu0
  %2523 = vmatprep.mubr.bf16.mxu0 %v1156
  %2524 = vmatmul.mubr.bf16.gmra.mrb[0].mxu0 %v1155
  %v2525 = vpop.f32.mrb[0].mxu0
  %v2526 = vadd.f32 %v2294, %v2525
  %v2527 = vpop.f32.mrb[0].mxu0
  %v2528 = vpop.f32.mrb[0].mxu0
  %v2529 = vadd.f32 %v2297, %v2528
  %v2530 = vpop.f32.mrb[0].mxu0
  %2531 = vmatprep.mubr.bf16.mxu0 %v1165
  %2532 = vmatmul.mubr.bf16.gmra.mrb[0].mxu0 %v1164
  %v2533 = vpop.f32.mrb[0].mxu0
  %v2534 = vadd.f32 %v2302, %v2533
  %v2535 = vpop.f32.mrb[0].mxu0
  %v2536 = vpop.f32.mrb[0].mxu0
  %v2537 = vadd.f32 %v2305, %v2536
  %v2538 = vpop.f32.mrb[0].mxu0
  %2539 = vmatprep.mubr.bf16.mxu0 %v1174
  %2540 = vmatmul.mubr.bf16.gmra.mrb[0].mxu0 %v1173
  %v2541 = vpop.f32.mrb[0].mxu0
  %v2542 = vadd.f32 %v2310, %v2541
  %v2543 = vpop.f32.mrb[0].mxu0
  %v2544 = vpop.f32.mrb[0].mxu0
  %v2545 = vadd.f32 %v2313, %v2544
  %v2546 = vpop.f32.mrb[0].mxu0
  %2547 = vmatprep.mubr.bf16.mxu0 %v1183
  %2548 = vmatmul.mubr.bf16.gmra.mrb[0].mxu0 %v1182
  %v2549 = vpop.f32.mrb[0].mxu0
  %v2550 = vadd.f32 %v2318, %v2549
  %v2551 = vpop.f32.mrb[0].mxu0
  %v2552 = vpop.f32.mrb[0].mxu0
  %v2553 = vadd.f32 %v2321, %v2552
  %v2554 = vpop.f32.mrb[0].mxu0
  %2555 = vmatprep.mubr.bf16.mxu0 %v1192
  %2556 = vmatmul.mubr.bf16.gmra.mrb[0].mxu0 %v1191
  %v2557 = vpop.f32.mrb[0].mxu0
  %v2558 = vadd.f32 %v2326, %v2557
  %v2559 = vpop.f32.mrb[0].mxu0
  %v2560 = vpop.f32.mrb[0].mxu0
  %v2561 = vadd.f32 %v2329, %v2560
  %v2562 = vpop.f32.mrb[0].mxu0
  %2563 = vmatprep.mubr.bf16.mxu0 %v1201
  %2564 = vmatmul.mubr.bf16.gmra.mrb[0].mxu0 %v1200
  %v2565 = vpop.f32.mrb[0].mxu0
  %v2566 = vadd.f32 %v2334, %v2565
  %v2567 = vpop.f32.mrb[0].mxu0
  %v2568 = vpop.f32.mrb[0].mxu0
  %v2569 = vadd.f32 %v2337, %v2568
  %v2570 = vpop.f32.mrb[0].mxu0
  %2571 = vmatprep.mubr.bf16.mxu0 %v1210
  %2572 = vmatmul.mubr.bf16.gmra.mrb[0].mxu0 %v1209
  %v2573 = vpop.f32.mrb[0].mxu0
  %v2574 = vadd.f32 %v2342, %v2573
  %v2575 = vpop.f32.mrb[0].mxu0
  %v2576 = vpop.f32.mrb[0].mxu0
  %v2577 = vadd.f32 %v2345, %v2576
  %v2578 = vpop.f32.mrb[0].mxu0
  %2579 = vmatprep.mubr.bf16.mxu0 %v1219
  %2580 = vmatmul.mubr.bf16.gmra.mrb[0].mxu0 %v1218
  %v2581 = vpop.f32.mrb[0].mxu0
  %v2582 = vadd.f32 %v2350, %v2581
  %v2583 = vpop.f32.mrb[0].mxu0
  %v2584 = vpop.f32.mrb[0].mxu0
  %v2585 = vadd.f32 %v2353, %v2584
  %v2586 = vpop.f32.mrb[0].mxu0
  %2587 = vmatprep.mubr.bf16.mxu0 %v1228
  %2588 = vmatmul.mubr.bf16.gmra.mrb[0].mxu0 %v1227
  %v2589 = vpop.f32.mrb[0].mxu0
  %v2590 = vadd.f32 %v2358, %v2589
  %v2591 = vpop.f32.mrb[0].mxu0
  %v2592 = vpop.f32.mrb[0].mxu0
  %v2593 = vadd.f32 %v2361, %v2592
  %v2594 = vpop.f32.mrb[0].mxu0
  %2595 = vmatprep.mubr.bf16.mxu0 %v1237
  %2596 = vmatmul.mubr.bf16.gmra.mrb[0].mxu0 %v1236
  %v2597 = vpop.f32.mrb[0].mxu0
  %v2598 = vadd.f32 %v2366, %v2597
  %v2599 = vpop.f32.mrb[0].mxu0
  %v2600 = vpop.f32.mrb[0].mxu0
  %v2601 = vadd.f32 %v2369, %v2600
  %v2602 = vpop.f32.mrb[0].mxu0
  %2603 = vmatprep.mubr.bf16.mxu0 %v1246
  %2604 = vmatmul.mubr.bf16.gmra.mrb[0].mxu0 %v1245
  %v2605 = vpop.f32.mrb[0].mxu0
  %v2606 = vadd.f32 %v2374, %v2605
  %v2607 = vpop.f32.mrb[0].mxu0
  %v2608 = vpop.f32.mrb[0].mxu0
  %v2609 = vadd.f32 %v2377, %v2608
  %v2610 = vpop.f32.mrb[0].mxu0
  %2611 = vmatprep.mubr.bf16.mxu0 %v1255
  %2612 = vmatmul.mubr.bf16.gmra.mrb[0].mxu0 %v1254
  %v2613 = vpop.f32.mrb[0].mxu0
  %v2614 = vadd.f32 %v2382, %v2613
  %v2615 = vpop.f32.mrb[0].mxu0
  %v2616 = vpop.f32.mrb[0].mxu0
  %v2617 = vadd.f32 %v2385, %v2616
  %v2618 = vpop.f32.mrb[0].mxu0
  %2619 = vmatprep.mubr.bf16.mxu0 %v1264
  %2620 = vmatmul.mubr.bf16.gmra.mrb[0].mxu0 %v1263
  %v2621 = vpop.f32.mrb[0].mxu0
  %v2622 = vadd.f32 %v2390, %v2621
  %v2623 = vpop.f32.mrb[0].mxu0
  %v2624 = vpop.f32.mrb[0].mxu0
  %v2625 = vadd.f32 %v2393, %v2624
  %v2626 = vpop.f32.mrb[0].mxu0
  %2627 = vmatprep.mubr.bf16.mxu0 %v1273
  %2628 = vmatmul.mubr.bf16.gmra.mrb[0].mxu0 %v1272
  %v2629 = vpop.f32.mrb[0].mxu0
  %v2630 = vadd.f32 %v2398, %v2629
  %v2631 = vpop.f32.mrb[0].mxu0
  %v2632 = vpop.f32.mrb[0].mxu0
  %v2633 = vadd.f32 %v2401, %v2632
  %v2634 = vpop.f32.mrb[0].mxu0
  %2635 = vmatprep.mubr.bf16.mxu0 %v1282
  %2636 = vmatmul.mubr.bf16.gmra.mrb[0].mxu0 %v1281
  %v2637 = vpop.f32.mrb[0].mxu0
  %v2638 = vadd.f32 %v2406, %v2637
  %v2639 = vpop.f32.mrb[0].mxu0
  %v2640 = vpop.f32.mrb[0].mxu0
  %v2641 = vadd.f32 %v2409, %v2640
  %v2642 = vpop.f32.mrb[0].mxu0
  %2643 = vmatprep.mubr.bf16.mxu0 %v1291
  %2644 = vmatmul.mubr.bf16.gmra.mrb[0].mxu0 %v1290
  %v2645 = vpop.f32.mrb[0].mxu0
  %v2646 = vadd.f32 %v2414, %v2645
  %v2647 = vpop.f32.mrb[0].mxu0
  %v2648 = vpop.f32.mrb[0].mxu0
  %v2649 = vadd.f32 %v2417, %v2648
  %v2650 = vpop.f32.mrb[0].mxu0
  %2651 = vmatprep.mubr.bf16.mxu0 %v1300
  %2652 = vmatmul.mubr.bf16.gmra.mrb[0].mxu0 %v1299
  %v2653 = vpop.f32.mrb[0].mxu0
  %v2654 = vadd.f32 %v2422, %v2653
  %v2655 = vpop.f32.mrb[0].mxu0
  %v2656 = vpop.f32.mrb[0].mxu0
  %v2657 = vadd.f32 %v2425, %v2656
  %v2658 = vpop.f32.mrb[0].mxu0
  %2659 = vmatprep.mubr.bf16.mxu0 %v1309
  %2660 = vmatmul.mubr.bf16.gmra.mrb[0].mxu0 %v1308
  %v2661 = vpop.f32.mrb[0].mxu0
  %v2662 = vadd.f32 %v2430, %v2661
  %v2663 = vpop.f32.mrb[0].mxu0
  %v2664 = vpop.f32.mrb[0].mxu0
  %v2665 = vadd.f32 %v2433, %v2664
  %v2666 = vpop.f32.mrb[0].mxu0
  %2667 = vmatprep.mubr.bf16.mxu0 %v1318
  %2668 = vmatmul.mubr.bf16.gmra.mrb[0].mxu0 %v1317
  %v2669 = vpop.f32.mrb[0].mxu0
  %v2670 = vadd.f32 %v2438, %v2669
  %v2671 = vpop.f32.mrb[0].mxu0
  %v2672 = vpop.f32.mrb[0].mxu0
  %v2673 = vpop.f32.mrb[0].mxu0
  %2674 = vdwg.mxu0
  %2675 = vmatprep.subr.bf16.mxu0 0
  %2676 = vmatpush1.bf16.msra.mxu0 %v1883
  %2677 = vmatprep.subr.bf16.mxu0 0
  %2678 = vmatpush1.bf16.msra.mxu0 %v1884
  %2679 = vmatprep.subr.bf16.mxu0 0
  %2680 = vmatpush1.bf16.msra.mxu0 %v1885
  %2681 = vmatprep.subr.bf16.mxu0 0
  %2682 = vmatpush1.bf16.msra.mxu0 %v1886
  %2683 = vmatprep.subr.bf16.mxu0 0
  %2684 = vmatpush1.bf16.msra.mxu0 %v1887
  %2685 = vmatprep.subr.bf16.mxu0 0
  %2686 = vmatpush1.bf16.msra.mxu0 %v1888
  %2687 = vmatprep.subr.bf16.mxu0 0
  %2688 = vmatpush1.bf16.msra.mxu0 %v1889
  %2689 = vmatprep.subr.bf16.mxu0 0
  %2690 = vmatpush1.bf16.msra.mxu0 %v1890
  %2691 = vmatprep.subr.bf16.mxu0 0
  %2692 = vmatpush1.bf16.msra.mxu0 %v1891
  %2693 = vmatprep.subr.bf16.mxu0 0
  %2694 = vmatpush1.bf16.msra.mxu0 %v1892
  %2695 = vmatprep.subr.bf16.mxu0 0
  %2696 = vmatpush1.bf16.msra.mxu0 %v1893
  %2697 = vmatprep.subr.bf16.mxu0 0
  %2698 = vmatpush1.bf16.msra.mxu0 %v1894
  %2699 = vmatprep.subr.bf16.mxu0 0
  %2700 = vmatpush1.bf16.msra.mxu0 %v1895
  %2701 = vmatprep.subr.bf16.mxu0 0
  %2702 = vmatpush1.bf16.msra.mxu0 %v1896
  %2703 = vmatprep.subr.bf16.mxu0 0
  %2704 = vmatpush1.bf16.msra.mxu0 %v1897
  %2705 = vmatprep.subr.bf16.mxu0 0
  %2706 = vmatpush1.bf16.msra.mxu0 %v1898
  %2707 = vmatprep.mubr.bf16.mxu0 %v1104
  %2708 = vmatmul.mubr.bf16.gmra.mrb[0].mxu0 %v1103
  %v2709 = vpop.f32.mrb[0].mxu0
  %v2710 = vadd.f32 %v2478, %v2709
  %v2711 = vpop.f32.mrb[0].mxu0
  %v2712 = vpop.f32.mrb[0].mxu0
  %v2713 = vadd.f32 %v2481, %v2712
  %v2714 = vpop.f32.mrb[0].mxu0
  %2715 = vmatprep.mubr.bf16.mxu0 %v1113
  %2716 = vmatmul.mubr.bf16.gmra.mrb[0].mxu0 %v1112
  %v2717 = vpop.f32.mrb[0].mxu0
  %v2718 = vadd.f32 %v2486, %v2717
  %v2719 = vpop.f32.mrb[0].mxu0
  %v2720 = vpop.f32.mrb[0].mxu0
  %v2721 = vadd.f32 %v2489, %v2720
  %v2722 = vpop.f32.mrb[0].mxu0
  %2723 = vmatprep.mubr.bf16.mxu0 %v1122
  %2724 = vmatmul.mubr.bf16.gmra.mrb[0].mxu0 %v1121
  %v2725 = vpop.f32.mrb[0].mxu0
  %v2726 = vadd.f32 %v2494, %v2725
  %v2727 = vpop.f32.mrb[0].mxu0
  %v2728 = vpop.f32.mrb[0].mxu0
  %v2729 = vadd.f32 %v2497, %v2728
  %v2730 = vpop.f32.mrb[0].mxu0
  %2731 = vmatprep.mubr.bf16.mxu0 %v1131
  %2732 = vmatmul.mubr.bf16.gmra.mrb[0].mxu0 %v1130
  %v2733 = vpop.f32.mrb[0].mxu0
  %v2734 = vadd.f32 %v2502, %v2733
  %v2735 = vpop.f32.mrb[0].mxu0
  %v2736 = vpop.f32.mrb[0].mxu0
  %v2737 = vadd.f32 %v2505, %v2736
  %v2738 = vpop.f32.mrb[0].mxu0
  %2739 = vmatprep.mubr.bf16.mxu0 %v1140
  %2740 = vmatmul.mubr.bf16.gmra.mrb[0].mxu0 %v1139
  %v2741 = vpop.f32.mrb[0].mxu0
  %v2742 = vadd.f32 %v2510, %v2741
  %v2743 = vpop.f32.mrb[0].mxu0
  %v2744 = vpop.f32.mrb[0].mxu0
  %v2745 = vadd.f32 %v2513, %v2744
  %v2746 = vpop.f32.mrb[0].mxu0
  %2747 = vmatprep.mubr.bf16.mxu0 %v1149
  %2748 = vmatmul.mubr.bf16.gmra.mrb[0].mxu0 %v1148
  %v2749 = vpop.f32.mrb[0].mxu0
  %v2750 = vadd.f32 %v2518, %v2749
  %v2751 = vpop.f32.mrb[0].mxu0
  %v2752 = vpop.f32.mrb[0].mxu0
  %v2753 = vadd.f32 %v2521, %v2752
  %v2754 = vpop.f32.mrb[0].mxu0
  %2755 = vmatprep.mubr.bf16.mxu0 %v1158
  %2756 = vmatmul.mubr.bf16.gmra.mrb[0].mxu0 %v1157
  %v2757 = vpop.f32.mrb[0].mxu0
  %v2758 = vadd.f32 %v2526, %v2757
  %v2759 = vpop.f32.mrb[0].mxu0
  %v2760 = vpop.f32.mrb[0].mxu0
  %v2761 = vadd.f32 %v2529, %v2760
  %v2762 = vpop.f32.mrb[0].mxu0
  %2763 = vmatprep.mubr.bf16.mxu0 %v1167
  %2764 = vmatmul.mubr.bf16.gmra.mrb[0].mxu0 %v1166
  %v2765 = vpop.f32.mrb[0].mxu0
  %v2766 = vadd.f32 %v2534, %v2765
  %v2767 = vpop.f32.mrb[0].mxu0
  %v2768 = vpop.f32.mrb[0].mxu0
  %v2769 = vadd.f32 %v2537, %v2768
  %v2770 = vpop.f32.mrb[0].mxu0
  %2771 = vmatprep.mubr.bf16.mxu0 %v1176
  %2772 = vmatmul.mubr.bf16.gmra.mrb[0].mxu0 %v1175
  %v2773 = vpop.f32.mrb[0].mxu0
  %v2774 = vadd.f32 %v2542, %v2773
  %v2775 = vpop.f32.mrb[0].mxu0
  %v2776 = vpop.f32.mrb[0].mxu0
  %v2777 = vadd.f32 %v2545, %v2776
  %v2778 = vpop.f32.mrb[0].mxu0
  %2779 = vmatprep.mubr.bf16.mxu0 %v1185
  %2780 = vmatmul.mubr.bf16.gmra.mrb[0].mxu0 %v1184
  %v2781 = vpop.f32.mrb[0].mxu0
  %v2782 = vadd.f32 %v2550, %v2781
  %v2783 = vpop.f32.mrb[0].mxu0
  %v2784 = vpop.f32.mrb[0].mxu0
  %v2785 = vadd.f32 %v2553, %v2784
  %v2786 = vpop.f32.mrb[0].mxu0
  %2787 = vmatprep.mubr.bf16.mxu0 %v1194
  %2788 = vmatmul.mubr.bf16.gmra.mrb[0].mxu0 %v1193
  %v2789 = vpop.f32.mrb[0].mxu0
  %v2790 = vadd.f32 %v2558, %v2789
  %v2791 = vpop.f32.mrb[0].mxu0
  %v2792 = vpop.f32.mrb[0].mxu0
  %v2793 = vadd.f32 %v2561, %v2792
  %v2794 = vpop.f32.mrb[0].mxu0
  %2795 = vmatprep.mubr.bf16.mxu0 %v1203
  %2796 = vmatmul.mubr.bf16.gmra.mrb[0].mxu0 %v1202
  %v2797 = vpop.f32.mrb[0].mxu0
  %v2798 = vadd.f32 %v2566, %v2797
  %v2799 = vpop.f32.mrb[0].mxu0
  %v2800 = vpop.f32.mrb[0].mxu0
  %v2801 = vadd.f32 %v2569, %v2800
  %v2802 = vpop.f32.mrb[0].mxu0
  %2803 = vmatprep.mubr.bf16.mxu0 %v1212
  %2804 = vmatmul.mubr.bf16.gmra.mrb[0].mxu0 %v1211
  %v2805 = vpop.f32.mrb[0].mxu0
  %v2806 = vadd.f32 %v2574, %v2805
  %v2807 = vpop.f32.mrb[0].mxu0
  %v2808 = vpop.f32.mrb[0].mxu0
  %v2809 = vadd.f32 %v2577, %v2808
  %v2810 = vpop.f32.mrb[0].mxu0
  %2811 = vmatprep.mubr.bf16.mxu0 %v1221
  %2812 = vmatmul.mubr.bf16.gmra.mrb[0].mxu0 %v1220
  %v2813 = vpop.f32.mrb[0].mxu0
  %v2814 = vadd.f32 %v2582, %v2813
  %v2815 = vpop.f32.mrb[0].mxu0
  %v2816 = vpop.f32.mrb[0].mxu0
  %v2817 = vadd.f32 %v2585, %v2816
  %v2818 = vpop.f32.mrb[0].mxu0
  %2819 = vmatprep.mubr.bf16.mxu0 %v1230
  %2820 = vmatmul.mubr.bf16.gmra.mrb[0].mxu0 %v1229
  %v2821 = vpop.f32.mrb[0].mxu0
  %v2822 = vadd.f32 %v2590, %v2821
  %v2823 = vpop.f32.mrb[0].mxu0
  %v2824 = vpop.f32.mrb[0].mxu0
  %v2825 = vadd.f32 %v2593, %v2824
  %v2826 = vpop.f32.mrb[0].mxu0
  %2827 = vmatprep.mubr.bf16.mxu0 %v1239
  %2828 = vmatmul.mubr.bf16.gmra.mrb[0].mxu0 %v1238
  %v2829 = vpop.f32.mrb[0].mxu0
  %v2830 = vadd.f32 %v2598, %v2829
  %v2831 = vpop.f32.mrb[0].mxu0
  %v2832 = vpop.f32.mrb[0].mxu0
  %v2833 = vadd.f32 %v2601, %v2832
  %v2834 = vpop.f32.mrb[0].mxu0
  %2835 = vmatprep.mubr.bf16.mxu0 %v1248
  %2836 = vmatmul.mubr.bf16.gmra.mrb[0].mxu0 %v1247
  %v2837 = vpop.f32.mrb[0].mxu0
  %v2838 = vadd.f32 %v2606, %v2837
  %v2839 = vpop.f32.mrb[0].mxu0
  %v2840 = vpop.f32.mrb[0].mxu0
  %v2841 = vadd.f32 %v2609, %v2840
  %v2842 = vpop.f32.mrb[0].mxu0
  %2843 = vmatprep.mubr.bf16.mxu0 %v1257
  %2844 = vmatmul.mubr.bf16.gmra.mrb[0].mxu0 %v1256
  %v2845 = vpop.f32.mrb[0].mxu0
  %v2846 = vadd.f32 %v2614, %v2845
  %v2847 = vpop.f32.mrb[0].mxu0
  %v2848 = vpop.f32.mrb[0].mxu0
  %v2849 = vadd.f32 %v2617, %v2848
  %v2850 = vpop.f32.mrb[0].mxu0
  %2851 = vmatprep.mubr.bf16.mxu0 %v1266
  %2852 = vmatmul.mubr.bf16.gmra.mrb[0].mxu0 %v1265
  %v2853 = vpop.f32.mrb[0].mxu0
  %v2854 = vadd.f32 %v2622, %v2853
  %v2855 = vpop.f32.mrb[0].mxu0
  %v2856 = vpop.f32.mrb[0].mxu0
  %v2857 = vadd.f32 %v2625, %v2856
  %v2858 = vpop.f32.mrb[0].mxu0
  %2859 = vmatprep.mubr.bf16.mxu0 %v1275
  %2860 = vmatmul.mubr.bf16.gmra.mrb[0].mxu0 %v1274
  %v2861 = vpop.f32.mrb[0].mxu0
  %v2862 = vadd.f32 %v2630, %v2861
  %v2863 = vpop.f32.mrb[0].mxu0
  %v2864 = vpop.f32.mrb[0].mxu0
  %v2865 = vadd.f32 %v2633, %v2864
  %v2866 = vpop.f32.mrb[0].mxu0
  %2867 = vmatprep.mubr.bf16.mxu0 %v1284
  %2868 = vmatmul.mubr.bf16.gmra.mrb[0].mxu0 %v1283
  %v2869 = vpop.f32.mrb[0].mxu0
  %v2870 = vadd.f32 %v2638, %v2869
  %v2871 = vpop.f32.mrb[0].mxu0
  %v2872 = vpop.f32.mrb[0].mxu0
  %v2873 = vadd.f32 %v2641, %v2872
  %v2874 = vpop.f32.mrb[0].mxu0
  %2875 = vmatprep.mubr.bf16.mxu0 %v1293
  %2876 = vmatmul.mubr.bf16.gmra.mrb[0].mxu0 %v1292
  %v2877 = vpop.f32.mrb[0].mxu0
  %v2878 = vadd.f32 %v2646, %v2877
  %v2879 = vpop.f32.mrb[0].mxu0
  %v2880 = vpop.f32.mrb[0].mxu0
  %v2881 = vadd.f32 %v2649, %v2880
  %v2882 = vpop.f32.mrb[0].mxu0
  %2883 = vmatprep.mubr.bf16.mxu0 %v1302
  %2884 = vmatmul.mubr.bf16.gmra.mrb[0].mxu0 %v1301
  %v2885 = vpop.f32.mrb[0].mxu0
  %v2886 = vadd.f32 %v2654, %v2885
  %v2887 = vpop.f32.mrb[0].mxu0
  %v2888 = vpop.f32.mrb[0].mxu0
  %v2889 = vadd.f32 %v2657, %v2888
  %v2890 = vpop.f32.mrb[0].mxu0
  %2891 = vmatprep.mubr.bf16.mxu0 %v1311
  %2892 = vmatmul.mubr.bf16.gmra.mrb[0].mxu0 %v1310
  %v2893 = vpop.f32.mrb[0].mxu0
  %v2894 = vadd.f32 %v2662, %v2893
  %v2895 = vpop.f32.mrb[0].mxu0
  %v2896 = vpop.f32.mrb[0].mxu0
  %v2897 = vadd.f32 %v2665, %v2896
  %v2898 = vpop.f32.mrb[0].mxu0
  %2899 = vmatprep.mubr.bf16.mxu0 %v1320
  %2900 = vmatmul.mubr.bf16.gmra.mrb[0].mxu0 %v1319
  %v2901 = vpop.f32.mrb[0].mxu0
  %v2902 = vadd.f32 %v2670, %v2901
  %v2903 = vpop.f32.mrb[0].mxu0
  %v2904 = vpop.f32.mrb[0].mxu0
  %v2905 = vpop.f32.mrb[0].mxu0
  %2906 = vdwg.mxu0
  %2907 = vmatprep.subr.bf16.mxu0 0
  %2908 = vmatpush1.bf16.msra.mxu0 %v1899
  %2909 = vmatprep.subr.bf16.mxu0 0
  %2910 = vmatpush1.bf16.msra.mxu0 %v1900
  %2911 = vmatprep.subr.bf16.mxu0 0
  %2912 = vmatpush1.bf16.msra.mxu0 %v1901
  %2913 = vmatprep.subr.bf16.mxu0 0
  %2914 = vmatpush1.bf16.msra.mxu0 %v1902
  %2915 = vmatprep.subr.bf16.mxu0 0
  %2916 = vmatpush1.bf16.msra.mxu0 %v1903
  %2917 = vmatprep.subr.bf16.mxu0 0
  %2918 = vmatpush1.bf16.msra.mxu0 %v1904
  %2919 = vmatprep.subr.bf16.mxu0 0
  %2920 = vmatpush1.bf16.msra.mxu0 %v1905
  %2921 = vmatprep.subr.bf16.mxu0 0
  %2922 = vmatpush1.bf16.msra.mxu0 %v1906
  %2923 = vmatprep.subr.bf16.mxu0 0
  %2924 = vmatpush1.bf16.msra.mxu0 0
  %2925 = vmatprep.subr.bf16.mxu0 0
  %2926 = vmatpush1.bf16.msra.mxu0 0
  %2927 = vmatprep.subr.bf16.mxu0 0
  %2928 = vmatpush1.bf16.msra.mxu0 0
  %2929 = vmatprep.subr.bf16.mxu0 0
  %2930 = vmatpush1.bf16.msra.mxu0 0
  %2931 = vmatprep.subr.bf16.mxu0 0
  %2932 = vmatpush1.bf16.msra.mxu0 0
  %2933 = vmatprep.subr.bf16.mxu0 0
  %2934 = vmatpush1.bf16.msra.mxu0 0
  %2935 = vmatprep.subr.bf16.mxu0 0
  %2936 = vmatpush1.bf16.msra.mxu0 0
  %2937 = vmatprep.subr.bf16.mxu0 0
  %2938 = vmatpush1.bf16.msra.mxu0 0
  %2939 = vmatprep.mubr.bf16.mxu0 0
  %2940 = vmatmul.mubr.bf16.gmra.mrb[0].mxu0 %v1105
  %v2941 = vpop.f32.mrb[0].mxu0
  %v2942 = vadd.f32 %v2710, %v2941
  %v2943 = vpop.f32.mrb[0].mxu0
  %v2944 = vpop.f32.mrb[0].mxu0
  %v2945 = vadd.f32 %v2713, %v2944
  %v2946 = vpop.f32.mrb[0].mxu0
  %2947 = vmatprep.mubr.bf16.mxu0 0
  %2948 = vmatmul.mubr.bf16.gmra.mrb[0].mxu0 %v1114
  %v2949 = vpop.f32.mrb[0].mxu0
  %v2950 = vadd.f32 %v2718, %v2949
  %v2951 = vpop.f32.mrb[0].mxu0
  %v2952 = vpop.f32.mrb[0].mxu0
  %v2953 = vadd.f32 %v2721, %v2952
  %v2954 = vpop.f32.mrb[0].mxu0
  %2955 = vmatprep.mubr.bf16.mxu0 0
  %2956 = vmatmul.mubr.bf16.gmra.mrb[0].mxu0 %v1123
  %v2957 = vpop.f32.mrb[0].mxu0
  %v2958 = vadd.f32 %v2726, %v2957
  %v2959 = vpop.f32.mrb[0].mxu0
  %v2960 = vpop.f32.mrb[0].mxu0
  %v2961 = vadd.f32 %v2729, %v2960
  %v2962 = vpop.f32.mrb[0].mxu0
  %2963 = vmatprep.mubr.bf16.mxu0 0
  %2964 = vmatmul.mubr.bf16.gmra.mrb[0].mxu0 %v1132
  %v2965 = vpop.f32.mrb[0].mxu0
  %v2966 = vadd.f32 %v2734, %v2965
  %v2967 = vpop.f32.mrb[0].mxu0
  %v2968 = vpop.f32.mrb[0].mxu0
  %v2969 = vadd.f32 %v2737, %v2968
  %v2970 = vpop.f32.mrb[0].mxu0
  %2971 = vmatprep.mubr.bf16.mxu0 0
  %2972 = vmatmul.mubr.bf16.gmra.mrb[0].mxu0 %v1141
  %v2973 = vpop.f32.mrb[0].mxu0
  %v2974 = vadd.f32 %v2742, %v2973
  %v2975 = vpop.f32.mrb[0].mxu0
  %v2976 = vpop.f32.mrb[0].mxu0
  %v2977 = vadd.f32 %v2745, %v2976
  %v2978 = vpop.f32.mrb[0].mxu0
  %2979 = vmatprep.mubr.bf16.mxu0 0
  %2980 = vmatmul.mubr.bf16.gmra.mrb[0].mxu0 %v1150
  %v2981 = vpop.f32.mrb[0].mxu0
  %v2982 = vadd.f32 %v2750, %v2981
  %v2983 = vpop.f32.mrb[0].mxu0
  %v2984 = vpop.f32.mrb[0].mxu0
  %v2985 = vadd.f32 %v2753, %v2984
  %v2986 = vpop.f32.mrb[0].mxu0
  %2987 = vmatprep.mubr.bf16.mxu0 0
  %2988 = vmatmul.mubr.bf16.gmra.mrb[0].mxu0 %v1159
  %v2989 = vpop.f32.mrb[0].mxu0
  %v2990 = vadd.f32 %v2758, %v2989
  %v2991 = vpop.f32.mrb[0].mxu0
  %v2992 = vpop.f32.mrb[0].mxu0
  %v2993 = vadd.f32 %v2761, %v2992
  %v2994 = vpop.f32.mrb[0].mxu0
  %2995 = vmatprep.mubr.bf16.mxu0 0
  %2996 = vmatmul.mubr.bf16.gmra.mrb[0].mxu0 %v1168
  %v2997 = vpop.f32.mrb[0].mxu0
  %v2998 = vadd.f32 %v2766, %v2997
  %v2999 = vpop.f32.mrb[0].mxu0
  %v3000 = vpop.f32.mrb[0].mxu0
  %v3001 = vadd.f32 %v2769, %v3000
  %v3002 = vpop.f32.mrb[0].mxu0
  %3003 = vmatprep.mubr.bf16.mxu0 0
  %3004 = vmatmul.mubr.bf16.gmra.mrb[0].mxu0 %v1177
  %v3005 = vpop.f32.mrb[0].mxu0
  %v3006 = vadd.f32 %v2774, %v3005
  %v3007 = vpop.f32.mrb[0].mxu0
  %v3008 = vpop.f32.mrb[0].mxu0
  %v3009 = vadd.f32 %v2777, %v3008
  %v3010 = vpop.f32.mrb[0].mxu0
  %3011 = vmatprep.mubr.bf16.mxu0 0
  %3012 = vmatmul.mubr.bf16.gmra.mrb[0].mxu0 %v1186
  %v3013 = vpop.f32.mrb[0].mxu0
  %v3014 = vadd.f32 %v2782, %v3013
  %v3015 = vpop.f32.mrb[0].mxu0
  %v3016 = vpop.f32.mrb[0].mxu0
  %v3017 = vadd.f32 %v2785, %v3016
  %v3018 = vpop.f32.mrb[0].mxu0
  %3019 = vmatprep.mubr.bf16.mxu0 0
  %3020 = vmatmul.mubr.bf16.gmra.mrb[0].mxu0 %v1195
  %v3021 = vpop.f32.mrb[0].mxu0
  %v3022 = vadd.f32 %v2790, %v3021
  %v3023 = vpop.f32.mrb[0].mxu0
  %v3024 = vpop.f32.mrb[0].mxu0
  %v3025 = vadd.f32 %v2793, %v3024
  %v3026 = vpop.f32.mrb[0].mxu0
  %3027 = vmatprep.mubr.bf16.mxu0 0
  %3028 = vmatmul.mubr.bf16.gmra.mrb[0].mxu0 %v1204
  %v3029 = vpop.f32.mrb[0].mxu0
  %v3030 = vadd.f32 %v2798, %v3029
  %v3031 = vpop.f32.mrb[0].mxu0
  %v3032 = vpop.f32.mrb[0].mxu0
  %v3033 = vadd.f32 %v2801, %v3032
  %v3034 = vpop.f32.mrb[0].mxu0
  %3035 = vmatprep.mubr.bf16.mxu0 0
  %3036 = vmatmul.mubr.bf16.gmra.mrb[0].mxu0 %v1213
  %v3037 = vpop.f32.mrb[0].mxu0
  %v3038 = vadd.f32 %v2806, %v3037
  %v3039 = vpop.f32.mrb[0].mxu0
  %v3040 = vpop.f32.mrb[0].mxu0
  %v3041 = vadd.f32 %v2809, %v3040
  %v3042 = vpop.f32.mrb[0].mxu0
  %3043 = vmatprep.mubr.bf16.mxu0 0
  %3044 = vmatmul.mubr.bf16.gmra.mrb[0].mxu0 %v1222
  %v3045 = vpop.f32.mrb[0].mxu0
  %v3046 = vadd.f32 %v2814, %v3045
  %v3047 = vpop.f32.mrb[0].mxu0
  %v3048 = vpop.f32.mrb[0].mxu0
  %v3049 = vadd.f32 %v2817, %v3048
  %v3050 = vpop.f32.mrb[0].mxu0
  %3051 = vmatprep.mubr.bf16.mxu0 0
  %3052 = vmatmul.mubr.bf16.gmra.mrb[0].mxu0 %v1231
  %v3053 = vpop.f32.mrb[0].mxu0
  %v3054 = vadd.f32 %v2822, %v3053
  %v3055 = vpop.f32.mrb[0].mxu0
  %v3056 = vpop.f32.mrb[0].mxu0
  %v3057 = vadd.f32 %v2825, %v3056
  %v3058 = vpop.f32.mrb[0].mxu0
  %3059 = vmatprep.mubr.bf16.mxu0 0
  %3060 = vmatmul.mubr.bf16.gmra.mrb[0].mxu0 %v1240
  %v3061 = vpop.f32.mrb[0].mxu0
  %v3062 = vadd.f32 %v2830, %v3061
  %v3063 = vpop.f32.mrb[0].mxu0
  %v3064 = vpop.f32.mrb[0].mxu0
  %v3065 = vadd.f32 %v2833, %v3064
  %v3066 = vpop.f32.mrb[0].mxu0
  %3067 = vmatprep.mubr.bf16.mxu0 0
  %3068 = vmatmul.mubr.bf16.gmra.mrb[0].mxu0 %v1249
  %v3069 = vpop.f32.mrb[0].mxu0
  %v3070 = vadd.f32 %v2838, %v3069
  %v3071 = vpop.f32.mrb[0].mxu0
  %v3072 = vpop.f32.mrb[0].mxu0
  %v3073 = vadd.f32 %v2841, %v3072
  %v3074 = vpop.f32.mrb[0].mxu0
  %3075 = vmatprep.mubr.bf16.mxu0 0
  %3076 = vmatmul.mubr.bf16.gmra.mrb[0].mxu0 %v1258
  %v3077 = vpop.f32.mrb[0].mxu0
  %v3078 = vadd.f32 %v2846, %v3077
  %v3079 = vpop.f32.mrb[0].mxu0
  %v3080 = vpop.f32.mrb[0].mxu0
  %v3081 = vadd.f32 %v2849, %v3080
  %v3082 = vpop.f32.mrb[0].mxu0
  %3083 = vmatprep.mubr.bf16.mxu0 0
  %3084 = vmatmul.mubr.bf16.gmra.mrb[0].mxu0 %v1267
  %v3085 = vpop.f32.mrb[0].mxu0
  %v3086 = vadd.f32 %v2854, %v3085
  %v3087 = vpop.f32.mrb[0].mxu0
  %v3088 = vpop.f32.mrb[0].mxu0
  %v3089 = vadd.f32 %v2857, %v3088
  %v3090 = vpop.f32.mrb[0].mxu0
  %3091 = vmatprep.mubr.bf16.mxu0 0
  %3092 = vmatmul.mubr.bf16.gmra.mrb[0].mxu0 %v1276
  %v3093 = vpop.f32.mrb[0].mxu0
  %v3094 = vadd.f32 %v2862, %v3093
  %v3095 = vpop.f32.mrb[0].mxu0
  %v3096 = vpop.f32.mrb[0].mxu0
  %v3097 = vadd.f32 %v2865, %v3096
  %v3098 = vpop.f32.mrb[0].mxu0
  %3099 = vmatprep.mubr.bf16.mxu0 0
  %3100 = vmatmul.mubr.bf16.gmra.mrb[0].mxu0 %v1285
  %v3101 = vpop.f32.mrb[0].mxu0
  %v3102 = vadd.f32 %v2870, %v3101
  %v3103 = vpop.f32.mrb[0].mxu0
  %v3104 = vpop.f32.mrb[0].mxu0
  %v3105 = vadd.f32 %v2873, %v3104
  %v3106 = vpop.f32.mrb[0].mxu0
  %3107 = vmatprep.mubr.bf16.mxu0 0
  %3108 = vmatmul.mubr.bf16.gmra.mrb[0].mxu0 %v1294
  %v3109 = vpop.f32.mrb[0].mxu0
  %v3110 = vadd.f32 %v2878, %v3109
  %v3111 = vpop.f32.mrb[0].mxu0
  %v3112 = vpop.f32.mrb[0].mxu0
  %v3113 = vadd.f32 %v2881, %v3112
  %v3114 = vpop.f32.mrb[0].mxu0
  %3115 = vmatprep.mubr.bf16.mxu0 0
  %3116 = vmatmul.mubr.bf16.gmra.mrb[0].mxu0 %v1303
  %v3117 = vpop.f32.mrb[0].mxu0
  %v3118 = vadd.f32 %v2886, %v3117
  %v3119 = vpop.f32.mrb[0].mxu0
  %v3120 = vpop.f32.mrb[0].mxu0
  %v3121 = vadd.f32 %v2889, %v3120
  %v3122 = vpop.f32.mrb[0].mxu0
  %3123 = vmatprep.mubr.bf16.mxu0 0
  %3124 = vmatmul.mubr.bf16.gmra.mrb[0].mxu0 %v1312
  %v3125 = vpop.f32.mrb[0].mxu0
  %v3126 = vadd.f32 %v2894, %v3125
  %v3127 = vpop.f32.mrb[0].mxu0
  %v3128 = vpop.f32.mrb[0].mxu0
  %v3129 = vadd.f32 %v2897, %v3128
  %v3130 = vpop.f32.mrb[0].mxu0
  %3131 = vmatprep.mubr.bf16.mxu0 0
  %3132 = vmatmul.mubr.bf16.gmra.mrb[0].mxu0 %v1321
  %v3133 = vpop.f32.mrb[0].mxu0
  %v3134 = vadd.f32 %v2902, %v3133
  %v3135 = vpop.f32.mrb[0].mxu0
  %v3136 = vpop.f32.mrb[0].mxu0
  %v3137 = vpop.f32.mrb[0].mxu0
  %3138 = vdwg.mxu0
  %v3139 = vpack.c.bf16 %v2945, %v2942
  %v3140 = vpack.c.bf16 %v2953, %v2950
  %v3141 = vpack.c.bf16 %v2961, %v2958
  %v3142 = vpack.c.bf16 %v2969, %v2966
  %v3143 = vpack.c.bf16 %v2977, %v2974
  %v3144 = vpack.c.bf16 %v2985, %v2982
  %v3145 = vpack.c.bf16 %v2993, %v2990
  %v3146 = vpack.c.bf16 %v3001, %v2998
  %v3147 = vpack.c.bf16 %v3009, %v3006
  %v3148 = vpack.c.bf16 %v3017, %v3014
  %v3149 = vpack.c.bf16 %v3025, %v3022
  %v3150 = vpack.c.bf16 %v3033, %v3030
  %v3151 = vpack.c.bf16 %v3041, %v3038
  %v3152 = vpack.c.bf16 %v3049, %v3046
  %v3153 = vpack.c.bf16 %v3057, %v3054
  %v3154 = vpack.c.bf16 %v3065, %v3062
  %v3155 = vpack.c.bf16 %v3073, %v3070
  %v3156 = vpack.c.bf16 %v3081, %v3078
  %v3157 = vpack.c.bf16 %v3089, %v3086
  %v3158 = vpack.c.bf16 %v3097, %v3094
  %v3159 = vpack.c.bf16 %v3105, %v3102
  %v3160 = vpack.c.bf16 %v3113, %v3110
  %v3161 = vpack.c.bf16 %v3121, %v3118
  %v3162 = vpack.c.bf16 %v3129, %v3126
  %v3163 = vpack.c.bf16 %v3134, %v3134
  %v3189 = vunpack.c.l.b16 %v3139
  %v3190 = vunpack.c.h.b16 %v3139
  %v3191 = vunpack.c.l.b16 %v3140
  %v3192 = vunpack.c.h.b16 %v3140
  %v3193 = vunpack.c.l.b16 %v3141
  %v3194 = vunpack.c.h.b16 %v3141
  %v3195 = vunpack.c.l.b16 %v3142
  %v3196 = vunpack.c.h.b16 %v3142
  %v3197 = vunpack.c.l.b16 %v3143
  %v3198 = vunpack.c.h.b16 %v3143
  %v3199 = vunpack.c.l.b16 %v3144
  %v3200 = vunpack.c.h.b16 %v3144
  %v3201 = vunpack.c.l.b16 %v3145
  %v3202 = vunpack.c.h.b16 %v3145
  %v3203 = vunpack.c.l.b16 %v3146
  %v3204 = vunpack.c.h.b16 %v3146
  %v3205 = vunpack.c.l.b16 %v3147
  %v3206 = vunpack.c.h.b16 %v3147
  %v3207 = vunpack.c.l.b16 %v3148
  %v3208 = vunpack.c.h.b16 %v3148
  %v3209 = vunpack.c.l.b16 %v3149
  %v3210 = vunpack.c.h.b16 %v3149
  %v3211 = vunpack.c.l.b16 %v3150
  %v3212 = vunpack.c.h.b16 %v3150
  %v3213 = vunpack.c.l.b16 %v3151
  %v3214 = vunpack.c.h.b16 %v3151
  %v3215 = vunpack.c.l.b16 %v3152
  %v3216 = vunpack.c.h.b16 %v3152
  %v3217 = vunpack.c.l.b16 %v3153
  %v3218 = vunpack.c.h.b16 %v3153
  %v3219 = vunpack.c.l.b16 %v3154
  %v3220 = vunpack.c.h.b16 %v3154
  %v3221 = vunpack.c.l.b16 %v3155
  %v3222 = vunpack.c.h.b16 %v3155
  %v3223 = vunpack.c.l.b16 %v3156
  %v3224 = vunpack.c.h.b16 %v3156
  %v3225 = vunpack.c.l.b16 %v3157
  %v3226 = vunpack.c.h.b16 %v3157
  %v3227 = vunpack.c.l.b16 %v3158
  %v3228 = vunpack.c.h.b16 %v3158
  %v3229 = vunpack.c.l.b16 %v3159
  %v3230 = vunpack.c.h.b16 %v3159
  %v3231 = vunpack.c.l.b16 %v3160
  %v3232 = vunpack.c.h.b16 %v3160
  %v3233 = vunpack.c.l.b16 %v3161
  %v3234 = vunpack.c.h.b16 %v3161
  %v3235 = vunpack.c.l.b16 %v3162
  %v3236 = vunpack.c.h.b16 %v3162
  %v3237 = vunpack.c.l.b16 %v3163
  %v3238 = vpack.c.b16 %v3189, %v3189
  %v3239 = vpack.c.b16 %v3190, %v3190
  %v3240 = vpack.c.b16 %v3191, %v3191
  %v3241 = vpack.c.b16 %v3192, %v3192
  %v3242 = vpack.c.b16 %v3193, %v3193
  %v3243 = vpack.c.b16 %v3194, %v3194
  %v3244 = vpack.c.b16 %v3195, %v3195
  %v3245 = vpack.c.b16 %v3196, %v3196
  %v3246 = vpack.c.b16 %v3197, %v3197
  %v3247 = vpack.c.b16 %v3198, %v3198
  %v3248 = vpack.c.b16 %v3199, %v3199
  %v3249 = vpack.c.b16 %v3200, %v3200
  %v3250 = vpack.c.b16 %v3201, %v3201
  %v3251 = vpack.c.b16 %v3202, %v3202
  %v3252 = vpack.c.b16 %v3203, %v3203
  %v3253 = vpack.c.b16 %v3204, %v3204
  %v3254 = vpack.c.b16 %v3205, %v3205
  %v3255 = vpack.c.b16 %v3206, %v3206
  %v3256 = vpack.c.b16 %v3207, %v3207
  %v3257 = vpack.c.b16 %v3208, %v3208
  %v3258 = vpack.c.b16 %v3209, %v3209
  %v3259 = vpack.c.b16 %v3210, %v3210
  %v3260 = vpack.c.b16 %v3211, %v3211
  %v3261 = vpack.c.b16 %v3212, %v3212
  %v3262 = vpack.c.b16 %v3213, %v3213
  %v3263 = vpack.c.b16 %v3214, %v3214
  %v3264 = vpack.c.b16 %v3215, %v3215
  %v3265 = vpack.c.b16 %v3216, %v3216
  %v3266 = vpack.c.b16 %v3217, %v3217
  %v3267 = vpack.c.b16 %v3218, %v3218
  %v3268 = vpack.c.b16 %v3219, %v3219
  %v3269 = vpack.c.b16 %v3220, %v3220
  %v3270 = vpack.c.b16 %v3221, %v3221
  %v3271 = vpack.c.b16 %v3222, %v3222
  %v3272 = vpack.c.b16 %v3223, %v3223
  %v3273 = vpack.c.b16 %v3224, %v3224
  %v3274 = vpack.c.b16 %v3225, %v3225
  %v3275 = vpack.c.b16 %v3226, %v3226
  %v3276 = vpack.c.b16 %v3227, %v3227
  %v3277 = vpack.c.b16 %v3228, %v3228
  %v3278 = vpack.c.b16 %v3229, %v3229
  %v3279 = vpack.c.b16 %v3230, %v3230
  %v3280 = vpack.c.b16 %v3231, %v3231
  %v3281 = vpack.c.b16 %v3232, %v3232
  %v3282 = vpack.c.b16 %v3233, %v3233
  %v3283 = vpack.c.b16 %v3234, %v3234
  %v3284 = vpack.c.b16 %v3235, %v3235
  %v3285 = vpack.c.b16 %v3236, %v3236
  %v3286 = vpack.c.b16 %v3237, %v3237
  %3336 = vst [vmem:[%s3] sm:$0xf] %v3238
  %3337 = vst [vmem:[%s3 + $0x4] sm:$0xf] %v3239
  %3338 = vst [vmem:[%s3 + $0x8] sm:$0xf] %v3240
  %3339 = vst [vmem:[%s3 + $0xc] sm:$0xf] %v3241
  %3340 = vst [vmem:[%s3 + $0x10] sm:$0xf] %v3242
  %3341 = vst [vmem:[%s3 + $0x14] sm:$0xf] %v3243
  %3342 = vst [vmem:[%s3 + $0x18] sm:$0xf] %v3244
  %3343 = vst [vmem:[%s3 + $0x1c] sm:$0xf] %v3245
  %3344 = vst [vmem:[%s3 + $0x20] sm:$0xf] %v3246
  %3345 = vst [vmem:[%s3 + $0x24] sm:$0xf] %v3247
  %3346 = vst [vmem:[%s3 + $0x28] sm:$0xf] %v3248
  %3347 = vst [vmem:[%s3 + $0x2c] sm:$0xf] %v3249
  %3348 = vst [vmem:[%s3 + $0x30] sm:$0xf] %v3250
  %3349 = vst [vmem:[%s3 + $0x34] sm:$0xf] %v3251
  %3350 = vst [vmem:[%s3 + $0x38] sm:$0xf] %v3252
  %3351 = vst [vmem:[%s3 + $0x3c] sm:$0xf] %v3253
  %3352 = vst [vmem:[%s3 + $0x40] sm:$0xf] %v3254
  %3353 = vst [vmem:[%s3 + $0x44] sm:$0xf] %v3255
  %3354 = vst [vmem:[%s3 + $0x48] sm:$0xf] %v3256
  %3355 = vst [vmem:[%s3 + $0x4c] sm:$0xf] %v3257
  %3356 = vst [vmem:[%s3 + $0x50] sm:$0xf] %v3258
  %3357 = vst [vmem:[%s3 + $0x54] sm:$0xf] %v3259
  %3358 = vst [vmem:[%s3 + $0x58] sm:$0xf] %v3260
  %3359 = vst [vmem:[%s3 + $0x5c] sm:$0xf] %v3261
  %3360 = vst [vmem:[%s3 + $0x60] sm:$0xf] %v3262
  %3361 = vst [vmem:[%s3 + $0x64] sm:$0xf] %v3263
  %3362 = vst [vmem:[%s3 + $0x68] sm:$0xf] %v3264
  %3363 = vst [vmem:[%s3 + $0x6c] sm:$0xf] %v3265
  %3364 = vst [vmem:[%s3 + $0x70] sm:$0xf] %v3266
  %3365 = vst [vmem:[%s3 + $0x74] sm:$0xf] %v3267
  %3366 = vst [vmem:[%s3 + $0x78] sm:$0xf] %v3268
  %3367 = vst [vmem:[%s3 + $0x7c] sm:$0xf] %v3269
  %3368 = vst [vmem:[%s3 + $0x80] sm:$0xf] %v3270
  %3369 = vst [vmem:[%s3 + $0x84] sm:$0xf] %v3271
  %3370 = vst [vmem:[%s3 + $0x88] sm:$0xf] %v3272
  %3371 = vst [vmem:[%s3 + $0x8c] sm:$0xf] %v3273
  %3372 = vst [vmem:[%s3 + $0x90] sm:$0xf] %v3274
  %3373 = vst [vmem:[%s3 + $0x94] sm:$0xf] %v3275
  %3374 = vst [vmem:[%s3 + $0x98] sm:$0xf] %v3276
  %3375 = vst [vmem:[%s3 + $0x9c] sm:$0xf] %v3277
  %3376 = vst [vmem:[%s3 + $0xa0] sm:$0xf] %v3278
  %3377 = vst [vmem:[%s3 + $0xa4] sm:$0xf] %v3279
  %3378 = vst [vmem:[%s3 + $0xa8] sm:$0xf] %v3280
  %3379 = vst [vmem:[%s3 + $0xac] sm:$0xf] %v3281
  %3380 = vst [vmem:[%s3 + $0xb0] sm:$0xf] %v3282
  %3381 = vst [vmem:[%s3 + $0xb4] sm:$0xf] %v3283
  %3382 = vst [vmem:[%s3 + $0xb8] sm:$0xf] %v3284
  %3383 = vst [vmem:[%s3 + $0xbc] sm:$0xf] %v3285
  %3384 = vst [vmem:[%s3 + $0xc0] sm:$0xf] %v3286
  // Predicated region
  $region14: #{deepgcn_slic_v2_forward.11} parent=0 // pred_check
    _
  $region15: #{deepgcn_slic_v2_forward.11} parent=0 // pred_check_branch
    %3386 = sbr.rel (0) target = $region17
  $region16: #{deepgcn_slic_v2_forward.11} parent=0 // pred_region
    _
  $region17: #{deepgcn_slic_v2_forward.11} parent=0 // pred_fallthru
    _
  // Predicated region
  $region18: #{deepgcn_slic_v2_forward.11} parent=0 // pred_check
    _
  $region19: #{deepgcn_slic_v2_forward.11} parent=0 // pred_check_branch
    %3388 = sbr.rel (0) target = $region21
  $region20: #{deepgcn_slic_v2_forward.11} parent=0 // pred_region
    _
  $region21: #{deepgcn_slic_v2_forward.11} parent=0 // pred_fallthru
    _

// kernel: deepgcn_slic_v2_forward.13
$region0: #{deepgcn_slic_v2_forward.13}
  #allocation0 [shape = 'u32[]', space=smem, size = 0x4, offset = 0x4, fixed_abs, tag = 'smem constant byte address 0x4 - core index']
  #allocation1 [shape = 'u32[144,128]{1,0:T(1,128)}', space=vmem, size = 0x12000, scoped, tag = 'internal scratch']
  #allocation2 [shape = 'bf16[392,128]{1,0:T(8,128)(2,1)}', space=vmem, size = 0x18800, scoped, tag = 'scratch operand']
  %s0 = inlined_call_operand.vmem [shape: bf16[392,128], index: 0, kind: input, shape index: {}]
  %s1 = inlined_call_operand.vmem [shape: bf16[2,128,128], index: 1, kind: input, shape index: {}]
  %s2 = inlined_call_operand.vmem [shape: f32[2,1,128], index: 2, kind: input, shape index: {}]
  %s3 = inlined_call_operand.vmem [shape: bf16[2,128,128], index: 3, kind: input, shape index: {}]
  %s4 = inlined_call_operand.vmem [shape: f32[2,1,128], index: 4, kind: input, shape index: {}]
  %s5 = inlined_call_operand.vmem [shape: bf16[2,392,128], index: 5, kind: output, shape index: {}]
  %s6 = sld [smem:[#allocation0]]
  $region57: #{deepgcn_slic_v2_forward.13} parent=0
    _
  %s8 = ssub.s32 1, %s6
  %s9 = scalar_select 0, %s8, %s6
  loop: start=0, step=1, limit=4
  $region2: #{deepgcn_slic_v2_forward.13} parent=0 // loop_pre_header
    _
  $region3: #{deepgcn_slic_v2_forward.13} parent=0 // loop_header
    %s11 = sphi 0, %s15
    %p12 = scmp.ge.s32.totalorder %s11, 4
    %s19 = sphi 0, %s19
    %s21 = sphi 0, %s19
    %s22 = sphi 0, %s21
    %s36 = sphi 0, %s22
    %s42 = sphi 0, %s44
    %s45 = sphi 0, %s42
    %s46 = sphi 0, %s45
    %s62 = sphi 0, %s46
    %s68 = sphi 0, %s70
    %s71 = sphi 0, %s68
    %s72 = sphi 0, %s71
    %s88 = sphi 0, %s72
    %s94 = sphi 0, %s96
    %s97 = sphi 0, %s94
    %s98 = sphi 0, %s97
    %s114 = sphi 0, %s98
    %s120 = sphi 0, %s122
    %s123 = sphi 0, %s120
    %s124 = sphi 0, %s123
    %s140 = sphi 0, %s124
    %s146 = sphi 0, %s148
    %s149 = sphi 0, %s146
    %s150 = sphi 0, %s149
    %s166 = sphi 0, %s150
  $region4: #{deepgcn_slic_v2_forward.13} parent=0 // loop_header_branch
    %14 = sbr.rel (%p12) target = $region8
  $region5: #{deepgcn_slic_v2_forward.13} parent=0 // loop_body
    %s16 = ssub.s32 %s11, 1
    %s17 = ssub.s32 %s11, 2
    %s18 = sadd.s32 %s11, 1
    %s20 = sadd.s32 %s19, 1
    %p23 = scmp.eq.s32.totalorder %s11, 1
    %p24 = scmp.ne.s32.totalorder %s19, %s21
    %p25 = scmp.eq.s32.totalorder %s11, 0
    %p26 = por %p24, %p25
    %p27 = scmp.ne.s32.totalorder %s19, %s21
    %p28 = scmp.eq.s32.totalorder %s16, 1
    %p29 = por %p27, %p28
    %p30 = scmp.ne.s32.totalorder %s21, %s22
    %p31 = scmp.eq.s32.totalorder %s16, 0
    %p32 = por %p30, %p31
    %p33 = scmp.ne.s32.totalorder %s21, %s22
    %p34 = scmp.eq.s32.totalorder %s17, 1
    %p35 = por %p33, %p34
    %p37 = scmp.ne.s32.totalorder %s22, %s36
    %p38 = scmp.eq.s32.totalorder %s17, 0
    %p39 = por %p37, %p38
    %s40 = ssub.s32 %s11, %s18
    %p41 = scmp.eq.s32.totalorder %s40, 0
    %s43 = sadd.s32 %s42, 1
    %s44 = scalar_select %p41, %s42, %s43
    %p47 = pneg %p41
    %p48 = scmp.eq.s32.totalorder %s11, 1
    %p49 = por %p47, %p48
    %p50 = scmp.ne.s32.totalorder %s42, %s45
    %p51 = scmp.eq.s32.totalorder %s11, 0
    %p52 = por %p50, %p51
    %p53 = scmp.ne.s32.totalorder %s42, %s45
    %p54 = scmp.eq.s32.totalorder %s16, 1
    %p55 = por %p53, %p54
    %p56 = scmp.ne.s32.totalorder %s45, %s46
    %p57 = scmp.eq.s32.totalorder %s16, 0
    %p58 = por %p56, %p57
    %p59 = scmp.ne.s32.totalorder %s45, %s46
    %p60 = scmp.eq.s32.totalorder %s17, 1
    %p61 = por %p59, %p60
    %p63 = scmp.ne.s32.totalorder %s46, %s62
    %p64 = scmp.eq.s32.totalorder %s17, 0
    %p65 = por %p63, %p64
    %s66 = ssub.s32 %s11, %s18
    %p67 = scmp.eq.s32.totalorder %s66, 0
    %s69 = sadd.s32 %s68, 1
    %s70 = scalar_select %p67, %s68, %s69
    %p73 = pneg %p67
    %p74 = scmp.eq.s32.totalorder %s11, 1
    %p75 = por %p73, %p74
    %p76 = scmp.ne.s32.totalorder %s68, %s71
    %p77 = scmp.eq.s32.totalorder %s11, 0
    %p78 = por %p76, %p77
    %p79 = scmp.ne.s32.totalorder %s68, %s71
    %p80 = scmp.eq.s32.totalorder %s16, 1
    %p81 = por %p79, %p80
    %p82 = scmp.ne.s32.totalorder %s71, %s72
    %p83 = scmp.eq.s32.totalorder %s16, 0
    %p84 = por %p82, %p83
    %p85 = scmp.ne.s32.totalorder %s71, %s72
    %p86 = scmp.eq.s32.totalorder %s17, 1
    %p87 = por %p85, %p86
    %p89 = scmp.ne.s32.totalorder %s72, %s88
    %p90 = scmp.eq.s32.totalorder %s17, 0
    %p91 = por %p89, %p90
    %s92 = ssub.s32 %s11, %s18
    %p93 = scmp.eq.s32.totalorder %s92, 0
    %s95 = sadd.s32 %s94, 1
    %s96 = scalar_select %p93, %s94, %s95
    %p99 = pneg %p93
    %p100 = scmp.eq.s32.totalorder %s11, 1
    %p101 = por %p99, %p100
    %p102 = scmp.ne.s32.totalorder %s94, %s97
    %p103 = scmp.eq.s32.totalorder %s11, 0
    %p104 = por %p102, %p103
    %p105 = scmp.ne.s32.totalorder %s94, %s97
    %p106 = scmp.eq.s32.totalorder %s16, 1
    %p107 = por %p105, %p106
    %p108 = scmp.ne.s32.totalorder %s97, %s98
    %p109 = scmp.eq.s32.totalorder %s16, 0
    %p110 = por %p108, %p109
    %p111 = scmp.ne.s32.totalorder %s97, %s98
    %p112 = scmp.eq.s32.totalorder %s17, 1
    %p113 = por %p111, %p112
    %p115 = scmp.ne.s32.totalorder %s98, %s114
    %p116 = scmp.eq.s32.totalorder %s17, 0
    %p117 = por %p115, %p116
    %s118 = ssub.s32 %s11, %s18
    %p119 = scmp.eq.s32.totalorder %s118, 0
    %s121 = sadd.s32 %s120, 1
    %s122 = scalar_select %p119, %s120, %s121
    %p125 = pneg %p119
    %p126 = scmp.eq.s32.totalorder %s11, 1
    %p127 = por %p125, %p126
    %p128 = scmp.ne.s32.totalorder %s120, %s123
    %p129 = scmp.eq.s32.totalorder %s11, 0
    %p130 = por %p128, %p129
    %p131 = scmp.ne.s32.totalorder %s120, %s123
    %p132 = scmp.eq.s32.totalorder %s16, 1
    %p133 = por %p131, %p132
    %p134 = scmp.ne.s32.totalorder %s123, %s124
    %p135 = scmp.eq.s32.totalorder %s16, 0
    %p136 = por %p134, %p135
    %p137 = scmp.ne.s32.totalorder %s123, %s124
    %p138 = scmp.eq.s32.totalorder %s17, 1
    %p139 = por %p137, %p138
    %p141 = scmp.ne.s32.totalorder %s124, %s140
    %p142 = scmp.eq.s32.totalorder %s17, 0
    %p143 = por %p141, %p142
    %s144 = ssub.s32 %s11, %s18
    %p145 = scmp.eq.s32.totalorder %s144, 0
    %s147 = sadd.s32 %s146, 1
    %s148 = scalar_select %p145, %s146, %s147
    %p151 = pneg %p145
    %p152 = scmp.eq.s32.totalorder %s11, 1
    %p153 = por %p151, %p152
    %p154 = scmp.ne.s32.totalorder %s146, %s149
    %p155 = scmp.eq.s32.totalorder %s11, 0
    %p156 = por %p154, %p155
    %p157 = scmp.ne.s32.totalorder %s146, %s149
    %p158 = scmp.eq.s32.totalorder %s16, 1
    %p159 = por %p157, %p158
    %p160 = scmp.ne.s32.totalorder %s149, %s150
    %p161 = scmp.eq.s32.totalorder %s16, 0
    %p162 = por %p160, %p161
    %p163 = scmp.ne.s32.totalorder %s149, %s150
    %p164 = scmp.eq.s32.totalorder %s17, 1
    %p165 = por %p163, %p164
    %p167 = scmp.ne.s32.totalorder %s150, %s166
    %p168 = scmp.eq.s32.totalorder %s17, 0
    %p169 = por %p167, %p168
    %p170 = scmp.le.s32.totalorder 1, %s11
    %p171 = scmp.lt.s32.totalorder %s11, 3
    %p172 = pnand %p170, %p171
    %p173 = pneg %p172
    // Predicated region
    $region9: #{deepgcn_slic_v2_forward.13} parent=5 // pred_check
      _
    $region10: #{deepgcn_slic_v2_forward.13} parent=5 // pred_check_branch
      %175 = sbr.rel (%p172) target = $region12
    $region11: #{deepgcn_slic_v2_forward.13} parent=5 // pred_region
      %s176 = ssub.s32 %s11, 1
      // Predicated region
      $region13: #{deepgcn_slic_v2_forward.13} parent=11 // pred_check
        %p177 = pneg %p32
      $region14: #{deepgcn_slic_v2_forward.13} parent=11 // pred_check_branch
        %179 = sbr.rel (%p177) target = $region16
      $region15: #{deepgcn_slic_v2_forward.13} parent=11 // pred_region
        _
      $region16: #{deepgcn_slic_v2_forward.13} parent=11 // pred_fallthru
        _
    $region12: #{deepgcn_slic_v2_forward.13} parent=5 // pred_fallthru
      _
    %p180 = scmp.lt.s32.totalorder %s11, 2
    // Predicated region
    $region17: #{deepgcn_slic_v2_forward.13} parent=5 // pred_check
      %p181 = pneg %p180
    $region18: #{deepgcn_slic_v2_forward.13} parent=5 // pred_check_branch
      %183 = sbr.rel (%p181) target = $region20
    $region19: #{deepgcn_slic_v2_forward.13} parent=5 // pred_region
      // Predicated region
      $region21: #{deepgcn_slic_v2_forward.13} parent=19 // pred_check
        %p184 = pneg %p52
      $region22: #{deepgcn_slic_v2_forward.13} parent=19 // pred_check_branch
        %186 = sbr.rel (%p184) target = $region24
      $region23: #{deepgcn_slic_v2_forward.13} parent=19 // pred_region
        %p187 = scmp.lt.s32.totalorder %s11, 1
        %s188 = scalar_select %p187, %s11, 1
        %s189 = smul.addr %s188, 16
        %s190 = smul.addr %s189, 4
        %s191 = scalar_lea.vmem %s1, %s190
      $region24: #{deepgcn_slic_v2_forward.13} parent=19 // pred_fallthru
        _
      // Predicated region
      $region25: #{deepgcn_slic_v2_forward.13} parent=19 // pred_check
        %p192 = pneg %p78
      $region26: #{deepgcn_slic_v2_forward.13} parent=19 // pred_check_branch
        %194 = sbr.rel (%p192) target = $region28
      $region27: #{deepgcn_slic_v2_forward.13} parent=19 // pred_region
        %p195 = scmp.lt.s32.totalorder %s11, 1
        %s196 = scalar_select %p195, %s11, 1
        %s197 = scalar_lea.vmem %s2, %s196
      $region28: #{deepgcn_slic_v2_forward.13} parent=19 // pred_fallthru
        _
      // Predicated region
      $region29: #{deepgcn_slic_v2_forward.13} parent=19 // pred_check
        %p198 = pneg %p104
      $region30: #{deepgcn_slic_v2_forward.13} parent=19 // pred_check_branch
        %200 = sbr.rel (%p198) target = $region32
      $region31: #{deepgcn_slic_v2_forward.13} parent=19 // pred_region
        %p201 = scmp.lt.s32.totalorder %s11, 1
        %s202 = scalar_select %p201, %s11, 1
        %s203 = smul.addr %s202, 16
        %s204 = smul.addr %s203, 4
        %s205 = scalar_lea.vmem %s3, %s204
      $region32: #{deepgcn_slic_v2_forward.13} parent=19 // pred_fallthru
        _
      // Predicated region
      $region33: #{deepgcn_slic_v2_forward.13} parent=19 // pred_check
        %p206 = pneg %p130
      $region34: #{deepgcn_slic_v2_forward.13} parent=19 // pred_check_branch
        %208 = sbr.rel (%p206) target = $region36
      $region35: #{deepgcn_slic_v2_forward.13} parent=19 // pred_region
        %p209 = scmp.lt.s32.totalorder %s11, 1
        %s210 = scalar_select %p209, %s11, 1
        %s211 = scalar_lea.vmem %s4, %s210
      $region36: #{deepgcn_slic_v2_forward.13} parent=19 // pred_fallthru
        _
    $region20: #{deepgcn_slic_v2_forward.13} parent=5 // pred_fallthru
      _
    %p212 = scmp.le.s32.totalorder 1, %s11
    %p213 = scmp.lt.s32.totalorder %s11, 3
    %p214 = pnand %p212, %p213
    %p215 = pneg %p214
    // Predicated region
    $region37: #{deepgcn_slic_v2_forward.13} parent=5 // pred_check
      _
    $region38: #{deepgcn_slic_v2_forward.13} parent=5 // pred_check_branch
      %217 = sbr.rel (%p214) target = $region40
    $region39: #{deepgcn_slic_v2_forward.13} parent=5 // pred_region
      %s218 = ssub.s32 %s11, 1
      %p219 = pneg %p32
      %p220 = pneg %p29
      %p221 = scmp.lt.s32.totalorder %s16, 1
      %s222 = scalar_select %p221, %s16, 1
      %s223 = smul.addr %s222, 16
      %s224 = smul.addr %s223, 4
      %s225 = scalar_lea.vmem %s1, %s224
      %p226 = pneg %p58
      %p227 = pneg %p55
      %p228 = scmp.lt.s32.totalorder %s16, 1
      %s229 = scalar_select %p228, %s16, 1
      %s230 = scalar_lea.vmem %s2, %s229
      %p231 = pneg %p84
      %p232 = pneg %p81
      %p233 = scmp.lt.s32.totalorder %s16, 1
      %s234 = scalar_select %p233, %s16, 1
      %s235 = smul.addr %s234, 16
      %s236 = smul.addr %s235, 4
      %s237 = scalar_lea.vmem %s3, %s236
      %p238 = pneg %p110
      %p239 = pneg %p107
      %p240 = scmp.lt.s32.totalorder %s16, 1
      %s241 = scalar_select %p240, %s16, 1
      %s242 = scalar_lea.vmem %s4, %s241
      %p243 = pneg %p136
      %p244 = pneg %p133
      %p245 = pneg %p162
      %p246 = pneg %p159
      %p247 = scmp.lt.s32.totalorder %s16, 1
      %s248 = scalar_select %p247, %s16, 1
      %s249 = smul.addr %s248, 49
      %s250 = smul.addr %s249, 4
      %s251 = scalar_lea.vmem %s5, %s250
      %p252 = scmp.lt.s32.totalorder %s16, 1
      %s253 = scalar_select %p252, %s16, 1
      %s254 = smul.addr %s253, 16
      %s255 = smul.addr %s254, 4
      %s256 = scalar_lea.vmem %s1, %s255
      %p257 = scmp.lt.s32.totalorder %s16, 1
      %s258 = scalar_select %p257, %s16, 1
      %s259 = scalar_lea.vmem %s2, %s258
      %p260 = scmp.lt.s32.totalorder %s16, 1
      %s261 = scalar_select %p260, %s16, 1
      %s262 = smul.addr %s261, 16
      %s263 = smul.addr %s262, 4
      %s264 = scalar_lea.vmem %s3, %s263
      %p265 = scmp.lt.s32.totalorder %s16, 1
      %s266 = scalar_select %p265, %s16, 1
      %s267 = scalar_lea.vmem %s4, %s266
      %p268 = scmp.lt.s32.totalorder %s16, 1
      %s269 = scalar_select %p268, %s16, 1
      %s270 = smul.addr %s269, 49
      %s271 = smul.addr %s270, 4
      %s272 = scalar_lea.vmem %s5, %s271
      %p274 = scmp.eq.s32.totalorder %s16, 0
      // Predicated region
      $region41: #{deepgcn_slic_v2_forward.13} parent=39 // pred_check
        %p275 = pneg %p274
      $region42: #{deepgcn_slic_v2_forward.13} parent=39 // pred_check_branch
        %277 = sbr.rel (%p275) target = $region44
      $region43: #{deepgcn_slic_v2_forward.13} parent=39 // pred_region
        %v278 = vld [vmem:[%s0] sm:$0xf]
        %v279 = vld [vmem:[%s0 + $0x4] sm:$0xf]
        %v280 = vld [vmem:[%s0 + $0x8] sm:$0xf]
        %v281 = vld [vmem:[%s0 + $0xc] sm:$0xf]
        %v282 = vld [vmem:[%s0 + $0x10] sm:$0xf]
        %v283 = vld [vmem:[%s0 + $0x14] sm:$0xf]
        %v284 = vld [vmem:[%s0 + $0x18] sm:$0xf]
        %v285 = vld [vmem:[%s0 + $0x1c] sm:$0xf]
        %v286 = vld [vmem:[%s0 + $0x20] sm:$0xf]
        %v287 = vld [vmem:[%s0 + $0x24] sm:$0xf]
        %v288 = vld [vmem:[%s0 + $0x28] sm:$0xf]
        %v289 = vld [vmem:[%s0 + $0x2c] sm:$0xf]
        %v290 = vld [vmem:[%s0 + $0x30] sm:$0xf]
        %v291 = vld [vmem:[%s0 + $0x34] sm:$0xf]
        %v292 = vld [vmem:[%s0 + $0x38] sm:$0xf]
        %v293 = vld [vmem:[%s0 + $0x3c] sm:$0xf]
        %v294 = vld [vmem:[%s0 + $0x40] sm:$0xf]
        %v295 = vld [vmem:[%s0 + $0x44] sm:$0xf]
        %v296 = vld [vmem:[%s0 + $0x48] sm:$0xf]
        %v297 = vld [vmem:[%s0 + $0x4c] sm:$0xf]
        %v298 = vld [vmem:[%s0 + $0x50] sm:$0xf]
        %v299 = vld [vmem:[%s0 + $0x54] sm:$0xf]
        %v300 = vld [vmem:[%s0 + $0x58] sm:$0xf]
        %v301 = vld [vmem:[%s0 + $0x5c] sm:$0xf]
        %v302 = vld [vmem:[%s0 + $0x60] sm:$0xf]
        %v303 = vld [vmem:[%s0 + $0x64] sm:$0xf]
        %v304 = vld [vmem:[%s0 + $0x68] sm:$0xf]
        %v305 = vld [vmem:[%s0 + $0x6c] sm:$0xf]
        %v306 = vld [vmem:[%s0 + $0x70] sm:$0xf]
        %v307 = vld [vmem:[%s0 + $0x74] sm:$0xf]
        %v308 = vld [vmem:[%s0 + $0x78] sm:$0xf]
        %v309 = vld [vmem:[%s0 + $0x7c] sm:$0xf]
        %v310 = vld [vmem:[%s0 + $0x80] sm:$0xf]
        %v311 = vld [vmem:[%s0 + $0x84] sm:$0xf]
        %v312 = vld [vmem:[%s0 + $0x88] sm:$0xf]
        %v313 = vld [vmem:[%s0 + $0x8c] sm:$0xf]
        %v314 = vld [vmem:[%s0 + $0x90] sm:$0xf]
        %v315 = vld [vmem:[%s0 + $0x94] sm:$0xf]
        %v316 = vld [vmem:[%s0 + $0x98] sm:$0xf]
        %v317 = vld [vmem:[%s0 + $0x9c] sm:$0xf]
        %v318 = vld [vmem:[%s0 + $0xa0] sm:$0xf]
        %v319 = vld [vmem:[%s0 + $0xa4] sm:$0xf]
        %v320 = vld [vmem:[%s0 + $0xa8] sm:$0xf]
        %v321 = vld [vmem:[%s0 + $0xac] sm:$0xf]
        %v322 = vld [vmem:[%s0 + $0xb0] sm:$0xf]
        %v323 = vld [vmem:[%s0 + $0xb4] sm:$0xf]
        %v324 = vld [vmem:[%s0 + $0xb8] sm:$0xf]
        %v325 = vld [vmem:[%s0 + $0xbc] sm:$0xf]
        %v326 = vld [vmem:[%s0 + $0xc0] sm:$0xf]
        %327 = vst [vmem:[#allocation2] sm:$0xf] %v278
        %328 = vst [vmem:[#allocation2 + $0x4] sm:$0xf] %v279
        %329 = vst [vmem:[#allocation2 + $0x8] sm:$0xf] %v280
        %330 = vst [vmem:[#allocation2 + $0xc] sm:$0xf] %v281
        %331 = vst [vmem:[#allocation2 + $0x10] sm:$0xf] %v282
        %332 = vst [vmem:[#allocation2 + $0x14] sm:$0xf] %v283
        %333 = vst [vmem:[#allocation2 + $0x18] sm:$0xf] %v284
        %334 = vst [vmem:[#allocation2 + $0x1c] sm:$0xf] %v285
        %335 = vst [vmem:[#allocation2 + $0x20] sm:$0xf] %v286
        %336 = vst [vmem:[#allocation2 + $0x24] sm:$0xf] %v287
        %337 = vst [vmem:[#allocation2 + $0x28] sm:$0xf] %v288
        %338 = vst [vmem:[#allocation2 + $0x2c] sm:$0xf] %v289
        %339 = vst [vmem:[#allocation2 + $0x30] sm:$0xf] %v290
        %340 = vst [vmem:[#allocation2 + $0x34] sm:$0xf] %v291
        %341 = vst [vmem:[#allocation2 + $0x38] sm:$0xf] %v292
        %342 = vst [vmem:[#allocation2 + $0x3c] sm:$0xf] %v293
        %343 = vst [vmem:[#allocation2 + $0x40] sm:$0xf] %v294
        %344 = vst [vmem:[#allocation2 + $0x44] sm:$0xf] %v295
        %345 = vst [vmem:[#allocation2 + $0x48] sm:$0xf] %v296
        %346 = vst [vmem:[#allocation2 + $0x4c] sm:$0xf] %v297
        %347 = vst [vmem:[#allocation2 + $0x50] sm:$0xf] %v298
        %348 = vst [vmem:[#allocation2 + $0x54] sm:$0xf] %v299
        %349 = vst [vmem:[#allocation2 + $0x58] sm:$0xf] %v300
        %350 = vst [vmem:[#allocation2 + $0x5c] sm:$0xf] %v301
        %351 = vst [vmem:[#allocation2 + $0x60] sm:$0xf] %v302
        %352 = vst [vmem:[#allocation2 + $0x64] sm:$0xf] %v303
        %353 = vst [vmem:[#allocation2 + $0x68] sm:$0xf] %v304
        %354 = vst [vmem:[#allocation2 + $0x6c] sm:$0xf] %v305
        %355 = vst [vmem:[#allocation2 + $0x70] sm:$0xf] %v306
        %356 = vst [vmem:[#allocation2 + $0x74] sm:$0xf] %v307
        %357 = vst [vmem:[#allocation2 + $0x78] sm:$0xf] %v308
        %358 = vst [vmem:[#allocation2 + $0x7c] sm:$0xf] %v309
        %359 = vst [vmem:[#allocation2 + $0x80] sm:$0xf] %v310
        %360 = vst [vmem:[#allocation2 + $0x84] sm:$0xf] %v311
        %361 = vst [vmem:[#allocation2 + $0x88] sm:$0xf] %v312
        %362 = vst [vmem:[#allocation2 + $0x8c] sm:$0xf] %v313
        %363 = vst [vmem:[#allocation2 + $0x90] sm:$0xf] %v314
        %364 = vst [vmem:[#allocation2 + $0x94] sm:$0xf] %v315
        %365 = vst [vmem:[#allocation2 + $0x98] sm:$0xf] %v316
        %366 = vst [vmem:[#allocation2 + $0x9c] sm:$0xf] %v317
        %367 = vst [vmem:[#allocation2 + $0xa0] sm:$0xf] %v318
        %368 = vst [vmem:[#allocation2 + $0xa4] sm:$0xf] %v319
        %369 = vst [vmem:[#allocation2 + $0xa8] sm:$0xf] %v320
        %370 = vst [vmem:[#allocation2 + $0xac] sm:$0xf] %v321
        %371 = vst [vmem:[#allocation2 + $0xb0] sm:$0xf] %v322
        %372 = vst [vmem:[#allocation2 + $0xb4] sm:$0xf] %v323
        %373 = vst [vmem:[#allocation2 + $0xb8] sm:$0xf] %v324
        %374 = vst [vmem:[#allocation2 + $0xbc] sm:$0xf] %v325
        %375 = vst [vmem:[#allocation2 + $0xc0] sm:$0xf] %v326
      $region44: #{deepgcn_slic_v2_forward.13} parent=39 // pred_fallthru
        _
      %v376 = vld [vmem:[#allocation2] sm:$0xf]
      %v377 = vld [vmem:[#allocation2 + $0x4] sm:$0xf]
      %v378 = vld [vmem:[#allocation2 + $0x8] sm:$0xf]
      %v379 = vld [vmem:[#allocation2 + $0xc] sm:$0xf]
      %v380 = vld [vmem:[#allocation2 + $0x10] sm:$0xf]
      %v381 = vld [vmem:[#allocation2 + $0x14] sm:$0xf]
      %v382 = vld [vmem:[#allocation2 + $0x18] sm:$0xf]
      %v383 = vld [vmem:[#allocation2 + $0x1c] sm:$0xf]
      %v384 = vld [vmem:[#allocation2 + $0x20] sm:$0xf]
      %v385 = vld [vmem:[#allocation2 + $0x24] sm:$0xf]
      %v386 = vld [vmem:[#allocation2 + $0x28] sm:$0xf]
      %v387 = vld [vmem:[#allocation2 + $0x2c] sm:$0xf]
      %v388 = vld [vmem:[#allocation2 + $0x30] sm:$0xf]
      %v389 = vld [vmem:[#allocation2 + $0x34] sm:$0xf]
      %v390 = vld [vmem:[#allocation2 + $0x38] sm:$0xf]
      %v391 = vld [vmem:[#allocation2 + $0x3c] sm:$0xf]
      %v392 = vld [vmem:[#allocation2 + $0x40] sm:$0xf]
      %v393 = vld [vmem:[#allocation2 + $0x44] sm:$0xf]
      %v394 = vld [vmem:[#allocation2 + $0x48] sm:$0xf]
      %v395 = vld [vmem:[#allocation2 + $0x4c] sm:$0xf]
      %v396 = vld [vmem:[#allocation2 + $0x50] sm:$0xf]
      %v397 = vld [vmem:[#allocation2 + $0x54] sm:$0xf]
      %v398 = vld [vmem:[#allocation2 + $0x58] sm:$0xf]
      %v399 = vld [vmem:[#allocation2 + $0x5c] sm:$0xf]
      %v400 = vld [vmem:[#allocation2 + $0x60] sm:$0xf]
      %v401 = vld [vmem:[#allocation2 + $0x64] sm:$0xf]
      %v402 = vld [vmem:[#allocation2 + $0x68] sm:$0xf]
      %v403 = vld [vmem:[#allocation2 + $0x6c] sm:$0xf]
      %v404 = vld [vmem:[#allocation2 + $0x70] sm:$0xf]
      %v405 = vld [vmem:[#allocation2 + $0x74] sm:$0xf]
      %v406 = vld [vmem:[#allocation2 + $0x78] sm:$0xf]
      %v407 = vld [vmem:[#allocation2 + $0x7c] sm:$0xf]
      %v408 = vld [vmem:[#allocation2 + $0x80] sm:$0xf]
      %v409 = vld [vmem:[#allocation2 + $0x84] sm:$0xf]
      %v410 = vld [vmem:[#allocation2 + $0x88] sm:$0xf]
      %v411 = vld [vmem:[#allocation2 + $0x8c] sm:$0xf]
      %v412 = vld [vmem:[#allocation2 + $0x90] sm:$0xf]
      %v413 = vld [vmem:[#allocation2 + $0x94] sm:$0xf]
      %v414 = vld [vmem:[#allocation2 + $0x98] sm:$0xf]
      %v415 = vld [vmem:[#allocation2 + $0x9c] sm:$0xf]
      %v416 = vld [vmem:[#allocation2 + $0xa0] sm:$0xf]
      %v417 = vld [vmem:[#allocation2 + $0xa4] sm:$0xf]
      %v418 = vld [vmem:[#allocation2 + $0xa8] sm:$0xf]
      %v419 = vld [vmem:[#allocation2 + $0xac] sm:$0xf]
      %v420 = vld [vmem:[#allocation2 + $0xb0] sm:$0xf]
      %v421 = vld [vmem:[#allocation2 + $0xb4] sm:$0xf]
      %v422 = vld [vmem:[#allocation2 + $0xb8] sm:$0xf]
      %v423 = vld [vmem:[#allocation2 + $0xbc] sm:$0xf]
      %v424 = vld [vmem:[#allocation2 + $0xc0] sm:$0xf]
      %v425 = vld [vmem:[%s256] sm:$0xf]
      %v426 = vld [vmem:[%s256 + $0x4] sm:$0xf]
      %v427 = vld [vmem:[%s256 + $0x8] sm:$0xf]
      %v428 = vld [vmem:[%s256 + $0xc] sm:$0xf]
      %v429 = vld [vmem:[%s256 + $0x10] sm:$0xf]
      %v430 = vld [vmem:[%s256 + $0x14] sm:$0xf]
      %v431 = vld [vmem:[%s256 + $0x18] sm:$0xf]
      %v432 = vld [vmem:[%s256 + $0x1c] sm:$0xf]
      %v433 = vld [vmem:[%s256 + $0x20] sm:$0xf]
      %v434 = vld [vmem:[%s256 + $0x24] sm:$0xf]
      %v435 = vld [vmem:[%s256 + $0x28] sm:$0xf]
      %v436 = vld [vmem:[%s256 + $0x2c] sm:$0xf]
      %v437 = vld [vmem:[%s256 + $0x30] sm:$0xf]
      %v438 = vld [vmem:[%s256 + $0x34] sm:$0xf]
      %v439 = vld [vmem:[%s256 + $0x38] sm:$0xf]
      %v440 = vld [vmem:[%s256 + $0x3c] sm:$0xf]
      %v441 = vld [vmem:[%s259] sm:$0x1]
      %v443 = vlaneseq
      %v444 = vshrl.u32 %v443, 7
      %v445 = vsub.s32 0, %v444
      %v446 = vrot.slane %v441, %v445
      %v497 = vunpack.c.l.b16 %v376
      %v498 = vunpack.c.l.b16 %v377
      %v499 = vunpack.c.l.b16 %v378
      %v500 = vunpack.c.l.b16 %v379
      %v501 = vunpack.c.l.b16 %v380
      %v502 = vunpack.c.l.b16 %v381
      %v503 = vunpack.c.l.b16 %v382
      %v504 = vunpack.c.l.b16 %v383
      %v505 = vunpack.c.l.b16 %v384
      %v506 = vunpack.c.l.b16 %v385
      %v507 = vunpack.c.l.b16 %v386
      %v508 = vunpack.c.l.b16 %v387
      %v509 = vunpack.c.l.b16 %v388
      %v510 = vunpack.c.l.b16 %v389
      %v511 = vunpack.c.l.b16 %v390
      %v512 = vunpack.c.l.b16 %v391
      %v513 = vunpack.c.l.b16 %v392
      %v514 = vunpack.c.l.b16 %v393
      %v515 = vunpack.c.l.b16 %v394
      %v516 = vunpack.c.l.b16 %v395
      %v517 = vunpack.c.l.b16 %v396
      %v518 = vunpack.c.l.b16 %v397
      %v519 = vunpack.c.l.b16 %v398
      %v520 = vunpack.c.l.b16 %v399
      %v521 = vunpack.c.l.b16 %v400
      %v522 = vunpack.c.l.b16 %v401
      %v523 = vunpack.c.l.b16 %v402
      %v524 = vunpack.c.l.b16 %v403
      %v525 = vunpack.c.l.b16 %v404
      %v526 = vunpack.c.l.b16 %v405
      %v527 = vunpack.c.l.b16 %v406
      %v528 = vunpack.c.l.b16 %v407
      %v529 = vunpack.c.l.b16 %v408
      %v530 = vunpack.c.l.b16 %v409
      %v531 = vunpack.c.l.b16 %v410
      %v532 = vunpack.c.l.b16 %v411
      %v533 = vunpack.c.l.b16 %v412
      %v534 = vunpack.c.l.b16 %v413
      %v535 = vunpack.c.l.b16 %v414
      %v536 = vunpack.c.l.b16 %v415
      %v537 = vunpack.c.l.b16 %v416
      %v538 = vunpack.c.l.b16 %v417
      %v539 = vunpack.c.l.b16 %v418
      %v540 = vunpack.c.l.b16 %v419
      %v541 = vunpack.c.l.b16 %v420
      %v542 = vunpack.c.l.b16 %v421
      %v543 = vunpack.c.l.b16 %v422
      %v544 = vunpack.c.l.b16 %v423
      %v545 = vunpack.c.l.b16 %v424
      %v546 = vpack.c.b16 %v498, %v497
      %v547 = vpack.c.b16 %v500, %v499
      %v548 = vpack.c.b16 %v502, %v501
      %v549 = vpack.c.b16 %v504, %v503
      %v550 = vpack.c.b16 %v506, %v505
      %v551 = vpack.c.b16 %v508, %v507
      %v552 = vpack.c.b16 %v510, %v509
      %v553 = vpack.c.b16 %v512, %v511
      %v554 = vpack.c.b16 %v514, %v513
      %v555 = vpack.c.b16 %v516, %v515
      %v556 = vpack.c.b16 %v518, %v517
      %v557 = vpack.c.b16 %v520, %v519
      %v558 = vpack.c.b16 %v522, %v521
      %v559 = vpack.c.b16 %v524, %v523
      %v560 = vpack.c.b16 %v526, %v525
      %v561 = vpack.c.b16 %v528, %v527
      %v562 = vpack.c.b16 %v530, %v529
      %v563 = vpack.c.b16 %v532, %v531
      %v564 = vpack.c.b16 %v534, %v533
      %v565 = vpack.c.b16 %v536, %v535
      %v566 = vpack.c.b16 %v538, %v537
      %v567 = vpack.c.b16 %v540, %v539
      %v568 = vpack.c.b16 %v542, %v541
      %v569 = vpack.c.b16 %v544, %v543
      %v570 = vpack.c.b16 %v545, %v545
      %v612 = vunpack.c.l.b16 %v425
      %v613 = vunpack.c.l.b16 %v426
      %v614 = vunpack.c.l.b16 %v427
      %v615 = vunpack.c.l.b16 %v428
      %v616 = vunpack.c.l.b16 %v429
      %v617 = vunpack.c.l.b16 %v430
      %v618 = vunpack.c.l.b16 %v431
      %v619 = vunpack.c.l.b16 %v432
      %v620 = vunpack.c.l.b16 %v433
      %v621 = vunpack.c.l.b16 %v434
      %v622 = vunpack.c.l.b16 %v435
      %v623 = vunpack.c.l.b16 %v436
      %v624 = vunpack.c.l.b16 %v437
      %v625 = vunpack.c.l.b16 %v438
      %v626 = vunpack.c.l.b16 %v439
      %v627 = vunpack.c.l.b16 %v440
      %v628 = vpack.c.b16 %v613, %v612
      %v629 = vpack.c.b16 %v615, %v614
      %v630 = vpack.c.b16 %v617, %v616
      %v631 = vpack.c.b16 %v619, %v618
      %v632 = vpack.c.b16 %v621, %v620
      %v633 = vpack.c.b16 %v623, %v622
      %v634 = vpack.c.b16 %v625, %v624
      %v635 = vpack.c.b16 %v627, %v626
      %644 = vmatprep.subr.bf16.mxu0 0
      %645 = vmatpush1.bf16.msra.mxu0 %v628
      %646 = vmatprep.subr.bf16.mxu0 0
      %647 = vmatpush1.bf16.msra.mxu0 %v629
      %648 = vmatprep.subr.bf16.mxu0 0
      %649 = vmatpush1.bf16.msra.mxu0 %v630
      %650 = vmatprep.subr.bf16.mxu0 0
      %651 = vmatpush1.bf16.msra.mxu0 %v631
      %652 = vmatprep.subr.bf16.mxu0 0
      %653 = vmatpush1.bf16.msra.mxu0 %v632
      %654 = vmatprep.subr.bf16.mxu0 0
      %655 = vmatpush1.bf16.msra.mxu0 %v633
      %656 = vmatprep.subr.bf16.mxu0 0
      %657 = vmatpush1.bf16.msra.mxu0 %v634
      %658 = vmatprep.subr.bf16.mxu0 0
      %659 = vmatpush1.bf16.msra.mxu0 %v635
      %660 = vmatprep.subr.bf16.mxu0 0
      %661 = vmatpush1.bf16.msra.mxu0 0
      %662 = vmatprep.subr.bf16.mxu0 0
      %663 = vmatpush1.bf16.msra.mxu0 0
      %664 = vmatprep.subr.bf16.mxu0 0
      %665 = vmatpush1.bf16.msra.mxu0 0
      %666 = vmatprep.subr.bf16.mxu0 0
      %667 = vmatpush1.bf16.msra.mxu0 0
      %668 = vmatprep.subr.bf16.mxu0 0
      %669 = vmatpush1.bf16.msra.mxu0 0
      %670 = vmatprep.subr.bf16.mxu0 0
      %671 = vmatpush1.bf16.msra.mxu0 0
      %672 = vmatprep.subr.bf16.mxu0 0
      %673 = vmatpush1.bf16.msra.mxu0 0
      %674 = vmatprep.subr.bf16.mxu0 0
      %675 = vmatpush1.bf16.msra.mxu0 0
      %676 = vmatprep.mubr.bf16.mxu0 0
      %677 = vmatmul.mubr.bf16.gmra.mrb[0].mxu0 %v546
      %v678 = vpop.f32.mrb[0].mxu0
      %v679 = vadd.f32 %v446, %v678
      %v680 = vpop.f32.mrb[0].mxu0
      %v681 = vpop.f32.mrb[0].mxu0
      %v682 = vadd.f32 %v446, %v681
      %v683 = vpop.f32.mrb[0].mxu0
      %684 = vmatprep.mubr.bf16.mxu0 0
      %685 = vmatmul.mubr.bf16.gmra.mrb[0].mxu0 %v547
      %v686 = vpop.f32.mrb[0].mxu0
      %v687 = vadd.f32 %v446, %v686
      %v688 = vpop.f32.mrb[0].mxu0
      %v689 = vpop.f32.mrb[0].mxu0
      %v690 = vadd.f32 %v446, %v689
      %v691 = vpop.f32.mrb[0].mxu0
      %692 = vmatprep.mubr.bf16.mxu0 0
      %693 = vmatmul.mubr.bf16.gmra.mrb[0].mxu0 %v548
      %v694 = vpop.f32.mrb[0].mxu0
      %v695 = vadd.f32 %v446, %v694
      %v696 = vpop.f32.mrb[0].mxu0
      %v697 = vpop.f32.mrb[0].mxu0
      %v698 = vadd.f32 %v446, %v697
      %v699 = vpop.f32.mrb[0].mxu0
      %700 = vmatprep.mubr.bf16.mxu0 0
      %701 = vmatmul.mubr.bf16.gmra.mrb[0].mxu0 %v549
      %v702 = vpop.f32.mrb[0].mxu0
      %v703 = vadd.f32 %v446, %v702
      %v704 = vpop.f32.mrb[0].mxu0
      %v705 = vpop.f32.mrb[0].mxu0
      %v706 = vadd.f32 %v446, %v705
      %v707 = vpop.f32.mrb[0].mxu0
      %708 = vmatprep.mubr.bf16.mxu0 0
      %709 = vmatmul.mubr.bf16.gmra.mrb[0].mxu0 %v550
      %v710 = vpop.f32.mrb[0].mxu0
      %v711 = vadd.f32 %v446, %v710
      %v712 = vpop.f32.mrb[0].mxu0
      %v713 = vpop.f32.mrb[0].mxu0
      %v714 = vadd.f32 %v446, %v713
      %v715 = vpop.f32.mrb[0].mxu0
      %716 = vmatprep.mubr.bf16.mxu0 0
      %717 = vmatmul.mubr.bf16.gmra.mrb[0].mxu0 %v551
      %v718 = vpop.f32.mrb[0].mxu0
      %v719 = vadd.f32 %v446, %v718
      %v720 = vpop.f32.mrb[0].mxu0
      %v721 = vpop.f32.mrb[0].mxu0
      %v722 = vadd.f32 %v446, %v721
      %v723 = vpop.f32.mrb[0].mxu0
      %724 = vmatprep.mubr.bf16.mxu0 0
      %725 = vmatmul.mubr.bf16.gmra.mrb[0].mxu0 %v552
      %v726 = vpop.f32.mrb[0].mxu0
      %v727 = vadd.f32 %v446, %v726
      %v728 = vpop.f32.mrb[0].mxu0
      %v729 = vpop.f32.mrb[0].mxu0
      %v730 = vadd.f32 %v446, %v729
      %v731 = vpop.f32.mrb[0].mxu0
      %732 = vmatprep.mubr.bf16.mxu0 0
      %733 = vmatmul.mubr.bf16.gmra.mrb[0].mxu0 %v553
      %v734 = vpop.f32.mrb[0].mxu0
      %v735 = vadd.f32 %v446, %v734
      %v736 = vpop.f32.mrb[0].mxu0
      %v737 = vpop.f32.mrb[0].mxu0
      %v738 = vadd.f32 %v446, %v737
      %v739 = vpop.f32.mrb[0].mxu0
      %740 = vmatprep.mubr.bf16.mxu0 0
      %741 = vmatmul.mubr.bf16.gmra.mrb[0].mxu0 %v554
      %v742 = vpop.f32.mrb[0].mxu0
      %v743 = vadd.f32 %v446, %v742
      %v744 = vpop.f32.mrb[0].mxu0
      %v745 = vpop.f32.mrb[0].mxu0
      %v746 = vadd.f32 %v446, %v745
      %v747 = vpop.f32.mrb[0].mxu0
      %748 = vmatprep.mubr.bf16.mxu0 0
      %749 = vmatmul.mubr.bf16.gmra.mrb[0].mxu0 %v555
      %v750 = vpop.f32.mrb[0].mxu0
      %v751 = vadd.f32 %v446, %v750
      %v752 = vpop.f32.mrb[0].mxu0
      %v753 = vpop.f32.mrb[0].mxu0
      %v754 = vadd.f32 %v446, %v753
      %v755 = vpop.f32.mrb[0].mxu0
      %756 = vmatprep.mubr.bf16.mxu0 0
      %757 = vmatmul.mubr.bf16.gmra.mrb[0].mxu0 %v556
      %v758 = vpop.f32.mrb[0].mxu0
      %v759 = vadd.f32 %v446, %v758
      %v760 = vpop.f32.mrb[0].mxu0
      %v761 = vpop.f32.mrb[0].mxu0
      %v762 = vadd.f32 %v446, %v761
      %v763 = vpop.f32.mrb[0].mxu0
      %764 = vmatprep.mubr.bf16.mxu0 0
      %765 = vmatmul.mubr.bf16.gmra.mrb[0].mxu0 %v557
      %v766 = vpop.f32.mrb[0].mxu0
      %v767 = vadd.f32 %v446, %v766
      %v768 = vpop.f32.mrb[0].mxu0
      %v769 = vpop.f32.mrb[0].mxu0
      %v770 = vadd.f32 %v446, %v769
      %v771 = vpop.f32.mrb[0].mxu0
      %772 = vmatprep.mubr.bf16.mxu0 0
      %773 = vmatmul.mubr.bf16.gmra.mrb[0].mxu0 %v558
      %v774 = vpop.f32.mrb[0].mxu0
      %v775 = vadd.f32 %v446, %v774
      %v776 = vpop.f32.mrb[0].mxu0
      %v777 = vpop.f32.mrb[0].mxu0
      %v778 = vadd.f32 %v446, %v777
      %v779 = vpop.f32.mrb[0].mxu0
      %780 = vmatprep.mubr.bf16.mxu0 0
      %781 = vmatmul.mubr.bf16.gmra.mrb[0].mxu0 %v559
      %v782 = vpop.f32.mrb[0].mxu0
      %v783 = vadd.f32 %v446, %v782
      %v784 = vpop.f32.mrb[0].mxu0
      %v785 = vpop.f32.mrb[0].mxu0
      %v786 = vadd.f32 %v446, %v785
      %v787 = vpop.f32.mrb[0].mxu0
      %788 = vmatprep.mubr.bf16.mxu0 0
      %789 = vmatmul.mubr.bf16.gmra.mrb[0].mxu0 %v560
      %v790 = vpop.f32.mrb[0].mxu0
      %v791 = vadd.f32 %v446, %v790
      %v792 = vpop.f32.mrb[0].mxu0
      %v793 = vpop.f32.mrb[0].mxu0
      %v794 = vadd.f32 %v446, %v793
      %v795 = vpop.f32.mrb[0].mxu0
      %796 = vmatprep.mubr.bf16.mxu0 0
      %797 = vmatmul.mubr.bf16.gmra.mrb[0].mxu0 %v561
      %v798 = vpop.f32.mrb[0].mxu0
      %v799 = vadd.f32 %v446, %v798
      %v800 = vpop.f32.mrb[0].mxu0
      %v801 = vpop.f32.mrb[0].mxu0
      %v802 = vadd.f32 %v446, %v801
      %v803 = vpop.f32.mrb[0].mxu0
      %804 = vmatprep.mubr.bf16.mxu0 0
      %805 = vmatmul.mubr.bf16.gmra.mrb[0].mxu0 %v562
      %v806 = vpop.f32.mrb[0].mxu0
      %v807 = vadd.f32 %v446, %v806
      %v808 = vpop.f32.mrb[0].mxu0
      %v809 = vpop.f32.mrb[0].mxu0
      %v810 = vadd.f32 %v446, %v809
      %v811 = vpop.f32.mrb[0].mxu0
      %812 = vmatprep.mubr.bf16.mxu0 0
      %813 = vmatmul.mubr.bf16.gmra.mrb[0].mxu0 %v563
      %v814 = vpop.f32.mrb[0].mxu0
      %v815 = vadd.f32 %v446, %v814
      %v816 = vpop.f32.mrb[0].mxu0
      %v817 = vpop.f32.mrb[0].mxu0
      %v818 = vadd.f32 %v446, %v817
      %v819 = vpop.f32.mrb[0].mxu0
      %820 = vmatprep.mubr.bf16.mxu0 0
      %821 = vmatmul.mubr.bf16.gmra.mrb[0].mxu0 %v564
      %v822 = vpop.f32.mrb[0].mxu0
      %v823 = vadd.f32 %v446, %v822
      %v824 = vpop.f32.mrb[0].mxu0
      %v825 = vpop.f32.mrb[0].mxu0
      %v826 = vadd.f32 %v446, %v825
      %v827 = vpop.f32.mrb[0].mxu0
      %828 = vmatprep.mubr.bf16.mxu0 0
      %829 = vmatmul.mubr.bf16.gmra.mrb[0].mxu0 %v565
      %v830 = vpop.f32.mrb[0].mxu0
      %v831 = vadd.f32 %v446, %v830
      %v832 = vpop.f32.mrb[0].mxu0
      %v833 = vpop.f32.mrb[0].mxu0
      %v834 = vadd.f32 %v446, %v833
      %v835 = vpop.f32.mrb[0].mxu0
      %836 = vmatprep.mubr.bf16.mxu0 0
      %837 = vmatmul.mubr.bf16.gmra.mrb[0].mxu0 %v566
      %v838 = vpop.f32.mrb[0].mxu0
      %v839 = vadd.f32 %v446, %v838
      %v840 = vpop.f32.mrb[0].mxu0
      %v841 = vpop.f32.mrb[0].mxu0
      %v842 = vadd.f32 %v446, %v841
      %v843 = vpop.f32.mrb[0].mxu0
      %844 = vmatprep.mubr.bf16.mxu0 0
      %845 = vmatmul.mubr.bf16.gmra.mrb[0].mxu0 %v567
      %v846 = vpop.f32.mrb[0].mxu0
      %v847 = vadd.f32 %v446, %v846
      %v848 = vpop.f32.mrb[0].mxu0
      %v849 = vpop.f32.mrb[0].mxu0
      %v850 = vadd.f32 %v446, %v849
      %v851 = vpop.f32.mrb[0].mxu0
      %852 = vmatprep.mubr.bf16.mxu0 0
      %853 = vmatmul.mubr.bf16.gmra.mrb[0].mxu0 %v568
      %v854 = vpop.f32.mrb[0].mxu0
      %v855 = vadd.f32 %v446, %v854
      %v856 = vpop.f32.mrb[0].mxu0
      %v857 = vpop.f32.mrb[0].mxu0
      %v858 = vadd.f32 %v446, %v857
      %v859 = vpop.f32.mrb[0].mxu0
      %860 = vmatprep.mubr.bf16.mxu0 0
      %861 = vmatmul.mubr.bf16.gmra.mrb[0].mxu0 %v569
      %v862 = vpop.f32.mrb[0].mxu0
      %v863 = vadd.f32 %v446, %v862
      %v864 = vpop.f32.mrb[0].mxu0
      %v865 = vpop.f32.mrb[0].mxu0
      %v866 = vadd.f32 %v446, %v865
      %v867 = vpop.f32.mrb[0].mxu0
      %868 = vmatprep.mubr.bf16.mxu0 0
      %869 = vmatmul.mubr.bf16.gmra.mrb[0].mxu0 %v570
      %v870 = vpop.f32.mrb[0].mxu0
      %v871 = vadd.f32 %v446, %v870
      %v872 = vpop.f32.mrb[0].mxu0
      %v873 = vpop.f32.mrb[0].mxu0
      %v874 = vpop.f32.mrb[0].mxu0
      %875 = vdwg.mxu0
      %v876 = vmax.f32 %v679, 0.0
      %v877 = vmax.f32 %v682, 0.0
      %v878 = vmax.f32 %v687, 0.0
      %v879 = vmax.f32 %v690, 0.0
      %v880 = vmax.f32 %v695, 0.0
      %v881 = vmax.f32 %v698, 0.0
      %v882 = vmax.f32 %v703, 0.0
      %v883 = vmax.f32 %v706, 0.0
      %v884 = vmax.f32 %v711, 0.0
      %v885 = vmax.f32 %v714, 0.0
      %v886 = vmax.f32 %v719, 0.0
      %v887 = vmax.f32 %v722, 0.0
      %v888 = vmax.f32 %v727, 0.0
      %v889 = vmax.f32 %v730, 0.0
      %v890 = vmax.f32 %v735, 0.0
      %v891 = vmax.f32 %v738, 0.0
      %v892 = vmax.f32 %v743, 0.0
      %v893 = vmax.f32 %v746, 0.0
      %v894 = vmax.f32 %v751, 0.0
      %v895 = vmax.f32 %v754, 0.0
      %v896 = vmax.f32 %v759, 0.0
      %v897 = vmax.f32 %v762, 0.0
      %v898 = vmax.f32 %v767, 0.0
      %v899 = vmax.f32 %v770, 0.0
      %v900 = vmax.f32 %v775, 0.0
      %v901 = vmax.f32 %v778, 0.0
      %v902 = vmax.f32 %v783, 0.0
      %v903 = vmax.f32 %v786, 0.0
      %v904 = vmax.f32 %v791, 0.0
      %v905 = vmax.f32 %v794, 0.0
      %v906 = vmax.f32 %v799, 0.0
      %v907 = vmax.f32 %v802, 0.0
      %v908 = vmax.f32 %v807, 0.0
      %v909 = vmax.f32 %v810, 0.0
      %v910 = vmax.f32 %v815, 0.0
      %v911 = vmax.f32 %v818, 0.0
      %v912 = vmax.f32 %v823, 0.0
      %v913 = vmax.f32 %v826, 0.0
      %v914 = vmax.f32 %v831, 0.0
      %v915 = vmax.f32 %v834, 0.0
      %v916 = vmax.f32 %v839, 0.0
      %v917 = vmax.f32 %v842, 0.0
      %v918 = vmax.f32 %v847, 0.0
      %v919 = vmax.f32 %v850, 0.0
      %v920 = vmax.f32 %v855, 0.0
      %v921 = vmax.f32 %v858, 0.0
      %v922 = vmax.f32 %v863, 0.0
      %v923 = vmax.f32 %v866, 0.0
      %v924 = vmax.f32 %v871, 0.0
      %v925 = vpack.c.bf16 %v877, %v876
      %v926 = vpack.c.bf16 %v879, %v878
      %v927 = vpack.c.bf16 %v881, %v880
      %v928 = vpack.c.bf16 %v883, %v882
      %v929 = vpack.c.bf16 %v885, %v884
      %v930 = vpack.c.bf16 %v887, %v886
      %v931 = vpack.c.bf16 %v889, %v888
      %v932 = vpack.c.bf16 %v891, %v890
      %v933 = vpack.c.bf16 %v893, %v892
      %v934 = vpack.c.bf16 %v895, %v894
      %v935 = vpack.c.bf16 %v897, %v896
      %v936 = vpack.c.bf16 %v899, %v898
      %v937 = vpack.c.bf16 %v901, %v900
      %v938 = vpack.c.bf16 %v903, %v902
      %v939 = vpack.c.bf16 %v905, %v904
      %v940 = vpack.c.bf16 %v907, %v906
      %v941 = vpack.c.bf16 %v909, %v908
      %v942 = vpack.c.bf16 %v911, %v910
      %v943 = vpack.c.bf16 %v913, %v912
      %v944 = vpack.c.bf16 %v915, %v914
      %v945 = vpack.c.bf16 %v917, %v916
      %v946 = vpack.c.bf16 %v919, %v918
      %v947 = vpack.c.bf16 %v921, %v920
      %v948 = vpack.c.bf16 %v923, %v922
      %v949 = vpack.c.bf16 %v924, %v924
      %v950 = vld [vmem:[%s264] sm:$0xf]
      %v951 = vld [vmem:[%s264 + $0x4] sm:$0xf]
      %v952 = vld [vmem:[%s264 + $0x8] sm:$0xf]
      %v953 = vld [vmem:[%s264 + $0xc] sm:$0xf]
      %v954 = vld [vmem:[%s264 + $0x10] sm:$0xf]
      %v955 = vld [vmem:[%s264 + $0x14] sm:$0xf]
      %v956 = vld [vmem:[%s264 + $0x18] sm:$0xf]
      %v957 = vld [vmem:[%s264 + $0x1c] sm:$0xf]
      %v958 = vld [vmem:[%s264 + $0x20] sm:$0xf]
      %v959 = vld [vmem:[%s264 + $0x24] sm:$0xf]
      %v960 = vld [vmem:[%s264 + $0x28] sm:$0xf]
      %v961 = vld [vmem:[%s264 + $0x2c] sm:$0xf]
      %v962 = vld [vmem:[%s264 + $0x30] sm:$0xf]
      %v963 = vld [vmem:[%s264 + $0x34] sm:$0xf]
      %v964 = vld [vmem:[%s264 + $0x38] sm:$0xf]
      %v965 = vld [vmem:[%s264 + $0x3c] sm:$0xf]
      %v966 = vld [vmem:[%s267] sm:$0x1]
      %v968 = vlaneseq
      %v969 = vshrl.u32 %v968, 7
      %v970 = vsub.s32 0, %v969
      %v971 = vrot.slane %v966, %v970
      %v989 = vunpack.c.l.b16 %v950
      %v990 = vunpack.c.l.b16 %v951
      %v991 = vunpack.c.l.b16 %v952
      %v992 = vunpack.c.l.b16 %v953
      %v993 = vunpack.c.l.b16 %v954
      %v994 = vunpack.c.l.b16 %v955
      %v995 = vunpack.c.l.b16 %v956
      %v996 = vunpack.c.l.b16 %v957
      %v997 = vunpack.c.l.b16 %v958
      %v998 = vunpack.c.l.b16 %v959
      %v999 = vunpack.c.l.b16 %v960
      %v1000 = vunpack.c.l.b16 %v961
      %v1001 = vunpack.c.l.b16 %v962
      %v1002 = vunpack.c.l.b16 %v963
      %v1003 = vunpack.c.l.b16 %v964
      %v1004 = vunpack.c.l.b16 %v965
      %v1005 = vpack.c.b16 %v990, %v989
      %v1006 = vpack.c.b16 %v992, %v991
      %v1007 = vpack.c.b16 %v994, %v993
      %v1008 = vpack.c.b16 %v996, %v995
      %v1009 = vpack.c.b16 %v998, %v997
      %v1010 = vpack.c.b16 %v1000, %v999
      %v1011 = vpack.c.b16 %v1002, %v1001
      %v1012 = vpack.c.b16 %v1004, %v1003
      %1021 = vmatprep.subr.bf16.mxu0 0
      %1022 = vmatpush1.bf16.msra.mxu0 %v1005
      %1023 = vmatprep.subr.bf16.mxu0 0
      %1024 = vmatpush1.bf16.msra.mxu0 %v1006
      %1025 = vmatprep.subr.bf16.mxu0 0
      %1026 = vmatpush1.bf16.msra.mxu0 %v1007
      %1027 = vmatprep.subr.bf16.mxu0 0
      %1028 = vmatpush1.bf16.msra.mxu0 %v1008
      %1029 = vmatprep.subr.bf16.mxu0 0
      %1030 = vmatpush1.bf16.msra.mxu0 %v1009
      %1031 = vmatprep.subr.bf16.mxu0 0
      %1032 = vmatpush1.bf16.msra.mxu0 %v1010
      %1033 = vmatprep.subr.bf16.mxu0 0
      %1034 = vmatpush1.bf16.msra.mxu0 %v1011
      %1035 = vmatprep.subr.bf16.mxu0 0
      %1036 = vmatpush1.bf16.msra.mxu0 %v1012
      %1037 = vmatprep.subr.bf16.mxu0 0
      %1038 = vmatpush1.bf16.msra.mxu0 0
      %1039 = vmatprep.subr.bf16.mxu0 0
      %1040 = vmatpush1.bf16.msra.mxu0 0
      %1041 = vmatprep.subr.bf16.mxu0 0
      %1042 = vmatpush1.bf16.msra.mxu0 0
      %1043 = vmatprep.subr.bf16.mxu0 0
      %1044 = vmatpush1.bf16.msra.mxu0 0
      %1045 = vmatprep.subr.bf16.mxu0 0
      %1046 = vmatpush1.bf16.msra.mxu0 0
      %1047 = vmatprep.subr.bf16.mxu0 0
      %1048 = vmatpush1.bf16.msra.mxu0 0
      %1049 = vmatprep.subr.bf16.mxu0 0
      %1050 = vmatpush1.bf16.msra.mxu0 0
      %1051 = vmatprep.subr.bf16.mxu0 0
      %1052 = vmatpush1.bf16.msra.mxu0 0
      %1053 = vmatprep.mubr.bf16.mxu0 0
      %1054 = vmatmul.mubr.bf16.gmra.mrb[0].mxu0 %v925
      %v1055 = vpop.f32.mrb[0].mxu0
      %v1056 = vadd.f32 %v971, %v1055
      %v1057 = vpop.f32.mrb[0].mxu0
      %v1058 = vpop.f32.mrb[0].mxu0
      %v1059 = vadd.f32 %v971, %v1058
      %v1060 = vpop.f32.mrb[0].mxu0
      %1061 = vmatprep.mubr.bf16.mxu0 0
      %1062 = vmatmul.mubr.bf16.gmra.mrb[0].mxu0 %v926
      %v1063 = vpop.f32.mrb[0].mxu0
      %v1064 = vadd.f32 %v971, %v1063
      %v1065 = vpop.f32.mrb[0].mxu0
      %v1066 = vpop.f32.mrb[0].mxu0
      %v1067 = vadd.f32 %v971, %v1066
      %v1068 = vpop.f32.mrb[0].mxu0
      %1069 = vmatprep.mubr.bf16.mxu0 0
      %1070 = vmatmul.mubr.bf16.gmra.mrb[0].mxu0 %v927
      %v1071 = vpop.f32.mrb[0].mxu0
      %v1072 = vadd.f32 %v971, %v1071
      %v1073 = vpop.f32.mrb[0].mxu0
      %v1074 = vpop.f32.mrb[0].mxu0
      %v1075 = vadd.f32 %v971, %v1074
      %v1076 = vpop.f32.mrb[0].mxu0
      %1077 = vmatprep.mubr.bf16.mxu0 0
      %1078 = vmatmul.mubr.bf16.gmra.mrb[0].mxu0 %v928
      %v1079 = vpop.f32.mrb[0].mxu0
      %v1080 = vadd.f32 %v971, %v1079
      %v1081 = vpop.f32.mrb[0].mxu0
      %v1082 = vpop.f32.mrb[0].mxu0
      %v1083 = vadd.f32 %v971, %v1082
      %v1084 = vpop.f32.mrb[0].mxu0
      %1085 = vmatprep.mubr.bf16.mxu0 0
      %1086 = vmatmul.mubr.bf16.gmra.mrb[0].mxu0 %v929
      %v1087 = vpop.f32.mrb[0].mxu0
      %v1088 = vadd.f32 %v971, %v1087
      %v1089 = vpop.f32.mrb[0].mxu0
      %v1090 = vpop.f32.mrb[0].mxu0
      %v1091 = vadd.f32 %v971, %v1090
      %v1092 = vpop.f32.mrb[0].mxu0
      %1093 = vmatprep.mubr.bf16.mxu0 0
      %1094 = vmatmul.mubr.bf16.gmra.mrb[0].mxu0 %v930
      %v1095 = vpop.f32.mrb[0].mxu0
      %v1096 = vadd.f32 %v971, %v1095
      %v1097 = vpop.f32.mrb[0].mxu0
      %v1098 = vpop.f32.mrb[0].mxu0
      %v1099 = vadd.f32 %v971, %v1098
      %v1100 = vpop.f32.mrb[0].mxu0
      %1101 = vmatprep.mubr.bf16.mxu0 0
      %1102 = vmatmul.mubr.bf16.gmra.mrb[0].mxu0 %v931
      %v1103 = vpop.f32.mrb[0].mxu0
      %v1104 = vadd.f32 %v971, %v1103
      %v1105 = vpop.f32.mrb[0].mxu0
      %v1106 = vpop.f32.mrb[0].mxu0
      %v1107 = vadd.f32 %v971, %v1106
      %v1108 = vpop.f32.mrb[0].mxu0
      %1109 = vmatprep.mubr.bf16.mxu0 0
      %1110 = vmatmul.mubr.bf16.gmra.mrb[0].mxu0 %v932
      %v1111 = vpop.f32.mrb[0].mxu0
      %v1112 = vadd.f32 %v971, %v1111
      %v1113 = vpop.f32.mrb[0].mxu0
      %v1114 = vpop.f32.mrb[0].mxu0
      %v1115 = vadd.f32 %v971, %v1114
      %v1116 = vpop.f32.mrb[0].mxu0
      %1117 = vmatprep.mubr.bf16.mxu0 0
      %1118 = vmatmul.mubr.bf16.gmra.mrb[0].mxu0 %v933
      %v1119 = vpop.f32.mrb[0].mxu0
      %v1120 = vadd.f32 %v971, %v1119
      %v1121 = vpop.f32.mrb[0].mxu0
      %v1122 = vpop.f32.mrb[0].mxu0
      %v1123 = vadd.f32 %v971, %v1122
      %v1124 = vpop.f32.mrb[0].mxu0
      %1125 = vmatprep.mubr.bf16.mxu0 0
      %1126 = vmatmul.mubr.bf16.gmra.mrb[0].mxu0 %v934
      %v1127 = vpop.f32.mrb[0].mxu0
      %v1128 = vadd.f32 %v971, %v1127
      %v1129 = vpop.f32.mrb[0].mxu0
      %v1130 = vpop.f32.mrb[0].mxu0
      %v1131 = vadd.f32 %v971, %v1130
      %v1132 = vpop.f32.mrb[0].mxu0
      %1133 = vmatprep.mubr.bf16.mxu0 0
      %1134 = vmatmul.mubr.bf16.gmra.mrb[0].mxu0 %v935
      %v1135 = vpop.f32.mrb[0].mxu0
      %v1136 = vadd.f32 %v971, %v1135
      %v1137 = vpop.f32.mrb[0].mxu0
      %v1138 = vpop.f32.mrb[0].mxu0
      %v1139 = vadd.f32 %v971, %v1138
      %v1140 = vpop.f32.mrb[0].mxu0
      %1141 = vmatprep.mubr.bf16.mxu0 0
      %1142 = vmatmul.mubr.bf16.gmra.mrb[0].mxu0 %v936
      %v1143 = vpop.f32.mrb[0].mxu0
      %v1144 = vadd.f32 %v971, %v1143
      %v1145 = vpop.f32.mrb[0].mxu0
      %v1146 = vpop.f32.mrb[0].mxu0
      %v1147 = vadd.f32 %v971, %v1146
      %v1148 = vpop.f32.mrb[0].mxu0
      %1149 = vmatprep.mubr.bf16.mxu0 0
      %1150 = vmatmul.mubr.bf16.gmra.mrb[0].mxu0 %v937
      %v1151 = vpop.f32.mrb[0].mxu0
      %v1152 = vadd.f32 %v971, %v1151
      %v1153 = vpop.f32.mrb[0].mxu0
      %v1154 = vpop.f32.mrb[0].mxu0
      %v1155 = vadd.f32 %v971, %v1154
      %v1156 = vpop.f32.mrb[0].mxu0
      %1157 = vmatprep.mubr.bf16.mxu0 0
      %1158 = vmatmul.mubr.bf16.gmra.mrb[0].mxu0 %v938
      %v1159 = vpop.f32.mrb[0].mxu0
      %v1160 = vadd.f32 %v971, %v1159
      %v1161 = vpop.f32.mrb[0].mxu0
      %v1162 = vpop.f32.mrb[0].mxu0
      %v1163 = vadd.f32 %v971, %v1162
      %v1164 = vpop.f32.mrb[0].mxu0
      %1165 = vmatprep.mubr.bf16.mxu0 0
      %1166 = vmatmul.mubr.bf16.gmra.mrb[0].mxu0 %v939
      %v1167 = vpop.f32.mrb[0].mxu0
      %v1168 = vadd.f32 %v971, %v1167
      %v1169 = vpop.f32.mrb[0].mxu0
      %v1170 = vpop.f32.mrb[0].mxu0
      %v1171 = vadd.f32 %v971, %v1170
      %v1172 = vpop.f32.mrb[0].mxu0
      %1173 = vmatprep.mubr.bf16.mxu0 0
      %1174 = vmatmul.mubr.bf16.gmra.mrb[0].mxu0 %v940
      %v1175 = vpop.f32.mrb[0].mxu0
      %v1176 = vadd.f32 %v971, %v1175
      %v1177 = vpop.f32.mrb[0].mxu0
      %v1178 = vpop.f32.mrb[0].mxu0
      %v1179 = vadd.f32 %v971, %v1178
      %v1180 = vpop.f32.mrb[0].mxu0
      %1181 = vmatprep.mubr.bf16.mxu0 0
      %1182 = vmatmul.mubr.bf16.gmra.mrb[0].mxu0 %v941
      %v1183 = vpop.f32.mrb[0].mxu0
      %v1184 = vadd.f32 %v971, %v1183
      %v1185 = vpop.f32.mrb[0].mxu0
      %v1186 = vpop.f32.mrb[0].mxu0
      %v1187 = vadd.f32 %v971, %v1186
      %v1188 = vpop.f32.mrb[0].mxu0
      %1189 = vmatprep.mubr.bf16.mxu0 0
      %1190 = vmatmul.mubr.bf16.gmra.mrb[0].mxu0 %v942
      %v1191 = vpop.f32.mrb[0].mxu0
      %v1192 = vadd.f32 %v971, %v1191
      %v1193 = vpop.f32.mrb[0].mxu0
      %v1194 = vpop.f32.mrb[0].mxu0
      %v1195 = vadd.f32 %v971, %v1194
      %v1196 = vpop.f32.mrb[0].mxu0
      %1197 = vmatprep.mubr.bf16.mxu0 0
      %1198 = vmatmul.mubr.bf16.gmra.mrb[0].mxu0 %v943
      %v1199 = vpop.f32.mrb[0].mxu0
      %v1200 = vadd.f32 %v971, %v1199
      %v1201 = vpop.f32.mrb[0].mxu0
      %v1202 = vpop.f32.mrb[0].mxu0
      %v1203 = vadd.f32 %v971, %v1202
      %v1204 = vpop.f32.mrb[0].mxu0
      %1205 = vmatprep.mubr.bf16.mxu0 0
      %1206 = vmatmul.mubr.bf16.gmra.mrb[0].mxu0 %v944
      %v1207 = vpop.f32.mrb[0].mxu0
      %v1208 = vadd.f32 %v971, %v1207
      %v1209 = vpop.f32.mrb[0].mxu0
      %v1210 = vpop.f32.mrb[0].mxu0
      %v1211 = vadd.f32 %v971, %v1210
      %v1212 = vpop.f32.mrb[0].mxu0
      %1213 = vmatprep.mubr.bf16.mxu0 0
      %1214 = vmatmul.mubr.bf16.gmra.mrb[0].mxu0 %v945
      %v1215 = vpop.f32.mrb[0].mxu0
      %v1216 = vadd.f32 %v971, %v1215
      %v1217 = vpop.f32.mrb[0].mxu0
      %v1218 = vpop.f32.mrb[0].mxu0
      %v1219 = vadd.f32 %v971, %v1218
      %v1220 = vpop.f32.mrb[0].mxu0
      %1221 = vmatprep.mubr.bf16.mxu0 0
      %1222 = vmatmul.mubr.bf16.gmra.mrb[0].mxu0 %v946
      %v1223 = vpop.f32.mrb[0].mxu0
      %v1224 = vadd.f32 %v971, %v1223
      %v1225 = vpop.f32.mrb[0].mxu0
      %v1226 = vpop.f32.mrb[0].mxu0
      %v1227 = vadd.f32 %v971, %v1226
      %v1228 = vpop.f32.mrb[0].mxu0
      %1229 = vmatprep.mubr.bf16.mxu0 0
      %1230 = vmatmul.mubr.bf16.gmra.mrb[0].mxu0 %v947
      %v1231 = vpop.f32.mrb[0].mxu0
      %v1232 = vadd.f32 %v971, %v1231
      %v1233 = vpop.f32.mrb[0].mxu0
      %v1234 = vpop.f32.mrb[0].mxu0
      %v1235 = vadd.f32 %v971, %v1234
      %v1236 = vpop.f32.mrb[0].mxu0
      %1237 = vmatprep.mubr.bf16.mxu0 0
      %1238 = vmatmul.mubr.bf16.gmra.mrb[0].mxu0 %v948
      %v1239 = vpop.f32.mrb[0].mxu0
      %v1240 = vadd.f32 %v971, %v1239
      %v1241 = vpop.f32.mrb[0].mxu0
      %v1242 = vpop.f32.mrb[0].mxu0
      %v1243 = vadd.f32 %v971, %v1242
      %v1244 = vpop.f32.mrb[0].mxu0
      %1245 = vmatprep.mubr.bf16.mxu0 0
      %1246 = vmatmul.mubr.bf16.gmra.mrb[0].mxu0 %v949
      %v1247 = vpop.f32.mrb[0].mxu0
      %v1248 = vadd.f32 %v971, %v1247
      %v1249 = vpop.f32.mrb[0].mxu0
      %v1250 = vpop.f32.mrb[0].mxu0
      %v1251 = vpop.f32.mrb[0].mxu0
      %1252 = vdwg.mxu0
      %v1253 = vunpack.c.l.bf16 %v376
      %v1254 = vunpack.c.l.bf16 %v377
      %v1255 = vunpack.c.l.bf16 %v378
      %v1256 = vunpack.c.l.bf16 %v379
      %v1257 = vunpack.c.l.bf16 %v380
      %v1258 = vunpack.c.l.bf16 %v381
      %v1259 = vunpack.c.l.bf16 %v382
      %v1260 = vunpack.c.l.bf16 %v383
      %v1261 = vunpack.c.l.bf16 %v384
      %v1262 = vunpack.c.l.bf16 %v385
      %v1263 = vunpack.c.l.bf16 %v386
      %v1264 = vunpack.c.l.bf16 %v387
      %v1265 = vunpack.c.l.bf16 %v388
      %v1266 = vunpack.c.l.bf16 %v389
      %v1267 = vunpack.c.l.bf16 %v390
      %v1268 = vunpack.c.l.bf16 %v391
      %v1269 = vunpack.c.l.bf16 %v392
      %v1270 = vunpack.c.l.bf16 %v393
      %v1271 = vunpack.c.l.bf16 %v394
      %v1272 = vunpack.c.l.bf16 %v395
      %v1273 = vunpack.c.l.bf16 %v396
      %v1274 = vunpack.c.l.bf16 %v397
      %v1275 = vunpack.c.l.bf16 %v398
      %v1276 = vunpack.c.l.bf16 %v399
      %v1277 = vunpack.c.l.bf16 %v400
      %v1278 = vunpack.c.l.bf16 %v401
      %v1279 = vunpack.c.l.bf16 %v402
      %v1280 = vunpack.c.l.bf16 %v403
      %v1281 = vunpack.c.l.bf16 %v404
      %v1282 = vunpack.c.l.bf16 %v405
      %v1283 = vunpack.c.l.bf16 %v406
      %v1284 = vunpack.c.l.bf16 %v407
      %v1285 = vunpack.c.l.bf16 %v408
      %v1286 = vunpack.c.l.bf16 %v409
      %v1287 = vunpack.c.l.bf16 %v410
      %v1288 = vunpack.c.l.bf16 %v411
      %v1289 = vunpack.c.l.bf16 %v412
      %v1290 = vunpack.c.l.bf16 %v413
      %v1291 = vunpack.c.l.bf16 %v414
      %v1292 = vunpack.c.l.bf16 %v415
      %v1293 = vunpack.c.l.bf16 %v416
      %v1294 = vunpack.c.l.bf16 %v417
      %v1295 = vunpack.c.l.bf16 %v418
      %v1296 = vunpack.c.l.bf16 %v419
      %v1297 = vunpack.c.l.bf16 %v420
      %v1298 = vunpack.c.l.bf16 %v421
      %v1299 = vunpack.c.l.bf16 %v422
      %v1300 = vunpack.c.l.bf16 %v423
      %v1301 = vunpack.c.l.bf16 %v424
      %v1302 = vadd.f32 %v1056, %v1253
      %v1303 = vadd.f32 %v1059, %v1254
      %v1304 = vadd.f32 %v1064, %v1255
      %v1305 = vadd.f32 %v1067, %v1256
      %v1306 = vadd.f32 %v1072, %v1257
      %v1307 = vadd.f32 %v1075, %v1258
      %v1308 = vadd.f32 %v1080, %v1259
      %v1309 = vadd.f32 %v1083, %v1260
      %v1310 = vadd.f32 %v1088, %v1261
      %v1311 = vadd.f32 %v1091, %v1262
      %v1312 = vadd.f32 %v1096, %v1263
      %v1313 = vadd.f32 %v1099, %v1264
      %v1314 = vadd.f32 %v1104, %v1265
      %v1315 = vadd.f32 %v1107, %v1266
      %v1316 = vadd.f32 %v1112, %v1267
      %v1317 = vadd.f32 %v1115, %v1268
      %v1318 = vadd.f32 %v1120, %v1269
      %v1319 = vadd.f32 %v1123, %v1270
      %v1320 = vadd.f32 %v1128, %v1271
      %v1321 = vadd.f32 %v1131, %v1272
      %v1322 = vadd.f32 %v1136, %v1273
      %v1323 = vadd.f32 %v1139, %v1274
      %v1324 = vadd.f32 %v1144, %v1275
      %v1325 = vadd.f32 %v1147, %v1276
      %v1326 = vadd.f32 %v1152, %v1277
      %v1327 = vadd.f32 %v1155, %v1278
      %v1328 = vadd.f32 %v1160, %v1279
      %v1329 = vadd.f32 %v1163, %v1280
      %v1330 = vadd.f32 %v1168, %v1281
      %v1331 = vadd.f32 %v1171, %v1282
      %v1332 = vadd.f32 %v1176, %v1283
      %v1333 = vadd.f32 %v1179, %v1284
      %v1334 = vadd.f32 %v1184, %v1285
      %v1335 = vadd.f32 %v1187, %v1286
      %v1336 = vadd.f32 %v1192, %v1287
      %v1337 = vadd.f32 %v1195, %v1288
      %v1338 = vadd.f32 %v1200, %v1289
      %v1339 = vadd.f32 %v1203, %v1290
      %v1340 = vadd.f32 %v1208, %v1291
      %v1341 = vadd.f32 %v1211, %v1292
      %v1342 = vadd.f32 %v1216, %v1293
      %v1343 = vadd.f32 %v1219, %v1294
      %v1344 = vadd.f32 %v1224, %v1295
      %v1345 = vadd.f32 %v1227, %v1296
      %v1346 = vadd.f32 %v1232, %v1297
      %v1347 = vadd.f32 %v1235, %v1298
      %v1348 = vadd.f32 %v1240, %v1299
      %v1349 = vadd.f32 %v1243, %v1300
      %v1350 = vadd.f32 %v1248, %v1301
      %v1351 = vpack.c.bf16 %v1303, %v1302
      %v1352 = vpack.c.bf16 %v1305, %v1304
      %v1353 = vpack.c.bf16 %v1307, %v1306
      %v1354 = vpack.c.bf16 %v1309, %v1308
      %v1355 = vpack.c.bf16 %v1311, %v1310
      %v1356 = vpack.c.bf16 %v1313, %v1312
      %v1357 = vpack.c.bf16 %v1315, %v1314
      %v1358 = vpack.c.bf16 %v1317, %v1316
      %v1359 = vpack.c.bf16 %v1319, %v1318
      %v1360 = vpack.c.bf16 %v1321, %v1320
      %v1361 = vpack.c.bf16 %v1323, %v1322
      %v1362 = vpack.c.bf16 %v1325, %v1324
      %v1363 = vpack.c.bf16 %v1327, %v1326
      %v1364 = vpack.c.bf16 %v1329, %v1328
      %v1365 = vpack.c.bf16 %v1331, %v1330
      %v1366 = vpack.c.bf16 %v1333, %v1332
      %v1367 = vpack.c.bf16 %v1335, %v1334
      %v1368 = vpack.c.bf16 %v1337, %v1336
      %v1369 = vpack.c.bf16 %v1339, %v1338
      %v1370 = vpack.c.bf16 %v1341, %v1340
      %v1371 = vpack.c.bf16 %v1343, %v1342
      %v1372 = vpack.c.bf16 %v1345, %v1344
      %v1373 = vpack.c.bf16 %v1347, %v1346
      %v1374 = vpack.c.bf16 %v1349, %v1348
      %v1375 = vpack.c.bf16 %v1350, %v1350
      %v1401 = vunpack.c.l.b16 %v1351
      %v1402 = vunpack.c.h.b16 %v1351
      %v1403 = vunpack.c.l.b16 %v1352
      %v1404 = vunpack.c.h.b16 %v1352
      %v1405 = vunpack.c.l.b16 %v1353
      %v1406 = vunpack.c.h.b16 %v1353
      %v1407 = vunpack.c.l.b16 %v1354
      %v1408 = vunpack.c.h.b16 %v1354
      %v1409 = vunpack.c.l.b16 %v1355
      %v1410 = vunpack.c.h.b16 %v1355
      %v1411 = vunpack.c.l.b16 %v1356
      %v1412 = vunpack.c.h.b16 %v1356
      %v1413 = vunpack.c.l.b16 %v1357
      %v1414 = vunpack.c.h.b16 %v1357
      %v1415 = vunpack.c.l.b16 %v1358
      %v1416 = vunpack.c.h.b16 %v1358
      %v1417 = vunpack.c.l.b16 %v1359
      %v1418 = vunpack.c.h.b16 %v1359
      %v1419 = vunpack.c.l.b16 %v1360
      %v1420 = vunpack.c.h.b16 %v1360
      %v1421 = vunpack.c.l.b16 %v1361
      %v1422 = vunpack.c.h.b16 %v1361
      %v1423 = vunpack.c.l.b16 %v1362
      %v1424 = vunpack.c.h.b16 %v1362
      %v1425 = vunpack.c.l.b16 %v1363
      %v1426 = vunpack.c.h.b16 %v1363
      %v1427 = vunpack.c.l.b16 %v1364
      %v1428 = vunpack.c.h.b16 %v1364
      %v1429 = vunpack.c.l.b16 %v1365
      %v1430 = vunpack.c.h.b16 %v1365
      %v1431 = vunpack.c.l.b16 %v1366
      %v1432 = vunpack.c.h.b16 %v1366
      %v1433 = vunpack.c.l.b16 %v1367
      %v1434 = vunpack.c.h.b16 %v1367
      %v1435 = vunpack.c.l.b16 %v1368
      %v1436 = vunpack.c.h.b16 %v1368
      %v1437 = vunpack.c.l.b16 %v1369
      %v1438 = vunpack.c.h.b16 %v1369
      %v1439 = vunpack.c.l.b16 %v1370
      %v1440 = vunpack.c.h.b16 %v1370
      %v1441 = vunpack.c.l.b16 %v1371
      %v1442 = vunpack.c.h.b16 %v1371
      %v1443 = vunpack.c.l.b16 %v1372
      %v1444 = vunpack.c.h.b16 %v1372
      %v1445 = vunpack.c.l.b16 %v1373
      %v1446 = vunpack.c.h.b16 %v1373
      %v1447 = vunpack.c.l.b16 %v1374
      %v1448 = vunpack.c.h.b16 %v1374
      %v1449 = vunpack.c.l.b16 %v1375
      %v1450 = vpack.c.b16 %v1401, %v1401
      %v1451 = vpack.c.b16 %v1402, %v1402
      %v1452 = vpack.c.b16 %v1403, %v1403
      %v1453 = vpack.c.b16 %v1404, %v1404
      %v1454 = vpack.c.b16 %v1405, %v1405
      %v1455 = vpack.c.b16 %v1406, %v1406
      %v1456 = vpack.c.b16 %v1407, %v1407
      %v1457 = vpack.c.b16 %v1408, %v1408
      %v1458 = vpack.c.b16 %v1409, %v1409
      %v1459 = vpack.c.b16 %v1410, %v1410
      %v1460 = vpack.c.b16 %v1411, %v1411
      %v1461 = vpack.c.b16 %v1412, %v1412
      %v1462 = vpack.c.b16 %v1413, %v1413
      %v1463 = vpack.c.b16 %v1414, %v1414
      %v1464 = vpack.c.b16 %v1415, %v1415
      %v1465 = vpack.c.b16 %v1416, %v1416
      %v1466 = vpack.c.b16 %v1417, %v1417
      %v1467 = vpack.c.b16 %v1418, %v1418
      %v1468 = vpack.c.b16 %v1419, %v1419
      %v1469 = vpack.c.b16 %v1420, %v1420
      %v1470 = vpack.c.b16 %v1421, %v1421
      %v1471 = vpack.c.b16 %v1422, %v1422
      %v1472 = vpack.c.b16 %v1423, %v1423
      %v1473 = vpack.c.b16 %v1424, %v1424
      %v1474 = vpack.c.b16 %v1425, %v1425
      %v1475 = vpack.c.b16 %v1426, %v1426
      %v1476 = vpack.c.b16 %v1427, %v1427
      %v1477 = vpack.c.b16 %v1428, %v1428
      %v1478 = vpack.c.b16 %v1429, %v1429
      %v1479 = vpack.c.b16 %v1430, %v1430
      %v1480 = vpack.c.b16 %v1431, %v1431
      %v1481 = vpack.c.b16 %v1432, %v1432
      %v1482 = vpack.c.b16 %v1433, %v1433
      %v1483 = vpack.c.b16 %v1434, %v1434
      %v1484 = vpack.c.b16 %v1435, %v1435
      %v1485 = vpack.c.b16 %v1436, %v1436
      %v1486 = vpack.c.b16 %v1437, %v1437
      %v1487 = vpack.c.b16 %v1438, %v1438
      %v1488 = vpack.c.b16 %v1439, %v1439
      %v1489 = vpack.c.b16 %v1440, %v1440
      %v1490 = vpack.c.b16 %v1441, %v1441
      %v1491 = vpack.c.b16 %v1442, %v1442
      %v1492 = vpack.c.b16 %v1443, %v1443
      %v1493 = vpack.c.b16 %v1444, %v1444
      %v1494 = vpack.c.b16 %v1445, %v1445
      %v1495 = vpack.c.b16 %v1446, %v1446
      %v1496 = vpack.c.b16 %v1447, %v1447
      %v1497 = vpack.c.b16 %v1448, %v1448
      %v1498 = vpack.c.b16 %v1449, %v1449
      %1548 = vst [vmem:[#allocation2] sm:$0xf] %v1450
      %1549 = vst [vmem:[#allocation2 + $0x4] sm:$0xf] %v1451
      %1550 = vst [vmem:[#allocation2 + $0x8] sm:$0xf] %v1452
      %1551 = vst [vmem:[#allocation2 + $0xc] sm:$0xf] %v1453
      %1552 = vst [vmem:[#allocation2 + $0x10] sm:$0xf] %v1454
      %1553 = vst [vmem:[#allocation2 + $0x14] sm:$0xf] %v1455
      %1554 = vst [vmem:[#allocation2 + $0x18] sm:$0xf] %v1456
      %1555 = vst [vmem:[#allocation2 + $0x1c] sm:$0xf] %v1457
      %1556 = vst [vmem:[#allocation2 + $0x20] sm:$0xf] %v1458
      %1557 = vst [vmem:[#allocation2 + $0x24] sm:$0xf] %v1459
      %1558 = vst [vmem:[#allocation2 + $0x28] sm:$0xf] %v1460
      %1559 = vst [vmem:[#allocation2 + $0x2c] sm:$0xf] %v1461
      %1560 = vst [vmem:[#allocation2 + $0x30] sm:$0xf] %v1462
      %1561 = vst [vmem:[#allocation2 + $0x34] sm:$0xf] %v1463
      %1562 = vst [vmem:[#allocation2 + $0x38] sm:$0xf] %v1464
      %1563 = vst [vmem:[#allocation2 + $0x3c] sm:$0xf] %v1465
      %1564 = vst [vmem:[#allocation2 + $0x40] sm:$0xf] %v1466
      %1565 = vst [vmem:[#allocation2 + $0x44] sm:$0xf] %v1467
      %1566 = vst [vmem:[#allocation2 + $0x48] sm:$0xf] %v1468
      %1567 = vst [vmem:[#allocation2 + $0x4c] sm:$0xf] %v1469
      %1568 = vst [vmem:[#allocation2 + $0x50] sm:$0xf] %v1470
      %1569 = vst [vmem:[#allocation2 + $0x54] sm:$0xf] %v1471
      %1570 = vst [vmem:[#allocation2 + $0x58] sm:$0xf] %v1472
      %1571 = vst [vmem:[#allocation2 + $0x5c] sm:$0xf] %v1473
      %1572 = vst [vmem:[#allocation2 + $0x60] sm:$0xf] %v1474
      %1573 = vst [vmem:[#allocation2 + $0x64] sm:$0xf] %v1475
      %1574 = vst [vmem:[#allocation2 + $0x68] sm:$0xf] %v1476
      %1575 = vst [vmem:[#allocation2 + $0x6c] sm:$0xf] %v1477
      %1576 = vst [vmem:[#allocation2 + $0x70] sm:$0xf] %v1478
      %1577 = vst [vmem:[#allocation2 + $0x74] sm:$0xf] %v1479
      %1578 = vst [vmem:[#allocation2 + $0x78] sm:$0xf] %v1480
      %1579 = vst [vmem:[#allocation2 + $0x7c] sm:$0xf] %v1481
      %1580 = vst [vmem:[#allocation2 + $0x80] sm:$0xf] %v1482
      %1581 = vst [vmem:[#allocation2 + $0x84] sm:$0xf] %v1483
      %1582 = vst [vmem:[#allocation2 + $0x88] sm:$0xf] %v1484
      %1583 = vst [vmem:[#allocation2 + $0x8c] sm:$0xf] %v1485
      %1584 = vst [vmem:[#allocation2 + $0x90] sm:$0xf] %v1486
      %1585 = vst [vmem:[#allocation2 + $0x94] sm:$0xf] %v1487
      %1586 = vst [vmem:[#allocation2 + $0x98] sm:$0xf] %v1488
      %1587 = vst [vmem:[#allocation2 + $0x9c] sm:$0xf] %v1489
      %1588 = vst [vmem:[#allocation2 + $0xa0] sm:$0xf] %v1490
      %1589 = vst [vmem:[#allocation2 + $0xa4] sm:$0xf] %v1491
      %1590 = vst [vmem:[#allocation2 + $0xa8] sm:$0xf] %v1492
      %1591 = vst [vmem:[#allocation2 + $0xac] sm:$0xf] %v1493
      %1592 = vst [vmem:[#allocation2 + $0xb0] sm:$0xf] %v1494
      %1593 = vst [vmem:[#allocation2 + $0xb4] sm:$0xf] %v1495
      %1594 = vst [vmem:[#allocation2 + $0xb8] sm:$0xf] %v1496
      %1595 = vst [vmem:[#allocation2 + $0xbc] sm:$0xf] %v1497
      %1596 = vst [vmem:[#allocation2 + $0xc0] sm:$0xf] %v1498
      %1597 = vst [vmem:[%s272] sm:$0xf] %v1450
      %1598 = vst [vmem:[%s272 + $0x4] sm:$0xf] %v1451
      %1599 = vst [vmem:[%s272 + $0x8] sm:$0xf] %v1452
      %1600 = vst [vmem:[%s272 + $0xc] sm:$0xf] %v1453
      %1601 = vst [vmem:[%s272 + $0x10] sm:$0xf] %v1454
      %1602 = vst [vmem:[%s272 + $0x14] sm:$0xf] %v1455
      %1603 = vst [vmem:[%s272 + $0x18] sm:$0xf] %v1456
      %1604 = vst [vmem:[%s272 + $0x1c] sm:$0xf] %v1457
      %1605 = vst [vmem:[%s272 + $0x20] sm:$0xf] %v1458
      %1606 = vst [vmem:[%s272 + $0x24] sm:$0xf] %v1459
      %1607 = vst [vmem:[%s272 + $0x28] sm:$0xf] %v1460
      %1608 = vst [vmem:[%s272 + $0x2c] sm:$0xf] %v1461
      %1609 = vst [vmem:[%s272 + $0x30] sm:$0xf] %v1462
      %1610 = vst [vmem:[%s272 + $0x34] sm:$0xf] %v1463
      %1611 = vst [vmem:[%s272 + $0x38] sm:$0xf] %v1464
      %1612 = vst [vmem:[%s272 + $0x3c] sm:$0xf] %v1465
      %1613 = vst [vmem:[%s272 + $0x40] sm:$0xf] %v1466
      %1614 = vst [vmem:[%s272 + $0x44] sm:$0xf] %v1467
      %1615 = vst [vmem:[%s272 + $0x48] sm:$0xf] %v1468
      %1616 = vst [vmem:[%s272 + $0x4c] sm:$0xf] %v1469
      %1617 = vst [vmem:[%s272 + $0x50] sm:$0xf] %v1470
      %1618 = vst [vmem:[%s272 + $0x54] sm:$0xf] %v1471
      %1619 = vst [vmem:[%s272 + $0x58] sm:$0xf] %v1472
      %1620 = vst [vmem:[%s272 + $0x5c] sm:$0xf] %v1473
      %1621 = vst [vmem:[%s272 + $0x60] sm:$0xf] %v1474
      %1622 = vst [vmem:[%s272 + $0x64] sm:$0xf] %v1475
      %1623 = vst [vmem:[%s272 + $0x68] sm:$0xf] %v1476
      %1624 = vst [vmem:[%s272 + $0x6c] sm:$0xf] %v1477
      %1625 = vst [vmem:[%s272 + $0x70] sm:$0xf] %v1478
      %1626 = vst [vmem:[%s272 + $0x74] sm:$0xf] %v1479
      %1627 = vst [vmem:[%s272 + $0x78] sm:$0xf] %v1480
      %1628 = vst [vmem:[%s272 + $0x7c] sm:$0xf] %v1481
      %1629 = vst [vmem:[%s272 + $0x80] sm:$0xf] %v1482
      %1630 = vst [vmem:[%s272 + $0x84] sm:$0xf] %v1483
      %1631 = vst [vmem:[%s272 + $0x88] sm:$0xf] %v1484
      %1632 = vst [vmem:[%s272 + $0x8c] sm:$0xf] %v1485
      %1633 = vst [vmem:[%s272 + $0x90] sm:$0xf] %v1486
      %1634 = vst [vmem:[%s272 + $0x94] sm:$0xf] %v1487
      %1635 = vst [vmem:[%s272 + $0x98] sm:$0xf] %v1488
      %1636 = vst [vmem:[%s272 + $0x9c] sm:$0xf] %v1489
      %1637 = vst [vmem:[%s272 + $0xa0] sm:$0xf] %v1490
      %1638 = vst [vmem:[%s272 + $0xa4] sm:$0xf] %v1491
      %1639 = vst [vmem:[%s272 + $0xa8] sm:$0xf] %v1492
      %1640 = vst [vmem:[%s272 + $0xac] sm:$0xf] %v1493
      %1641 = vst [vmem:[%s272 + $0xb0] sm:$0xf] %v1494
      %1642 = vst [vmem:[%s272 + $0xb4] sm:$0xf] %v1495
      %1643 = vst [vmem:[%s272 + $0xb8] sm:$0xf] %v1496
      %1644 = vst [vmem:[%s272 + $0xbc] sm:$0xf] %v1497
      %1645 = vst [vmem:[%s272 + $0xc0] sm:$0xf] %v1498
      %p1646 = scmp.lt.s32.totalorder %s16, 1
      %s1647 = scalar_select %p1646, %s16, 1
      %s1648 = smul.addr %s1647, 49
      %s1649 = smul.addr %s1648, 4
      %s1650 = scalar_lea.vmem %s5, %s1649
      // Predicated region
      $region45: #{deepgcn_slic_v2_forward.13} parent=39 // pred_check
        %p1651 = pneg %p159
      $region46: #{deepgcn_slic_v2_forward.13} parent=39 // pred_check_branch
        %1653 = sbr.rel (%p1651) target = $region48
      $region47: #{deepgcn_slic_v2_forward.13} parent=39 // pred_region
        _
      $region48: #{deepgcn_slic_v2_forward.13} parent=39 // pred_fallthru
        _
    $region40: #{deepgcn_slic_v2_forward.13} parent=5 // pred_fallthru
      _
    %p1654 = scmp.le.s32.totalorder 2, %s11
    // Predicated region
    $region49: #{deepgcn_slic_v2_forward.13} parent=5 // pred_check
      %p1655 = pneg %p1654
    $region50: #{deepgcn_slic_v2_forward.13} parent=5 // pred_check_branch
      %1657 = sbr.rel (%p1655) target = $region52
    $region51: #{deepgcn_slic_v2_forward.13} parent=5 // pred_region
      %s1658 = ssub.s32 %s11, 2
      // Predicated region
      $region53: #{deepgcn_slic_v2_forward.13} parent=51 // pred_check
        %p1659 = pneg %p165
      $region54: #{deepgcn_slic_v2_forward.13} parent=51 // pred_check_branch
        %1661 = sbr.rel (%p1659) target = $region56
      $region55: #{deepgcn_slic_v2_forward.13} parent=51 // pred_region
        %p1662 = scmp.lt.s32.totalorder %s17, 1
        %s1663 = scalar_select %p1662, %s17, 1
        %s1664 = smul.addr %s1663, 49
        %s1665 = smul.addr %s1664, 4
        %s1666 = scalar_lea.vmem %s5, %s1665
      $region56: #{deepgcn_slic_v2_forward.13} parent=51 // pred_fallthru
        _
    $region52: #{deepgcn_slic_v2_forward.13} parent=5 // pred_fallthru
      _
  $region6: #{deepgcn_slic_v2_forward.13} parent=0 // loop_footer
    %s15 = sadd.s32 1, %s11
  $region7: #{deepgcn_slic_v2_forward.13} parent=0 // loop_footer_branch
    %10 = sbr.rel target = $region3
  $region8: #{deepgcn_slic_v2_forward.13} parent=0 // loop_exit
    _

</llo_original>
